<compile_context>
chip_gen: v7x
topology: tpu7x:2x2x1
jax: 0.10.0
libtpu: 0.0.40
codegen_flags: <defaults>
</compile_context>

<pallas_src>
import jax
import jax.numpy as jnp
from jax.experimental import pallas as pl
from jax.experimental.pallas import tpu as pltpu


# ---------------------------------------------------------------------------
# Pallas kernels
# ---------------------------------------------------------------------------

def _conv_relu_pool_kernel(x_ref, w_ref, b_ref, o_ref):
    """One pool-phase step: (N*Ho*Wo, K) x (K, 128) matmul + bias + ReLU,
    max-accumulated across the 4 pool phases into the resident output block."""
    y = jnp.dot(x_ref[0], w_ref[...], preferred_element_type=jnp.float32)
    y = jnp.maximum(y + b_ref[...], 0.0)            # (R, 128) f32
    y = y.astype(o_ref.dtype)

    @pl.when(pl.program_id(0) == 0)
    def _():
        o_ref[...] = y                              # init with phase 0

    @pl.when(pl.program_id(0) != 0)
    def _():
        o_ref[...] = jnp.maximum(o_ref[...], y)     # maxpool across phases


def _mlp_head_kernel(x_ref, w3_ref, b3_ref, w4_ref, b4_ref, o_ref):
    """Fused Linear(3136->512)+ReLU+Linear(512->10 padded to 128)+LogSoftmax."""
    h = jnp.dot(x_ref[...], w3_ref[...], preferred_element_type=jnp.float32)
    h = jnp.maximum(h + b3_ref[...], 0.0)           # (TB, 512) f32
    z = jnp.dot(h.astype(jnp.bfloat16), w4_ref[...],
                preferred_element_type=jnp.float32)
    z = z + b4_ref[...]                             # (TB, 128); pad lanes ~ -1e30
    m = jnp.max(z, axis=1, keepdims=True)
    lse = m + jnp.log(jnp.sum(jnp.exp(z - m), axis=1, keepdims=True))
    o_ref[...] = z - lse


# ---------------------------------------------------------------------------
# pallas_call wrappers
# ---------------------------------------------------------------------------

def conv_relu_pool(cols, w, b):
    """cols: (4, R, K) bf16 pool-phase-ordered im2col (R = N*Ho*Wo);
    w: (K, 128) bf16; b: (1, 128) f32.  Returns (R, 128) bf16 pooled acts."""
    P, R, K = cols.shape
    Cout = w.shape[1]
    return pl.pallas_call(
        _conv_relu_pool_kernel,
        out_shape=jax.ShapeDtypeStruct((R, Cout), jnp.bfloat16),
        grid=(P,),
        in_specs=[
            pl.BlockSpec((1, R, K), lambda p: (p, 0, 0)),
            pl.BlockSpec((K, Cout), lambda p: (0, 0)),
            pl.BlockSpec((1, Cout), lambda p: (0, 0)),
        ],
        out_specs=pl.BlockSpec((R, Cout), lambda p: (0, 0)),
        compiler_params=pltpu.CompilerParams(
            dimension_semantics=("arbitrary",)),
    )(cols, w, b)


def mlp_head(xf, w3, b3, w4, b4, tb):
    """xf: (Np, 6272) bf16 (Np % tb == 0).  Returns (Np, 128) f32 log-probs
    (only the first 10 lanes are real classes)."""
    Np, F = xf.shape
    H = w3.shape[1]
    return pl.pallas_call(
        _mlp_head_kernel,
        out_shape=jax.ShapeDtypeStruct((Np, 128), jnp.float32),
        grid=(Np // tb,),
        in_specs=[
            pl.BlockSpec((tb, F), lambda i: (i, 0)),
            pl.BlockSpec((F, H), lambda i: (0, 0)),
            pl.BlockSpec((1, H), lambda i: (0, 0)),
            pl.BlockSpec((H, 128), lambda i: (0, 0)),
            pl.BlockSpec((1, 128), lambda i: (0, 0)),
        ],
        out_specs=pl.BlockSpec((tb, 128), lambda i: (i, 0)),
        compiler_params=pltpu.CompilerParams(
            dimension_semantics=("parallel",),
            vmem_limit_bytes=48 * 1024 * 1024),
    )(xf, w3, b3, w4, b4)


# ---------------------------------------------------------------------------
# Glue: pool-phase im2col, parameter init / prep, forward pass
# ---------------------------------------------------------------------------

def _im2col_pool_phases(x):
    """x: (N, H, W, C) -> (4, N*(H//2)*(W//2), 9*C).

    Phase axis enumerates the 2x2 maxpool window positions (a, b); per-phase
    rows are (image, pooled-output position) in row-major order; columns are
    (ky, kx, ci) for the 3x3, pad=1 conv taps."""
    N, H, W, C = x.shape
    Ho, Wo = H // 2, W // 2
    xp = jnp.pad(x, ((0, 0), (1, 1), (1, 1), (0, 0)))
    phases = []
    for a in range(2):
        for b in range(2):
            taps = []
            for ky in range(3):
                for kx in range(3):
                    sl = jax.lax.slice(
                        xp,
                        (0, a + ky, b + kx, 0),
                        (N, a + ky + 2 * (Ho - 1) + 1,
                         b + kx + 2 * (Wo - 1) + 1, C),
                        (1, 2, 2, 1))                      # (N, Ho, Wo, C)
                    taps.append(sl)
            ph = jnp.concatenate(taps, axis=-1)            # (N, Ho, Wo, 9C)
            phases.append(ph.reshape(N * Ho * Wo, 9 * C))
    return jnp.stack(phases, axis=0)                       # (4, N*Ho*Wo, 9C)


def init_params(key):
    """PyTorch-convention parameters (Conv2d OIHW, Linear (out, in))."""
    ks = jax.random.split(key, 8)

    def u(k, shape, fan_in):
        bound = 1.0 / jnp.sqrt(jnp.float32(fan_in))
        return jax.random.uniform(k, shape, jnp.float32, -bound, bound)

    return {
        "w1": u(ks[0], (32, 1, 3, 3), 1 * 9),   "b1": u(ks[1], (32,), 1 * 9),
        "w2": u(ks[2], (64, 32, 3, 3), 32 * 9), "b2": u(ks[3], (64,), 32 * 9),
        "w3": u(ks[4], (512, 64 * 7 * 7), 64 * 7 * 7),
        "b3": u(ks[5], (512,), 64 * 7 * 7),
        "w4": u(ks[6], (10, 512), 512),         "b4": u(ks[7], (10,), 512),
    }


def prepare_params(raw):
    """One-time conversion to kernel-friendly padded / permuted bf16 weights."""
    # conv1: (32,1,3,3) -> (9,32) -> pad to (16,128)  (K 9->16, Cout 32->128)
    w1m = jnp.transpose(raw["w1"], (2, 3, 1, 0)).reshape(9, 32)
    w1e = jnp.zeros((16, 128), jnp.float32).at[:9, :32].set(w1m)
    b1e = jnp.zeros((1, 128), jnp.float32).at[0, :32].set(raw["b1"])

    # conv2: (64,32,3,3) -> (288,64) -> pad Cout to 128
    w2m = jnp.transpose(raw["w2"], (2, 3, 1, 0)).reshape(288, 64)
    w2e = jnp.zeros((288, 128), jnp.float32).at[:, :64].set(w2m)
    b2e = jnp.zeros((1, 128), jnp.float32).at[0, :64].set(raw["b2"])

    # layer3: fold torch.flatten (C,H,W) ordering into the weight and pad the
    # channel dim to 128 so the NHWC(-padded) activation can be flattened
    # directly: feature index = spatial*128 + channel.
    w3t = raw["w3"].T.reshape(64, 49, 512)                 # (c, s, out)
    w3sc = jnp.transpose(w3t, (1, 0, 2))                   # (s, c, out)
    w3e = jnp.zeros((49, 128, 512), jnp.float32).at[:, :64, :].set(w3sc)
    w3e = w3e.reshape(49 * 128, 512)
    b3e = raw["b3"].reshape(1, 512).astype(jnp.float32)

    # layer4: pad 10 classes -> 128 lanes; pad lanes get bias -1e30 so they
    # vanish in the log-softmax reduction.
    w4e = jnp.zeros((512, 128), jnp.float32).at[:, :10].set(raw["w4"].T)
    b4e = jnp.full((1, 128), -1e30, jnp.float32).at[0, :10].set(raw["b4"])

    return {
        "w1e": w1e.astype(jnp.bfloat16), "b1e": b1e,
        "w2e": w2e.astype(jnp.bfloat16), "b2e": b2e,
        "w3e": w3e.astype(jnp.bfloat16), "b3e": b3e,
        "w4e": w4e.astype(jnp.bfloat16), "b4e": b4e,
    }


def forward(x_nchw, p):
    # NCHW (PyTorch) -> NHWC, bf16 for the MXU path.
    x = jnp.transpose(x_nchw, (0, 2, 3, 1)).astype(jnp.bfloat16)   # (N,28,28,1)
    N = x.shape[0]

    # layer1: conv+ReLU+pool fused; K padded 9 -> 16 for aligned loads.
    cols1 = _im2col_pool_phases(x)                                 # (4,N*196,9)
    cols1 = jnp.pad(cols1, ((0, 0), (0, 0), (0, 7)))               # (4,N*196,16)
    a1 = conv_relu_pool(cols1, p["w1e"], p["b1e"])                 # (N*196,128)

    # layer2: conv+ReLU+pool fused (Dropout(0.2) identity at inference).
    x2 = a1.reshape(N, 14, 14, 128)[..., :32]                      # real channels
    cols2 = _im2col_pool_phases(x2)                                # (4,N*49,288)
    a2 = conv_relu_pool(cols2, p["w2e"], p["b2e"])                 # (N*49,128)

    # flatten directly in (spatial, padded-channel) order; the (C,H,W)
    # permutation of torch.flatten is already folded into w3e.
    xf = a2.reshape(N, 49 * 128)                                   # (N, 6272)

    # layer3 + layer4 fused head (Dropout(0.2) identity at inference).
    tb = 8 if N <= 8 else 128
    n_pad = (-N) % tb
    if n_pad:
        xf = jnp.pad(xf, ((0, n_pad), (0, 0)))
    logp = mlp_head(xf, p["w3e"], p["b3e"], p["w4e"], p["b4e"], tb)  # (Np,128)
    return logp[:N, :10]


# ---------------------------------------------------------------------------
# Pure-JAX f32 reference (for validation only)
# ---------------------------------------------------------------------------

def reference_forward(x_nchw, raw):
    y = jax.lax.conv_general_dilated(
        x_nchw, raw["w1"], (1, 1), ((1, 1), (1, 1)),
        dimension_numbers=("NCHW", "OIHW", "NCHW"))
    y = jax.nn.relu(y + raw["b1"][None, :, None, None])
    y = jax.lax.reduce_window(y, -jnp.inf, jax.lax.max,
                              (1, 1, 2, 2), (1, 1, 2, 2), "VALID")
    y = jax.lax.conv_general_dilated(
        y, raw["w2"], (1, 1), ((1, 1), (1, 1)),
        dimension_numbers=("NCHW", "OIHW", "NCHW"))
    y = jax.nn.relu(y + raw["b2"][None, :, None, None])
    y = jax.lax.reduce_window(y, -jnp.inf, jax.lax.max,
                              (1, 1, 2, 2), (1, 1, 2, 2), "VALID")
    f = y.reshape(y.shape[0], -1)                                  # NCHW flatten
    h = jax.nn.relu(f @ raw["w3"].T + raw["b3"])
    z = h @ raw["w4"].T + raw["b4"]
    return jax.nn.log_softmax(z, axis=1)


# ---------------------------------------------------------------------------
# Main
# ---------------------------------------------------------------------------

if __name__ == "__main__":
    key = jax.random.PRNGKey(0)
    kx, kp = jax.random.split(key)

    # MNIST-shaped input (fixed by Linear(64*7*7, 512)): batch=2, 1x28x28 NCHW.
    x = jax.random.normal(kx, (2, 1, 28, 28), dtype=jnp.float32)
    raw = init_params(kp)
    params = prepare_params(raw)

    out = jax.jit(forward)(x, params)
    out = jax.block_until_ready(out)

    assert out.shape == (2, 10), out.shape
    # log-softmax rows must exponentiate-sum to 1
    assert jnp.allclose(jnp.exp(out).sum(axis=1), 1.0, atol=1e-3)

    # validate against f32 reference (kernel path is bf16 on the MXU)
    ref = reference_forward(x, raw)
    max_err = float(jnp.max(jnp.abs(out - ref)))
    assert max_err < 0.15, f"max |logp - ref| = {max_err}"

    print("KERNEL_OK")
</pallas_src>

<mosaic_0001>
module attributes {stable_mosaic.version = 11 : i64} {
  func.func @_conv_relu_pool_kernel(%arg0: i32, %arg1: memref<1x392x16xbf16, #tpu.memory_space<vmem>>, %arg2: memref<16x128xbf16, #tpu.memory_space<vmem>>, %arg3: memref<1x128xf32, #tpu.memory_space<vmem>>, %arg4: memref<392x128xbf16, #tpu.memory_space<vmem>>) attributes {dimension_semantics = [#tpu.dimension_semantics<arbitrary>], iteration_bounds = array<i64: 4>, scalar_prefetch = 0 : i64, scratch_operands = 0 : i64, tpu.core_type = #tpu.core_type<tc>, window_params = [{transform_indices = @transform_0, window_bounds = array<i64: 1, 392, 16>}, {pipeline_mode = #tpu.pipeline_mode<synchronous>, transform_indices = @transform_1, window_bounds = array<i64: 16, 128>}, {pipeline_mode = #tpu.pipeline_mode<synchronous>, transform_indices = @transform_2, window_bounds = array<i64: 1, 128>}, {pipeline_mode = #tpu.pipeline_mode<synchronous>, transform_indices = @transform_3, window_bounds = array<i64: 392, 128>}]} {
    %c0 = arith.constant 0 : index
    %c0_0 = arith.constant 0 : index
    %c0_1 = arith.constant 0 : index
    %0 = vector.load %arg1[%c0, %c0_0, %c0_1] : memref<1x392x16xbf16, #tpu.memory_space<vmem>>, vector<1x392x16xbf16>
    %1 = vector.shape_cast %0 : vector<1x392x16xbf16> to vector<392x16xbf16>
    %c0_2 = arith.constant 0 : index
    %c0_3 = arith.constant 0 : index
    %2 = vector.load %arg2[%c0_2, %c0_3] : memref<16x128xbf16, #tpu.memory_space<vmem>>, vector<16x128xbf16>
    %cst = arith.constant dense<0.000000e+00> : vector<392x128xf32>
    %3 = tpu.matmul %1, %2, %cst {dimension_numbers = #tpu.dot_dimension_numbers<[1], [0], [0], [1], [0, 0, 1, 1], [], []>} : vector<392x16xbf16>, vector<16x128xbf16>, vector<392x128xf32> -> vector<392x128xf32>
    %c0_4 = arith.constant 0 : index
    %c0_5 = arith.constant 0 : index
    %4 = vector.load %arg3[%c0_4, %c0_5] : memref<1x128xf32, #tpu.memory_space<vmem>>, vector<1x128xf32>
    %5 = vector.broadcast %4 : vector<1x128xf32> to vector<392x128xf32>
    %6 = arith.addf %3, %5 : vector<392x128xf32>
    %cst_6 = arith.constant 0.000000e+00 : f32
    %7 = vector.broadcast %cst_6 : f32 to vector<392x128xf32>
    %8 = arith.maximumf %6, %7 : vector<392x128xf32>
    %9 = arith.truncf %8 : vector<392x128xf32> to vector<392x128xbf16>
    %c0_i32 = arith.constant 0 : i32
    %10 = arith.cmpi eq, %arg0, %c0_i32 : i32
    %11 = arith.extui %10 : i1 to i32
    %c0_i32_7 = arith.constant 0 : i32
    %12 = arith.cmpi ne, %11, %c0_i32_7 : i32
    scf.if %12 {
      %c0_10 = arith.constant 0 : index
      %c0_11 = arith.constant 0 : index
      %16 = vector.load %arg4[%c0_10, %c0_11] : memref<392x128xbf16, #tpu.memory_space<vmem>>, vector<392x128xbf16>
      tpu.vector_store %arg4[%c0_10, %c0_11], %9 {strides = array<i32>} : memref<392x128xbf16, #tpu.memory_space<vmem>>, vector<392x128xbf16>,
    } else {
    }
    %c0_i32_8 = arith.constant 0 : i32
    %13 = arith.cmpi ne, %arg0, %c0_i32_8 : i32
    %14 = arith.extui %13 : i1 to i32
    %c0_i32_9 = arith.constant 0 : i32
    %15 = arith.cmpi ne, %14, %c0_i32_9 : i32
    scf.if %15 {
      %c0_10 = arith.constant 0 : index
      %c0_11 = arith.constant 0 : index
      %16 = vector.load %arg4[%c0_10, %c0_11] : memref<392x128xbf16, #tpu.memory_space<vmem>>, vector<392x128xbf16>
      %17 = arith.maximumf %16, %9 : vector<392x128xbf16>
      %c0_12 = arith.constant 0 : index
      %c0_13 = arith.constant 0 : index
      %18 = vector.load %arg4[%c0_12, %c0_13] : memref<392x128xbf16, #tpu.memory_space<vmem>>, vector<392x128xbf16>
      tpu.vector_store %arg4[%c0_12, %c0_13], %17 {strides = array<i32>} : memref<392x128xbf16, #tpu.memory_space<vmem>>, vector<392x128xbf16>,
    } else {
    }
    return
  }
  func.func @transform_0(%arg0: i32) -> (i32, i32, i32) {
    %c0_i32 = arith.constant 0 : i32
    %c0_i32_0 = arith.constant 0 : i32
    %c0_i32_1 = arith.constant 0 : i32
    return %arg0, %c0_i32, %c0_i32_0 : i32, i32, i32
  }
  func.func @transform_1(%arg0: i32) -> (i32, i32) {
    %c0_i32 = arith.constant 0 : i32
    %c0_i32_0 = arith.constant 0 : i32
    %c0_i32_1 = arith.constant 0 : i32
    return %c0_i32, %c0_i32_0 : i32, i32
  }
  func.func @transform_2(%arg0: i32) -> (i32, i32) {
    %c0_i32 = arith.constant 0 : i32
    %c0_i32_0 = arith.constant 0 : i32
    %c0_i32_1 = arith.constant 0 : i32
    return %c0_i32, %c0_i32_0 : i32, i32
  }
  func.func @transform_3(%arg0: i32) -> (i32, i32) {
    %c0_i32 = arith.constant 0 : i32
    %c0_i32_0 = arith.constant 0 : i32
    %c0_i32_1 = arith.constant 0 : i32
    return %c0_i32, %c0_i32_0 : i32, i32
  }
}

module attributes {stable_mosaic.version = 11 : i64} {
  func.func @_conv_relu_pool_kernel(%arg0: i32, %arg1: memref<1x98x288xbf16, #tpu.memory_space<vmem>>, %arg2: memref<288x128xbf16, #tpu.memory_space<vmem>>, %arg3: memref<1x128xf32, #tpu.memory_space<vmem>>, %arg4: memref<98x128xbf16, #tpu.memory_space<vmem>>) attributes {dimension_semantics = [#tpu.dimension_semantics<arbitrary>], iteration_bounds = array<i64: 4>, scalar_prefetch = 0 : i64, scratch_operands = 0 : i64, tpu.core_type = #tpu.core_type<tc>, window_params = [{transform_indices = @transform_0, window_bounds = array<i64: 1, 98, 288>}, {pipeline_mode = #tpu.pipeline_mode<synchronous>, transform_indices = @transform_1, window_bounds = array<i64: 288, 128>}, {pipeline_mode = #tpu.pipeline_mode<synchronous>, transform_indices = @transform_2, window_bounds = array<i64: 1, 128>}, {pipeline_mode = #tpu.pipeline_mode<synchronous>, transform_indices = @transform_3, window_bounds = array<i64: 98, 128>}]} {
    %c0 = arith.constant 0 : index
    %c0_0 = arith.constant 0 : index
    %c0_1 = arith.constant 0 : index
    %0 = vector.load %arg1[%c0, %c0_0, %c0_1] : memref<1x98x288xbf16, #tpu.memory_space<vmem>>, vector<1x98x288xbf16>
    %1 = vector.shape_cast %0 : vector<1x98x288xbf16> to vector<98x288xbf16>
    %c0_2 = arith.constant 0 : index
    %c0_3 = arith.constant 0 : index
    %2 = vector.load %arg2[%c0_2, %c0_3] : memref<288x128xbf16, #tpu.memory_space<vmem>>, vector<288x128xbf16>
    %cst = arith.constant dense<0.000000e+00> : vector<98x128xf32>
    %3 = tpu.matmul %1, %2, %cst {dimension_numbers = #tpu.dot_dimension_numbers<[1], [0], [0], [1], [0, 0, 1, 1], [], []>} : vector<98x288xbf16>, vector<288x128xbf16>, vector<98x128xf32> -> vector<98x128xf32>
    %c0_4 = arith.constant 0 : index
    %c0_5 = arith.constant 0 : index
    %4 = vector.load %arg3[%c0_4, %c0_5] : memref<1x128xf32, #tpu.memory_space<vmem>>, vector<1x128xf32>
    %5 = vector.broadcast %4 : vector<1x128xf32> to vector<98x128xf32>
    %6 = arith.addf %3, %5 : vector<98x128xf32>
    %cst_6 = arith.constant 0.000000e+00 : f32
    %7 = vector.broadcast %cst_6 : f32 to vector<98x128xf32>
    %8 = arith.maximumf %6, %7 : vector<98x128xf32>
    %9 = arith.truncf %8 : vector<98x128xf32> to vector<98x128xbf16>
    %c0_i32 = arith.constant 0 : i32
    %10 = arith.cmpi eq, %arg0, %c0_i32 : i32
    %11 = arith.extui %10 : i1 to i32
    %c0_i32_7 = arith.constant 0 : i32
    %12 = arith.cmpi ne, %11, %c0_i32_7 : i32
    scf.if %12 {
      %c0_10 = arith.constant 0 : index
      %c0_11 = arith.constant 0 : index
      %16 = vector.load %arg4[%c0_10, %c0_11] : memref<98x128xbf16, #tpu.memory_space<vmem>>, vector<98x128xbf16>
      tpu.vector_store %arg4[%c0_10, %c0_11], %9 {strides = array<i32>} : memref<98x128xbf16, #tpu.memory_space<vmem>>, vector<98x128xbf16>,
    } else {
    }
    %c0_i32_8 = arith.constant 0 : i32
    %13 = arith.cmpi ne, %arg0, %c0_i32_8 : i32
    %14 = arith.extui %13 : i1 to i32
    %c0_i32_9 = arith.constant 0 : i32
    %15 = arith.cmpi ne, %14, %c0_i32_9 : i32
    scf.if %15 {
      %c0_10 = arith.constant 0 : index
      %c0_11 = arith.constant 0 : index
      %16 = vector.load %arg4[%c0_10, %c0_11] : memref<98x128xbf16, #tpu.memory_space<vmem>>, vector<98x128xbf16>
      %17 = arith.maximumf %16, %9 : vector<98x128xbf16>
      %c0_12 = arith.constant 0 : index
      %c0_13 = arith.constant 0 : index
      %18 = vector.load %arg4[%c0_12, %c0_13] : memref<98x128xbf16, #tpu.memory_space<vmem>>, vector<98x128xbf16>
      tpu.vector_store %arg4[%c0_12, %c0_13], %17 {strides = array<i32>} : memref<98x128xbf16, #tpu.memory_space<vmem>>, vector<98x128xbf16>,
    } else {
    }
    return
  }
  func.func @transform_0(%arg0: i32) -> (i32, i32, i32) {
    %c0_i32 = arith.constant 0 : i32
    %c0_i32_0 = arith.constant 0 : i32
    %c0_i32_1 = arith.constant 0 : i32
    return %arg0, %c0_i32, %c0_i32_0 : i32, i32, i32
  }
  func.func @transform_1(%arg0: i32) -> (i32, i32) {
    %c0_i32 = arith.constant 0 : i32
    %c0_i32_0 = arith.constant 0 : i32
    %c0_i32_1 = arith.constant 0 : i32
    return %c0_i32, %c0_i32_0 : i32, i32
  }
  func.func @transform_2(%arg0: i32) -> (i32, i32) {
    %c0_i32 = arith.constant 0 : i32
    %c0_i32_0 = arith.constant 0 : i32
    %c0_i32_1 = arith.constant 0 : i32
    return %c0_i32, %c0_i32_0 : i32, i32
  }
  func.func @transform_3(%arg0: i32) -> (i32, i32) {
    %c0_i32 = arith.constant 0 : i32
    %c0_i32_0 = arith.constant 0 : i32
    %c0_i32_1 = arith.constant 0 : i32
    return %c0_i32, %c0_i32_0 : i32, i32
  }
}

module attributes {stable_mosaic.version = 11 : i64} {
  func.func @_mlp_head_kernel(%arg0: i32, %arg1: memref<8x6272xbf16, #tpu.memory_space<vmem>>, %arg2: memref<6272x512xbf16, #tpu.memory_space<vmem>>, %arg3: memref<1x512xf32, #tpu.memory_space<vmem>>, %arg4: memref<512x128xbf16, #tpu.memory_space<vmem>>, %arg5: memref<1x128xf32, #tpu.memory_space<vmem>>, %arg6: memref<8x128xf32, #tpu.memory_space<vmem>>) attributes {dimension_semantics = [#tpu.dimension_semantics<parallel>], iteration_bounds = array<i64: 1>, scalar_prefetch = 0 : i64, scratch_operands = 0 : i64, tpu.core_type = #tpu.core_type<tc>, window_params = [{transform_indices = @transform_0, window_bounds = array<i64: 8, 6272>}, {pipeline_mode = #tpu.pipeline_mode<synchronous>, transform_indices = @transform_1, window_bounds = array<i64: 6272, 512>}, {pipeline_mode = #tpu.pipeline_mode<synchronous>, transform_indices = @transform_2, window_bounds = array<i64: 1, 512>}, {pipeline_mode = #tpu.pipeline_mode<synchronous>, transform_indices = @transform_3, window_bounds = array<i64: 512, 128>}, {pipeline_mode = #tpu.pipeline_mode<synchronous>, transform_indices = @transform_4, window_bounds = array<i64: 1, 128>}, {transform_indices = @transform_5, window_bounds = array<i64: 8, 128>}]} {
    %c0 = arith.constant 0 : index
    %c0_0 = arith.constant 0 : index
    %0 = vector.load %arg1[%c0, %c0_0] : memref<8x6272xbf16, #tpu.memory_space<vmem>>, vector<8x6272xbf16>
    %c0_1 = arith.constant 0 : index
    %c0_2 = arith.constant 0 : index
    %1 = vector.load %arg2[%c0_1, %c0_2] : memref<6272x512xbf16, #tpu.memory_space<vmem>>, vector<6272x512xbf16>
    %cst = arith.constant dense<0.000000e+00> : vector<8x512xf32>
    %2 = tpu.matmul %0, %1, %cst {dimension_numbers = #tpu.dot_dimension_numbers<[1], [0], [0], [1], [0, 0, 1, 1], [], []>} : vector<8x6272xbf16>, vector<6272x512xbf16>, vector<8x512xf32> -> vector<8x512xf32>
    %c0_3 = arith.constant 0 : index
    %c0_4 = arith.constant 0 : index
    %3 = vector.load %arg3[%c0_3, %c0_4] : memref<1x512xf32, #tpu.memory_space<vmem>>, vector<1x512xf32>
    %4 = vector.broadcast %3 : vector<1x512xf32> to vector<8x512xf32>
    %5 = arith.addf %2, %4 : vector<8x512xf32>
    %cst_5 = arith.constant 0.000000e+00 : f32
    %6 = vector.broadcast %cst_5 : f32 to vector<8x512xf32>
    %7 = arith.maximumf %5, %6 : vector<8x512xf32>
    %8 = arith.truncf %7 : vector<8x512xf32> to vector<8x512xbf16>
    %c0_6 = arith.constant 0 : index
    %c0_7 = arith.constant 0 : index
    %9 = vector.load %arg4[%c0_6, %c0_7] : memref<512x128xbf16, #tpu.memory_space<vmem>>, vector<512x128xbf16>
    %cst_8 = arith.constant dense<0.000000e+00> : vector<8x128xf32>
    %10 = tpu.matmul %8, %9, %cst_8 {dimension_numbers = #tpu.dot_dimension_numbers<[1], [0], [0], [1], [0, 0, 1, 1], [], []>} : vector<8x512xbf16>, vector<512x128xbf16>, vector<8x128xf32> -> vector<8x128xf32>
    %c0_9 = arith.constant 0 : index
    %c0_10 = arith.constant 0 : index
    %11 = vector.load %arg5[%c0_9, %c0_10] : memref<1x128xf32, #tpu.memory_space<vmem>>, vector<1x128xf32>
    %12 = vector.broadcast %11 : vector<1x128xf32> to vector<8x128xf32>
    %13 = arith.addf %10, %12 : vector<8x128xf32>
    %cst_11 = arith.constant dense<0xFF800000> : vector<8xf32>
    %14 = vector.multi_reduction <maximumf>, %13, %cst_11 [1] : vector<8x128xf32> to vector<8xf32>
    %15 = vector.shape_cast %14 : vector<8xf32> to vector<8x1xf32>
    %16 = vector.broadcast %15 : vector<8x1xf32> to vector<8x128xf32>
    %17 = arith.subf %13, %16 : vector<8x128xf32>
    %18 = math.exp %17 : vector<8x128xf32>
    %cst_12 = arith.constant dense<0.000000e+00> : vector<8xf32>
    %19 = vector.multi_reduction <add>, %18, %cst_12 [1] : vector<8x128xf32> to vector<8xf32>
    %20 = vector.shape_cast %19 : vector<8xf32> to vector<8x1xf32>
    %21 = math.log %20 : vector<8x1xf32>
    %22 = arith.addf %15, %21 : vector<8x1xf32>
    %23 = vector.broadcast %22 : vector<8x1xf32> to vector<8x128xf32>
    %24 = arith.subf %13, %23 : vector<8x128xf32>
    %c0_13 = arith.constant 0 : index
    %c0_14 = arith.constant 0 : index
    %25 = vector.load %arg6[%c0_13, %c0_14] : memref<8x128xf32, #tpu.memory_space<vmem>>, vector<8x128xf32>
    tpu.vector_store %arg6[%c0_13, %c0_14], %24 {strides = array<i32>} : memref<8x128xf32, #tpu.memory_space<vmem>>, vector<8x128xf32>,
    return
  }
  func.func @transform_0(%arg0: i32) -> (i32, i32) {
    %c0_i32 = arith.constant 0 : i32
    %c0_i32_0 = arith.constant 0 : i32
    return %arg0, %c0_i32 : i32, i32
  }
  func.func @transform_1(%arg0: i32) -> (i32, i32) {
    %c0_i32 = arith.constant 0 : i32
    %c0_i32_0 = arith.constant 0 : i32
    %c0_i32_1 = arith.constant 0 : i32
    return %c0_i32, %c0_i32_0 : i32, i32
  }
  func.func @transform_2(%arg0: i32) -> (i32, i32) {
    %c0_i32 = arith.constant 0 : i32
    %c0_i32_0 = arith.constant 0 : i32
    %c0_i32_1 = arith.constant 0 : i32
    return %c0_i32, %c0_i32_0 : i32, i32
  }
  func.func @transform_3(%arg0: i32) -> (i32, i32) {
    %c0_i32 = arith.constant 0 : i32
    %c0_i32_0 = arith.constant 0 : i32
    %c0_i32_1 = arith.constant 0 : i32
    return %c0_i32, %c0_i32_0 : i32, i32
  }
  func.func @transform_4(%arg0: i32) -> (i32, i32) {
    %c0_i32 = arith.constant 0 : i32
    %c0_i32_0 = arith.constant 0 : i32
    %c0_i32_1 = arith.constant 0 : i32
    return %c0_i32, %c0_i32_0 : i32, i32
  }
  func.func @transform_5(%arg0: i32) -> (i32, i32) {
    %c0_i32 = arith.constant 0 : i32
    %c0_i32_0 = arith.constant 0 : i32
    return %arg0, %c0_i32 : i32, i32
  }
}

</mosaic_0001>

<llo_original>
// kernel: forward.3
$region0: #{forward.3}
  #allocation0 [shape = 'u32[]', space=smem, size = 0x4, offset = 0x4, fixed_abs, tag = 'smem constant byte address 0x4 - core index']
  #allocation1 [shape = 'u32[144,128]{1,0:T(1,128)}', space=vmem, size = 0x12000, scoped, tag = 'internal scratch']
  %s0 = inlined_call_operand.vmem [shape: bf16[4,392,16], index: 0, kind: input, shape index: {}]
  %s1 = inlined_call_operand.hbm [shape: bf16[16,128], index: 1, kind: input, shape index: {}]
  %s2 = inlined_call_operand.hbm [shape: f32[1,128], index: 2, kind: input, shape index: {}]
  %s3 = inlined_call_operand.vmem [shape: bf16[392,128], index: 3, kind: output, shape index: {}]
  %s4 = sld [smem:[#allocation0]]
  $region61: #{forward.3} parent=0
    _
  %s6 = ssub.s32 1, %s4
  %s7 = scalar_select 0, %s6, %s4
  $region1: #{forward.3} parent=0
    #allocation2 [shape = 'u8[4096]{0}', space=vmem, size = 0x1000, scoped, tag = 'input window, operand 1, single buffered']
    #allocation3 [shape = 's32[2]{0}', space=sflag, size = 0x8, scoped, tag = 'scoped memory for forward.3']
    #allocation4 [shape = 'u8[512]{0}', space=vmem, size = 0x400, scoped, tag = 'input window, operand 2, single buffered']
    #allocation5 [shape = 's32[1]{0}', space=sflag, size = 0x4, scoped, tag = 'scoped memory for forward.3']
    %8 = vsyncpa [#allocation3], 0
    %9 = vsyncpa [#allocation5], 0
    loop: start=0, step=1, limit=6
    $region2: #{forward.3} parent=1 // loop_pre_header
      _
    $region3: #{forward.3} parent=1 // loop_header
      %s11 = sphi 0, %s15
      %p12 = scmp.ge.s32.totalorder %s11, 6
      %s21 = sphi 0, %s23
      %s24 = sphi 0, %s21
      %s25 = sphi 0, %s24
      %s41 = sphi 0, %s25
      %s45 = sphi 0, %s45
      %s47 = sphi 0, %s45
      %s48 = sphi 0, %s47
      %s62 = sphi 0, %s48
      %s66 = sphi 0, %s66
      %s68 = sphi 0, %s66
      %s69 = sphi 0, %s68
      %s83 = sphi 0, %s69
      %s87 = sphi 0, %s87
      %s89 = sphi 0, %s87
      %s90 = sphi 0, %s89
      %s104 = sphi 0, %s90
    $region4: #{forward.3} parent=1 // loop_header_branch
      %14 = sbr.rel (%p12) target = $region8
    $region5: #{forward.3} parent=1 // loop_body
      %s16 = ssub.s32 %s11, 1
      %s17 = ssub.s32 %s11, 2
      %s18 = sadd.s32 %s11, 1
      %s19 = ssub.s32 %s11, %s18
      %p20 = scmp.eq.s32.totalorder %s19, 0
      %s22 = sadd.s32 %s21, 1
      %s23 = scalar_select %p20, %s21, %s22
      %p26 = pneg %p20
      %p27 = scmp.eq.s32.totalorder %s11, 3
      %p28 = por %p26, %p27
      %p29 = scmp.ne.s32.totalorder %s21, %s24
      %p30 = scmp.eq.s32.totalorder %s11, 0
      %p31 = por %p29, %p30
      %p32 = scmp.ne.s32.totalorder %s21, %s24
      %p33 = scmp.eq.s32.totalorder %s16, 3
      %p34 = por %p32, %p33
      %p35 = scmp.ne.s32.totalorder %s24, %s25
      %p36 = scmp.eq.s32.totalorder %s16, 0
      %p37 = por %p35, %p36
      %p38 = scmp.ne.s32.totalorder %s24, %s25
      %p39 = scmp.eq.s32.totalorder %s17, 3
      %p40 = por %p38, %p39
      %p42 = scmp.ne.s32.totalorder %s25, %s41
      %p43 = scmp.eq.s32.totalorder %s17, 0
      %p44 = por %p42, %p43
      %s46 = sadd.s32 %s45, 1
      %p49 = scmp.eq.s32.totalorder %s11, 3
      %p50 = scmp.ne.s32.totalorder %s45, %s47
      %p51 = scmp.eq.s32.totalorder %s11, 0
      %p52 = por %p50, %p51
      %p53 = scmp.ne.s32.totalorder %s45, %s47
      %p54 = scmp.eq.s32.totalorder %s16, 3
      %p55 = por %p53, %p54
      %p56 = scmp.ne.s32.totalorder %s47, %s48
      %p57 = scmp.eq.s32.totalorder %s16, 0
      %p58 = por %p56, %p57
      %p59 = scmp.ne.s32.totalorder %s47, %s48
      %p60 = scmp.eq.s32.totalorder %s17, 3
      %p61 = por %p59, %p60
      %p63 = scmp.ne.s32.totalorder %s48, %s62
      %p64 = scmp.eq.s32.totalorder %s17, 0
      %p65 = por %p63, %p64
      %s67 = sadd.s32 %s66, 1
      %p70 = scmp.eq.s32.totalorder %s11, 3
      %p71 = scmp.ne.s32.totalorder %s66, %s68
      %p72 = scmp.eq.s32.totalorder %s11, 0
      %p73 = por %p71, %p72
      %p74 = scmp.ne.s32.totalorder %s66, %s68
      %p75 = scmp.eq.s32.totalorder %s16, 3
      %p76 = por %p74, %p75
      %p77 = scmp.ne.s32.totalorder %s68, %s69
      %p78 = scmp.eq.s32.totalorder %s16, 0
      %p79 = por %p77, %p78
      %p80 = scmp.ne.s32.totalorder %s68, %s69
      %p81 = scmp.eq.s32.totalorder %s17, 3
      %p82 = por %p80, %p81
      %p84 = scmp.ne.s32.totalorder %s69, %s83
      %p85 = scmp.eq.s32.totalorder %s17, 0
      %p86 = por %p84, %p85
      %s88 = sadd.s32 %s87, 1
      %p91 = scmp.eq.s32.totalorder %s11, 3
      %p92 = scmp.ne.s32.totalorder %s87, %s89
      %p93 = scmp.eq.s32.totalorder %s11, 0
      %p94 = por %p92, %p93
      %p95 = scmp.ne.s32.totalorder %s87, %s89
      %p96 = scmp.eq.s32.totalorder %s16, 3
      %p97 = por %p95, %p96
      %p98 = scmp.ne.s32.totalorder %s89, %s90
      %p99 = scmp.eq.s32.totalorder %s16, 0
      %p100 = por %p98, %p99
      %p101 = scmp.ne.s32.totalorder %s89, %s90
      %p102 = scmp.eq.s32.totalorder %s17, 3
      %p103 = por %p101, %p102
      %p105 = scmp.ne.s32.totalorder %s90, %s104
      %p106 = scmp.eq.s32.totalorder %s17, 0
      %p107 = por %p105, %p106
      %p108 = scmp.le.s32.totalorder 1, %s11
      %p109 = scmp.lt.s32.totalorder %s11, 5
      %p110 = pnand %p108, %p109
      %p111 = pneg %p110
      // Predicated region
      $region9: #{forward.3} parent=5 // pred_check
        _
      $region10: #{forward.3} parent=5 // pred_check_branch
        %113 = sbr.rel (%p110) target = $region12
      $region11: #{forward.3} parent=5 // pred_region
        %s114 = ssub.s32 %s11, 1
        // Predicated region
        $region13: #{forward.3} parent=11 // pred_check
          %p115 = pneg %p58
        $region14: #{forward.3} parent=11 // pred_check_branch
          %117 = sbr.rel (%p115) target = $region16
        $region15: #{forward.3} parent=11 // pred_region
          %s119 = ssub.s32 128, 128
          %120 = vsyncadd [#allocation3], %s119
          %s121 = sshll.u32 [#allocation2], 4
          %s122 = int_to_ptr.vmem [resolvable:$true] %s121
          %127 = dma.hbm_to_vmem [thread:$0]  %s1, 128, %s122, [#allocation3], 64, 64, 4
        $region16: #{forward.3} parent=11 // pred_fallthru
          _
        // Predicated region
        $region17: #{forward.3} parent=11 // pred_check
          %p128 = pneg %p79
        $region18: #{forward.3} parent=11 // pred_check_branch
          %130 = sbr.rel (%p128) target = $region20
        $region19: #{forward.3} parent=11 // pred_region
          %s132 = ssub.s32 16, 16
          %133 = vsyncadd [#allocation5], %s132
          %s135 = sshll.u32 [#allocation4], 4
          %s136 = int_to_ptr.vmem [resolvable:$true] %s135
          %138 = dma.hbm_to_vmem [thread:$0]  %s2, 16, %s136, [#allocation5]
        $region20: #{forward.3} parent=11 // pred_fallthru
          _
      $region12: #{forward.3} parent=5 // pred_fallthru
        _
      %p139 = scmp.lt.s32.totalorder %s11, 4
      // Predicated region
      $region21: #{forward.3} parent=5 // pred_check
        %p140 = pneg %p139
      $region22: #{forward.3} parent=5 // pred_check_branch
        %142 = sbr.rel (%p140) target = $region24
      $region23: #{forward.3} parent=5 // pred_region
        // Predicated region
        $region25: #{forward.3} parent=23 // pred_check
          %p143 = pneg %p31
        $region26: #{forward.3} parent=23 // pred_check_branch
          %145 = sbr.rel (%p143) target = $region28
        $region27: #{forward.3} parent=23 // pred_region
          %p146 = scmp.lt.s32.totalorder %s11, 3
          %s147 = scalar_select %p146, %s11, 3
          %s148 = smul.addr %s147, 49
          %s149 = smul.addr %s148, 4
          %s150 = scalar_lea.vmem %s0, %s149
        $region28: #{forward.3} parent=23 // pred_fallthru
          _
      $region24: #{forward.3} parent=5 // pred_fallthru
        _
      %p151 = scmp.le.s32.totalorder 1, %s11
      %p152 = scmp.lt.s32.totalorder %s11, 5
      %p153 = pnand %p151, %p152
      %p154 = pneg %p153
      // Predicated region
      $region29: #{forward.3} parent=5 // pred_check
        _
      $region30: #{forward.3} parent=5 // pred_check_branch
        %156 = sbr.rel (%p153) target = $region32
      $region31: #{forward.3} parent=5 // pred_region
        %s157 = ssub.s32 %s11, 1
        // Predicated region
        $region33: #{forward.3} parent=31 // pred_check
          %p158 = pneg %p58
        $region34: #{forward.3} parent=31 // pred_check_branch
          %160 = sbr.rel (%p158) target = $region36
        $region35: #{forward.3} parent=31 // pred_region
          %161 = dma.done [#allocation3], 128
        $region36: #{forward.3} parent=31 // pred_fallthru
          _
        // Predicated region
        $region37: #{forward.3} parent=31 // pred_check
          %p162 = pneg %p79
        $region38: #{forward.3} parent=31 // pred_check_branch
          %164 = sbr.rel (%p162) target = $region40
        $region39: #{forward.3} parent=31 // pred_region
          %165 = dma.done [#allocation5], 16
        $region40: #{forward.3} parent=31 // pred_fallthru
          _
        %p166 = scmp.lt.s32.totalorder %s16, 3
        %s167 = scalar_select %p166, %s16, 3
        %s168 = smul.addr %s167, 49
        %s169 = smul.addr %s168, 4
        %s170 = scalar_lea.vmem %s0, %s169
        %p171 = pneg %p37
        %p172 = pneg %p34
        %p173 = pneg %p58
        %p174 = pneg %p55
        %p175 = pneg %p79
        %p176 = pneg %p76
        %p177 = pneg %p100
        %p178 = pneg %p97
        %p179 = scmp.lt.s32.totalorder %s16, 3
        %s180 = scalar_select %p179, %s16, 3
        %s181 = smul.addr %s180, 49
        %s182 = smul.addr %s181, 4
        %s183 = scalar_lea.vmem %s0, %s182
        %v185 = vld [vmem:[%s183] sm:$0xf]
        %v186 = vld [vmem:[%s183 + $0x4] sm:$0xf]
        %v187 = vld [vmem:[%s183 + $0x8] sm:$0xf]
        %v188 = vld [vmem:[%s183 + $0xc] sm:$0xf]
        %v189 = vld [vmem:[%s183 + $0x10] sm:$0xf]
        %v190 = vld [vmem:[%s183 + $0x14] sm:$0xf]
        %v191 = vld [vmem:[%s183 + $0x18] sm:$0xf]
        %v192 = vld [vmem:[%s183 + $0x1c] sm:$0xf]
        %v193 = vld [vmem:[%s183 + $0x20] sm:$0xf]
        %v194 = vld [vmem:[%s183 + $0x24] sm:$0xf]
        %v195 = vld [vmem:[%s183 + $0x28] sm:$0xf]
        %v196 = vld [vmem:[%s183 + $0x2c] sm:$0xf]
        %v197 = vld [vmem:[%s183 + $0x30] sm:$0xf]
        %v198 = vld [vmem:[%s183 + $0x34] sm:$0xf]
        %v199 = vld [vmem:[%s183 + $0x38] sm:$0xf]
        %v200 = vld [vmem:[%s183 + $0x3c] sm:$0xf]
        %v201 = vld [vmem:[%s183 + $0x40] sm:$0xf]
        %v202 = vld [vmem:[%s183 + $0x44] sm:$0xf]
        %v203 = vld [vmem:[%s183 + $0x48] sm:$0xf]
        %v204 = vld [vmem:[%s183 + $0x4c] sm:$0xf]
        %v205 = vld [vmem:[%s183 + $0x50] sm:$0xf]
        %v206 = vld [vmem:[%s183 + $0x54] sm:$0xf]
        %v207 = vld [vmem:[%s183 + $0x58] sm:$0xf]
        %v208 = vld [vmem:[%s183 + $0x5c] sm:$0xf]
        %v209 = vld [vmem:[%s183 + $0x60] sm:$0xf]
        %v210 = vld [vmem:[%s183 + $0x64] sm:$0xf]
        %v211 = vld [vmem:[%s183 + $0x68] sm:$0xf]
        %v212 = vld [vmem:[%s183 + $0x6c] sm:$0xf]
        %v213 = vld [vmem:[%s183 + $0x70] sm:$0xf]
        %v214 = vld [vmem:[%s183 + $0x74] sm:$0xf]
        %v215 = vld [vmem:[%s183 + $0x78] sm:$0xf]
        %v216 = vld [vmem:[%s183 + $0x7c] sm:$0xf]
        %v217 = vld [vmem:[%s183 + $0x80] sm:$0xf]
        %v218 = vld [vmem:[%s183 + $0x84] sm:$0xf]
        %v219 = vld [vmem:[%s183 + $0x88] sm:$0xf]
        %v220 = vld [vmem:[%s183 + $0x8c] sm:$0xf]
        %v221 = vld [vmem:[%s183 + $0x90] sm:$0xf]
        %v222 = vld [vmem:[%s183 + $0x94] sm:$0xf]
        %v223 = vld [vmem:[%s183 + $0x98] sm:$0xf]
        %v224 = vld [vmem:[%s183 + $0x9c] sm:$0xf]
        %v225 = vld [vmem:[%s183 + $0xa0] sm:$0xf]
        %v226 = vld [vmem:[%s183 + $0xa4] sm:$0xf]
        %v227 = vld [vmem:[%s183 + $0xa8] sm:$0xf]
        %v228 = vld [vmem:[%s183 + $0xac] sm:$0xf]
        %v229 = vld [vmem:[%s183 + $0xb0] sm:$0xf]
        %v230 = vld [vmem:[%s183 + $0xb4] sm:$0xf]
        %v231 = vld [vmem:[%s183 + $0xb8] sm:$0xf]
        %v232 = vld [vmem:[%s183 + $0xbc] sm:$0xf]
        %v233 = vld [vmem:[%s183 + $0xc0] sm:$0xf]
        %v234 = vld [vmem:[#allocation2] sm:$0xf]
        %v235 = vld [vmem:[#allocation2 + $0x4] sm:$0xf]
        %v236 = vld [vmem:[#allocation4] sm:$0x1]
        %v238 = vlaneseq
        %v239 = vshrl.u32 %v238, 7
        %v240 = vsub.s32 0, %v239
        %v241 = vrot.slane %v236, %v240
        %v292 = vunpack.c.l.b16 %v185
        %v293 = vunpack.c.l.b16 %v186
        %v294 = vunpack.c.l.b16 %v187
        %v295 = vunpack.c.l.b16 %v188
        %v296 = vunpack.c.l.b16 %v189
        %v297 = vunpack.c.l.b16 %v190
        %v298 = vunpack.c.l.b16 %v191
        %v299 = vunpack.c.l.b16 %v192
        %v300 = vunpack.c.l.b16 %v193
        %v301 = vunpack.c.l.b16 %v194
        %v302 = vunpack.c.l.b16 %v195
        %v303 = vunpack.c.l.b16 %v196
        %v304 = vunpack.c.l.b16 %v197
        %v305 = vunpack.c.l.b16 %v198
        %v306 = vunpack.c.l.b16 %v199
        %v307 = vunpack.c.l.b16 %v200
        %v308 = vunpack.c.l.b16 %v201
        %v309 = vunpack.c.l.b16 %v202
        %v310 = vunpack.c.l.b16 %v203
        %v311 = vunpack.c.l.b16 %v204
        %v312 = vunpack.c.l.b16 %v205
        %v313 = vunpack.c.l.b16 %v206
        %v314 = vunpack.c.l.b16 %v207
        %v315 = vunpack.c.l.b16 %v208
        %v316 = vunpack.c.l.b16 %v209
        %v317 = vunpack.c.l.b16 %v210
        %v318 = vunpack.c.l.b16 %v211
        %v319 = vunpack.c.l.b16 %v212
        %v320 = vunpack.c.l.b16 %v213
        %v321 = vunpack.c.l.b16 %v214
        %v322 = vunpack.c.l.b16 %v215
        %v323 = vunpack.c.l.b16 %v216
        %v324 = vunpack.c.l.b16 %v217
        %v325 = vunpack.c.l.b16 %v218
        %v326 = vunpack.c.l.b16 %v219
        %v327 = vunpack.c.l.b16 %v220
        %v328 = vunpack.c.l.b16 %v221
        %v329 = vunpack.c.l.b16 %v222
        %v330 = vunpack.c.l.b16 %v223
        %v331 = vunpack.c.l.b16 %v224
        %v332 = vunpack.c.l.b16 %v225
        %v333 = vunpack.c.l.b16 %v226
        %v334 = vunpack.c.l.b16 %v227
        %v335 = vunpack.c.l.b16 %v228
        %v336 = vunpack.c.l.b16 %v229
        %v337 = vunpack.c.l.b16 %v230
        %v338 = vunpack.c.l.b16 %v231
        %v339 = vunpack.c.l.b16 %v232
        %v340 = vunpack.c.l.b16 %v233
        %v341 = vpack.c.b16 %v293, %v292
        %v342 = vpack.c.b16 %v295, %v294
        %v343 = vpack.c.b16 %v297, %v296
        %v344 = vpack.c.b16 %v299, %v298
        %v345 = vpack.c.b16 %v301, %v300
        %v346 = vpack.c.b16 %v303, %v302
        %v347 = vpack.c.b16 %v305, %v304
        %v348 = vpack.c.b16 %v307, %v306
        %v349 = vpack.c.b16 %v309, %v308
        %v350 = vpack.c.b16 %v311, %v310
        %v351 = vpack.c.b16 %v313, %v312
        %v352 = vpack.c.b16 %v315, %v314
        %v353 = vpack.c.b16 %v317, %v316
        %v354 = vpack.c.b16 %v319, %v318
        %v355 = vpack.c.b16 %v321, %v320
        %v356 = vpack.c.b16 %v323, %v322
        %v357 = vpack.c.b16 %v325, %v324
        %v358 = vpack.c.b16 %v327, %v326
        %v359 = vpack.c.b16 %v329, %v328
        %v360 = vpack.c.b16 %v331, %v330
        %v361 = vpack.c.b16 %v333, %v332
        %v362 = vpack.c.b16 %v335, %v334
        %v363 = vpack.c.b16 %v337, %v336
        %v364 = vpack.c.b16 %v339, %v338
        %v365 = vpack.c.b16 %v340, %v340
        %v368 = vunpack.c.l.b16 %v234
        %v369 = vunpack.c.l.b16 %v235
        %v370 = vpack.c.b16 %v369, %v368
        %vm372 = vcmask 130048
        %v374 = vsel %vm372, %v341, 0
        %v377 = vsel %vm372, %v342, 0
        %v380 = vsel %vm372, %v343, 0
        %v383 = vsel %vm372, %v344, 0
        %v386 = vsel %vm372, %v345, 0
        %v389 = vsel %vm372, %v346, 0
        %v392 = vsel %vm372, %v347, 0
        %v395 = vsel %vm372, %v348, 0
        %v398 = vsel %vm372, %v349, 0
        %v401 = vsel %vm372, %v350, 0
        %v404 = vsel %vm372, %v351, 0
        %v407 = vsel %vm372, %v352, 0
        %v410 = vsel %vm372, %v353, 0
        %v413 = vsel %vm372, %v354, 0
        %v416 = vsel %vm372, %v355, 0
        %v419 = vsel %vm372, %v356, 0
        %v422 = vsel %vm372, %v357, 0
        %v425 = vsel %vm372, %v358, 0
        %v428 = vsel %vm372, %v359, 0
        %v431 = vsel %vm372, %v360, 0
        %v434 = vsel %vm372, %v361, 0
        %v437 = vsel %vm372, %v362, 0
        %v440 = vsel %vm372, %v363, 0
        %v443 = vsel %vm372, %v364, 0
        %v446 = vsel %vm372, %v365, 0
        %448 = vmatprep.subr.bf16.mxu0 0
        %449 = vmatpush1.bf16.msra.mxu0 %v370
        %450 = vmatprep.subr.bf16.mxu0 0
        %451 = vmatpush1.bf16.msra.mxu0 0
        %452 = vmatprep.subr.bf16.mxu0 0
        %453 = vmatpush1.bf16.msra.mxu0 0
        %454 = vmatprep.subr.bf16.mxu0 0
        %455 = vmatpush1.bf16.msra.mxu0 0
        %456 = vmatprep.subr.bf16.mxu0 0
        %457 = vmatpush1.bf16.msra.mxu0 0
        %458 = vmatprep.subr.bf16.mxu0 0
        %459 = vmatpush1.bf16.msra.mxu0 0
        %460 = vmatprep.subr.bf16.mxu0 0
        %461 = vmatpush1.bf16.msra.mxu0 0
        %462 = vmatprep.subr.bf16.mxu0 0
        %463 = vmatpush1.bf16.msra.mxu0 0
        %464 = vmatprep.subr.bf16.mxu0 0
        %465 = vmatpush1.bf16.msra.mxu0 0
        %466 = vmatprep.subr.bf16.mxu0 0
        %467 = vmatpush1.bf16.msra.mxu0 0
        %468 = vmatprep.subr.bf16.mxu0 0
        %469 = vmatpush1.bf16.msra.mxu0 0
        %470 = vmatprep.subr.bf16.mxu0 0
        %471 = vmatpush1.bf16.msra.mxu0 0
        %472 = vmatprep.subr.bf16.mxu0 0
        %473 = vmatpush1.bf16.msra.mxu0 0
        %474 = vmatprep.subr.bf16.mxu0 0
        %475 = vmatpush1.bf16.msra.mxu0 0
        %476 = vmatprep.subr.bf16.mxu0 0
        %477 = vmatpush1.bf16.msra.mxu0 0
        %478 = vmatprep.subr.bf16.mxu0 0
        %479 = vmatpush1.bf16.msra.mxu0 0
        %480 = vmatprep.mubr.bf16.mxu0 0
        %481 = vmatmul.mubr.bf16.gmra.mrb[0].mxu0 %v374
        %v482 = vpop.f32.mrb[0].mxu0
        %v483 = vadd.f32 %v241, %v482
        %v484 = vpop.f32.mrb[0].mxu0
        %v485 = vpop.f32.mrb[0].mxu0
        %v486 = vadd.f32 %v241, %v485
        %v487 = vpop.f32.mrb[0].mxu0
        %488 = vmatprep.mubr.bf16.mxu0 0
        %489 = vmatmul.mubr.bf16.gmra.mrb[0].mxu0 %v377
        %v490 = vpop.f32.mrb[0].mxu0
        %v491 = vadd.f32 %v241, %v490
        %v492 = vpop.f32.mrb[0].mxu0
        %v493 = vpop.f32.mrb[0].mxu0
        %v494 = vadd.f32 %v241, %v493
        %v495 = vpop.f32.mrb[0].mxu0
        %496 = vmatprep.mubr.bf16.mxu0 0
        %497 = vmatmul.mubr.bf16.gmra.mrb[0].mxu0 %v380
        %v498 = vpop.f32.mrb[0].mxu0
        %v499 = vadd.f32 %v241, %v498
        %v500 = vpop.f32.mrb[0].mxu0
        %v501 = vpop.f32.mrb[0].mxu0
        %v502 = vadd.f32 %v241, %v501
        %v503 = vpop.f32.mrb[0].mxu0
        %504 = vmatprep.mubr.bf16.mxu0 0
        %505 = vmatmul.mubr.bf16.gmra.mrb[0].mxu0 %v383
        %v506 = vpop.f32.mrb[0].mxu0
        %v507 = vadd.f32 %v241, %v506
        %v508 = vpop.f32.mrb[0].mxu0
        %v509 = vpop.f32.mrb[0].mxu0
        %v510 = vadd.f32 %v241, %v509
        %v511 = vpop.f32.mrb[0].mxu0
        %512 = vmatprep.mubr.bf16.mxu0 0
        %513 = vmatmul.mubr.bf16.gmra.mrb[0].mxu0 %v386
        %v514 = vpop.f32.mrb[0].mxu0
        %v515 = vadd.f32 %v241, %v514
        %v516 = vpop.f32.mrb[0].mxu0
        %v517 = vpop.f32.mrb[0].mxu0
        %v518 = vadd.f32 %v241, %v517
        %v519 = vpop.f32.mrb[0].mxu0
        %520 = vmatprep.mubr.bf16.mxu0 0
        %521 = vmatmul.mubr.bf16.gmra.mrb[0].mxu0 %v389
        %v522 = vpop.f32.mrb[0].mxu0
        %v523 = vadd.f32 %v241, %v522
        %v524 = vpop.f32.mrb[0].mxu0
        %v525 = vpop.f32.mrb[0].mxu0
        %v526 = vadd.f32 %v241, %v525
        %v527 = vpop.f32.mrb[0].mxu0
        %528 = vmatprep.mubr.bf16.mxu0 0
        %529 = vmatmul.mubr.bf16.gmra.mrb[0].mxu0 %v392
        %v530 = vpop.f32.mrb[0].mxu0
        %v531 = vadd.f32 %v241, %v530
        %v532 = vpop.f32.mrb[0].mxu0
        %v533 = vpop.f32.mrb[0].mxu0
        %v534 = vadd.f32 %v241, %v533
        %v535 = vpop.f32.mrb[0].mxu0
        %536 = vmatprep.mubr.bf16.mxu0 0
        %537 = vmatmul.mubr.bf16.gmra.mrb[0].mxu0 %v395
        %v538 = vpop.f32.mrb[0].mxu0
        %v539 = vadd.f32 %v241, %v538
        %v540 = vpop.f32.mrb[0].mxu0
        %v541 = vpop.f32.mrb[0].mxu0
        %v542 = vadd.f32 %v241, %v541
        %v543 = vpop.f32.mrb[0].mxu0
        %544 = vmatprep.mubr.bf16.mxu0 0
        %545 = vmatmul.mubr.bf16.gmra.mrb[0].mxu0 %v398
        %v546 = vpop.f32.mrb[0].mxu0
        %v547 = vadd.f32 %v241, %v546
        %v548 = vpop.f32.mrb[0].mxu0
        %v549 = vpop.f32.mrb[0].mxu0
        %v550 = vadd.f32 %v241, %v549
        %v551 = vpop.f32.mrb[0].mxu0
        %552 = vmatprep.mubr.bf16.mxu0 0
        %553 = vmatmul.mubr.bf16.gmra.mrb[0].mxu0 %v401
        %v554 = vpop.f32.mrb[0].mxu0
        %v555 = vadd.f32 %v241, %v554
        %v556 = vpop.f32.mrb[0].mxu0
        %v557 = vpop.f32.mrb[0].mxu0
        %v558 = vadd.f32 %v241, %v557
        %v559 = vpop.f32.mrb[0].mxu0
        %560 = vmatprep.mubr.bf16.mxu0 0
        %561 = vmatmul.mubr.bf16.gmra.mrb[0].mxu0 %v404
        %v562 = vpop.f32.mrb[0].mxu0
        %v563 = vadd.f32 %v241, %v562
        %v564 = vpop.f32.mrb[0].mxu0
        %v565 = vpop.f32.mrb[0].mxu0
        %v566 = vadd.f32 %v241, %v565
        %v567 = vpop.f32.mrb[0].mxu0
        %568 = vmatprep.mubr.bf16.mxu0 0
        %569 = vmatmul.mubr.bf16.gmra.mrb[0].mxu0 %v407
        %v570 = vpop.f32.mrb[0].mxu0
        %v571 = vadd.f32 %v241, %v570
        %v572 = vpop.f32.mrb[0].mxu0
        %v573 = vpop.f32.mrb[0].mxu0
        %v574 = vadd.f32 %v241, %v573
        %v575 = vpop.f32.mrb[0].mxu0
        %576 = vmatprep.mubr.bf16.mxu0 0
        %577 = vmatmul.mubr.bf16.gmra.mrb[0].mxu0 %v410
        %v578 = vpop.f32.mrb[0].mxu0
        %v579 = vadd.f32 %v241, %v578
        %v580 = vpop.f32.mrb[0].mxu0
        %v581 = vpop.f32.mrb[0].mxu0
        %v582 = vadd.f32 %v241, %v581
        %v583 = vpop.f32.mrb[0].mxu0
        %584 = vmatprep.mubr.bf16.mxu0 0
        %585 = vmatmul.mubr.bf16.gmra.mrb[0].mxu0 %v413
        %v586 = vpop.f32.mrb[0].mxu0
        %v587 = vadd.f32 %v241, %v586
        %v588 = vpop.f32.mrb[0].mxu0
        %v589 = vpop.f32.mrb[0].mxu0
        %v590 = vadd.f32 %v241, %v589
        %v591 = vpop.f32.mrb[0].mxu0
        %592 = vmatprep.mubr.bf16.mxu0 0
        %593 = vmatmul.mubr.bf16.gmra.mrb[0].mxu0 %v416
        %v594 = vpop.f32.mrb[0].mxu0
        %v595 = vadd.f32 %v241, %v594
        %v596 = vpop.f32.mrb[0].mxu0
        %v597 = vpop.f32.mrb[0].mxu0
        %v598 = vadd.f32 %v241, %v597
        %v599 = vpop.f32.mrb[0].mxu0
        %600 = vmatprep.mubr.bf16.mxu0 0
        %601 = vmatmul.mubr.bf16.gmra.mrb[0].mxu0 %v419
        %v602 = vpop.f32.mrb[0].mxu0
        %v603 = vadd.f32 %v241, %v602
        %v604 = vpop.f32.mrb[0].mxu0
        %v605 = vpop.f32.mrb[0].mxu0
        %v606 = vadd.f32 %v241, %v605
        %v607 = vpop.f32.mrb[0].mxu0
        %608 = vmatprep.mubr.bf16.mxu0 0
        %609 = vmatmul.mubr.bf16.gmra.mrb[0].mxu0 %v422
        %v610 = vpop.f32.mrb[0].mxu0
        %v611 = vadd.f32 %v241, %v610
        %v612 = vpop.f32.mrb[0].mxu0
        %v613 = vpop.f32.mrb[0].mxu0
        %v614 = vadd.f32 %v241, %v613
        %v615 = vpop.f32.mrb[0].mxu0
        %616 = vmatprep.mubr.bf16.mxu0 0
        %617 = vmatmul.mubr.bf16.gmra.mrb[0].mxu0 %v425
        %v618 = vpop.f32.mrb[0].mxu0
        %v619 = vadd.f32 %v241, %v618
        %v620 = vpop.f32.mrb[0].mxu0
        %v621 = vpop.f32.mrb[0].mxu0
        %v622 = vadd.f32 %v241, %v621
        %v623 = vpop.f32.mrb[0].mxu0
        %624 = vmatprep.mubr.bf16.mxu0 0
        %625 = vmatmul.mubr.bf16.gmra.mrb[0].mxu0 %v428
        %v626 = vpop.f32.mrb[0].mxu0
        %v627 = vadd.f32 %v241, %v626
        %v628 = vpop.f32.mrb[0].mxu0
        %v629 = vpop.f32.mrb[0].mxu0
        %v630 = vadd.f32 %v241, %v629
        %v631 = vpop.f32.mrb[0].mxu0
        %632 = vmatprep.mubr.bf16.mxu0 0
        %633 = vmatmul.mubr.bf16.gmra.mrb[0].mxu0 %v431
        %v634 = vpop.f32.mrb[0].mxu0
        %v635 = vadd.f32 %v241, %v634
        %v636 = vpop.f32.mrb[0].mxu0
        %v637 = vpop.f32.mrb[0].mxu0
        %v638 = vadd.f32 %v241, %v637
        %v639 = vpop.f32.mrb[0].mxu0
        %640 = vmatprep.mubr.bf16.mxu0 0
        %641 = vmatmul.mubr.bf16.gmra.mrb[0].mxu0 %v434
        %v642 = vpop.f32.mrb[0].mxu0
        %v643 = vadd.f32 %v241, %v642
        %v644 = vpop.f32.mrb[0].mxu0
        %v645 = vpop.f32.mrb[0].mxu0
        %v646 = vadd.f32 %v241, %v645
        %v647 = vpop.f32.mrb[0].mxu0
        %648 = vmatprep.mubr.bf16.mxu0 0
        %649 = vmatmul.mubr.bf16.gmra.mrb[0].mxu0 %v437
        %v650 = vpop.f32.mrb[0].mxu0
        %v651 = vadd.f32 %v241, %v650
        %v652 = vpop.f32.mrb[0].mxu0
        %v653 = vpop.f32.mrb[0].mxu0
        %v654 = vadd.f32 %v241, %v653
        %v655 = vpop.f32.mrb[0].mxu0
        %656 = vmatprep.mubr.bf16.mxu0 0
        %657 = vmatmul.mubr.bf16.gmra.mrb[0].mxu0 %v440
        %v658 = vpop.f32.mrb[0].mxu0
        %v659 = vadd.f32 %v241, %v658
        %v660 = vpop.f32.mrb[0].mxu0
        %v661 = vpop.f32.mrb[0].mxu0
        %v662 = vadd.f32 %v241, %v661
        %v663 = vpop.f32.mrb[0].mxu0
        %664 = vmatprep.mubr.bf16.mxu0 0
        %665 = vmatmul.mubr.bf16.gmra.mrb[0].mxu0 %v443
        %v666 = vpop.f32.mrb[0].mxu0
        %v667 = vadd.f32 %v241, %v666
        %v668 = vpop.f32.mrb[0].mxu0
        %v669 = vpop.f32.mrb[0].mxu0
        %v670 = vadd.f32 %v241, %v669
        %v671 = vpop.f32.mrb[0].mxu0
        %672 = vmatprep.mubr.bf16.mxu0 0
        %673 = vmatmul.mubr.bf16.gmra.mrb[0].mxu0 %v446
        %v674 = vpop.f32.mrb[0].mxu0
        %v675 = vadd.f32 %v241, %v674
        %v676 = vpop.f32.mrb[0].mxu0
        %v677 = vpop.f32.mrb[0].mxu0
        %v678 = vpop.f32.mrb[0].mxu0
        %679 = vdwg.mxu0
        %v680 = vmax.f32 %v483, 0.0
        %v681 = vmax.f32 %v486, 0.0
        %v682 = vmax.f32 %v491, 0.0
        %v683 = vmax.f32 %v494, 0.0
        %v684 = vmax.f32 %v499, 0.0
        %v685 = vmax.f32 %v502, 0.0
        %v686 = vmax.f32 %v507, 0.0
        %v687 = vmax.f32 %v510, 0.0
        %v688 = vmax.f32 %v515, 0.0
        %v689 = vmax.f32 %v518, 0.0
        %v690 = vmax.f32 %v523, 0.0
        %v691 = vmax.f32 %v526, 0.0
        %v692 = vmax.f32 %v531, 0.0
        %v693 = vmax.f32 %v534, 0.0
        %v694 = vmax.f32 %v539, 0.0
        %v695 = vmax.f32 %v542, 0.0
        %v696 = vmax.f32 %v547, 0.0
        %v697 = vmax.f32 %v550, 0.0
        %v698 = vmax.f32 %v555, 0.0
        %v699 = vmax.f32 %v558, 0.0
        %v700 = vmax.f32 %v563, 0.0
        %v701 = vmax.f32 %v566, 0.0
        %v702 = vmax.f32 %v571, 0.0
        %v703 = vmax.f32 %v574, 0.0
        %v704 = vmax.f32 %v579, 0.0
        %v705 = vmax.f32 %v582, 0.0
        %v706 = vmax.f32 %v587, 0.0
        %v707 = vmax.f32 %v590, 0.0
        %v708 = vmax.f32 %v595, 0.0
        %v709 = vmax.f32 %v598, 0.0
        %v710 = vmax.f32 %v603, 0.0
        %v711 = vmax.f32 %v606, 0.0
        %v712 = vmax.f32 %v611, 0.0
        %v713 = vmax.f32 %v614, 0.0
        %v714 = vmax.f32 %v619, 0.0
        %v715 = vmax.f32 %v622, 0.0
        %v716 = vmax.f32 %v627, 0.0
        %v717 = vmax.f32 %v630, 0.0
        %v718 = vmax.f32 %v635, 0.0
        %v719 = vmax.f32 %v638, 0.0
        %v720 = vmax.f32 %v643, 0.0
        %v721 = vmax.f32 %v646, 0.0
        %v722 = vmax.f32 %v651, 0.0
        %v723 = vmax.f32 %v654, 0.0
        %v724 = vmax.f32 %v659, 0.0
        %v725 = vmax.f32 %v662, 0.0
        %v726 = vmax.f32 %v667, 0.0
        %v727 = vmax.f32 %v670, 0.0
        %v728 = vmax.f32 %v675, 0.0
        %v729 = vpack.c.bf16 %v681, %v680
        %v730 = vpack.c.bf16 %v683, %v682
        %v731 = vpack.c.bf16 %v685, %v684
        %v732 = vpack.c.bf16 %v687, %v686
        %v733 = vpack.c.bf16 %v689, %v688
        %v734 = vpack.c.bf16 %v691, %v690
        %v735 = vpack.c.bf16 %v693, %v692
        %v736 = vpack.c.bf16 %v695, %v694
        %v737 = vpack.c.bf16 %v697, %v696
        %v738 = vpack.c.bf16 %v699, %v698
        %v739 = vpack.c.bf16 %v701, %v700
        %v740 = vpack.c.bf16 %v703, %v702
        %v741 = vpack.c.bf16 %v705, %v704
        %v742 = vpack.c.bf16 %v707, %v706
        %v743 = vpack.c.bf16 %v709, %v708
        %v744 = vpack.c.bf16 %v711, %v710
        %v745 = vpack.c.bf16 %v713, %v712
        %v746 = vpack.c.bf16 %v715, %v714
        %v747 = vpack.c.bf16 %v717, %v716
        %v748 = vpack.c.bf16 %v719, %v718
        %v749 = vpack.c.bf16 %v721, %v720
        %v750 = vpack.c.bf16 %v723, %v722
        %v751 = vpack.c.bf16 %v725, %v724
        %v752 = vpack.c.bf16 %v727, %v726
        %v753 = vpack.c.bf16 %v728, %v728
        %p754 = scmp.eq.s32.totalorder %s16, 0
        // Predicated region
        $region41: #{forward.3} parent=31 // pred_check
          %p755 = pneg %p754
        $region42: #{forward.3} parent=31 // pred_check_branch
          %757 = sbr.rel (%p755) target = $region44
        $region43: #{forward.3} parent=31 // pred_region
          %v783 = vunpack.c.l.b16 %v729
          %v784 = vunpack.c.h.b16 %v729
          %v785 = vunpack.c.l.b16 %v730
          %v786 = vunpack.c.h.b16 %v730
          %v787 = vunpack.c.l.b16 %v731
          %v788 = vunpack.c.h.b16 %v731
          %v789 = vunpack.c.l.b16 %v732
          %v790 = vunpack.c.h.b16 %v732
          %v791 = vunpack.c.l.b16 %v733
          %v792 = vunpack.c.h.b16 %v733
          %v793 = vunpack.c.l.b16 %v734
          %v794 = vunpack.c.h.b16 %v734
          %v795 = vunpack.c.l.b16 %v735
          %v796 = vunpack.c.h.b16 %v735
          %v797 = vunpack.c.l.b16 %v736
          %v798 = vunpack.c.h.b16 %v736
          %v799 = vunpack.c.l.b16 %v737
          %v800 = vunpack.c.h.b16 %v737
          %v801 = vunpack.c.l.b16 %v738
          %v802 = vunpack.c.h.b16 %v738
          %v803 = vunpack.c.l.b16 %v739
          %v804 = vunpack.c.h.b16 %v739
          %v805 = vunpack.c.l.b16 %v740
          %v806 = vunpack.c.h.b16 %v740
          %v807 = vunpack.c.l.b16 %v741
          %v808 = vunpack.c.h.b16 %v741
          %v809 = vunpack.c.l.b16 %v742
          %v810 = vunpack.c.h.b16 %v742
          %v811 = vunpack.c.l.b16 %v743
          %v812 = vunpack.c.h.b16 %v743
          %v813 = vunpack.c.l.b16 %v744
          %v814 = vunpack.c.h.b16 %v744
          %v815 = vunpack.c.l.b16 %v745
          %v816 = vunpack.c.h.b16 %v745
          %v817 = vunpack.c.l.b16 %v746
          %v818 = vunpack.c.h.b16 %v746
          %v819 = vunpack.c.l.b16 %v747
          %v820 = vunpack.c.h.b16 %v747
          %v821 = vunpack.c.l.b16 %v748
          %v822 = vunpack.c.h.b16 %v748
          %v823 = vunpack.c.l.b16 %v749
          %v824 = vunpack.c.h.b16 %v749
          %v825 = vunpack.c.l.b16 %v750
          %v826 = vunpack.c.h.b16 %v750
          %v827 = vunpack.c.l.b16 %v751
          %v828 = vunpack.c.h.b16 %v751
          %v829 = vunpack.c.l.b16 %v752
          %v830 = vunpack.c.h.b16 %v752
          %v831 = vunpack.c.l.b16 %v753
          %v832 = vpack.c.b16 %v783, %v783
          %v833 = vpack.c.b16 %v784, %v784
          %v834 = vpack.c.b16 %v785, %v785
          %v835 = vpack.c.b16 %v786, %v786
          %v836 = vpack.c.b16 %v787, %v787
          %v837 = vpack.c.b16 %v788, %v788
          %v838 = vpack.c.b16 %v789, %v789
          %v839 = vpack.c.b16 %v790, %v790
          %v840 = vpack.c.b16 %v791, %v791
          %v841 = vpack.c.b16 %v792, %v792
          %v842 = vpack.c.b16 %v793, %v793
          %v843 = vpack.c.b16 %v794, %v794
          %v844 = vpack.c.b16 %v795, %v795
          %v845 = vpack.c.b16 %v796, %v796
          %v846 = vpack.c.b16 %v797, %v797
          %v847 = vpack.c.b16 %v798, %v798
          %v848 = vpack.c.b16 %v799, %v799
          %v849 = vpack.c.b16 %v800, %v800
          %v850 = vpack.c.b16 %v801, %v801
          %v851 = vpack.c.b16 %v802, %v802
          %v852 = vpack.c.b16 %v803, %v803
          %v853 = vpack.c.b16 %v804, %v804
          %v854 = vpack.c.b16 %v805, %v805
          %v855 = vpack.c.b16 %v806, %v806
          %v856 = vpack.c.b16 %v807, %v807
          %v857 = vpack.c.b16 %v808, %v808
          %v858 = vpack.c.b16 %v809, %v809
          %v859 = vpack.c.b16 %v810, %v810
          %v860 = vpack.c.b16 %v811, %v811
          %v861 = vpack.c.b16 %v812, %v812
          %v862 = vpack.c.b16 %v813, %v813
          %v863 = vpack.c.b16 %v814, %v814
          %v864 = vpack.c.b16 %v815, %v815
          %v865 = vpack.c.b16 %v816, %v816
          %v866 = vpack.c.b16 %v817, %v817
          %v867 = vpack.c.b16 %v818, %v818
          %v868 = vpack.c.b16 %v819, %v819
          %v869 = vpack.c.b16 %v820, %v820
          %v870 = vpack.c.b16 %v821, %v821
          %v871 = vpack.c.b16 %v822, %v822
          %v872 = vpack.c.b16 %v823, %v823
          %v873 = vpack.c.b16 %v824, %v824
          %v874 = vpack.c.b16 %v825, %v825
          %v875 = vpack.c.b16 %v826, %v826
          %v876 = vpack.c.b16 %v827, %v827
          %v877 = vpack.c.b16 %v828, %v828
          %v878 = vpack.c.b16 %v829, %v829
          %v879 = vpack.c.b16 %v830, %v830
          %v880 = vpack.c.b16 %v831, %v831
          %930 = vst [vmem:[%s3] sm:$0xf] %v832
          %931 = vst [vmem:[%s3 + $0x4] sm:$0xf] %v833
          %932 = vst [vmem:[%s3 + $0x8] sm:$0xf] %v834
          %933 = vst [vmem:[%s3 + $0xc] sm:$0xf] %v835
          %934 = vst [vmem:[%s3 + $0x10] sm:$0xf] %v836
          %935 = vst [vmem:[%s3 + $0x14] sm:$0xf] %v837
          %936 = vst [vmem:[%s3 + $0x18] sm:$0xf] %v838
          %937 = vst [vmem:[%s3 + $0x1c] sm:$0xf] %v839
          %938 = vst [vmem:[%s3 + $0x20] sm:$0xf] %v840
          %939 = vst [vmem:[%s3 + $0x24] sm:$0xf] %v841
          %940 = vst [vmem:[%s3 + $0x28] sm:$0xf] %v842
          %941 = vst [vmem:[%s3 + $0x2c] sm:$0xf] %v843
          %942 = vst [vmem:[%s3 + $0x30] sm:$0xf] %v844
          %943 = vst [vmem:[%s3 + $0x34] sm:$0xf] %v845
          %944 = vst [vmem:[%s3 + $0x38] sm:$0xf] %v846
          %945 = vst [vmem:[%s3 + $0x3c] sm:$0xf] %v847
          %946 = vst [vmem:[%s3 + $0x40] sm:$0xf] %v848
          %947 = vst [vmem:[%s3 + $0x44] sm:$0xf] %v849
          %948 = vst [vmem:[%s3 + $0x48] sm:$0xf] %v850
          %949 = vst [vmem:[%s3 + $0x4c] sm:$0xf] %v851
          %950 = vst [vmem:[%s3 + $0x50] sm:$0xf] %v852
          %951 = vst [vmem:[%s3 + $0x54] sm:$0xf] %v853
          %952 = vst [vmem:[%s3 + $0x58] sm:$0xf] %v854
          %953 = vst [vmem:[%s3 + $0x5c] sm:$0xf] %v855
          %954 = vst [vmem:[%s3 + $0x60] sm:$0xf] %v856
          %955 = vst [vmem:[%s3 + $0x64] sm:$0xf] %v857
          %956 = vst [vmem:[%s3 + $0x68] sm:$0xf] %v858
          %957 = vst [vmem:[%s3 + $0x6c] sm:$0xf] %v859
          %958 = vst [vmem:[%s3 + $0x70] sm:$0xf] %v860
          %959 = vst [vmem:[%s3 + $0x74] sm:$0xf] %v861
          %960 = vst [vmem:[%s3 + $0x78] sm:$0xf] %v862
          %961 = vst [vmem:[%s3 + $0x7c] sm:$0xf] %v863
          %962 = vst [vmem:[%s3 + $0x80] sm:$0xf] %v864
          %963 = vst [vmem:[%s3 + $0x84] sm:$0xf] %v865
          %964 = vst [vmem:[%s3 + $0x88] sm:$0xf] %v866
          %965 = vst [vmem:[%s3 + $0x8c] sm:$0xf] %v867
          %966 = vst [vmem:[%s3 + $0x90] sm:$0xf] %v868
          %967 = vst [vmem:[%s3 + $0x94] sm:$0xf] %v869
          %968 = vst [vmem:[%s3 + $0x98] sm:$0xf] %v870
          %969 = vst [vmem:[%s3 + $0x9c] sm:$0xf] %v871
          %970 = vst [vmem:[%s3 + $0xa0] sm:$0xf] %v872
          %971 = vst [vmem:[%s3 + $0xa4] sm:$0xf] %v873
          %972 = vst [vmem:[%s3 + $0xa8] sm:$0xf] %v874
          %973 = vst [vmem:[%s3 + $0xac] sm:$0xf] %v875
          %974 = vst [vmem:[%s3 + $0xb0] sm:$0xf] %v876
          %975 = vst [vmem:[%s3 + $0xb4] sm:$0xf] %v877
          %976 = vst [vmem:[%s3 + $0xb8] sm:$0xf] %v878
          %977 = vst [vmem:[%s3 + $0xbc] sm:$0xf] %v879
          %978 = vst [vmem:[%s3 + $0xc0] sm:$0xf] %v880
        $region44: #{forward.3} parent=31 // pred_fallthru
          _
        %p979 = scmp.ne.s32.totalorder %s16, 0
        // Predicated region
        $region45: #{forward.3} parent=31 // pred_check
          %p980 = pneg %p979
        $region46: #{forward.3} parent=31 // pred_check_branch
          %982 = sbr.rel (%p980) target = $region48
        $region47: #{forward.3} parent=31 // pred_region
          %v983 = vld [vmem:[%s3] sm:$0xf]
          %v984 = vld [vmem:[%s3 + $0x4] sm:$0xf]
          %v985 = vld [vmem:[%s3 + $0x8] sm:$0xf]
          %v986 = vld [vmem:[%s3 + $0xc] sm:$0xf]
          %v987 = vld [vmem:[%s3 + $0x10] sm:$0xf]
          %v988 = vld [vmem:[%s3 + $0x14] sm:$0xf]
          %v989 = vld [vmem:[%s3 + $0x18] sm:$0xf]
          %v990 = vld [vmem:[%s3 + $0x1c] sm:$0xf]
          %v991 = vld [vmem:[%s3 + $0x20] sm:$0xf]
          %v992 = vld [vmem:[%s3 + $0x24] sm:$0xf]
          %v993 = vld [vmem:[%s3 + $0x28] sm:$0xf]
          %v994 = vld [vmem:[%s3 + $0x2c] sm:$0xf]
          %v995 = vld [vmem:[%s3 + $0x30] sm:$0xf]
          %v996 = vld [vmem:[%s3 + $0x34] sm:$0xf]
          %v997 = vld [vmem:[%s3 + $0x38] sm:$0xf]
          %v998 = vld [vmem:[%s3 + $0x3c] sm:$0xf]
          %v999 = vld [vmem:[%s3 + $0x40] sm:$0xf]
          %v1000 = vld [vmem:[%s3 + $0x44] sm:$0xf]
          %v1001 = vld [vmem:[%s3 + $0x48] sm:$0xf]
          %v1002 = vld [vmem:[%s3 + $0x4c] sm:$0xf]
          %v1003 = vld [vmem:[%s3 + $0x50] sm:$0xf]
          %v1004 = vld [vmem:[%s3 + $0x54] sm:$0xf]
          %v1005 = vld [vmem:[%s3 + $0x58] sm:$0xf]
          %v1006 = vld [vmem:[%s3 + $0x5c] sm:$0xf]
          %v1007 = vld [vmem:[%s3 + $0x60] sm:$0xf]
          %v1008 = vld [vmem:[%s3 + $0x64] sm:$0xf]
          %v1009 = vld [vmem:[%s3 + $0x68] sm:$0xf]
          %v1010 = vld [vmem:[%s3 + $0x6c] sm:$0xf]
          %v1011 = vld [vmem:[%s3 + $0x70] sm:$0xf]
          %v1012 = vld [vmem:[%s3 + $0x74] sm:$0xf]
          %v1013 = vld [vmem:[%s3 + $0x78] sm:$0xf]
          %v1014 = vld [vmem:[%s3 + $0x7c] sm:$0xf]
          %v1015 = vld [vmem:[%s3 + $0x80] sm:$0xf]
          %v1016 = vld [vmem:[%s3 + $0x84] sm:$0xf]
          %v1017 = vld [vmem:[%s3 + $0x88] sm:$0xf]
          %v1018 = vld [vmem:[%s3 + $0x8c] sm:$0xf]
          %v1019 = vld [vmem:[%s3 + $0x90] sm:$0xf]
          %v1020 = vld [vmem:[%s3 + $0x94] sm:$0xf]
          %v1021 = vld [vmem:[%s3 + $0x98] sm:$0xf]
          %v1022 = vld [vmem:[%s3 + $0x9c] sm:$0xf]
          %v1023 = vld [vmem:[%s3 + $0xa0] sm:$0xf]
          %v1024 = vld [vmem:[%s3 + $0xa4] sm:$0xf]
          %v1025 = vld [vmem:[%s3 + $0xa8] sm:$0xf]
          %v1026 = vld [vmem:[%s3 + $0xac] sm:$0xf]
          %v1027 = vld [vmem:[%s3 + $0xb0] sm:$0xf]
          %v1028 = vld [vmem:[%s3 + $0xb4] sm:$0xf]
          %v1029 = vld [vmem:[%s3 + $0xb8] sm:$0xf]
          %v1030 = vld [vmem:[%s3 + $0xbc] sm:$0xf]
          %v1031 = vld [vmem:[%s3 + $0xc0] sm:$0xf]
          %v1057 = vunpack.c.l.b16 %v729
          %v1058 = vunpack.c.h.b16 %v729
          %v1059 = vunpack.c.l.b16 %v730
          %v1060 = vunpack.c.h.b16 %v730
          %v1061 = vunpack.c.l.b16 %v731
          %v1062 = vunpack.c.h.b16 %v731
          %v1063 = vunpack.c.l.b16 %v732
          %v1064 = vunpack.c.h.b16 %v732
          %v1065 = vunpack.c.l.b16 %v733
          %v1066 = vunpack.c.h.b16 %v733
          %v1067 = vunpack.c.l.b16 %v734
          %v1068 = vunpack.c.h.b16 %v734
          %v1069 = vunpack.c.l.b16 %v735
          %v1070 = vunpack.c.h.b16 %v735
          %v1071 = vunpack.c.l.b16 %v736
          %v1072 = vunpack.c.h.b16 %v736
          %v1073 = vunpack.c.l.b16 %v737
          %v1074 = vunpack.c.h.b16 %v737
          %v1075 = vunpack.c.l.b16 %v738
          %v1076 = vunpack.c.h.b16 %v738
          %v1077 = vunpack.c.l.b16 %v739
          %v1078 = vunpack.c.h.b16 %v739
          %v1079 = vunpack.c.l.b16 %v740
          %v1080 = vunpack.c.h.b16 %v740
          %v1081 = vunpack.c.l.b16 %v741
          %v1082 = vunpack.c.h.b16 %v741
          %v1083 = vunpack.c.l.b16 %v742
          %v1084 = vunpack.c.h.b16 %v742
          %v1085 = vunpack.c.l.b16 %v743
          %v1086 = vunpack.c.h.b16 %v743
          %v1087 = vunpack.c.l.b16 %v744
          %v1088 = vunpack.c.h.b16 %v744
          %v1089 = vunpack.c.l.b16 %v745
          %v1090 = vunpack.c.h.b16 %v745
          %v1091 = vunpack.c.l.b16 %v746
          %v1092 = vunpack.c.h.b16 %v746
          %v1093 = vunpack.c.l.b16 %v747
          %v1094 = vunpack.c.h.b16 %v747
          %v1095 = vunpack.c.l.b16 %v748
          %v1096 = vunpack.c.h.b16 %v748
          %v1097 = vunpack.c.l.b16 %v749
          %v1098 = vunpack.c.h.b16 %v749
          %v1099 = vunpack.c.l.b16 %v750
          %v1100 = vunpack.c.h.b16 %v750
          %v1101 = vunpack.c.l.b16 %v751
          %v1102 = vunpack.c.h.b16 %v751
          %v1103 = vunpack.c.l.b16 %v752
          %v1104 = vunpack.c.h.b16 %v752
          %v1105 = vunpack.c.l.b16 %v753
          %v1106 = vpack.c.b16 %v1057, %v1057
          %v1107 = vpack.c.b16 %v1058, %v1058
          %v1108 = vpack.c.b16 %v1059, %v1059
          %v1109 = vpack.c.b16 %v1060, %v1060
          %v1110 = vpack.c.b16 %v1061, %v1061
          %v1111 = vpack.c.b16 %v1062, %v1062
          %v1112 = vpack.c.b16 %v1063, %v1063
          %v1113 = vpack.c.b16 %v1064, %v1064
          %v1114 = vpack.c.b16 %v1065, %v1065
          %v1115 = vpack.c.b16 %v1066, %v1066
          %v1116 = vpack.c.b16 %v1067, %v1067
          %v1117 = vpack.c.b16 %v1068, %v1068
          %v1118 = vpack.c.b16 %v1069, %v1069
          %v1119 = vpack.c.b16 %v1070, %v1070
          %v1120 = vpack.c.b16 %v1071, %v1071
          %v1121 = vpack.c.b16 %v1072, %v1072
          %v1122 = vpack.c.b16 %v1073, %v1073
          %v1123 = vpack.c.b16 %v1074, %v1074
          %v1124 = vpack.c.b16 %v1075, %v1075
          %v1125 = vpack.c.b16 %v1076, %v1076
          %v1126 = vpack.c.b16 %v1077, %v1077
          %v1127 = vpack.c.b16 %v1078, %v1078
          %v1128 = vpack.c.b16 %v1079, %v1079
          %v1129 = vpack.c.b16 %v1080, %v1080
          %v1130 = vpack.c.b16 %v1081, %v1081
          %v1131 = vpack.c.b16 %v1082, %v1082
          %v1132 = vpack.c.b16 %v1083, %v1083
          %v1133 = vpack.c.b16 %v1084, %v1084
          %v1134 = vpack.c.b16 %v1085, %v1085
          %v1135 = vpack.c.b16 %v1086, %v1086
          %v1136 = vpack.c.b16 %v1087, %v1087
          %v1137 = vpack.c.b16 %v1088, %v1088
          %v1138 = vpack.c.b16 %v1089, %v1089
          %v1139 = vpack.c.b16 %v1090, %v1090
          %v1140 = vpack.c.b16 %v1091, %v1091
          %v1141 = vpack.c.b16 %v1092, %v1092
          %v1142 = vpack.c.b16 %v1093, %v1093
          %v1143 = vpack.c.b16 %v1094, %v1094
          %v1144 = vpack.c.b16 %v1095, %v1095
          %v1145 = vpack.c.b16 %v1096, %v1096
          %v1146 = vpack.c.b16 %v1097, %v1097
          %v1147 = vpack.c.b16 %v1098, %v1098
          %v1148 = vpack.c.b16 %v1099, %v1099
          %v1149 = vpack.c.b16 %v1100, %v1100
          %v1150 = vpack.c.b16 %v1101, %v1101
          %v1151 = vpack.c.b16 %v1102, %v1102
          %v1152 = vpack.c.b16 %v1103, %v1103
          %v1153 = vpack.c.b16 %v1104, %v1104
          %v1154 = vpack.c.b16 %v1105, %v1105
          %v1204 = vmax.bf16 %v983, %v1106
          %v1205 = vmax.bf16 %v984, %v1107
          %v1206 = vmax.bf16 %v985, %v1108
          %v1207 = vmax.bf16 %v986, %v1109
          %v1208 = vmax.bf16 %v987, %v1110
          %v1209 = vmax.bf16 %v988, %v1111
          %v1210 = vmax.bf16 %v989, %v1112
          %v1211 = vmax.bf16 %v990, %v1113
          %v1212 = vmax.bf16 %v991, %v1114
          %v1213 = vmax.bf16 %v992, %v1115
          %v1214 = vmax.bf16 %v993, %v1116
          %v1215 = vmax.bf16 %v994, %v1117
          %v1216 = vmax.bf16 %v995, %v1118
          %v1217 = vmax.bf16 %v996, %v1119
          %v1218 = vmax.bf16 %v997, %v1120
          %v1219 = vmax.bf16 %v998, %v1121
          %v1220 = vmax.bf16 %v999, %v1122
          %v1221 = vmax.bf16 %v1000, %v1123
          %v1222 = vmax.bf16 %v1001, %v1124
          %v1223 = vmax.bf16 %v1002, %v1125
          %v1224 = vmax.bf16 %v1003, %v1126
          %v1225 = vmax.bf16 %v1004, %v1127
          %v1226 = vmax.bf16 %v1005, %v1128
          %v1227 = vmax.bf16 %v1006, %v1129
          %v1228 = vmax.bf16 %v1007, %v1130
          %v1229 = vmax.bf16 %v1008, %v1131
          %v1230 = vmax.bf16 %v1009, %v1132
          %v1231 = vmax.bf16 %v1010, %v1133
          %v1232 = vmax.bf16 %v1011, %v1134
          %v1233 = vmax.bf16 %v1012, %v1135
          %v1234 = vmax.bf16 %v1013, %v1136
          %v1235 = vmax.bf16 %v1014, %v1137
          %v1236 = vmax.bf16 %v1015, %v1138
          %v1237 = vmax.bf16 %v1016, %v1139
          %v1238 = vmax.bf16 %v1017, %v1140
          %v1239 = vmax.bf16 %v1018, %v1141
          %v1240 = vmax.bf16 %v1019, %v1142
          %v1241 = vmax.bf16 %v1020, %v1143
          %v1242 = vmax.bf16 %v1021, %v1144
          %v1243 = vmax.bf16 %v1022, %v1145
          %v1244 = vmax.bf16 %v1023, %v1146
          %v1245 = vmax.bf16 %v1024, %v1147
          %v1246 = vmax.bf16 %v1025, %v1148
          %v1247 = vmax.bf16 %v1026, %v1149
          %v1248 = vmax.bf16 %v1027, %v1150
          %v1249 = vmax.bf16 %v1028, %v1151
          %v1250 = vmax.bf16 %v1029, %v1152
          %v1251 = vmax.bf16 %v1030, %v1153
          %v1252 = vmax.bf16 %v1031, %v1154
          %1253 = vst [vmem:[%s3] sm:$0xf] %v1204
          %1254 = vst [vmem:[%s3 + $0x4] sm:$0xf] %v1205
          %1255 = vst [vmem:[%s3 + $0x8] sm:$0xf] %v1206
          %1256 = vst [vmem:[%s3 + $0xc] sm:$0xf] %v1207
          %1257 = vst [vmem:[%s3 + $0x10] sm:$0xf] %v1208
          %1258 = vst [vmem:[%s3 + $0x14] sm:$0xf] %v1209
          %1259 = vst [vmem:[%s3 + $0x18] sm:$0xf] %v1210
          %1260 = vst [vmem:[%s3 + $0x1c] sm:$0xf] %v1211
          %1261 = vst [vmem:[%s3 + $0x20] sm:$0xf] %v1212
          %1262 = vst [vmem:[%s3 + $0x24] sm:$0xf] %v1213
          %1263 = vst [vmem:[%s3 + $0x28] sm:$0xf] %v1214
          %1264 = vst [vmem:[%s3 + $0x2c] sm:$0xf] %v1215
          %1265 = vst [vmem:[%s3 + $0x30] sm:$0xf] %v1216
          %1266 = vst [vmem:[%s3 + $0x34] sm:$0xf] %v1217
          %1267 = vst [vmem:[%s3 + $0x38] sm:$0xf] %v1218
          %1268 = vst [vmem:[%s3 + $0x3c] sm:$0xf] %v1219
          %1269 = vst [vmem:[%s3 + $0x40] sm:$0xf] %v1220
          %1270 = vst [vmem:[%s3 + $0x44] sm:$0xf] %v1221
          %1271 = vst [vmem:[%s3 + $0x48] sm:$0xf] %v1222
          %1272 = vst [vmem:[%s3 + $0x4c] sm:$0xf] %v1223
          %1273 = vst [vmem:[%s3 + $0x50] sm:$0xf] %v1224
          %1274 = vst [vmem:[%s3 + $0x54] sm:$0xf] %v1225
          %1275 = vst [vmem:[%s3 + $0x58] sm:$0xf] %v1226
          %1276 = vst [vmem:[%s3 + $0x5c] sm:$0xf] %v1227
          %1277 = vst [vmem:[%s3 + $0x60] sm:$0xf] %v1228
          %1278 = vst [vmem:[%s3 + $0x64] sm:$0xf] %v1229
          %1279 = vst [vmem:[%s3 + $0x68] sm:$0xf] %v1230
          %1280 = vst [vmem:[%s3 + $0x6c] sm:$0xf] %v1231
          %1281 = vst [vmem:[%s3 + $0x70] sm:$0xf] %v1232
          %1282 = vst [vmem:[%s3 + $0x74] sm:$0xf] %v1233
          %1283 = vst [vmem:[%s3 + $0x78] sm:$0xf] %v1234
          %1284 = vst [vmem:[%s3 + $0x7c] sm:$0xf] %v1235
          %1285 = vst [vmem:[%s3 + $0x80] sm:$0xf] %v1236
          %1286 = vst [vmem:[%s3 + $0x84] sm:$0xf] %v1237
          %1287 = vst [vmem:[%s3 + $0x88] sm:$0xf] %v1238
          %1288 = vst [vmem:[%s3 + $0x8c] sm:$0xf] %v1239
          %1289 = vst [vmem:[%s3 + $0x90] sm:$0xf] %v1240
          %1290 = vst [vmem:[%s3 + $0x94] sm:$0xf] %v1241
          %1291 = vst [vmem:[%s3 + $0x98] sm:$0xf] %v1242
          %1292 = vst [vmem:[%s3 + $0x9c] sm:$0xf] %v1243
          %1293 = vst [vmem:[%s3 + $0xa0] sm:$0xf] %v1244
          %1294 = vst [vmem:[%s3 + $0xa4] sm:$0xf] %v1245
          %1295 = vst [vmem:[%s3 + $0xa8] sm:$0xf] %v1246
          %1296 = vst [vmem:[%s3 + $0xac] sm:$0xf] %v1247
          %1297 = vst [vmem:[%s3 + $0xb0] sm:$0xf] %v1248
          %1298 = vst [vmem:[%s3 + $0xb4] sm:$0xf] %v1249
          %1299 = vst [vmem:[%s3 + $0xb8] sm:$0xf] %v1250
          %1300 = vst [vmem:[%s3 + $0xbc] sm:$0xf] %v1251
          %1301 = vst [vmem:[%s3 + $0xc0] sm:$0xf] %v1252
        $region48: #{forward.3} parent=31 // pred_fallthru
          _
        // Predicated region
        $region49: #{forward.3} parent=31 // pred_check
          %p1302 = pneg %p97
        $region50: #{forward.3} parent=31 // pred_check_branch
          %1304 = sbr.rel (%p1302) target = $region52
        $region51: #{forward.3} parent=31 // pred_region
          _
        $region52: #{forward.3} parent=31 // pred_fallthru
          _
        // Predicated region
        $region53: #{forward.3} parent=31 // pred_check
          %p1305 = pneg %p97
        $region54: #{forward.3} parent=31 // pred_check_branch
          %1307 = sbr.rel (%p1305) target = $region56
        $region55: #{forward.3} parent=31 // pred_region
          _
        $region56: #{forward.3} parent=31 // pred_fallthru
          _
      $region32: #{forward.3} parent=5 // pred_fallthru
        _
      %p1308 = scmp.le.s32.totalorder 2, %s11
      // Predicated region
      $region57: #{forward.3} parent=5 // pred_check
        %p1309 = pneg %p1308
      $region58: #{forward.3} parent=5 // pred_check_branch
        %1311 = sbr.rel (%p1309) target = $region60
      $region59: #{forward.3} parent=5 // pred_region
        %s1312 = ssub.s32 %s11, 2
      $region60: #{forward.3} parent=5 // pred_fallthru
        _
    $region6: #{forward.3} parent=1 // loop_footer
      %s15 = sadd.s32 1, %s11
    $region7: #{forward.3} parent=1 // loop_footer_branch
      %10 = sbr.rel target = $region3
    $region8: #{forward.3} parent=1 // loop_exit
      _
    %1313 = vsyncpa [#allocation3], 1
    %s1314 = scalar_lea.sflag [#allocation3], 1
    %1315 = vsyncpa %s1314, 1
    %1316 = vsyncpa [#allocation5], 1

// kernel: forward.4
$region0: #{forward.4}
  #allocation0 [shape = 'u32[]', space=smem, size = 0x4, offset = 0x4, fixed_abs, tag = 'smem constant byte address 0x4 - core index']
  #allocation1 [shape = 'u32[144,128]{1,0:T(1,128)}', space=vmem, size = 0x12000, scoped, tag = 'internal scratch']
  %s0 = inlined_call_operand.vmem [shape: bf16[4,98,288], index: 0, kind: input, shape index: {}]
  %s1 = inlined_call_operand.vmem [shape: bf16[288,128], index: 1, kind: input, shape index: {}]
  %s2 = inlined_call_operand.vmem [shape: f32[1,128], index: 2, kind: input, shape index: {}]
  %s3 = inlined_call_operand.vmem [shape: bf16[98,128], index: 3, kind: output, shape index: {}]
  %s4 = sld [smem:[#allocation0]]
  $region53: #{forward.4} parent=0
    _
  %s6 = ssub.s32 1, %s4
  %s7 = scalar_select 0, %s6, %s4
  loop: start=0, step=1, limit=6
  $region2: #{forward.4} parent=0 // loop_pre_header
    _
  $region3: #{forward.4} parent=0 // loop_header
    %s9 = sphi 0, %s13
    %p10 = scmp.ge.s32.totalorder %s9, 6
    %s19 = sphi 0, %s21
    %s22 = sphi 0, %s19
    %s23 = sphi 0, %s22
    %s39 = sphi 0, %s23
    %s43 = sphi 0, %s43
    %s45 = sphi 0, %s43
    %s46 = sphi 0, %s45
    %s60 = sphi 0, %s46
    %s64 = sphi 0, %s64
    %s66 = sphi 0, %s64
    %s67 = sphi 0, %s66
    %s81 = sphi 0, %s67
    %s85 = sphi 0, %s85
    %s87 = sphi 0, %s85
    %s88 = sphi 0, %s87
    %s102 = sphi 0, %s88
  $region4: #{forward.4} parent=0 // loop_header_branch
    %12 = sbr.rel (%p10) target = $region8
  $region5: #{forward.4} parent=0 // loop_body
    %s14 = ssub.s32 %s9, 1
    %s15 = ssub.s32 %s9, 2
    %s16 = sadd.s32 %s9, 1
    %s17 = ssub.s32 %s9, %s16
    %p18 = scmp.eq.s32.totalorder %s17, 0
    %s20 = sadd.s32 %s19, 1
    %s21 = scalar_select %p18, %s19, %s20
    %p24 = pneg %p18
    %p25 = scmp.eq.s32.totalorder %s9, 3
    %p26 = por %p24, %p25
    %p27 = scmp.ne.s32.totalorder %s19, %s22
    %p28 = scmp.eq.s32.totalorder %s9, 0
    %p29 = por %p27, %p28
    %p30 = scmp.ne.s32.totalorder %s19, %s22
    %p31 = scmp.eq.s32.totalorder %s14, 3
    %p32 = por %p30, %p31
    %p33 = scmp.ne.s32.totalorder %s22, %s23
    %p34 = scmp.eq.s32.totalorder %s14, 0
    %p35 = por %p33, %p34
    %p36 = scmp.ne.s32.totalorder %s22, %s23
    %p37 = scmp.eq.s32.totalorder %s15, 3
    %p38 = por %p36, %p37
    %p40 = scmp.ne.s32.totalorder %s23, %s39
    %p41 = scmp.eq.s32.totalorder %s15, 0
    %p42 = por %p40, %p41
    %s44 = sadd.s32 %s43, 1
    %p47 = scmp.eq.s32.totalorder %s9, 3
    %p48 = scmp.ne.s32.totalorder %s43, %s45
    %p49 = scmp.eq.s32.totalorder %s9, 0
    %p50 = por %p48, %p49
    %p51 = scmp.ne.s32.totalorder %s43, %s45
    %p52 = scmp.eq.s32.totalorder %s14, 3
    %p53 = por %p51, %p52
    %p54 = scmp.ne.s32.totalorder %s45, %s46
    %p55 = scmp.eq.s32.totalorder %s14, 0
    %p56 = por %p54, %p55
    %p57 = scmp.ne.s32.totalorder %s45, %s46
    %p58 = scmp.eq.s32.totalorder %s15, 3
    %p59 = por %p57, %p58
    %p61 = scmp.ne.s32.totalorder %s46, %s60
    %p62 = scmp.eq.s32.totalorder %s15, 0
    %p63 = por %p61, %p62
    %s65 = sadd.s32 %s64, 1
    %p68 = scmp.eq.s32.totalorder %s9, 3
    %p69 = scmp.ne.s32.totalorder %s64, %s66
    %p70 = scmp.eq.s32.totalorder %s9, 0
    %p71 = por %p69, %p70
    %p72 = scmp.ne.s32.totalorder %s64, %s66
    %p73 = scmp.eq.s32.totalorder %s14, 3
    %p74 = por %p72, %p73
    %p75 = scmp.ne.s32.totalorder %s66, %s67
    %p76 = scmp.eq.s32.totalorder %s14, 0
    %p77 = por %p75, %p76
    %p78 = scmp.ne.s32.totalorder %s66, %s67
    %p79 = scmp.eq.s32.totalorder %s15, 3
    %p80 = por %p78, %p79
    %p82 = scmp.ne.s32.totalorder %s67, %s81
    %p83 = scmp.eq.s32.totalorder %s15, 0
    %p84 = por %p82, %p83
    %s86 = sadd.s32 %s85, 1
    %p89 = scmp.eq.s32.totalorder %s9, 3
    %p90 = scmp.ne.s32.totalorder %s85, %s87
    %p91 = scmp.eq.s32.totalorder %s9, 0
    %p92 = por %p90, %p91
    %p93 = scmp.ne.s32.totalorder %s85, %s87
    %p94 = scmp.eq.s32.totalorder %s14, 3
    %p95 = por %p93, %p94
    %p96 = scmp.ne.s32.totalorder %s87, %s88
    %p97 = scmp.eq.s32.totalorder %s14, 0
    %p98 = por %p96, %p97
    %p99 = scmp.ne.s32.totalorder %s87, %s88
    %p100 = scmp.eq.s32.totalorder %s15, 3
    %p101 = por %p99, %p100
    %p103 = scmp.ne.s32.totalorder %s88, %s102
    %p104 = scmp.eq.s32.totalorder %s15, 0
    %p105 = por %p103, %p104
    %p106 = scmp.le.s32.totalorder 1, %s9
    %p107 = scmp.lt.s32.totalorder %s9, 5
    %p108 = pnand %p106, %p107
    %p109 = pneg %p108
    // Predicated region
    $region9: #{forward.4} parent=5 // pred_check
      _
    $region10: #{forward.4} parent=5 // pred_check_branch
      %111 = sbr.rel (%p108) target = $region12
    $region11: #{forward.4} parent=5 // pred_region
      %s112 = ssub.s32 %s9, 1
      // Predicated region
      $region13: #{forward.4} parent=11 // pred_check
        %p113 = pneg %p56
      $region14: #{forward.4} parent=11 // pred_check_branch
        %115 = sbr.rel (%p113) target = $region16
      $region15: #{forward.4} parent=11 // pred_region
        _
      $region16: #{forward.4} parent=11 // pred_fallthru
        _
      // Predicated region
      $region17: #{forward.4} parent=11 // pred_check
        %p116 = pneg %p77
      $region18: #{forward.4} parent=11 // pred_check_branch
        %118 = sbr.rel (%p116) target = $region20
      $region19: #{forward.4} parent=11 // pred_region
        _
      $region20: #{forward.4} parent=11 // pred_fallthru
        _
    $region12: #{forward.4} parent=5 // pred_fallthru
      _
    %p119 = scmp.lt.s32.totalorder %s9, 4
    // Predicated region
    $region21: #{forward.4} parent=5 // pred_check
      %p120 = pneg %p119
    $region22: #{forward.4} parent=5 // pred_check_branch
      %122 = sbr.rel (%p120) target = $region24
    $region23: #{forward.4} parent=5 // pred_region
      // Predicated region
      $region25: #{forward.4} parent=23 // pred_check
        %p123 = pneg %p29
      $region26: #{forward.4} parent=23 // pred_check_branch
        %125 = sbr.rel (%p123) target = $region28
      $region27: #{forward.4} parent=23 // pred_region
        %p126 = scmp.lt.s32.totalorder %s9, 3
        %s127 = scalar_select %p126, %s9, 3
        %s128 = smul.addr %s127, 39
        %s129 = smul.addr %s128, 4
        %s130 = scalar_lea.vmem %s0, %s129
      $region28: #{forward.4} parent=23 // pred_fallthru
        _
    $region24: #{forward.4} parent=5 // pred_fallthru
      _
    %p131 = scmp.le.s32.totalorder 1, %s9
    %p132 = scmp.lt.s32.totalorder %s9, 5
    %p133 = pnand %p131, %p132
    %p134 = pneg %p133
    // Predicated region
    $region29: #{forward.4} parent=5 // pred_check
      _
    $region30: #{forward.4} parent=5 // pred_check_branch
      %136 = sbr.rel (%p133) target = $region32
    $region31: #{forward.4} parent=5 // pred_region
      %s137 = ssub.s32 %s9, 1
      %p138 = scmp.lt.s32.totalorder %s14, 3
      %s139 = scalar_select %p138, %s14, 3
      %s140 = smul.addr %s139, 39
      %s141 = smul.addr %s140, 4
      %s142 = scalar_lea.vmem %s0, %s141
      %p143 = pneg %p35
      %p144 = pneg %p32
      %p145 = pneg %p56
      %p146 = pneg %p53
      %p147 = pneg %p77
      %p148 = pneg %p74
      %p149 = pneg %p98
      %p150 = pneg %p95
      %p151 = scmp.lt.s32.totalorder %s14, 3
      %s152 = scalar_select %p151, %s14, 3
      %s153 = smul.addr %s152, 39
      %s154 = smul.addr %s153, 4
      %s155 = scalar_lea.vmem %s0, %s154
      %v157 = vld [vmem:[%s155] sm:$0xff]
      %v158 = vld [vmem:[%s155 + $0x8] sm:$0xf]
      %v159 = vld [vmem:[%s155 + $0xc] sm:$0xff]
      %v160 = vld [vmem:[%s155 + $0x14] sm:$0xf]
      %v161 = vld [vmem:[%s155 + $0x18] sm:$0xff]
      %v162 = vld [vmem:[%s155 + $0x20] sm:$0xf]
      %v163 = vld [vmem:[%s155 + $0x24] sm:$0xff]
      %v164 = vld [vmem:[%s155 + $0x2c] sm:$0xf]
      %v165 = vld [vmem:[%s155 + $0x30] sm:$0xff]
      %v166 = vld [vmem:[%s155 + $0x38] sm:$0xf]
      %v167 = vld [vmem:[%s155 + $0x3c] sm:$0xff]
      %v168 = vld [vmem:[%s155 + $0x44] sm:$0xf]
      %v169 = vld [vmem:[%s155 + $0x48] sm:$0xff]
      %v170 = vld [vmem:[%s155 + $0x50] sm:$0xf]
      %v171 = vld [vmem:[%s155 + $0x54] sm:$0xff]
      %v172 = vld [vmem:[%s155 + $0x5c] sm:$0xf]
      %v173 = vld [vmem:[%s155 + $0x60] sm:$0xff]
      %v174 = vld [vmem:[%s155 + $0x68] sm:$0xf]
      %v175 = vld [vmem:[%s155 + $0x6c] sm:$0xff]
      %v176 = vld [vmem:[%s155 + $0x74] sm:$0xf]
      %v177 = vld [vmem:[%s155 + $0x78] sm:$0xff]
      %v178 = vld [vmem:[%s155 + $0x80] sm:$0xf]
      %v179 = vld [vmem:[%s155 + $0x84] sm:$0xff]
      %v180 = vld [vmem:[%s155 + $0x8c] sm:$0xf]
      %v181 = vld [vmem:[%s155 + $0x90] sm:$0x11]
      %v182 = vld [vmem:[%s155 + $0x98] sm:$0x1]
      %v183 = vld [vmem:[%s1] sm:$0xf]
      %v184 = vld [vmem:[%s1 + $0x4] sm:$0xf]
      %v185 = vld [vmem:[%s1 + $0x8] sm:$0xf]
      %v186 = vld [vmem:[%s1 + $0xc] sm:$0xf]
      %v187 = vld [vmem:[%s1 + $0x10] sm:$0xf]
      %v188 = vld [vmem:[%s1 + $0x14] sm:$0xf]
      %v189 = vld [vmem:[%s1 + $0x18] sm:$0xf]
      %v190 = vld [vmem:[%s1 + $0x1c] sm:$0xf]
      %v191 = vld [vmem:[%s1 + $0x20] sm:$0xf]
      %v192 = vld [vmem:[%s1 + $0x24] sm:$0xf]
      %v193 = vld [vmem:[%s1 + $0x28] sm:$0xf]
      %v194 = vld [vmem:[%s1 + $0x2c] sm:$0xf]
      %v195 = vld [vmem:[%s1 + $0x30] sm:$0xf]
      %v196 = vld [vmem:[%s1 + $0x34] sm:$0xf]
      %v197 = vld [vmem:[%s1 + $0x38] sm:$0xf]
      %v198 = vld [vmem:[%s1 + $0x3c] sm:$0xf]
      %v199 = vld [vmem:[%s1 + $0x40] sm:$0xf]
      %v200 = vld [vmem:[%s1 + $0x44] sm:$0xf]
      %v201 = vld [vmem:[%s1 + $0x48] sm:$0xf]
      %v202 = vld [vmem:[%s1 + $0x4c] sm:$0xf]
      %v203 = vld [vmem:[%s1 + $0x50] sm:$0xf]
      %v204 = vld [vmem:[%s1 + $0x54] sm:$0xf]
      %v205 = vld [vmem:[%s1 + $0x58] sm:$0xf]
      %v206 = vld [vmem:[%s1 + $0x5c] sm:$0xf]
      %v207 = vld [vmem:[%s1 + $0x60] sm:$0xf]
      %v208 = vld [vmem:[%s1 + $0x64] sm:$0xf]
      %v209 = vld [vmem:[%s1 + $0x68] sm:$0xf]
      %v210 = vld [vmem:[%s1 + $0x6c] sm:$0xf]
      %v211 = vld [vmem:[%s1 + $0x70] sm:$0xf]
      %v212 = vld [vmem:[%s1 + $0x74] sm:$0xf]
      %v213 = vld [vmem:[%s1 + $0x78] sm:$0xf]
      %v214 = vld [vmem:[%s1 + $0x7c] sm:$0xf]
      %v215 = vld [vmem:[%s1 + $0x80] sm:$0xf]
      %v216 = vld [vmem:[%s1 + $0x84] sm:$0xf]
      %v217 = vld [vmem:[%s1 + $0x88] sm:$0xf]
      %v218 = vld [vmem:[%s1 + $0x8c] sm:$0xf]
      %v219 = vld [vmem:[%s2] sm:$0x1]
      %v221 = vlaneseq
      %v222 = vshrl.u32 %v221, 7
      %v223 = vsub.s32 0, %v222
      %v224 = vrot.slane %v219, %v223
      %v252 = vunpack.c.l.b16 %v157
      %v253 = vunpack.c.h.b16 %v157
      %v254 = vunpack.c.l.b16 %v158
      %v255 = vunpack.c.l.b16 %v159
      %v256 = vunpack.c.h.b16 %v159
      %v257 = vunpack.c.l.b16 %v160
      %v258 = vunpack.c.l.b16 %v161
      %v259 = vunpack.c.h.b16 %v161
      %v260 = vunpack.c.l.b16 %v162
      %v261 = vunpack.c.l.b16 %v163
      %v262 = vunpack.c.h.b16 %v163
      %v263 = vunpack.c.l.b16 %v164
      %v264 = vunpack.c.l.b16 %v165
      %v265 = vunpack.c.h.b16 %v165
      %v266 = vunpack.c.l.b16 %v166
      %v267 = vunpack.c.l.b16 %v167
      %v268 = vunpack.c.h.b16 %v167
      %v269 = vunpack.c.l.b16 %v168
      %v270 = vunpack.c.l.b16 %v169
      %v271 = vunpack.c.h.b16 %v169
      %v272 = vunpack.c.l.b16 %v170
      %v273 = vunpack.c.l.b16 %v171
      %v274 = vunpack.c.h.b16 %v171
      %v275 = vunpack.c.l.b16 %v172
      %v276 = vunpack.c.l.b16 %v173
      %v277 = vunpack.c.h.b16 %v173
      %v278 = vunpack.c.l.b16 %v174
      %v279 = vunpack.c.l.b16 %v175
      %v280 = vunpack.c.h.b16 %v175
      %v281 = vunpack.c.l.b16 %v176
      %v282 = vunpack.c.l.b16 %v177
      %v283 = vunpack.c.h.b16 %v177
      %v284 = vunpack.c.l.b16 %v178
      %v285 = vunpack.c.l.b16 %v179
      %v286 = vunpack.c.h.b16 %v179
      %v287 = vunpack.c.l.b16 %v180
      %v288 = vunpack.c.l.b16 %v181
      %v289 = vunpack.c.h.b16 %v181
      %v290 = vunpack.c.l.b16 %v182
      %v291 = vpack.c.b16 %v255, %v252
      %v292 = vpack.c.b16 %v256, %v253
      %v293 = vpack.c.b16 %v257, %v254
      %v294 = vpack.c.b16 %v261, %v258
      %v295 = vpack.c.b16 %v262, %v259
      %v296 = vpack.c.b16 %v263, %v260
      %v297 = vpack.c.b16 %v267, %v264
      %v298 = vpack.c.b16 %v268, %v265
      %v299 = vpack.c.b16 %v269, %v266
      %v300 = vpack.c.b16 %v273, %v270
      %v301 = vpack.c.b16 %v274, %v271
      %v302 = vpack.c.b16 %v275, %v272
      %v303 = vpack.c.b16 %v279, %v276
      %v304 = vpack.c.b16 %v280, %v277
      %v305 = vpack.c.b16 %v281, %v278
      %v306 = vpack.c.b16 %v285, %v282
      %v307 = vpack.c.b16 %v286, %v283
      %v308 = vpack.c.b16 %v287, %v284
      %v309 = vpack.c.b16 %v288, %v288
      %v310 = vpack.c.b16 %v289, %v289
      %v311 = vpack.c.b16 %v290, %v290
      %v362 = vunpack.c.l.b16 %v183
      %v363 = vunpack.c.l.b16 %v184
      %v364 = vunpack.c.l.b16 %v185
      %v365 = vunpack.c.l.b16 %v186
      %v366 = vunpack.c.l.b16 %v187
      %v367 = vunpack.c.l.b16 %v188
      %v368 = vunpack.c.l.b16 %v189
      %v369 = vunpack.c.l.b16 %v190
      %v370 = vunpack.c.l.b16 %v191
      %v371 = vunpack.c.l.b16 %v192
      %v372 = vunpack.c.l.b16 %v193
      %v373 = vunpack.c.l.b16 %v194
      %v374 = vunpack.c.l.b16 %v195
      %v375 = vunpack.c.l.b16 %v196
      %v376 = vunpack.c.l.b16 %v197
      %v377 = vunpack.c.l.b16 %v198
      %v378 = vunpack.c.l.b16 %v199
      %v379 = vunpack.c.l.b16 %v200
      %v380 = vunpack.c.l.b16 %v201
      %v381 = vunpack.c.l.b16 %v202
      %v382 = vunpack.c.l.b16 %v203
      %v383 = vunpack.c.l.b16 %v204
      %v384 = vunpack.c.l.b16 %v205
      %v385 = vunpack.c.l.b16 %v206
      %v386 = vunpack.c.l.b16 %v207
      %v387 = vunpack.c.l.b16 %v208
      %v388 = vunpack.c.l.b16 %v209
      %v389 = vunpack.c.l.b16 %v210
      %v390 = vunpack.c.l.b16 %v211
      %v391 = vunpack.c.l.b16 %v212
      %v392 = vunpack.c.l.b16 %v213
      %v393 = vunpack.c.l.b16 %v214
      %v394 = vunpack.c.l.b16 %v215
      %v395 = vunpack.c.l.b16 %v216
      %v396 = vunpack.c.l.b16 %v217
      %v397 = vunpack.c.l.b16 %v218
      %v398 = vpack.c.b16 %v363, %v362
      %v399 = vpack.c.b16 %v365, %v364
      %v400 = vpack.c.b16 %v367, %v366
      %v401 = vpack.c.b16 %v369, %v368
      %v402 = vpack.c.b16 %v371, %v370
      %v403 = vpack.c.b16 %v373, %v372
      %v404 = vpack.c.b16 %v375, %v374
      %v405 = vpack.c.b16 %v377, %v376
      %v406 = vpack.c.b16 %v379, %v378
      %v407 = vpack.c.b16 %v381, %v380
      %v408 = vpack.c.b16 %v383, %v382
      %v409 = vpack.c.b16 %v385, %v384
      %v410 = vpack.c.b16 %v387, %v386
      %v411 = vpack.c.b16 %v389, %v388
      %v412 = vpack.c.b16 %v391, %v390
      %v413 = vpack.c.b16 %v393, %v392
      %v414 = vpack.c.b16 %v395, %v394
      %v415 = vpack.c.b16 %v397, %v396
      %vm434 = vcmask 261120
      %v436 = vsel %vm434, %v293, 0
      %v439 = vsel %vm434, %v296, 0
      %v442 = vsel %vm434, %v299, 0
      %v445 = vsel %vm434, %v302, 0
      %v448 = vsel %vm434, %v305, 0
      %v451 = vsel %vm434, %v308, 0
      %v454 = vsel %vm434, %v311, 0
      %456 = vmatprep.subr.bf16.mxu0 0
      %457 = vmatpush1.bf16.msra.mxu0 %v398
      %458 = vmatprep.subr.bf16.mxu0 0
      %459 = vmatpush1.bf16.msra.mxu0 %v399
      %460 = vmatprep.subr.bf16.mxu0 0
      %461 = vmatpush1.bf16.msra.mxu0 %v400
      %462 = vmatprep.subr.bf16.mxu0 0
      %463 = vmatpush1.bf16.msra.mxu0 %v401
      %464 = vmatprep.subr.bf16.mxu0 0
      %465 = vmatpush1.bf16.msra.mxu0 %v402
      %466 = vmatprep.subr.bf16.mxu0 0
      %467 = vmatpush1.bf16.msra.mxu0 %v403
      %468 = vmatprep.subr.bf16.mxu0 0
      %469 = vmatpush1.bf16.msra.mxu0 %v404
      %470 = vmatprep.subr.bf16.mxu0 0
      %471 = vmatpush1.bf16.msra.mxu0 %v405
      %472 = vmatprep.subr.bf16.mxu0 0
      %473 = vmatpush1.bf16.msra.mxu0 %v406
      %474 = vmatprep.subr.bf16.mxu0 0
      %475 = vmatpush1.bf16.msra.mxu0 %v407
      %476 = vmatprep.subr.bf16.mxu0 0
      %477 = vmatpush1.bf16.msra.mxu0 %v408
      %478 = vmatprep.subr.bf16.mxu0 0
      %479 = vmatpush1.bf16.msra.mxu0 %v409
      %480 = vmatprep.subr.bf16.mxu0 0
      %481 = vmatpush1.bf16.msra.mxu0 %v410
      %482 = vmatprep.subr.bf16.mxu0 0
      %483 = vmatpush1.bf16.msra.mxu0 %v411
      %484 = vmatprep.subr.bf16.mxu0 0
      %485 = vmatpush1.bf16.msra.mxu0 %v412
      %486 = vmatprep.subr.bf16.mxu0 0
      %487 = vmatpush1.bf16.msra.mxu0 %v413
      %488 = vmatprep.mubr.bf16.mxu0 %v292
      %489 = vmatmul.mubr.bf16.gmra.mrb[0].mxu0 %v291
      %v490 = vpop.f32.mrb[0].mxu0
      %v491 = vadd.f32 %v224, %v490
      %v492 = vpop.f32.mrb[0].mxu0
      %v493 = vpop.f32.mrb[0].mxu0
      %v494 = vadd.f32 %v224, %v493
      %v495 = vpop.f32.mrb[0].mxu0
      %496 = vmatprep.mubr.bf16.mxu0 %v295
      %497 = vmatmul.mubr.bf16.gmra.mrb[0].mxu0 %v294
      %v498 = vpop.f32.mrb[0].mxu0
      %v499 = vadd.f32 %v224, %v498
      %v500 = vpop.f32.mrb[0].mxu0
      %v501 = vpop.f32.mrb[0].mxu0
      %v502 = vadd.f32 %v224, %v501
      %v503 = vpop.f32.mrb[0].mxu0
      %504 = vmatprep.mubr.bf16.mxu0 %v298
      %505 = vmatmul.mubr.bf16.gmra.mrb[0].mxu0 %v297
      %v506 = vpop.f32.mrb[0].mxu0
      %v507 = vadd.f32 %v224, %v506
      %v508 = vpop.f32.mrb[0].mxu0
      %v509 = vpop.f32.mrb[0].mxu0
      %v510 = vadd.f32 %v224, %v509
      %v511 = vpop.f32.mrb[0].mxu0
      %512 = vmatprep.mubr.bf16.mxu0 %v301
      %513 = vmatmul.mubr.bf16.gmra.mrb[0].mxu0 %v300
      %v514 = vpop.f32.mrb[0].mxu0
      %v515 = vadd.f32 %v224, %v514
      %v516 = vpop.f32.mrb[0].mxu0
      %v517 = vpop.f32.mrb[0].mxu0
      %v518 = vadd.f32 %v224, %v517
      %v519 = vpop.f32.mrb[0].mxu0
      %520 = vmatprep.mubr.bf16.mxu0 %v304
      %521 = vmatmul.mubr.bf16.gmra.mrb[0].mxu0 %v303
      %v522 = vpop.f32.mrb[0].mxu0
      %v523 = vadd.f32 %v224, %v522
      %v524 = vpop.f32.mrb[0].mxu0
      %v525 = vpop.f32.mrb[0].mxu0
      %v526 = vadd.f32 %v224, %v525
      %v527 = vpop.f32.mrb[0].mxu0
      %528 = vmatprep.mubr.bf16.mxu0 %v307
      %529 = vmatmul.mubr.bf16.gmra.mrb[0].mxu0 %v306
      %v530 = vpop.f32.mrb[0].mxu0
      %v531 = vadd.f32 %v224, %v530
      %v532 = vpop.f32.mrb[0].mxu0
      %v533 = vpop.f32.mrb[0].mxu0
      %v534 = vadd.f32 %v224, %v533
      %v535 = vpop.f32.mrb[0].mxu0
      %536 = vmatprep.mubr.bf16.mxu0 %v310
      %537 = vmatmul.mubr.bf16.gmra.mrb[0].mxu0 %v309
      %v538 = vpop.f32.mrb[0].mxu0
      %v539 = vadd.f32 %v224, %v538
      %v540 = vpop.f32.mrb[0].mxu0
      %v541 = vpop.f32.mrb[0].mxu0
      %v542 = vpop.f32.mrb[0].mxu0
      %543 = vdwg.mxu0
      %544 = vmatprep.subr.bf16.mxu0 0
      %545 = vmatpush1.bf16.msra.mxu0 %v414
      %546 = vmatprep.subr.bf16.mxu0 0
      %547 = vmatpush1.bf16.msra.mxu0 %v415
      %548 = vmatprep.subr.bf16.mxu0 0
      %549 = vmatpush1.bf16.msra.mxu0 0
      %550 = vmatprep.subr.bf16.mxu0 0
      %551 = vmatpush1.bf16.msra.mxu0 0
      %552 = vmatprep.subr.bf16.mxu0 0
      %553 = vmatpush1.bf16.msra.mxu0 0
      %554 = vmatprep.subr.bf16.mxu0 0
      %555 = vmatpush1.bf16.msra.mxu0 0
      %556 = vmatprep.subr.bf16.mxu0 0
      %557 = vmatpush1.bf16.msra.mxu0 0
      %558 = vmatprep.subr.bf16.mxu0 0
      %559 = vmatpush1.bf16.msra.mxu0 0
      %560 = vmatprep.subr.bf16.mxu0 0
      %561 = vmatpush1.bf16.msra.mxu0 0
      %562 = vmatprep.subr.bf16.mxu0 0
      %563 = vmatpush1.bf16.msra.mxu0 0
      %564 = vmatprep.subr.bf16.mxu0 0
      %565 = vmatpush1.bf16.msra.mxu0 0
      %566 = vmatprep.subr.bf16.mxu0 0
      %567 = vmatpush1.bf16.msra.mxu0 0
      %568 = vmatprep.subr.bf16.mxu0 0
      %569 = vmatpush1.bf16.msra.mxu0 0
      %570 = vmatprep.subr.bf16.mxu0 0
      %571 = vmatpush1.bf16.msra.mxu0 0
      %572 = vmatprep.subr.bf16.mxu0 0
      %573 = vmatpush1.bf16.msra.mxu0 0
      %574 = vmatprep.subr.bf16.mxu0 0
      %575 = vmatpush1.bf16.msra.mxu0 0
      %576 = vmatprep.mubr.bf16.mxu0 0
      %577 = vmatmul.mubr.bf16.gmra.mrb[0].mxu0 %v436
      %v578 = vpop.f32.mrb[0].mxu0
      %v579 = vadd.f32 %v491, %v578
      %v580 = vpop.f32.mrb[0].mxu0
      %v581 = vpop.f32.mrb[0].mxu0
      %v582 = vadd.f32 %v494, %v581
      %v583 = vpop.f32.mrb[0].mxu0
      %584 = vmatprep.mubr.bf16.mxu0 0
      %585 = vmatmul.mubr.bf16.gmra.mrb[0].mxu0 %v439
      %v586 = vpop.f32.mrb[0].mxu0
      %v587 = vadd.f32 %v499, %v586
      %v588 = vpop.f32.mrb[0].mxu0
      %v589 = vpop.f32.mrb[0].mxu0
      %v590 = vadd.f32 %v502, %v589
      %v591 = vpop.f32.mrb[0].mxu0
      %592 = vmatprep.mubr.bf16.mxu0 0
      %593 = vmatmul.mubr.bf16.gmra.mrb[0].mxu0 %v442
      %v594 = vpop.f32.mrb[0].mxu0
      %v595 = vadd.f32 %v507, %v594
      %v596 = vpop.f32.mrb[0].mxu0
      %v597 = vpop.f32.mrb[0].mxu0
      %v598 = vadd.f32 %v510, %v597
      %v599 = vpop.f32.mrb[0].mxu0
      %600 = vmatprep.mubr.bf16.mxu0 0
      %601 = vmatmul.mubr.bf16.gmra.mrb[0].mxu0 %v445
      %v602 = vpop.f32.mrb[0].mxu0
      %v603 = vadd.f32 %v515, %v602
      %v604 = vpop.f32.mrb[0].mxu0
      %v605 = vpop.f32.mrb[0].mxu0
      %v606 = vadd.f32 %v518, %v605
      %v607 = vpop.f32.mrb[0].mxu0
      %608 = vmatprep.mubr.bf16.mxu0 0
      %609 = vmatmul.mubr.bf16.gmra.mrb[0].mxu0 %v448
      %v610 = vpop.f32.mrb[0].mxu0
      %v611 = vadd.f32 %v523, %v610
      %v612 = vpop.f32.mrb[0].mxu0
      %v613 = vpop.f32.mrb[0].mxu0
      %v614 = vadd.f32 %v526, %v613
      %v615 = vpop.f32.mrb[0].mxu0
      %616 = vmatprep.mubr.bf16.mxu0 0
      %617 = vmatmul.mubr.bf16.gmra.mrb[0].mxu0 %v451
      %v618 = vpop.f32.mrb[0].mxu0
      %v619 = vadd.f32 %v531, %v618
      %v620 = vpop.f32.mrb[0].mxu0
      %v621 = vpop.f32.mrb[0].mxu0
      %v622 = vadd.f32 %v534, %v621
      %v623 = vpop.f32.mrb[0].mxu0
      %624 = vmatprep.mubr.bf16.mxu0 0
      %625 = vmatmul.mubr.bf16.gmra.mrb[0].mxu0 %v454
      %v626 = vpop.f32.mrb[0].mxu0
      %v627 = vadd.f32 %v539, %v626
      %v628 = vpop.f32.mrb[0].mxu0
      %v629 = vpop.f32.mrb[0].mxu0
      %v630 = vpop.f32.mrb[0].mxu0
      %631 = vdwg.mxu0
      %v632 = vmax.f32 %v579, 0.0
      %v633 = vmax.f32 %v582, 0.0
      %v634 = vmax.f32 %v587, 0.0
      %v635 = vmax.f32 %v590, 0.0
      %v636 = vmax.f32 %v595, 0.0
      %v637 = vmax.f32 %v598, 0.0
      %v638 = vmax.f32 %v603, 0.0
      %v639 = vmax.f32 %v606, 0.0
      %v640 = vmax.f32 %v611, 0.0
      %v641 = vmax.f32 %v614, 0.0
      %v642 = vmax.f32 %v619, 0.0
      %v643 = vmax.f32 %v622, 0.0
      %v644 = vmax.f32 %v627, 0.0
      %v645 = vpack.c.bf16 %v633, %v632
      %v646 = vpack.c.bf16 %v635, %v634
      %v647 = vpack.c.bf16 %v637, %v636
      %v648 = vpack.c.bf16 %v639, %v638
      %v649 = vpack.c.bf16 %v641, %v640
      %v650 = vpack.c.bf16 %v643, %v642
      %v651 = vpack.c.bf16 %v644, %v644
      %p652 = scmp.eq.s32.totalorder %s14, 0
      // Predicated region
      $region33: #{forward.4} parent=31 // pred_check
        %p653 = pneg %p652
      $region34: #{forward.4} parent=31 // pred_check_branch
        %655 = sbr.rel (%p653) target = $region36
      $region35: #{forward.4} parent=31 // pred_region
        %v663 = vunpack.c.l.b16 %v645
        %v664 = vunpack.c.h.b16 %v645
        %v665 = vunpack.c.l.b16 %v646
        %v666 = vunpack.c.h.b16 %v646
        %v667 = vunpack.c.l.b16 %v647
        %v668 = vunpack.c.h.b16 %v647
        %v669 = vunpack.c.l.b16 %v648
        %v670 = vunpack.c.h.b16 %v648
        %v671 = vunpack.c.l.b16 %v649
        %v672 = vunpack.c.h.b16 %v649
        %v673 = vunpack.c.l.b16 %v650
        %v674 = vunpack.c.h.b16 %v650
        %v675 = vunpack.c.l.b16 %v651
        %v676 = vpack.c.b16 %v663, %v663
        %v677 = vpack.c.b16 %v664, %v664
        %v678 = vpack.c.b16 %v665, %v665
        %v679 = vpack.c.b16 %v666, %v666
        %v680 = vpack.c.b16 %v667, %v667
        %v681 = vpack.c.b16 %v668, %v668
        %v682 = vpack.c.b16 %v669, %v669
        %v683 = vpack.c.b16 %v670, %v670
        %v684 = vpack.c.b16 %v671, %v671
        %v685 = vpack.c.b16 %v672, %v672
        %v686 = vpack.c.b16 %v673, %v673
        %v687 = vpack.c.b16 %v674, %v674
        %v688 = vpack.c.b16 %v675, %v675
        %702 = vst [vmem:[%s3] sm:$0xf] %v676
        %703 = vst [vmem:[%s3 + $0x4] sm:$0xf] %v677
        %704 = vst [vmem:[%s3 + $0x8] sm:$0xf] %v678
        %705 = vst [vmem:[%s3 + $0xc] sm:$0xf] %v679
        %706 = vst [vmem:[%s3 + $0x10] sm:$0xf] %v680
        %707 = vst [vmem:[%s3 + $0x14] sm:$0xf] %v681
        %708 = vst [vmem:[%s3 + $0x18] sm:$0xf] %v682
        %709 = vst [vmem:[%s3 + $0x1c] sm:$0xf] %v683
        %710 = vst [vmem:[%s3 + $0x20] sm:$0xf] %v684
        %711 = vst [vmem:[%s3 + $0x24] sm:$0xf] %v685
        %712 = vst [vmem:[%s3 + $0x28] sm:$0xf] %v686
        %713 = vst [vmem:[%s3 + $0x2c] sm:$0xf] %v687
        %714 = vst [vmem:[%s3 + $0x30] sm:$0x1] %v688
      $region36: #{forward.4} parent=31 // pred_fallthru
        _
      %p715 = scmp.ne.s32.totalorder %s14, 0
      // Predicated region
      $region37: #{forward.4} parent=31 // pred_check
        %p716 = pneg %p715
      $region38: #{forward.4} parent=31 // pred_check_branch
        %718 = sbr.rel (%p716) target = $region40
      $region39: #{forward.4} parent=31 // pred_region
        %v719 = vld [vmem:[%s3] sm:$0xf]
        %v720 = vld [vmem:[%s3 + $0x4] sm:$0xf]
        %v721 = vld [vmem:[%s3 + $0x8] sm:$0xf]
        %v722 = vld [vmem:[%s3 + $0xc] sm:$0xf]
        %v723 = vld [vmem:[%s3 + $0x10] sm:$0xf]
        %v724 = vld [vmem:[%s3 + $0x14] sm:$0xf]
        %v725 = vld [vmem:[%s3 + $0x18] sm:$0xf]
        %v726 = vld [vmem:[%s3 + $0x1c] sm:$0xf]
        %v727 = vld [vmem:[%s3 + $0x20] sm:$0xf]
        %v728 = vld [vmem:[%s3 + $0x24] sm:$0xf]
        %v729 = vld [vmem:[%s3 + $0x28] sm:$0xf]
        %v730 = vld [vmem:[%s3 + $0x2c] sm:$0xf]
        %v731 = vld [vmem:[%s3 + $0x30] sm:$0x1]
        %v739 = vunpack.c.l.b16 %v645
        %v740 = vunpack.c.h.b16 %v645
        %v741 = vunpack.c.l.b16 %v646
        %v742 = vunpack.c.h.b16 %v646
        %v743 = vunpack.c.l.b16 %v647
        %v744 = vunpack.c.h.b16 %v647
        %v745 = vunpack.c.l.b16 %v648
        %v746 = vunpack.c.h.b16 %v648
        %v747 = vunpack.c.l.b16 %v649
        %v748 = vunpack.c.h.b16 %v649
        %v749 = vunpack.c.l.b16 %v650
        %v750 = vunpack.c.h.b16 %v650
        %v751 = vunpack.c.l.b16 %v651
        %v752 = vpack.c.b16 %v739, %v739
        %v753 = vpack.c.b16 %v740, %v740
        %v754 = vpack.c.b16 %v741, %v741
        %v755 = vpack.c.b16 %v742, %v742
        %v756 = vpack.c.b16 %v743, %v743
        %v757 = vpack.c.b16 %v744, %v744
        %v758 = vpack.c.b16 %v745, %v745
        %v759 = vpack.c.b16 %v746, %v746
        %v760 = vpack.c.b16 %v747, %v747
        %v761 = vpack.c.b16 %v748, %v748
        %v762 = vpack.c.b16 %v749, %v749
        %v763 = vpack.c.b16 %v750, %v750
        %v764 = vpack.c.b16 %v751, %v751
        %v778 = vmax.bf16 %v719, %v752
        %v779 = vmax.bf16 %v720, %v753
        %v780 = vmax.bf16 %v721, %v754
        %v781 = vmax.bf16 %v722, %v755
        %v782 = vmax.bf16 %v723, %v756
        %v783 = vmax.bf16 %v724, %v757
        %v784 = vmax.bf16 %v725, %v758
        %v785 = vmax.bf16 %v726, %v759
        %v786 = vmax.bf16 %v727, %v760
        %v787 = vmax.bf16 %v728, %v761
        %v788 = vmax.bf16 %v729, %v762
        %v789 = vmax.bf16 %v730, %v763
        %v790 = vmax.bf16 %v731, %v764
        %791 = vst [vmem:[%s3] sm:$0xf] %v778
        %792 = vst [vmem:[%s3 + $0x4] sm:$0xf] %v779
        %793 = vst [vmem:[%s3 + $0x8] sm:$0xf] %v780
        %794 = vst [vmem:[%s3 + $0xc] sm:$0xf] %v781
        %795 = vst [vmem:[%s3 + $0x10] sm:$0xf] %v782
        %796 = vst [vmem:[%s3 + $0x14] sm:$0xf] %v783
        %797 = vst [vmem:[%s3 + $0x18] sm:$0xf] %v784
        %798 = vst [vmem:[%s3 + $0x1c] sm:$0xf] %v785
        %799 = vst [vmem:[%s3 + $0x20] sm:$0xf] %v786
        %800 = vst [vmem:[%s3 + $0x24] sm:$0xf] %v787
        %801 = vst [vmem:[%s3 + $0x28] sm:$0xf] %v788
        %802 = vst [vmem:[%s3 + $0x2c] sm:$0xf] %v789
        %803 = vst [vmem:[%s3 + $0x30] sm:$0x1] %v790
      $region40: #{forward.4} parent=31 // pred_fallthru
        _
      // Predicated region
      $region41: #{forward.4} parent=31 // pred_check
        %p804 = pneg %p95
      $region42: #{forward.4} parent=31 // pred_check_branch
        %806 = sbr.rel (%p804) target = $region44
      $region43: #{forward.4} parent=31 // pred_region
        _
      $region44: #{forward.4} parent=31 // pred_fallthru
        _
      // Predicated region
      $region45: #{forward.4} parent=31 // pred_check
        %p807 = pneg %p95
      $region46: #{forward.4} parent=31 // pred_check_branch
        %809 = sbr.rel (%p807) target = $region48
      $region47: #{forward.4} parent=31 // pred_region
        _
      $region48: #{forward.4} parent=31 // pred_fallthru
        _
    $region32: #{forward.4} parent=5 // pred_fallthru
      _
    %p810 = scmp.le.s32.totalorder 2, %s9
    // Predicated region
    $region49: #{forward.4} parent=5 // pred_check
      %p811 = pneg %p810
    $region50: #{forward.4} parent=5 // pred_check_branch
      %813 = sbr.rel (%p811) target = $region52
    $region51: #{forward.4} parent=5 // pred_region
      %s814 = ssub.s32 %s9, 2
    $region52: #{forward.4} parent=5 // pred_fallthru
      _
  $region6: #{forward.4} parent=0 // loop_footer
    %s13 = sadd.s32 1, %s9
  $region7: #{forward.4} parent=0 // loop_footer_branch
    %8 = sbr.rel target = $region3
  $region8: #{forward.4} parent=0 // loop_exit
    _

// kernel: forward.5
$region0: #{forward.5}
  #allocation0 [shape = 'u32[]', space=smem, size = 0x4, offset = 0x4, fixed_abs, tag = 'smem constant byte address 0x4 - core index']
  #allocation1 [shape = 'u32[144,128]{1,0:T(1,128)}', space=vmem, size = 0x12000, scoped, tag = 'internal scratch']
  %s0 = inlined_call_operand.vmem [shape: bf16[8,6272], index: 0, kind: input, shape index: {}]
  %s1 = inlined_call_operand.vmem [shape: bf16[6272,512], index: 1, kind: input, shape index: {}]
  %s2 = inlined_call_operand.vmem [shape: f32[1,512], index: 2, kind: input, shape index: {}]
  %s3 = inlined_call_operand.vmem [shape: bf16[512,128], index: 3, kind: input, shape index: {}]
  %s4 = inlined_call_operand.vmem [shape: f32[1,128], index: 4, kind: input, shape index: {}]
  %s5 = inlined_call_operand.vmem [shape: f32[8,128], index: 5, kind: output, shape index: {}]
  %s6 = sld [smem:[#allocation0]]
  $region30: #{forward.5} parent=0
    _
  %s8 = ssub.s32 1, %s6
  %s9 = scalar_select 0, %s8, %s6
  // Predicated region
  $region2: #{forward.5} parent=0 // pred_check
    _
  $region3: #{forward.5} parent=0 // pred_check_branch
    %11 = sbr.rel (0) target = $region5
  $region4: #{forward.5} parent=0 // pred_region
    _
  $region5: #{forward.5} parent=0 // pred_fallthru
    _
  // Predicated region
  $region6: #{forward.5} parent=0 // pred_check
    _
  $region7: #{forward.5} parent=0 // pred_check_branch
    %13 = sbr.rel (0) target = $region9
  $region8: #{forward.5} parent=0 // pred_region
    _
  $region9: #{forward.5} parent=0 // pred_fallthru
    _
  // Predicated region
  $region10: #{forward.5} parent=0 // pred_check
    _
  $region11: #{forward.5} parent=0 // pred_check_branch
    %15 = sbr.rel (0) target = $region13
  $region12: #{forward.5} parent=0 // pred_region
    _
  $region13: #{forward.5} parent=0 // pred_fallthru
    _
  // Predicated region
  $region14: #{forward.5} parent=0 // pred_check
    _
  $region15: #{forward.5} parent=0 // pred_check_branch
    %17 = sbr.rel (0) target = $region17
  $region16: #{forward.5} parent=0 // pred_region
    _
  $region17: #{forward.5} parent=0 // pred_fallthru
    _
  // Predicated region
  $region18: #{forward.5} parent=0 // pred_check
    _
  $region19: #{forward.5} parent=0 // pred_check_branch
    %19 = sbr.rel (0) target = $region21
  $region20: #{forward.5} parent=0 // pred_region
    _
  $region21: #{forward.5} parent=0 // pred_fallthru
    _
  %v21 = vld [vmem:[%s0] sm:$0xff]
  %v22 = vld [vmem:[%s0 + $0x8] sm:$0xff]
  %v23 = vld [vmem:[%s0 + $0x10] sm:$0xff]
  %v24 = vld [vmem:[%s0 + $0x18] sm:$0xff]
  %v25 = vld [vmem:[%s0 + $0x20] sm:$0xff]
  %v26 = vld [vmem:[%s0 + $0x28] sm:$0xff]
  %v27 = vld [vmem:[%s0 + $0x30] sm:$0xff]
  %v28 = vld [vmem:[%s0 + $0x38] sm:$0xff]
  %v29 = vld [vmem:[%s0 + $0x40] sm:$0xff]
  %v30 = vld [vmem:[%s0 + $0x48] sm:$0xff]
  %v31 = vld [vmem:[%s0 + $0x50] sm:$0xff]
  %v32 = vld [vmem:[%s0 + $0x58] sm:$0xff]
  %v33 = vld [vmem:[%s0 + $0x60] sm:$0xff]
  %v34 = vld [vmem:[%s0 + $0x68] sm:$0xff]
  %v35 = vld [vmem:[%s0 + $0x70] sm:$0xff]
  %v36 = vld [vmem:[%s0 + $0x78] sm:$0xff]
  %v37 = vld [vmem:[%s0 + $0x80] sm:$0xff]
  %v38 = vld [vmem:[%s0 + $0x88] sm:$0xff]
  %v39 = vld [vmem:[%s0 + $0x90] sm:$0xff]
  %v40 = vld [vmem:[%s0 + $0x98] sm:$0xff]
  %v41 = vld [vmem:[%s0 + $0xa0] sm:$0xff]
  %v42 = vld [vmem:[%s0 + $0xa8] sm:$0xff]
  %v43 = vld [vmem:[%s0 + $0xb0] sm:$0xff]
  %v44 = vld [vmem:[%s0 + $0xb8] sm:$0xff]
  %v45 = vld [vmem:[%s0 + $0xc0] sm:$0xf]
  %v46 = vld [vmem:[%s1] sm:$0xff]
  %v47 = vld [vmem:[%s1 + $0x8] sm:$0xff]
  %v48 = vld [vmem:[%s1 + $0x10] sm:$0xff]
  %v49 = vld [vmem:[%s1 + $0x18] sm:$0xff]
  %v50 = vld [vmem:[%s1 + $0x20] sm:$0xff]
  %v51 = vld [vmem:[%s1 + $0x28] sm:$0xff]
  %v52 = vld [vmem:[%s1 + $0x30] sm:$0xff]
  %v53 = vld [vmem:[%s1 + $0x38] sm:$0xff]
  %v54 = vld [vmem:[%s1 + $0x40] sm:$0xff]
  %v55 = vld [vmem:[%s1 + $0x48] sm:$0xff]
  %v56 = vld [vmem:[%s1 + $0x50] sm:$0xff]
  %v57 = vld [vmem:[%s1 + $0x58] sm:$0xff]
  %v58 = vld [vmem:[%s1 + $0x60] sm:$0xff]
  %v59 = vld [vmem:[%s1 + $0x68] sm:$0xff]
  %v60 = vld [vmem:[%s1 + $0x70] sm:$0xff]
  %v61 = vld [vmem:[%s1 + $0x78] sm:$0xff]
  %v62 = vld [vmem:[%s1 + $0x80] sm:$0xff]
  %v63 = vld [vmem:[%s1 + $0x88] sm:$0xff]
  %v64 = vld [vmem:[%s1 + $0x90] sm:$0xff]
  %v65 = vld [vmem:[%s1 + $0x98] sm:$0xff]
  %v66 = vld [vmem:[%s1 + $0xa0] sm:$0xff]
  %v67 = vld [vmem:[%s1 + $0xa8] sm:$0xff]
  %v68 = vld [vmem:[%s1 + $0xb0] sm:$0xff]
  %v69 = vld [vmem:[%s1 + $0xb8] sm:$0xff]
  %v70 = vld [vmem:[%s1 + $0xc0] sm:$0xff]
  %v71 = vld [vmem:[%s1 + $0xc8] sm:$0xff]
  %v72 = vld [vmem:[%s1 + $0xd0] sm:$0xff]
  %v73 = vld [vmem:[%s1 + $0xd8] sm:$0xff]
  %v74 = vld [vmem:[%s1 + $0xe0] sm:$0xff]
  %v75 = vld [vmem:[%s1 + $0xe8] sm:$0xff]
  %v76 = vld [vmem:[%s1 + $0xf0] sm:$0xff]
  %v77 = vld [vmem:[%s1 + $0xf8] sm:$0xff]
  %v78 = vld [vmem:[%s1 + $0x100] sm:$0xff]
  %v79 = vld [vmem:[%s1 + $0x108] sm:$0xff]
  %v80 = vld [vmem:[%s1 + $0x110] sm:$0xff]
  %v81 = vld [vmem:[%s1 + $0x118] sm:$0xff]
  %v82 = vld [vmem:[%s1 + $0x120] sm:$0xff]
  %v83 = vld [vmem:[%s1 + $0x128] sm:$0xff]
  %v84 = vld [vmem:[%s1 + $0x130] sm:$0xff]
  %v85 = vld [vmem:[%s1 + $0x138] sm:$0xff]
  %v86 = vld [vmem:[%s1 + $0x140] sm:$0xff]
  %v87 = vld [vmem:[%s1 + $0x148] sm:$0xff]
  %v88 = vld [vmem:[%s1 + $0x150] sm:$0xff]
  %v89 = vld [vmem:[%s1 + $0x158] sm:$0xff]
  %v90 = vld [vmem:[%s1 + $0x160] sm:$0xff]
  %v91 = vld [vmem:[%s1 + $0x168] sm:$0xff]
  %v92 = vld [vmem:[%s1 + $0x170] sm:$0xff]
  %v93 = vld [vmem:[%s1 + $0x178] sm:$0xff]
  %v94 = vld [vmem:[%s1 + $0x180] sm:$0xff]
  %v95 = vld [vmem:[%s1 + $0x188] sm:$0xff]
  %v96 = vld [vmem:[%s1 + $0x190] sm:$0xff]
  %v97 = vld [vmem:[%s1 + $0x198] sm:$0xff]
  %v98 = vld [vmem:[%s1 + $0x1a0] sm:$0xff]
  %v99 = vld [vmem:[%s1 + $0x1a8] sm:$0xff]
  %v100 = vld [vmem:[%s1 + $0x1b0] sm:$0xff]
  %v101 = vld [vmem:[%s1 + $0x1b8] sm:$0xff]
  %v102 = vld [vmem:[%s1 + $0x1c0] sm:$0xff]
  %v103 = vld [vmem:[%s1 + $0x1c8] sm:$0xff]
  %v104 = vld [vmem:[%s1 + $0x1d0] sm:$0xff]
  %v105 = vld [vmem:[%s1 + $0x1d8] sm:$0xff]
  %v106 = vld [vmem:[%s1 + $0x1e0] sm:$0xff]
  %v107 = vld [vmem:[%s1 + $0x1e8] sm:$0xff]
  %v108 = vld [vmem:[%s1 + $0x1f0] sm:$0xff]
  %v109 = vld [vmem:[%s1 + $0x1f8] sm:$0xff]
  %v110 = vld [vmem:[%s1 + $0x200] sm:$0xff]
  %v111 = vld [vmem:[%s1 + $0x208] sm:$0xff]
  %v112 = vld [vmem:[%s1 + $0x210] sm:$0xff]
  %v113 = vld [vmem:[%s1 + $0x218] sm:$0xff]
  %v114 = vld [vmem:[%s1 + $0x220] sm:$0xff]
  %v115 = vld [vmem:[%s1 + $0x228] sm:$0xff]
  %v116 = vld [vmem:[%s1 + $0x230] sm:$0xff]
  %v117 = vld [vmem:[%s1 + $0x238] sm:$0xff]
  %v118 = vld [vmem:[%s1 + $0x240] sm:$0xff]
  %v119 = vld [vmem:[%s1 + $0x248] sm:$0xff]
  %v120 = vld [vmem:[%s1 + $0x250] sm:$0xff]
  %v121 = vld [vmem:[%s1 + $0x258] sm:$0xff]
  %v122 = vld [vmem:[%s1 + $0x260] sm:$0xff]
  %v123 = vld [vmem:[%s1 + $0x268] sm:$0xff]
  %v124 = vld [vmem:[%s1 + $0x270] sm:$0xff]
  %v125 = vld [vmem:[%s1 + $0x278] sm:$0xff]
  %v126 = vld [vmem:[%s1 + $0x280] sm:$0xff]
  %v127 = vld [vmem:[%s1 + $0x288] sm:$0xff]
  %v128 = vld [vmem:[%s1 + $0x290] sm:$0xff]
  %v129 = vld [vmem:[%s1 + $0x298] sm:$0xff]
  %v130 = vld [vmem:[%s1 + $0x2a0] sm:$0xff]
  %v131 = vld [vmem:[%s1 + $0x2a8] sm:$0xff]
  %v132 = vld [vmem:[%s1 + $0x2b0] sm:$0xff]
  %v133 = vld [vmem:[%s1 + $0x2b8] sm:$0xff]
  %v134 = vld [vmem:[%s1 + $0x2c0] sm:$0xff]
  %v135 = vld [vmem:[%s1 + $0x2c8] sm:$0xff]
  %v136 = vld [vmem:[%s1 + $0x2d0] sm:$0xff]
  %v137 = vld [vmem:[%s1 + $0x2d8] sm:$0xff]
  %v138 = vld [vmem:[%s1 + $0x2e0] sm:$0xff]
  %v139 = vld [vmem:[%s1 + $0x2e8] sm:$0xff]
  %v140 = vld [vmem:[%s1 + $0x2f0] sm:$0xff]
  %v141 = vld [vmem:[%s1 + $0x2f8] sm:$0xff]
  %v142 = vld [vmem:[%s1 + $0x300] sm:$0xff]
  %v143 = vld [vmem:[%s1 + $0x308] sm:$0xff]
  %v144 = vld [vmem:[%s1 + $0x310] sm:$0xff]
  %v145 = vld [vmem:[%s1 + $0x318] sm:$0xff]
  %v146 = vld [vmem:[%s1 + $0x320] sm:$0xff]
  %v147 = vld [vmem:[%s1 + $0x328] sm:$0xff]
  %v148 = vld [vmem:[%s1 + $0x330] sm:$0xff]
  %v149 = vld [vmem:[%s1 + $0x338] sm:$0xff]
  %v150 = vld [vmem:[%s1 + $0x340] sm:$0xff]
  %v151 = vld [vmem:[%s1 + $0x348] sm:$0xff]
  %v152 = vld [vmem:[%s1 + $0x350] sm:$0xff]
  %v153 = vld [vmem:[%s1 + $0x358] sm:$0xff]
  %v154 = vld [vmem:[%s1 + $0x360] sm:$0xff]
  %v155 = vld [vmem:[%s1 + $0x368] sm:$0xff]
  %v156 = vld [vmem:[%s1 + $0x370] sm:$0xff]
  %v157 = vld [vmem:[%s1 + $0x378] sm:$0xff]
  %v158 = vld [vmem:[%s1 + $0x380] sm:$0xff]
  %v159 = vld [vmem:[%s1 + $0x388] sm:$0xff]
  %v160 = vld [vmem:[%s1 + $0x390] sm:$0xff]
  %v161 = vld [vmem:[%s1 + $0x398] sm:$0xff]
  %v162 = vld [vmem:[%s1 + $0x3a0] sm:$0xff]
  %v163 = vld [vmem:[%s1 + $0x3a8] sm:$0xff]
  %v164 = vld [vmem:[%s1 + $0x3b0] sm:$0xff]
  %v165 = vld [vmem:[%s1 + $0x3b8] sm:$0xff]
  %v166 = vld [vmem:[%s1 + $0x3c0] sm:$0xff]
  %v167 = vld [vmem:[%s1 + $0x3c8] sm:$0xff]
  %v168 = vld [vmem:[%s1 + $0x3d0] sm:$0xff]
  %v169 = vld [vmem:[%s1 + $0x3d8] sm:$0xff]
  %v170 = vld [vmem:[%s1 + $0x3e0] sm:$0xff]
  %v171 = vld [vmem:[%s1 + $0x3e8] sm:$0xff]
  %v172 = vld [vmem:[%s1 + $0x3f0] sm:$0xff]
  %v173 = vld [vmem:[%s1 + $0x3f8] sm:$0xff]
  %v174 = vld [vmem:[%s1 + $0x400] sm:$0xff]
  %v175 = vld [vmem:[%s1 + $0x408] sm:$0xff]
  %v176 = vld [vmem:[%s1 + $0x410] sm:$0xff]
  %v177 = vld [vmem:[%s1 + $0x418] sm:$0xff]
  %v178 = vld [vmem:[%s1 + $0x420] sm:$0xff]
  %v179 = vld [vmem:[%s1 + $0x428] sm:$0xff]
  %v180 = vld [vmem:[%s1 + $0x430] sm:$0xff]
  %v181 = vld [vmem:[%s1 + $0x438] sm:$0xff]
  %v182 = vld [vmem:[%s1 + $0x440] sm:$0xff]
  %v183 = vld [vmem:[%s1 + $0x448] sm:$0xff]
  %v184 = vld [vmem:[%s1 + $0x450] sm:$0xff]
  %v185 = vld [vmem:[%s1 + $0x458] sm:$0xff]
  %v186 = vld [vmem:[%s1 + $0x460] sm:$0xff]
  %v187 = vld [vmem:[%s1 + $0x468] sm:$0xff]
  %v188 = vld [vmem:[%s1 + $0x470] sm:$0xff]
  %v189 = vld [vmem:[%s1 + $0x478] sm:$0xff]
  %v190 = vld [vmem:[%s1 + $0x480] sm:$0xff]
  %v191 = vld [vmem:[%s1 + $0x488] sm:$0xff]
  %v192 = vld [vmem:[%s1 + $0x490] sm:$0xff]
  %v193 = vld [vmem:[%s1 + $0x498] sm:$0xff]
  %v194 = vld [vmem:[%s1 + $0x4a0] sm:$0xff]
  %v195 = vld [vmem:[%s1 + $0x4a8] sm:$0xff]
  %v196 = vld [vmem:[%s1 + $0x4b0] sm:$0xff]
  %v197 = vld [vmem:[%s1 + $0x4b8] sm:$0xff]
  %v198 = vld [vmem:[%s1 + $0x4c0] sm:$0xff]
  %v199 = vld [vmem:[%s1 + $0x4c8] sm:$0xff]
  %v200 = vld [vmem:[%s1 + $0x4d0] sm:$0xff]
  %v201 = vld [vmem:[%s1 + $0x4d8] sm:$0xff]
  %v202 = vld [vmem:[%s1 + $0x4e0] sm:$0xff]
  %v203 = vld [vmem:[%s1 + $0x4e8] sm:$0xff]
  %v204 = vld [vmem:[%s1 + $0x4f0] sm:$0xff]
  %v205 = vld [vmem:[%s1 + $0x4f8] sm:$0xff]
  %v206 = vld [vmem:[%s1 + $0x500] sm:$0xff]
  %v207 = vld [vmem:[%s1 + $0x508] sm:$0xff]
  %v208 = vld [vmem:[%s1 + $0x510] sm:$0xff]
  %v209 = vld [vmem:[%s1 + $0x518] sm:$0xff]
  %v210 = vld [vmem:[%s1 + $0x520] sm:$0xff]
  %v211 = vld [vmem:[%s1 + $0x528] sm:$0xff]
  %v212 = vld [vmem:[%s1 + $0x530] sm:$0xff]
  %v213 = vld [vmem:[%s1 + $0x538] sm:$0xff]
  %v214 = vld [vmem:[%s1 + $0x540] sm:$0xff]
  %v215 = vld [vmem:[%s1 + $0x548] sm:$0xff]
  %v216 = vld [vmem:[%s1 + $0x550] sm:$0xff]
  %v217 = vld [vmem:[%s1 + $0x558] sm:$0xff]
  %v218 = vld [vmem:[%s1 + $0x560] sm:$0xff]
  %v219 = vld [vmem:[%s1 + $0x568] sm:$0xff]
  %v220 = vld [vmem:[%s1 + $0x570] sm:$0xff]
  %v221 = vld [vmem:[%s1 + $0x578] sm:$0xff]
  %v222 = vld [vmem:[%s1 + $0x580] sm:$0xff]
  %v223 = vld [vmem:[%s1 + $0x588] sm:$0xff]
  %v224 = vld [vmem:[%s1 + $0x590] sm:$0xff]
  %v225 = vld [vmem:[%s1 + $0x598] sm:$0xff]
  %v226 = vld [vmem:[%s1 + $0x5a0] sm:$0xff]
  %v227 = vld [vmem:[%s1 + $0x5a8] sm:$0xff]
  %v228 = vld [vmem:[%s1 + $0x5b0] sm:$0xff]
  %v229 = vld [vmem:[%s1 + $0x5b8] sm:$0xff]
  %v230 = vld [vmem:[%s1 + $0x5c0] sm:$0xff]
  %v231 = vld [vmem:[%s1 + $0x5c8] sm:$0xff]
  %v232 = vld [vmem:[%s1 + $0x5d0] sm:$0xff]
  %v233 = vld [vmem:[%s1 + $0x5d8] sm:$0xff]
  %v234 = vld [vmem:[%s1 + $0x5e0] sm:$0xff]
  %v235 = vld [vmem:[%s1 + $0x5e8] sm:$0xff]
  %v236 = vld [vmem:[%s1 + $0x5f0] sm:$0xff]
  %v237 = vld [vmem:[%s1 + $0x5f8] sm:$0xff]
  %v238 = vld [vmem:[%s1 + $0x600] sm:$0xff]
  %v239 = vld [vmem:[%s1 + $0x608] sm:$0xff]
  %v240 = vld [vmem:[%s1 + $0x610] sm:$0xff]
  %v241 = vld [vmem:[%s1 + $0x618] sm:$0xff]
  %v242 = vld [vmem:[%s1 + $0x620] sm:$0xff]
  %v243 = vld [vmem:[%s1 + $0x628] sm:$0xff]
  %v244 = vld [vmem:[%s1 + $0x630] sm:$0xff]
  %v245 = vld [vmem:[%s1 + $0x638] sm:$0xff]
  %v246 = vld [vmem:[%s1 + $0x640] sm:$0xff]
  %v247 = vld [vmem:[%s1 + $0x648] sm:$0xff]
  %v248 = vld [vmem:[%s1 + $0x650] sm:$0xff]
  %v249 = vld [vmem:[%s1 + $0x658] sm:$0xff]
  %v250 = vld [vmem:[%s1 + $0x660] sm:$0xff]
  %v251 = vld [vmem:[%s1 + $0x668] sm:$0xff]
  %v252 = vld [vmem:[%s1 + $0x670] sm:$0xff]
  %v253 = vld [vmem:[%s1 + $0x678] sm:$0xff]
  %v254 = vld [vmem:[%s1 + $0x680] sm:$0xff]
  %v255 = vld [vmem:[%s1 + $0x688] sm:$0xff]
  %v256 = vld [vmem:[%s1 + $0x690] sm:$0xff]
  %v257 = vld [vmem:[%s1 + $0x698] sm:$0xff]
  %v258 = vld [vmem:[%s1 + $0x6a0] sm:$0xff]
  %v259 = vld [vmem:[%s1 + $0x6a8] sm:$0xff]
  %v260 = vld [vmem:[%s1 + $0x6b0] sm:$0xff]
  %v261 = vld [vmem:[%s1 + $0x6b8] sm:$0xff]
  %v262 = vld [vmem:[%s1 + $0x6c0] sm:$0xff]
  %v263 = vld [vmem:[%s1 + $0x6c8] sm:$0xff]
  %v264 = vld [vmem:[%s1 + $0x6d0] sm:$0xff]
  %v265 = vld [vmem:[%s1 + $0x6d8] sm:$0xff]
  %v266 = vld [vmem:[%s1 + $0x6e0] sm:$0xff]
  %v267 = vld [vmem:[%s1 + $0x6e8] sm:$0xff]
  %v268 = vld [vmem:[%s1 + $0x6f0] sm:$0xff]
  %v269 = vld [vmem:[%s1 + $0x6f8] sm:$0xff]
  %v270 = vld [vmem:[%s1 + $0x700] sm:$0xff]
  %v271 = vld [vmem:[%s1 + $0x708] sm:$0xff]
  %v272 = vld [vmem:[%s1 + $0x710] sm:$0xff]
  %v273 = vld [vmem:[%s1 + $0x718] sm:$0xff]
  %v274 = vld [vmem:[%s1 + $0x720] sm:$0xff]
  %v275 = vld [vmem:[%s1 + $0x728] sm:$0xff]
  %v276 = vld [vmem:[%s1 + $0x730] sm:$0xff]
  %v277 = vld [vmem:[%s1 + $0x738] sm:$0xff]
  %v278 = vld [vmem:[%s1 + $0x740] sm:$0xff]
  %v279 = vld [vmem:[%s1 + $0x748] sm:$0xff]
  %v280 = vld [vmem:[%s1 + $0x750] sm:$0xff]
  %v281 = vld [vmem:[%s1 + $0x758] sm:$0xff]
  %v282 = vld [vmem:[%s1 + $0x760] sm:$0xff]
  %v283 = vld [vmem:[%s1 + $0x768] sm:$0xff]
  %v284 = vld [vmem:[%s1 + $0x770] sm:$0xff]
  %v285 = vld [vmem:[%s1 + $0x778] sm:$0xff]
  %v286 = vld [vmem:[%s1 + $0x780] sm:$0xff]
  %v287 = vld [vmem:[%s1 + $0x788] sm:$0xff]
  %v288 = vld [vmem:[%s1 + $0x790] sm:$0xff]
  %v289 = vld [vmem:[%s1 + $0x798] sm:$0xff]
  %v290 = vld [vmem:[%s1 + $0x7a0] sm:$0xff]
  %v291 = vld [vmem:[%s1 + $0x7a8] sm:$0xff]
  %v292 = vld [vmem:[%s1 + $0x7b0] sm:$0xff]
  %v293 = vld [vmem:[%s1 + $0x7b8] sm:$0xff]
  %v294 = vld [vmem:[%s1 + $0x7c0] sm:$0xff]
  %v295 = vld [vmem:[%s1 + $0x7c8] sm:$0xff]
  %v296 = vld [vmem:[%s1 + $0x7d0] sm:$0xff]
  %v297 = vld [vmem:[%s1 + $0x7d8] sm:$0xff]
  %v298 = vld [vmem:[%s1 + $0x7e0] sm:$0xff]
  %v299 = vld [vmem:[%s1 + $0x7e8] sm:$0xff]
  %v300 = vld [vmem:[%s1 + $0x7f0] sm:$0xff]
  %v301 = vld [vmem:[%s1 + $0x7f8] sm:$0xff]
  %v302 = vld [vmem:[%s1 + $0x800] sm:$0xff]
  %v303 = vld [vmem:[%s1 + $0x808] sm:$0xff]
  %v304 = vld [vmem:[%s1 + $0x810] sm:$0xff]
  %v305 = vld [vmem:[%s1 + $0x818] sm:$0xff]
  %v306 = vld [vmem:[%s1 + $0x820] sm:$0xff]
  %v307 = vld [vmem:[%s1 + $0x828] sm:$0xff]
  %v308 = vld [vmem:[%s1 + $0x830] sm:$0xff]
  %v309 = vld [vmem:[%s1 + $0x838] sm:$0xff]
  %v310 = vld [vmem:[%s1 + $0x840] sm:$0xff]
  %v311 = vld [vmem:[%s1 + $0x848] sm:$0xff]
  %v312 = vld [vmem:[%s1 + $0x850] sm:$0xff]
  %v313 = vld [vmem:[%s1 + $0x858] sm:$0xff]
  %v314 = vld [vmem:[%s1 + $0x860] sm:$0xff]
  %v315 = vld [vmem:[%s1 + $0x868] sm:$0xff]
  %v316 = vld [vmem:[%s1 + $0x870] sm:$0xff]
  %v317 = vld [vmem:[%s1 + $0x878] sm:$0xff]
  %v318 = vld [vmem:[%s1 + $0x880] sm:$0xff]
  %v319 = vld [vmem:[%s1 + $0x888] sm:$0xff]
  %v320 = vld [vmem:[%s1 + $0x890] sm:$0xff]
  %v321 = vld [vmem:[%s1 + $0x898] sm:$0xff]
  %v322 = vld [vmem:[%s1 + $0x8a0] sm:$0xff]
  %v323 = vld [vmem:[%s1 + $0x8a8] sm:$0xff]
  %v324 = vld [vmem:[%s1 + $0x8b0] sm:$0xff]
  %v325 = vld [vmem:[%s1 + $0x8b8] sm:$0xff]
  %v326 = vld [vmem:[%s1 + $0x8c0] sm:$0xff]
  %v327 = vld [vmem:[%s1 + $0x8c8] sm:$0xff]
  %v328 = vld [vmem:[%s1 + $0x8d0] sm:$0xff]
  %v329 = vld [vmem:[%s1 + $0x8d8] sm:$0xff]
  %v330 = vld [vmem:[%s1 + $0x8e0] sm:$0xff]
  %v331 = vld [vmem:[%s1 + $0x8e8] sm:$0xff]
  %v332 = vld [vmem:[%s1 + $0x8f0] sm:$0xff]
  %v333 = vld [vmem:[%s1 + $0x8f8] sm:$0xff]
  %v334 = vld [vmem:[%s1 + $0x900] sm:$0xff]
  %v335 = vld [vmem:[%s1 + $0x908] sm:$0xff]
  %v336 = vld [vmem:[%s1 + $0x910] sm:$0xff]
  %v337 = vld [vmem:[%s1 + $0x918] sm:$0xff]
  %v338 = vld [vmem:[%s1 + $0x920] sm:$0xff]
  %v339 = vld [vmem:[%s1 + $0x928] sm:$0xff]
  %v340 = vld [vmem:[%s1 + $0x930] sm:$0xff]
  %v341 = vld [vmem:[%s1 + $0x938] sm:$0xff]
  %v342 = vld [vmem:[%s1 + $0x940] sm:$0xff]
  %v343 = vld [vmem:[%s1 + $0x948] sm:$0xff]
  %v344 = vld [vmem:[%s1 + $0x950] sm:$0xff]
  %v345 = vld [vmem:[%s1 + $0x958] sm:$0xff]
  %v346 = vld [vmem:[%s1 + $0x960] sm:$0xff]
  %v347 = vld [vmem:[%s1 + $0x968] sm:$0xff]
  %v348 = vld [vmem:[%s1 + $0x970] sm:$0xff]
  %v349 = vld [vmem:[%s1 + $0x978] sm:$0xff]
  %v350 = vld [vmem:[%s1 + $0x980] sm:$0xff]
  %v351 = vld [vmem:[%s1 + $0x988] sm:$0xff]
  %v352 = vld [vmem:[%s1 + $0x990] sm:$0xff]
  %v353 = vld [vmem:[%s1 + $0x998] sm:$0xff]
  %v354 = vld [vmem:[%s1 + $0x9a0] sm:$0xff]
  %v355 = vld [vmem:[%s1 + $0x9a8] sm:$0xff]
  %v356 = vld [vmem:[%s1 + $0x9b0] sm:$0xff]
  %v357 = vld [vmem:[%s1 + $0x9b8] sm:$0xff]
  %v358 = vld [vmem:[%s1 + $0x9c0] sm:$0xff]
  %v359 = vld [vmem:[%s1 + $0x9c8] sm:$0xff]
  %v360 = vld [vmem:[%s1 + $0x9d0] sm:$0xff]
  %v361 = vld [vmem:[%s1 + $0x9d8] sm:$0xff]
  %v362 = vld [vmem:[%s1 + $0x9e0] sm:$0xff]
  %v363 = vld [vmem:[%s1 + $0x9e8] sm:$0xff]
  %v364 = vld [vmem:[%s1 + $0x9f0] sm:$0xff]
  %v365 = vld [vmem:[%s1 + $0x9f8] sm:$0xff]
  %v366 = vld [vmem:[%s1 + $0xa00] sm:$0xff]
  %v367 = vld [vmem:[%s1 + $0xa08] sm:$0xff]
  %v368 = vld [vmem:[%s1 + $0xa10] sm:$0xff]
  %v369 = vld [vmem:[%s1 + $0xa18] sm:$0xff]
  %v370 = vld [vmem:[%s1 + $0xa20] sm:$0xff]
  %v371 = vld [vmem:[%s1 + $0xa28] sm:$0xff]
  %v372 = vld [vmem:[%s1 + $0xa30] sm:$0xff]
  %v373 = vld [vmem:[%s1 + $0xa38] sm:$0xff]
  %v374 = vld [vmem:[%s1 + $0xa40] sm:$0xff]
  %v375 = vld [vmem:[%s1 + $0xa48] sm:$0xff]
  %v376 = vld [vmem:[%s1 + $0xa50] sm:$0xff]
  %v377 = vld [vmem:[%s1 + $0xa58] sm:$0xff]
  %v378 = vld [vmem:[%s1 + $0xa60] sm:$0xff]
  %v379 = vld [vmem:[%s1 + $0xa68] sm:$0xff]
  %v380 = vld [vmem:[%s1 + $0xa70] sm:$0xff]
  %v381 = vld [vmem:[%s1 + $0xa78] sm:$0xff]
  %v382 = vld [vmem:[%s1 + $0xa80] sm:$0xff]
  %v383 = vld [vmem:[%s1 + $0xa88] sm:$0xff]
  %v384 = vld [vmem:[%s1 + $0xa90] sm:$0xff]
  %v385 = vld [vmem:[%s1 + $0xa98] sm:$0xff]
  %v386 = vld [vmem:[%s1 + $0xaa0] sm:$0xff]
  %v387 = vld [vmem:[%s1 + $0xaa8] sm:$0xff]
  %v388 = vld [vmem:[%s1 + $0xab0] sm:$0xff]
  %v389 = vld [vmem:[%s1 + $0xab8] sm:$0xff]
  %v390 = vld [vmem:[%s1 + $0xac0] sm:$0xff]
  %v391 = vld [vmem:[%s1 + $0xac8] sm:$0xff]
  %v392 = vld [vmem:[%s1 + $0xad0] sm:$0xff]
  %v393 = vld [vmem:[%s1 + $0xad8] sm:$0xff]
  %v394 = vld [vmem:[%s1 + $0xae0] sm:$0xff]
  %v395 = vld [vmem:[%s1 + $0xae8] sm:$0xff]
  %v396 = vld [vmem:[%s1 + $0xaf0] sm:$0xff]
  %v397 = vld [vmem:[%s1 + $0xaf8] sm:$0xff]
  %v398 = vld [vmem:[%s1 + $0xb00] sm:$0xff]
  %v399 = vld [vmem:[%s1 + $0xb08] sm:$0xff]
  %v400 = vld [vmem:[%s1 + $0xb10] sm:$0xff]
  %v401 = vld [vmem:[%s1 + $0xb18] sm:$0xff]
  %v402 = vld [vmem:[%s1 + $0xb20] sm:$0xff]
  %v403 = vld [vmem:[%s1 + $0xb28] sm:$0xff]
  %v404 = vld [vmem:[%s1 + $0xb30] sm:$0xff]
  %v405 = vld [vmem:[%s1 + $0xb38] sm:$0xff]
  %v406 = vld [vmem:[%s1 + $0xb40] sm:$0xff]
  %v407 = vld [vmem:[%s1 + $0xb48] sm:$0xff]
  %v408 = vld [vmem:[%s1 + $0xb50] sm:$0xff]
  %v409 = vld [vmem:[%s1 + $0xb58] sm:$0xff]
  %v410 = vld [vmem:[%s1 + $0xb60] sm:$0xff]
  %v411 = vld [vmem:[%s1 + $0xb68] sm:$0xff]
  %v412 = vld [vmem:[%s1 + $0xb70] sm:$0xff]
  %v413 = vld [vmem:[%s1 + $0xb78] sm:$0xff]
  %v414 = vld [vmem:[%s1 + $0xb80] sm:$0xff]
  %v415 = vld [vmem:[%s1 + $0xb88] sm:$0xff]
  %v416 = vld [vmem:[%s1 + $0xb90] sm:$0xff]
  %v417 = vld [vmem:[%s1 + $0xb98] sm:$0xff]
  %v418 = vld [vmem:[%s1 + $0xba0] sm:$0xff]
  %v419 = vld [vmem:[%s1 + $0xba8] sm:$0xff]
  %v420 = vld [vmem:[%s1 + $0xbb0] sm:$0xff]
  %v421 = vld [vmem:[%s1 + $0xbb8] sm:$0xff]
  %v422 = vld [vmem:[%s1 + $0xbc0] sm:$0xff]
  %v423 = vld [vmem:[%s1 + $0xbc8] sm:$0xff]
  %v424 = vld [vmem:[%s1 + $0xbd0] sm:$0xff]
  %v425 = vld [vmem:[%s1 + $0xbd8] sm:$0xff]
  %v426 = vld [vmem:[%s1 + $0xbe0] sm:$0xff]
  %v427 = vld [vmem:[%s1 + $0xbe8] sm:$0xff]
  %v428 = vld [vmem:[%s1 + $0xbf0] sm:$0xff]
  %v429 = vld [vmem:[%s1 + $0xbf8] sm:$0xff]
  %v430 = vld [vmem:[%s1 + $0xc00] sm:$0xff]
  %v431 = vld [vmem:[%s1 + $0xc08] sm:$0xff]
  %v432 = vld [vmem:[%s1 + $0xc10] sm:$0xff]
  %v433 = vld [vmem:[%s1 + $0xc18] sm:$0xff]
  %v434 = vld [vmem:[%s1 + $0xc20] sm:$0xff]
  %v435 = vld [vmem:[%s1 + $0xc28] sm:$0xff]
  %v436 = vld [vmem:[%s1 + $0xc30] sm:$0xff]
  %v437 = vld [vmem:[%s1 + $0xc38] sm:$0xff]
  %v438 = vld [vmem:[%s1 + $0xc40] sm:$0xff]
  %v439 = vld [vmem:[%s1 + $0xc48] sm:$0xff]
  %v440 = vld [vmem:[%s1 + $0xc50] sm:$0xff]
  %v441 = vld [vmem:[%s1 + $0xc58] sm:$0xff]
  %v442 = vld [vmem:[%s1 + $0xc60] sm:$0xff]
  %v443 = vld [vmem:[%s1 + $0xc68] sm:$0xff]
  %v444 = vld [vmem:[%s1 + $0xc70] sm:$0xff]
  %v445 = vld [vmem:[%s1 + $0xc78] sm:$0xff]
  %v446 = vld [vmem:[%s1 + $0xc80] sm:$0xff]
  %v447 = vld [vmem:[%s1 + $0xc88] sm:$0xff]
  %v448 = vld [vmem:[%s1 + $0xc90] sm:$0xff]
  %v449 = vld [vmem:[%s1 + $0xc98] sm:$0xff]
  %v450 = vld [vmem:[%s1 + $0xca0] sm:$0xff]
  %v451 = vld [vmem:[%s1 + $0xca8] sm:$0xff]
  %v452 = vld [vmem:[%s1 + $0xcb0] sm:$0xff]
  %v453 = vld [vmem:[%s1 + $0xcb8] sm:$0xff]
  %v454 = vld [vmem:[%s1 + $0xcc0] sm:$0xff]
  %v455 = vld [vmem:[%s1 + $0xcc8] sm:$0xff]
  %v456 = vld [vmem:[%s1 + $0xcd0] sm:$0xff]
  %v457 = vld [vmem:[%s1 + $0xcd8] sm:$0xff]
  %v458 = vld [vmem:[%s1 + $0xce0] sm:$0xff]
  %v459 = vld [vmem:[%s1 + $0xce8] sm:$0xff]
  %v460 = vld [vmem:[%s1 + $0xcf0] sm:$0xff]
  %v461 = vld [vmem:[%s1 + $0xcf8] sm:$0xff]
  %v462 = vld [vmem:[%s1 + $0xd00] sm:$0xff]
  %v463 = vld [vmem:[%s1 + $0xd08] sm:$0xff]
  %v464 = vld [vmem:[%s1 + $0xd10] sm:$0xff]
  %v465 = vld [vmem:[%s1 + $0xd18] sm:$0xff]
  %v466 = vld [vmem:[%s1 + $0xd20] sm:$0xff]
  %v467 = vld [vmem:[%s1 + $0xd28] sm:$0xff]
  %v468 = vld [vmem:[%s1 + $0xd30] sm:$0xff]
  %v469 = vld [vmem:[%s1 + $0xd38] sm:$0xff]
  %v470 = vld [vmem:[%s1 + $0xd40] sm:$0xff]
  %v471 = vld [vmem:[%s1 + $0xd48] sm:$0xff]
  %v472 = vld [vmem:[%s1 + $0xd50] sm:$0xff]
  %v473 = vld [vmem:[%s1 + $0xd58] sm:$0xff]
  %v474 = vld [vmem:[%s1 + $0xd60] sm:$0xff]
  %v475 = vld [vmem:[%s1 + $0xd68] sm:$0xff]
  %v476 = vld [vmem:[%s1 + $0xd70] sm:$0xff]
  %v477 = vld [vmem:[%s1 + $0xd78] sm:$0xff]
  %v478 = vld [vmem:[%s1 + $0xd80] sm:$0xff]
  %v479 = vld [vmem:[%s1 + $0xd88] sm:$0xff]
  %v480 = vld [vmem:[%s1 + $0xd90] sm:$0xff]
  %v481 = vld [vmem:[%s1 + $0xd98] sm:$0xff]
  %v482 = vld [vmem:[%s1 + $0xda0] sm:$0xff]
  %v483 = vld [vmem:[%s1 + $0xda8] sm:$0xff]
  %v484 = vld [vmem:[%s1 + $0xdb0] sm:$0xff]
  %v485 = vld [vmem:[%s1 + $0xdb8] sm:$0xff]
  %v486 = vld [vmem:[%s1 + $0xdc0] sm:$0xff]
  %v487 = vld [vmem:[%s1 + $0xdc8] sm:$0xff]
  %v488 = vld [vmem:[%s1 + $0xdd0] sm:$0xff]
  %v489 = vld [vmem:[%s1 + $0xdd8] sm:$0xff]
  %v490 = vld [vmem:[%s1 + $0xde0] sm:$0xff]
  %v491 = vld [vmem:[%s1 + $0xde8] sm:$0xff]
  %v492 = vld [vmem:[%s1 + $0xdf0] sm:$0xff]
  %v493 = vld [vmem:[%s1 + $0xdf8] sm:$0xff]
  %v494 = vld [vmem:[%s1 + $0xe00] sm:$0xff]
  %v495 = vld [vmem:[%s1 + $0xe08] sm:$0xff]
  %v496 = vld [vmem:[%s1 + $0xe10] sm:$0xff]
  %v497 = vld [vmem:[%s1 + $0xe18] sm:$0xff]
  %v498 = vld [vmem:[%s1 + $0xe20] sm:$0xff]
  %v499 = vld [vmem:[%s1 + $0xe28] sm:$0xff]
  %v500 = vld [vmem:[%s1 + $0xe30] sm:$0xff]
  %v501 = vld [vmem:[%s1 + $0xe38] sm:$0xff]
  %v502 = vld [vmem:[%s1 + $0xe40] sm:$0xff]
  %v503 = vld [vmem:[%s1 + $0xe48] sm:$0xff]
  %v504 = vld [vmem:[%s1 + $0xe50] sm:$0xff]
  %v505 = vld [vmem:[%s1 + $0xe58] sm:$0xff]
  %v506 = vld [vmem:[%s1 + $0xe60] sm:$0xff]
  %v507 = vld [vmem:[%s1 + $0xe68] sm:$0xff]
  %v508 = vld [vmem:[%s1 + $0xe70] sm:$0xff]
  %v509 = vld [vmem:[%s1 + $0xe78] sm:$0xff]
  %v510 = vld [vmem:[%s1 + $0xe80] sm:$0xff]
  %v511 = vld [vmem:[%s1 + $0xe88] sm:$0xff]
  %v512 = vld [vmem:[%s1 + $0xe90] sm:$0xff]
  %v513 = vld [vmem:[%s1 + $0xe98] sm:$0xff]
  %v514 = vld [vmem:[%s1 + $0xea0] sm:$0xff]
  %v515 = vld [vmem:[%s1 + $0xea8] sm:$0xff]
  %v516 = vld [vmem:[%s1 + $0xeb0] sm:$0xff]
  %v517 = vld [vmem:[%s1 + $0xeb8] sm:$0xff]
  %v518 = vld [vmem:[%s1 + $0xec0] sm:$0xff]
  %v519 = vld [vmem:[%s1 + $0xec8] sm:$0xff]
  %v520 = vld [vmem:[%s1 + $0xed0] sm:$0xff]
  %v521 = vld [vmem:[%s1 + $0xed8] sm:$0xff]
  %v522 = vld [vmem:[%s1 + $0xee0] sm:$0xff]
  %v523 = vld [vmem:[%s1 + $0xee8] sm:$0xff]
  %v524 = vld [vmem:[%s1 + $0xef0] sm:$0xff]
  %v525 = vld [vmem:[%s1 + $0xef8] sm:$0xff]
  %v526 = vld [vmem:[%s1 + $0xf00] sm:$0xff]
  %v527 = vld [vmem:[%s1 + $0xf08] sm:$0xff]
  %v528 = vld [vmem:[%s1 + $0xf10] sm:$0xff]
  %v529 = vld [vmem:[%s1 + $0xf18] sm:$0xff]
  %v530 = vld [vmem:[%s1 + $0xf20] sm:$0xff]
  %v531 = vld [vmem:[%s1 + $0xf28] sm:$0xff]
  %v532 = vld [vmem:[%s1 + $0xf30] sm:$0xff]
  %v533 = vld [vmem:[%s1 + $0xf38] sm:$0xff]
  %v534 = vld [vmem:[%s1 + $0xf40] sm:$0xff]
  %v535 = vld [vmem:[%s1 + $0xf48] sm:$0xff]
  %v536 = vld [vmem:[%s1 + $0xf50] sm:$0xff]
  %v537 = vld [vmem:[%s1 + $0xf58] sm:$0xff]
  %v538 = vld [vmem:[%s1 + $0xf60] sm:$0xff]
  %v539 = vld [vmem:[%s1 + $0xf68] sm:$0xff]
  %v540 = vld [vmem:[%s1 + $0xf70] sm:$0xff]
  %v541 = vld [vmem:[%s1 + $0xf78] sm:$0xff]
  %v542 = vld [vmem:[%s1 + $0xf80] sm:$0xff]
  %v543 = vld [vmem:[%s1 + $0xf88] sm:$0xff]
  %v544 = vld [vmem:[%s1 + $0xf90] sm:$0xff]
  %v545 = vld [vmem:[%s1 + $0xf98] sm:$0xff]
  %v546 = vld [vmem:[%s1 + $0xfa0] sm:$0xff]
  %v547 = vld [vmem:[%s1 + $0xfa8] sm:$0xff]
  %v548 = vld [vmem:[%s1 + $0xfb0] sm:$0xff]
  %v549 = vld [vmem:[%s1 + $0xfb8] sm:$0xff]
  %v550 = vld [vmem:[%s1 + $0xfc0] sm:$0xff]
  %v551 = vld [vmem:[%s1 + $0xfc8] sm:$0xff]
  %v552 = vld [vmem:[%s1 + $0xfd0] sm:$0xff]
  %v553 = vld [vmem:[%s1 + $0xfd8] sm:$0xff]
  %v554 = vld [vmem:[%s1 + $0xfe0] sm:$0xff]
  %v555 = vld [vmem:[%s1 + $0xfe8] sm:$0xff]
  %v556 = vld [vmem:[%s1 + $0xff0] sm:$0xff]
  %v557 = vld [vmem:[%s1 + $0xff8] sm:$0xff]
  %v558 = vld [vmem:[%s1 + $0x1000] sm:$0xff]
  %v559 = vld [vmem:[%s1 + $0x1008] sm:$0xff]
  %v560 = vld [vmem:[%s1 + $0x1010] sm:$0xff]
  %v561 = vld [vmem:[%s1 + $0x1018] sm:$0xff]
  %v562 = vld [vmem:[%s1 + $0x1020] sm:$0xff]
  %v563 = vld [vmem:[%s1 + $0x1028] sm:$0xff]
  %v564 = vld [vmem:[%s1 + $0x1030] sm:$0xff]
  %v565 = vld [vmem:[%s1 + $0x1038] sm:$0xff]
  %v566 = vld [vmem:[%s1 + $0x1040] sm:$0xff]
  %v567 = vld [vmem:[%s1 + $0x1048] sm:$0xff]
  %v568 = vld [vmem:[%s1 + $0x1050] sm:$0xff]
  %v569 = vld [vmem:[%s1 + $0x1058] sm:$0xff]
  %v570 = vld [vmem:[%s1 + $0x1060] sm:$0xff]
  %v571 = vld [vmem:[%s1 + $0x1068] sm:$0xff]
  %v572 = vld [vmem:[%s1 + $0x1070] sm:$0xff]
  %v573 = vld [vmem:[%s1 + $0x1078] sm:$0xff]
  %v574 = vld [vmem:[%s1 + $0x1080] sm:$0xff]
  %v575 = vld [vmem:[%s1 + $0x1088] sm:$0xff]
  %v576 = vld [vmem:[%s1 + $0x1090] sm:$0xff]
  %v577 = vld [vmem:[%s1 + $0x1098] sm:$0xff]
  %v578 = vld [vmem:[%s1 + $0x10a0] sm:$0xff]
  %v579 = vld [vmem:[%s1 + $0x10a8] sm:$0xff]
  %v580 = vld [vmem:[%s1 + $0x10b0] sm:$0xff]
  %v581 = vld [vmem:[%s1 + $0x10b8] sm:$0xff]
  %v582 = vld [vmem:[%s1 + $0x10c0] sm:$0xff]
  %v583 = vld [vmem:[%s1 + $0x10c8] sm:$0xff]
  %v584 = vld [vmem:[%s1 + $0x10d0] sm:$0xff]
  %v585 = vld [vmem:[%s1 + $0x10d8] sm:$0xff]
  %v586 = vld [vmem:[%s1 + $0x10e0] sm:$0xff]
  %v587 = vld [vmem:[%s1 + $0x10e8] sm:$0xff]
  %v588 = vld [vmem:[%s1 + $0x10f0] sm:$0xff]
  %v589 = vld [vmem:[%s1 + $0x10f8] sm:$0xff]
  %v590 = vld [vmem:[%s1 + $0x1100] sm:$0xff]
  %v591 = vld [vmem:[%s1 + $0x1108] sm:$0xff]
  %v592 = vld [vmem:[%s1 + $0x1110] sm:$0xff]
  %v593 = vld [vmem:[%s1 + $0x1118] sm:$0xff]
  %v594 = vld [vmem:[%s1 + $0x1120] sm:$0xff]
  %v595 = vld [vmem:[%s1 + $0x1128] sm:$0xff]
  %v596 = vld [vmem:[%s1 + $0x1130] sm:$0xff]
  %v597 = vld [vmem:[%s1 + $0x1138] sm:$0xff]
  %v598 = vld [vmem:[%s1 + $0x1140] sm:$0xff]
  %v599 = vld [vmem:[%s1 + $0x1148] sm:$0xff]
  %v600 = vld [vmem:[%s1 + $0x1150] sm:$0xff]
  %v601 = vld [vmem:[%s1 + $0x1158] sm:$0xff]
  %v602 = vld [vmem:[%s1 + $0x1160] sm:$0xff]
  %v603 = vld [vmem:[%s1 + $0x1168] sm:$0xff]
  %v604 = vld [vmem:[%s1 + $0x1170] sm:$0xff]
  %v605 = vld [vmem:[%s1 + $0x1178] sm:$0xff]
  %v606 = vld [vmem:[%s1 + $0x1180] sm:$0xff]
  %v607 = vld [vmem:[%s1 + $0x1188] sm:$0xff]
  %v608 = vld [vmem:[%s1 + $0x1190] sm:$0xff]
  %v609 = vld [vmem:[%s1 + $0x1198] sm:$0xff]
  %v610 = vld [vmem:[%s1 + $0x11a0] sm:$0xff]
  %v611 = vld [vmem:[%s1 + $0x11a8] sm:$0xff]
  %v612 = vld [vmem:[%s1 + $0x11b0] sm:$0xff]
  %v613 = vld [vmem:[%s1 + $0x11b8] sm:$0xff]
  %v614 = vld [vmem:[%s1 + $0x11c0] sm:$0xff]
  %v615 = vld [vmem:[%s1 + $0x11c8] sm:$0xff]
  %v616 = vld [vmem:[%s1 + $0x11d0] sm:$0xff]
  %v617 = vld [vmem:[%s1 + $0x11d8] sm:$0xff]
  %v618 = vld [vmem:[%s1 + $0x11e0] sm:$0xff]
  %v619 = vld [vmem:[%s1 + $0x11e8] sm:$0xff]
  %v620 = vld [vmem:[%s1 + $0x11f0] sm:$0xff]
  %v621 = vld [vmem:[%s1 + $0x11f8] sm:$0xff]
  %v622 = vld [vmem:[%s1 + $0x1200] sm:$0xff]
  %v623 = vld [vmem:[%s1 + $0x1208] sm:$0xff]
  %v624 = vld [vmem:[%s1 + $0x1210] sm:$0xff]
  %v625 = vld [vmem:[%s1 + $0x1218] sm:$0xff]
  %v626 = vld [vmem:[%s1 + $0x1220] sm:$0xff]
  %v627 = vld [vmem:[%s1 + $0x1228] sm:$0xff]
  %v628 = vld [vmem:[%s1 + $0x1230] sm:$0xff]
  %v629 = vld [vmem:[%s1 + $0x1238] sm:$0xff]
  %v630 = vld [vmem:[%s1 + $0x1240] sm:$0xff]
  %v631 = vld [vmem:[%s1 + $0x1248] sm:$0xff]
  %v632 = vld [vmem:[%s1 + $0x1250] sm:$0xff]
  %v633 = vld [vmem:[%s1 + $0x1258] sm:$0xff]
  %v634 = vld [vmem:[%s1 + $0x1260] sm:$0xff]
  %v635 = vld [vmem:[%s1 + $0x1268] sm:$0xff]
  %v636 = vld [vmem:[%s1 + $0x1270] sm:$0xff]
  %v637 = vld [vmem:[%s1 + $0x1278] sm:$0xff]
  %v638 = vld [vmem:[%s1 + $0x1280] sm:$0xff]
  %v639 = vld [vmem:[%s1 + $0x1288] sm:$0xff]
  %v640 = vld [vmem:[%s1 + $0x1290] sm:$0xff]
  %v641 = vld [vmem:[%s1 + $0x1298] sm:$0xff]
  %v642 = vld [vmem:[%s1 + $0x12a0] sm:$0xff]
  %v643 = vld [vmem:[%s1 + $0x12a8] sm:$0xff]
  %v644 = vld [vmem:[%s1 + $0x12b0] sm:$0xff]
  %v645 = vld [vmem:[%s1 + $0x12b8] sm:$0xff]
  %v646 = vld [vmem:[%s1 + $0x12c0] sm:$0xff]
  %v647 = vld [vmem:[%s1 + $0x12c8] sm:$0xff]
  %v648 = vld [vmem:[%s1 + $0x12d0] sm:$0xff]
  %v649 = vld [vmem:[%s1 + $0x12d8] sm:$0xff]
  %v650 = vld [vmem:[%s1 + $0x12e0] sm:$0xff]
  %v651 = vld [vmem:[%s1 + $0x12e8] sm:$0xff]
  %v652 = vld [vmem:[%s1 + $0x12f0] sm:$0xff]
  %v653 = vld [vmem:[%s1 + $0x12f8] sm:$0xff]
  %v654 = vld [vmem:[%s1 + $0x1300] sm:$0xff]
  %v655 = vld [vmem:[%s1 + $0x1308] sm:$0xff]
  %v656 = vld [vmem:[%s1 + $0x1310] sm:$0xff]
  %v657 = vld [vmem:[%s1 + $0x1318] sm:$0xff]
  %v658 = vld [vmem:[%s1 + $0x1320] sm:$0xff]
  %v659 = vld [vmem:[%s1 + $0x1328] sm:$0xff]
  %v660 = vld [vmem:[%s1 + $0x1330] sm:$0xff]
  %v661 = vld [vmem:[%s1 + $0x1338] sm:$0xff]
  %v662 = vld [vmem:[%s1 + $0x1340] sm:$0xff]
  %v663 = vld [vmem:[%s1 + $0x1348] sm:$0xff]
  %v664 = vld [vmem:[%s1 + $0x1350] sm:$0xff]
  %v665 = vld [vmem:[%s1 + $0x1358] sm:$0xff]
  %v666 = vld [vmem:[%s1 + $0x1360] sm:$0xff]
  %v667 = vld [vmem:[%s1 + $0x1368] sm:$0xff]
  %v668 = vld [vmem:[%s1 + $0x1370] sm:$0xff]
  %v669 = vld [vmem:[%s1 + $0x1378] sm:$0xff]
  %v670 = vld [vmem:[%s1 + $0x1380] sm:$0xff]
  %v671 = vld [vmem:[%s1 + $0x1388] sm:$0xff]
  %v672 = vld [vmem:[%s1 + $0x1390] sm:$0xff]
  %v673 = vld [vmem:[%s1 + $0x1398] sm:$0xff]
  %v674 = vld [vmem:[%s1 + $0x13a0] sm:$0xff]
  %v675 = vld [vmem:[%s1 + $0x13a8] sm:$0xff]
  %v676 = vld [vmem:[%s1 + $0x13b0] sm:$0xff]
  %v677 = vld [vmem:[%s1 + $0x13b8] sm:$0xff]
  %v678 = vld [vmem:[%s1 + $0x13c0] sm:$0xff]
  %v679 = vld [vmem:[%s1 + $0x13c8] sm:$0xff]
  %v680 = vld [vmem:[%s1 + $0x13d0] sm:$0xff]
  %v681 = vld [vmem:[%s1 + $0x13d8] sm:$0xff]
  %v682 = vld [vmem:[%s1 + $0x13e0] sm:$0xff]
  %v683 = vld [vmem:[%s1 + $0x13e8] sm:$0xff]
  %v684 = vld [vmem:[%s1 + $0x13f0] sm:$0xff]
  %v685 = vld [vmem:[%s1 + $0x13f8] sm:$0xff]
  %v686 = vld [vmem:[%s1 + $0x1400] sm:$0xff]
  %v687 = vld [vmem:[%s1 + $0x1408] sm:$0xff]
  %v688 = vld [vmem:[%s1 + $0x1410] sm:$0xff]
  %v689 = vld [vmem:[%s1 + $0x1418] sm:$0xff]
  %v690 = vld [vmem:[%s1 + $0x1420] sm:$0xff]
  %v691 = vld [vmem:[%s1 + $0x1428] sm:$0xff]
  %v692 = vld [vmem:[%s1 + $0x1430] sm:$0xff]
  %v693 = vld [vmem:[%s1 + $0x1438] sm:$0xff]
  %v694 = vld [vmem:[%s1 + $0x1440] sm:$0xff]
  %v695 = vld [vmem:[%s1 + $0x1448] sm:$0xff]
  %v696 = vld [vmem:[%s1 + $0x1450] sm:$0xff]
  %v697 = vld [vmem:[%s1 + $0x1458] sm:$0xff]
  %v698 = vld [vmem:[%s1 + $0x1460] sm:$0xff]
  %v699 = vld [vmem:[%s1 + $0x1468] sm:$0xff]
  %v700 = vld [vmem:[%s1 + $0x1470] sm:$0xff]
  %v701 = vld [vmem:[%s1 + $0x1478] sm:$0xff]
  %v702 = vld [vmem:[%s1 + $0x1480] sm:$0xff]
  %v703 = vld [vmem:[%s1 + $0x1488] sm:$0xff]
  %v704 = vld [vmem:[%s1 + $0x1490] sm:$0xff]
  %v705 = vld [vmem:[%s1 + $0x1498] sm:$0xff]
  %v706 = vld [vmem:[%s1 + $0x14a0] sm:$0xff]
  %v707 = vld [vmem:[%s1 + $0x14a8] sm:$0xff]
  %v708 = vld [vmem:[%s1 + $0x14b0] sm:$0xff]
  %v709 = vld [vmem:[%s1 + $0x14b8] sm:$0xff]
  %v710 = vld [vmem:[%s1 + $0x14c0] sm:$0xff]
  %v711 = vld [vmem:[%s1 + $0x14c8] sm:$0xff]
  %v712 = vld [vmem:[%s1 + $0x14d0] sm:$0xff]
  %v713 = vld [vmem:[%s1 + $0x14d8] sm:$0xff]
  %v714 = vld [vmem:[%s1 + $0x14e0] sm:$0xff]
  %v715 = vld [vmem:[%s1 + $0x14e8] sm:$0xff]
  %v716 = vld [vmem:[%s1 + $0x14f0] sm:$0xff]
  %v717 = vld [vmem:[%s1 + $0x14f8] sm:$0xff]
  %v718 = vld [vmem:[%s1 + $0x1500] sm:$0xff]
  %v719 = vld [vmem:[%s1 + $0x1508] sm:$0xff]
  %v720 = vld [vmem:[%s1 + $0x1510] sm:$0xff]
  %v721 = vld [vmem:[%s1 + $0x1518] sm:$0xff]
  %v722 = vld [vmem:[%s1 + $0x1520] sm:$0xff]
  %v723 = vld [vmem:[%s1 + $0x1528] sm:$0xff]
  %v724 = vld [vmem:[%s1 + $0x1530] sm:$0xff]
  %v725 = vld [vmem:[%s1 + $0x1538] sm:$0xff]
  %v726 = vld [vmem:[%s1 + $0x1540] sm:$0xff]
  %v727 = vld [vmem:[%s1 + $0x1548] sm:$0xff]
  %v728 = vld [vmem:[%s1 + $0x1550] sm:$0xff]
  %v729 = vld [vmem:[%s1 + $0x1558] sm:$0xff]
  %v730 = vld [vmem:[%s1 + $0x1560] sm:$0xff]
  %v731 = vld [vmem:[%s1 + $0x1568] sm:$0xff]
  %v732 = vld [vmem:[%s1 + $0x1570] sm:$0xff]
  %v733 = vld [vmem:[%s1 + $0x1578] sm:$0xff]
  %v734 = vld [vmem:[%s1 + $0x1580] sm:$0xff]
  %v735 = vld [vmem:[%s1 + $0x1588] sm:$0xff]
  %v736 = vld [vmem:[%s1 + $0x1590] sm:$0xff]
  %v737 = vld [vmem:[%s1 + $0x1598] sm:$0xff]
  %v738 = vld [vmem:[%s1 + $0x15a0] sm:$0xff]
  %v739 = vld [vmem:[%s1 + $0x15a8] sm:$0xff]
  %v740 = vld [vmem:[%s1 + $0x15b0] sm:$0xff]
  %v741 = vld [vmem:[%s1 + $0x15b8] sm:$0xff]
  %v742 = vld [vmem:[%s1 + $0x15c0] sm:$0xff]
  %v743 = vld [vmem:[%s1 + $0x15c8] sm:$0xff]
  %v744 = vld [vmem:[%s1 + $0x15d0] sm:$0xff]
  %v745 = vld [vmem:[%s1 + $0x15d8] sm:$0xff]
  %v746 = vld [vmem:[%s1 + $0x15e0] sm:$0xff]
  %v747 = vld [vmem:[%s1 + $0x15e8] sm:$0xff]
  %v748 = vld [vmem:[%s1 + $0x15f0] sm:$0xff]
  %v749 = vld [vmem:[%s1 + $0x15f8] sm:$0xff]
  %v750 = vld [vmem:[%s1 + $0x1600] sm:$0xff]
  %v751 = vld [vmem:[%s1 + $0x1608] sm:$0xff]
  %v752 = vld [vmem:[%s1 + $0x1610] sm:$0xff]
  %v753 = vld [vmem:[%s1 + $0x1618] sm:$0xff]
  %v754 = vld [vmem:[%s1 + $0x1620] sm:$0xff]
  %v755 = vld [vmem:[%s1 + $0x1628] sm:$0xff]
  %v756 = vld [vmem:[%s1 + $0x1630] sm:$0xff]
  %v757 = vld [vmem:[%s1 + $0x1638] sm:$0xff]
  %v758 = vld [vmem:[%s1 + $0x1640] sm:$0xff]
  %v759 = vld [vmem:[%s1 + $0x1648] sm:$0xff]
  %v760 = vld [vmem:[%s1 + $0x1650] sm:$0xff]
  %v761 = vld [vmem:[%s1 + $0x1658] sm:$0xff]
  %v762 = vld [vmem:[%s1 + $0x1660] sm:$0xff]
  %v763 = vld [vmem:[%s1 + $0x1668] sm:$0xff]
  %v764 = vld [vmem:[%s1 + $0x1670] sm:$0xff]
  %v765 = vld [vmem:[%s1 + $0x1678] sm:$0xff]
  %v766 = vld [vmem:[%s1 + $0x1680] sm:$0xff]
  %v767 = vld [vmem:[%s1 + $0x1688] sm:$0xff]
  %v768 = vld [vmem:[%s1 + $0x1690] sm:$0xff]
  %v769 = vld [vmem:[%s1 + $0x1698] sm:$0xff]
  %v770 = vld [vmem:[%s1 + $0x16a0] sm:$0xff]
  %v771 = vld [vmem:[%s1 + $0x16a8] sm:$0xff]
  %v772 = vld [vmem:[%s1 + $0x16b0] sm:$0xff]
  %v773 = vld [vmem:[%s1 + $0x16b8] sm:$0xff]
  %v774 = vld [vmem:[%s1 + $0x16c0] sm:$0xff]
  %v775 = vld [vmem:[%s1 + $0x16c8] sm:$0xff]
  %v776 = vld [vmem:[%s1 + $0x16d0] sm:$0xff]
  %v777 = vld [vmem:[%s1 + $0x16d8] sm:$0xff]
  %v778 = vld [vmem:[%s1 + $0x16e0] sm:$0xff]
  %v779 = vld [vmem:[%s1 + $0x16e8] sm:$0xff]
  %v780 = vld [vmem:[%s1 + $0x16f0] sm:$0xff]
  %v781 = vld [vmem:[%s1 + $0x16f8] sm:$0xff]
  %v782 = vld [vmem:[%s1 + $0x1700] sm:$0xff]
  %v783 = vld [vmem:[%s1 + $0x1708] sm:$0xff]
  %v784 = vld [vmem:[%s1 + $0x1710] sm:$0xff]
  %v785 = vld [vmem:[%s1 + $0x1718] sm:$0xff]
  %v786 = vld [vmem:[%s1 + $0x1720] sm:$0xff]
  %v787 = vld [vmem:[%s1 + $0x1728] sm:$0xff]
  %v788 = vld [vmem:[%s1 + $0x1730] sm:$0xff]
  %v789 = vld [vmem:[%s1 + $0x1738] sm:$0xff]
  %v790 = vld [vmem:[%s1 + $0x1740] sm:$0xff]
  %v791 = vld [vmem:[%s1 + $0x1748] sm:$0xff]
  %v792 = vld [vmem:[%s1 + $0x1750] sm:$0xff]
  %v793 = vld [vmem:[%s1 + $0x1758] sm:$0xff]
  %v794 = vld [vmem:[%s1 + $0x1760] sm:$0xff]
  %v795 = vld [vmem:[%s1 + $0x1768] sm:$0xff]
  %v796 = vld [vmem:[%s1 + $0x1770] sm:$0xff]
  %v797 = vld [vmem:[%s1 + $0x1778] sm:$0xff]
  %v798 = vld [vmem:[%s1 + $0x1780] sm:$0xff]
  %v799 = vld [vmem:[%s1 + $0x1788] sm:$0xff]
  %v800 = vld [vmem:[%s1 + $0x1790] sm:$0xff]
  %v801 = vld [vmem:[%s1 + $0x1798] sm:$0xff]
  %v802 = vld [vmem:[%s1 + $0x17a0] sm:$0xff]
  %v803 = vld [vmem:[%s1 + $0x17a8] sm:$0xff]
  %v804 = vld [vmem:[%s1 + $0x17b0] sm:$0xff]
  %v805 = vld [vmem:[%s1 + $0x17b8] sm:$0xff]
  %v806 = vld [vmem:[%s1 + $0x17c0] sm:$0xff]
  %v807 = vld [vmem:[%s1 + $0x17c8] sm:$0xff]
  %v808 = vld [vmem:[%s1 + $0x17d0] sm:$0xff]
  %v809 = vld [vmem:[%s1 + $0x17d8] sm:$0xff]
  %v810 = vld [vmem:[%s1 + $0x17e0] sm:$0xff]
  %v811 = vld [vmem:[%s1 + $0x17e8] sm:$0xff]
  %v812 = vld [vmem:[%s1 + $0x17f0] sm:$0xff]
  %v813 = vld [vmem:[%s1 + $0x17f8] sm:$0xff]
  %v814 = vld [vmem:[%s1 + $0x1800] sm:$0xff]
  %v815 = vld [vmem:[%s1 + $0x1808] sm:$0xff]
  %v816 = vld [vmem:[%s1 + $0x1810] sm:$0xff]
  %v817 = vld [vmem:[%s1 + $0x1818] sm:$0xff]
  %v818 = vld [vmem:[%s1 + $0x1820] sm:$0xff]
  %v819 = vld [vmem:[%s1 + $0x1828] sm:$0xff]
  %v820 = vld [vmem:[%s1 + $0x1830] sm:$0xff]
  %v821 = vld [vmem:[%s1 + $0x1838] sm:$0xff]
  %v822 = vld [vmem:[%s1 + $0x1840] sm:$0xff]
  %v823 = vld [vmem:[%s1 + $0x1848] sm:$0xff]
  %v824 = vld [vmem:[%s1 + $0x1850] sm:$0xff]
  %v825 = vld [vmem:[%s1 + $0x1858] sm:$0xff]
  %v826 = vld [vmem:[%s1 + $0x1860] sm:$0xff]
  %v827 = vld [vmem:[%s1 + $0x1868] sm:$0xff]
  %v828 = vld [vmem:[%s1 + $0x1870] sm:$0xff]
  %v829 = vld [vmem:[%s1 + $0x1878] sm:$0xff]
  %v830 = vld [vmem:[%s1 + $0x1880] sm:$0xff]
  %v831 = vld [vmem:[%s1 + $0x1888] sm:$0xff]
  %v832 = vld [vmem:[%s1 + $0x1890] sm:$0xff]
  %v833 = vld [vmem:[%s1 + $0x1898] sm:$0xff]
  %v834 = vld [vmem:[%s1 + $0x18a0] sm:$0xff]
  %v835 = vld [vmem:[%s1 + $0x18a8] sm:$0xff]
  %v836 = vld [vmem:[%s1 + $0x18b0] sm:$0xff]
  %v837 = vld [vmem:[%s1 + $0x18b8] sm:$0xff]
  %v838 = vld [vmem:[%s1 + $0x18c0] sm:$0xff]
  %v839 = vld [vmem:[%s1 + $0x18c8] sm:$0xff]
  %v840 = vld [vmem:[%s1 + $0x18d0] sm:$0xff]
  %v841 = vld [vmem:[%s1 + $0x18d8] sm:$0xff]
  %v842 = vld [vmem:[%s1 + $0x18e0] sm:$0xff]
  %v843 = vld [vmem:[%s1 + $0x18e8] sm:$0xff]
  %v844 = vld [vmem:[%s1 + $0x18f0] sm:$0xff]
  %v845 = vld [vmem:[%s1 + $0x18f8] sm:$0xff]
  %v846 = vld [vmem:[%s1 + $0x1900] sm:$0xff]
  %v847 = vld [vmem:[%s1 + $0x1908] sm:$0xff]
  %v848 = vld [vmem:[%s1 + $0x1910] sm:$0xff]
  %v849 = vld [vmem:[%s1 + $0x1918] sm:$0xff]
  %v850 = vld [vmem:[%s1 + $0x1920] sm:$0xff]
  %v851 = vld [vmem:[%s1 + $0x1928] sm:$0xff]
  %v852 = vld [vmem:[%s1 + $0x1930] sm:$0xff]
  %v853 = vld [vmem:[%s1 + $0x1938] sm:$0xff]
  %v854 = vld [vmem:[%s1 + $0x1940] sm:$0xff]
  %v855 = vld [vmem:[%s1 + $0x1948] sm:$0xff]
  %v856 = vld [vmem:[%s1 + $0x1950] sm:$0xff]
  %v857 = vld [vmem:[%s1 + $0x1958] sm:$0xff]
  %v858 = vld [vmem:[%s1 + $0x1960] sm:$0xff]
  %v859 = vld [vmem:[%s1 + $0x1968] sm:$0xff]
  %v860 = vld [vmem:[%s1 + $0x1970] sm:$0xff]
  %v861 = vld [vmem:[%s1 + $0x1978] sm:$0xff]
  %v862 = vld [vmem:[%s1 + $0x1980] sm:$0xff]
  %v863 = vld [vmem:[%s1 + $0x1988] sm:$0xff]
  %v864 = vld [vmem:[%s1 + $0x1990] sm:$0xff]
  %v865 = vld [vmem:[%s1 + $0x1998] sm:$0xff]
  %v866 = vld [vmem:[%s1 + $0x19a0] sm:$0xff]
  %v867 = vld [vmem:[%s1 + $0x19a8] sm:$0xff]
  %v868 = vld [vmem:[%s1 + $0x19b0] sm:$0xff]
  %v869 = vld [vmem:[%s1 + $0x19b8] sm:$0xff]
  %v870 = vld [vmem:[%s1 + $0x19c0] sm:$0xff]
  %v871 = vld [vmem:[%s1 + $0x19c8] sm:$0xff]
  %v872 = vld [vmem:[%s1 + $0x19d0] sm:$0xff]
  %v873 = vld [vmem:[%s1 + $0x19d8] sm:$0xff]
  %v874 = vld [vmem:[%s1 + $0x19e0] sm:$0xff]
  %v875 = vld [vmem:[%s1 + $0x19e8] sm:$0xff]
  %v876 = vld [vmem:[%s1 + $0x19f0] sm:$0xff]
  %v877 = vld [vmem:[%s1 + $0x19f8] sm:$0xff]
  %v878 = vld [vmem:[%s1 + $0x1a00] sm:$0xff]
  %v879 = vld [vmem:[%s1 + $0x1a08] sm:$0xff]
  %v880 = vld [vmem:[%s1 + $0x1a10] sm:$0xff]
  %v881 = vld [vmem:[%s1 + $0x1a18] sm:$0xff]
  %v882 = vld [vmem:[%s1 + $0x1a20] sm:$0xff]
  %v883 = vld [vmem:[%s1 + $0x1a28] sm:$0xff]
  %v884 = vld [vmem:[%s1 + $0x1a30] sm:$0xff]
  %v885 = vld [vmem:[%s1 + $0x1a38] sm:$0xff]
  %v886 = vld [vmem:[%s1 + $0x1a40] sm:$0xff]
  %v887 = vld [vmem:[%s1 + $0x1a48] sm:$0xff]
  %v888 = vld [vmem:[%s1 + $0x1a50] sm:$0xff]
  %v889 = vld [vmem:[%s1 + $0x1a58] sm:$0xff]
  %v890 = vld [vmem:[%s1 + $0x1a60] sm:$0xff]
  %v891 = vld [vmem:[%s1 + $0x1a68] sm:$0xff]
  %v892 = vld [vmem:[%s1 + $0x1a70] sm:$0xff]
  %v893 = vld [vmem:[%s1 + $0x1a78] sm:$0xff]
  %v894 = vld [vmem:[%s1 + $0x1a80] sm:$0xff]
  %v895 = vld [vmem:[%s1 + $0x1a88] sm:$0xff]
  %v896 = vld [vmem:[%s1 + $0x1a90] sm:$0xff]
  %v897 = vld [vmem:[%s1 + $0x1a98] sm:$0xff]
  %v898 = vld [vmem:[%s1 + $0x1aa0] sm:$0xff]
  %v899 = vld [vmem:[%s1 + $0x1aa8] sm:$0xff]
  %v900 = vld [vmem:[%s1 + $0x1ab0] sm:$0xff]
  %v901 = vld [vmem:[%s1 + $0x1ab8] sm:$0xff]
  %v902 = vld [vmem:[%s1 + $0x1ac0] sm:$0xff]
  %v903 = vld [vmem:[%s1 + $0x1ac8] sm:$0xff]
  %v904 = vld [vmem:[%s1 + $0x1ad0] sm:$0xff]
  %v905 = vld [vmem:[%s1 + $0x1ad8] sm:$0xff]
  %v906 = vld [vmem:[%s1 + $0x1ae0] sm:$0xff]
  %v907 = vld [vmem:[%s1 + $0x1ae8] sm:$0xff]
  %v908 = vld [vmem:[%s1 + $0x1af0] sm:$0xff]
  %v909 = vld [vmem:[%s1 + $0x1af8] sm:$0xff]
  %v910 = vld [vmem:[%s1 + $0x1b00] sm:$0xff]
  %v911 = vld [vmem:[%s1 + $0x1b08] sm:$0xff]
  %v912 = vld [vmem:[%s1 + $0x1b10] sm:$0xff]
  %v913 = vld [vmem:[%s1 + $0x1b18] sm:$0xff]
  %v914 = vld [vmem:[%s1 + $0x1b20] sm:$0xff]
  %v915 = vld [vmem:[%s1 + $0x1b28] sm:$0xff]
  %v916 = vld [vmem:[%s1 + $0x1b30] sm:$0xff]
  %v917 = vld [vmem:[%s1 + $0x1b38] sm:$0xff]
  %v918 = vld [vmem:[%s1 + $0x1b40] sm:$0xff]
  %v919 = vld [vmem:[%s1 + $0x1b48] sm:$0xff]
  %v920 = vld [vmem:[%s1 + $0x1b50] sm:$0xff]
  %v921 = vld [vmem:[%s1 + $0x1b58] sm:$0xff]
  %v922 = vld [vmem:[%s1 + $0x1b60] sm:$0xff]
  %v923 = vld [vmem:[%s1 + $0x1b68] sm:$0xff]
  %v924 = vld [vmem:[%s1 + $0x1b70] sm:$0xff]
  %v925 = vld [vmem:[%s1 + $0x1b78] sm:$0xff]
  %v926 = vld [vmem:[%s1 + $0x1b80] sm:$0xff]
  %v927 = vld [vmem:[%s1 + $0x1b88] sm:$0xff]
  %v928 = vld [vmem:[%s1 + $0x1b90] sm:$0xff]
  %v929 = vld [vmem:[%s1 + $0x1b98] sm:$0xff]
  %v930 = vld [vmem:[%s1 + $0x1ba0] sm:$0xff]
  %v931 = vld [vmem:[%s1 + $0x1ba8] sm:$0xff]
  %v932 = vld [vmem:[%s1 + $0x1bb0] sm:$0xff]
  %v933 = vld [vmem:[%s1 + $0x1bb8] sm:$0xff]
  %v934 = vld [vmem:[%s1 + $0x1bc0] sm:$0xff]
  %v935 = vld [vmem:[%s1 + $0x1bc8] sm:$0xff]
  %v936 = vld [vmem:[%s1 + $0x1bd0] sm:$0xff]
  %v937 = vld [vmem:[%s1 + $0x1bd8] sm:$0xff]
  %v938 = vld [vmem:[%s1 + $0x1be0] sm:$0xff]
  %v939 = vld [vmem:[%s1 + $0x1be8] sm:$0xff]
  %v940 = vld [vmem:[%s1 + $0x1bf0] sm:$0xff]
  %v941 = vld [vmem:[%s1 + $0x1bf8] sm:$0xff]
  %v942 = vld [vmem:[%s1 + $0x1c00] sm:$0xff]
  %v943 = vld [vmem:[%s1 + $0x1c08] sm:$0xff]
  %v944 = vld [vmem:[%s1 + $0x1c10] sm:$0xff]
  %v945 = vld [vmem:[%s1 + $0x1c18] sm:$0xff]
  %v946 = vld [vmem:[%s1 + $0x1c20] sm:$0xff]
  %v947 = vld [vmem:[%s1 + $0x1c28] sm:$0xff]
  %v948 = vld [vmem:[%s1 + $0x1c30] sm:$0xff]
  %v949 = vld [vmem:[%s1 + $0x1c38] sm:$0xff]
  %v950 = vld [vmem:[%s1 + $0x1c40] sm:$0xff]
  %v951 = vld [vmem:[%s1 + $0x1c48] sm:$0xff]
  %v952 = vld [vmem:[%s1 + $0x1c50] sm:$0xff]
  %v953 = vld [vmem:[%s1 + $0x1c58] sm:$0xff]
  %v954 = vld [vmem:[%s1 + $0x1c60] sm:$0xff]
  %v955 = vld [vmem:[%s1 + $0x1c68] sm:$0xff]
  %v956 = vld [vmem:[%s1 + $0x1c70] sm:$0xff]
  %v957 = vld [vmem:[%s1 + $0x1c78] sm:$0xff]
  %v958 = vld [vmem:[%s1 + $0x1c80] sm:$0xff]
  %v959 = vld [vmem:[%s1 + $0x1c88] sm:$0xff]
  %v960 = vld [vmem:[%s1 + $0x1c90] sm:$0xff]
  %v961 = vld [vmem:[%s1 + $0x1c98] sm:$0xff]
  %v962 = vld [vmem:[%s1 + $0x1ca0] sm:$0xff]
  %v963 = vld [vmem:[%s1 + $0x1ca8] sm:$0xff]
  %v964 = vld [vmem:[%s1 + $0x1cb0] sm:$0xff]
  %v965 = vld [vmem:[%s1 + $0x1cb8] sm:$0xff]
  %v966 = vld [vmem:[%s1 + $0x1cc0] sm:$0xff]
  %v967 = vld [vmem:[%s1 + $0x1cc8] sm:$0xff]
  %v968 = vld [vmem:[%s1 + $0x1cd0] sm:$0xff]
  %v969 = vld [vmem:[%s1 + $0x1cd8] sm:$0xff]
  %v970 = vld [vmem:[%s1 + $0x1ce0] sm:$0xff]
  %v971 = vld [vmem:[%s1 + $0x1ce8] sm:$0xff]
  %v972 = vld [vmem:[%s1 + $0x1cf0] sm:$0xff]
  %v973 = vld [vmem:[%s1 + $0x1cf8] sm:$0xff]
  %v974 = vld [vmem:[%s1 + $0x1d00] sm:$0xff]
  %v975 = vld [vmem:[%s1 + $0x1d08] sm:$0xff]
  %v976 = vld [vmem:[%s1 + $0x1d10] sm:$0xff]
  %v977 = vld [vmem:[%s1 + $0x1d18] sm:$0xff]
  %v978 = vld [vmem:[%s1 + $0x1d20] sm:$0xff]
  %v979 = vld [vmem:[%s1 + $0x1d28] sm:$0xff]
  %v980 = vld [vmem:[%s1 + $0x1d30] sm:$0xff]
  %v981 = vld [vmem:[%s1 + $0x1d38] sm:$0xff]
  %v982 = vld [vmem:[%s1 + $0x1d40] sm:$0xff]
  %v983 = vld [vmem:[%s1 + $0x1d48] sm:$0xff]
  %v984 = vld [vmem:[%s1 + $0x1d50] sm:$0xff]
  %v985 = vld [vmem:[%s1 + $0x1d58] sm:$0xff]
  %v986 = vld [vmem:[%s1 + $0x1d60] sm:$0xff]
  %v987 = vld [vmem:[%s1 + $0x1d68] sm:$0xff]
  %v988 = vld [vmem:[%s1 + $0x1d70] sm:$0xff]
  %v989 = vld [vmem:[%s1 + $0x1d78] sm:$0xff]
  %v990 = vld [vmem:[%s1 + $0x1d80] sm:$0xff]
  %v991 = vld [vmem:[%s1 + $0x1d88] sm:$0xff]
  %v992 = vld [vmem:[%s1 + $0x1d90] sm:$0xff]
  %v993 = vld [vmem:[%s1 + $0x1d98] sm:$0xff]
  %v994 = vld [vmem:[%s1 + $0x1da0] sm:$0xff]
  %v995 = vld [vmem:[%s1 + $0x1da8] sm:$0xff]
  %v996 = vld [vmem:[%s1 + $0x1db0] sm:$0xff]
  %v997 = vld [vmem:[%s1 + $0x1db8] sm:$0xff]
  %v998 = vld [vmem:[%s1 + $0x1dc0] sm:$0xff]
  %v999 = vld [vmem:[%s1 + $0x1dc8] sm:$0xff]
  %v1000 = vld [vmem:[%s1 + $0x1dd0] sm:$0xff]
  %v1001 = vld [vmem:[%s1 + $0x1dd8] sm:$0xff]
  %v1002 = vld [vmem:[%s1 + $0x1de0] sm:$0xff]
  %v1003 = vld [vmem:[%s1 + $0x1de8] sm:$0xff]
  %v1004 = vld [vmem:[%s1 + $0x1df0] sm:$0xff]
  %v1005 = vld [vmem:[%s1 + $0x1df8] sm:$0xff]
  %v1006 = vld [vmem:[%s1 + $0x1e00] sm:$0xff]
  %v1007 = vld [vmem:[%s1 + $0x1e08] sm:$0xff]
  %v1008 = vld [vmem:[%s1 + $0x1e10] sm:$0xff]
  %v1009 = vld [vmem:[%s1 + $0x1e18] sm:$0xff]
  %v1010 = vld [vmem:[%s1 + $0x1e20] sm:$0xff]
  %v1011 = vld [vmem:[%s1 + $0x1e28] sm:$0xff]
  %v1012 = vld [vmem:[%s1 + $0x1e30] sm:$0xff]
  %v1013 = vld [vmem:[%s1 + $0x1e38] sm:$0xff]
  %v1014 = vld [vmem:[%s1 + $0x1e40] sm:$0xff]
  %v1015 = vld [vmem:[%s1 + $0x1e48] sm:$0xff]
  %v1016 = vld [vmem:[%s1 + $0x1e50] sm:$0xff]
  %v1017 = vld [vmem:[%s1 + $0x1e58] sm:$0xff]
  %v1018 = vld [vmem:[%s1 + $0x1e60] sm:$0xff]
  %v1019 = vld [vmem:[%s1 + $0x1e68] sm:$0xff]
  %v1020 = vld [vmem:[%s1 + $0x1e70] sm:$0xff]
  %v1021 = vld [vmem:[%s1 + $0x1e78] sm:$0xff]
  %v1022 = vld [vmem:[%s1 + $0x1e80] sm:$0xff]
  %v1023 = vld [vmem:[%s1 + $0x1e88] sm:$0xff]
  %v1024 = vld [vmem:[%s1 + $0x1e90] sm:$0xff]
  %v1025 = vld [vmem:[%s1 + $0x1e98] sm:$0xff]
  %v1026 = vld [vmem:[%s1 + $0x1ea0] sm:$0xff]
  %v1027 = vld [vmem:[%s1 + $0x1ea8] sm:$0xff]
  %v1028 = vld [vmem:[%s1 + $0x1eb0] sm:$0xff]
  %v1029 = vld [vmem:[%s1 + $0x1eb8] sm:$0xff]
  %v1030 = vld [vmem:[%s1 + $0x1ec0] sm:$0xff]
  %v1031 = vld [vmem:[%s1 + $0x1ec8] sm:$0xff]
  %v1032 = vld [vmem:[%s1 + $0x1ed0] sm:$0xff]
  %v1033 = vld [vmem:[%s1 + $0x1ed8] sm:$0xff]
  %v1034 = vld [vmem:[%s1 + $0x1ee0] sm:$0xff]
  %v1035 = vld [vmem:[%s1 + $0x1ee8] sm:$0xff]
  %v1036 = vld [vmem:[%s1 + $0x1ef0] sm:$0xff]
  %v1037 = vld [vmem:[%s1 + $0x1ef8] sm:$0xff]
  %v1038 = vld [vmem:[%s1 + $0x1f00] sm:$0xff]
  %v1039 = vld [vmem:[%s1 + $0x1f08] sm:$0xff]
  %v1040 = vld [vmem:[%s1 + $0x1f10] sm:$0xff]
  %v1041 = vld [vmem:[%s1 + $0x1f18] sm:$0xff]
  %v1042 = vld [vmem:[%s1 + $0x1f20] sm:$0xff]
  %v1043 = vld [vmem:[%s1 + $0x1f28] sm:$0xff]
  %v1044 = vld [vmem:[%s1 + $0x1f30] sm:$0xff]
  %v1045 = vld [vmem:[%s1 + $0x1f38] sm:$0xff]
  %v1046 = vld [vmem:[%s1 + $0x1f40] sm:$0xff]
  %v1047 = vld [vmem:[%s1 + $0x1f48] sm:$0xff]
  %v1048 = vld [vmem:[%s1 + $0x1f50] sm:$0xff]
  %v1049 = vld [vmem:[%s1 + $0x1f58] sm:$0xff]
  %v1050 = vld [vmem:[%s1 + $0x1f60] sm:$0xff]
  %v1051 = vld [vmem:[%s1 + $0x1f68] sm:$0xff]
  %v1052 = vld [vmem:[%s1 + $0x1f70] sm:$0xff]
  %v1053 = vld [vmem:[%s1 + $0x1f78] sm:$0xff]
  %v1054 = vld [vmem:[%s1 + $0x1f80] sm:$0xff]
  %v1055 = vld [vmem:[%s1 + $0x1f88] sm:$0xff]
  %v1056 = vld [vmem:[%s1 + $0x1f90] sm:$0xff]
  %v1057 = vld [vmem:[%s1 + $0x1f98] sm:$0xff]
  %v1058 = vld [vmem:[%s1 + $0x1fa0] sm:$0xff]
  %v1059 = vld [vmem:[%s1 + $0x1fa8] sm:$0xff]
  %v1060 = vld [vmem:[%s1 + $0x1fb0] sm:$0xff]
  %v1061 = vld [vmem:[%s1 + $0x1fb8] sm:$0xff]
  %v1062 = vld [vmem:[%s1 + $0x1fc0] sm:$0xff]
  %v1063 = vld [vmem:[%s1 + $0x1fc8] sm:$0xff]
  %v1064 = vld [vmem:[%s1 + $0x1fd0] sm:$0xff]
  %v1065 = vld [vmem:[%s1 + $0x1fd8] sm:$0xff]
  %v1066 = vld [vmem:[%s1 + $0x1fe0] sm:$0xff]
  %v1067 = vld [vmem:[%s1 + $0x1fe8] sm:$0xff]
  %v1068 = vld [vmem:[%s1 + $0x1ff0] sm:$0xff]
  %v1069 = vld [vmem:[%s1 + $0x1ff8] sm:$0xff]
  %v1070 = vld [vmem:[%s1 + $0x2000] sm:$0xff]
  %v1071 = vld [vmem:[%s1 + $0x2008] sm:$0xff]
  %v1072 = vld [vmem:[%s1 + $0x2010] sm:$0xff]
  %v1073 = vld [vmem:[%s1 + $0x2018] sm:$0xff]
  %v1074 = vld [vmem:[%s1 + $0x2020] sm:$0xff]
  %v1075 = vld [vmem:[%s1 + $0x2028] sm:$0xff]
  %v1076 = vld [vmem:[%s1 + $0x2030] sm:$0xff]
  %v1077 = vld [vmem:[%s1 + $0x2038] sm:$0xff]
  %v1078 = vld [vmem:[%s1 + $0x2040] sm:$0xff]
  %v1079 = vld [vmem:[%s1 + $0x2048] sm:$0xff]
  %v1080 = vld [vmem:[%s1 + $0x2050] sm:$0xff]
  %v1081 = vld [vmem:[%s1 + $0x2058] sm:$0xff]
  %v1082 = vld [vmem:[%s1 + $0x2060] sm:$0xff]
  %v1083 = vld [vmem:[%s1 + $0x2068] sm:$0xff]
  %v1084 = vld [vmem:[%s1 + $0x2070] sm:$0xff]
  %v1085 = vld [vmem:[%s1 + $0x2078] sm:$0xff]
  %v1086 = vld [vmem:[%s1 + $0x2080] sm:$0xff]
  %v1087 = vld [vmem:[%s1 + $0x2088] sm:$0xff]
  %v1088 = vld [vmem:[%s1 + $0x2090] sm:$0xff]
  %v1089 = vld [vmem:[%s1 + $0x2098] sm:$0xff]
  %v1090 = vld [vmem:[%s1 + $0x20a0] sm:$0xff]
  %v1091 = vld [vmem:[%s1 + $0x20a8] sm:$0xff]
  %v1092 = vld [vmem:[%s1 + $0x20b0] sm:$0xff]
  %v1093 = vld [vmem:[%s1 + $0x20b8] sm:$0xff]
  %v1094 = vld [vmem:[%s1 + $0x20c0] sm:$0xff]
  %v1095 = vld [vmem:[%s1 + $0x20c8] sm:$0xff]
  %v1096 = vld [vmem:[%s1 + $0x20d0] sm:$0xff]
  %v1097 = vld [vmem:[%s1 + $0x20d8] sm:$0xff]
  %v1098 = vld [vmem:[%s1 + $0x20e0] sm:$0xff]
  %v1099 = vld [vmem:[%s1 + $0x20e8] sm:$0xff]
  %v1100 = vld [vmem:[%s1 + $0x20f0] sm:$0xff]
  %v1101 = vld [vmem:[%s1 + $0x20f8] sm:$0xff]
  %v1102 = vld [vmem:[%s1 + $0x2100] sm:$0xff]
  %v1103 = vld [vmem:[%s1 + $0x2108] sm:$0xff]
  %v1104 = vld [vmem:[%s1 + $0x2110] sm:$0xff]
  %v1105 = vld [vmem:[%s1 + $0x2118] sm:$0xff]
  %v1106 = vld [vmem:[%s1 + $0x2120] sm:$0xff]
  %v1107 = vld [vmem:[%s1 + $0x2128] sm:$0xff]
  %v1108 = vld [vmem:[%s1 + $0x2130] sm:$0xff]
  %v1109 = vld [vmem:[%s1 + $0x2138] sm:$0xff]
  %v1110 = vld [vmem:[%s1 + $0x2140] sm:$0xff]
  %v1111 = vld [vmem:[%s1 + $0x2148] sm:$0xff]
  %v1112 = vld [vmem:[%s1 + $0x2150] sm:$0xff]
  %v1113 = vld [vmem:[%s1 + $0x2158] sm:$0xff]
  %v1114 = vld [vmem:[%s1 + $0x2160] sm:$0xff]
  %v1115 = vld [vmem:[%s1 + $0x2168] sm:$0xff]
  %v1116 = vld [vmem:[%s1 + $0x2170] sm:$0xff]
  %v1117 = vld [vmem:[%s1 + $0x2178] sm:$0xff]
  %v1118 = vld [vmem:[%s1 + $0x2180] sm:$0xff]
  %v1119 = vld [vmem:[%s1 + $0x2188] sm:$0xff]
  %v1120 = vld [vmem:[%s1 + $0x2190] sm:$0xff]
  %v1121 = vld [vmem:[%s1 + $0x2198] sm:$0xff]
  %v1122 = vld [vmem:[%s1 + $0x21a0] sm:$0xff]
  %v1123 = vld [vmem:[%s1 + $0x21a8] sm:$0xff]
  %v1124 = vld [vmem:[%s1 + $0x21b0] sm:$0xff]
  %v1125 = vld [vmem:[%s1 + $0x21b8] sm:$0xff]
  %v1126 = vld [vmem:[%s1 + $0x21c0] sm:$0xff]
  %v1127 = vld [vmem:[%s1 + $0x21c8] sm:$0xff]
  %v1128 = vld [vmem:[%s1 + $0x21d0] sm:$0xff]
  %v1129 = vld [vmem:[%s1 + $0x21d8] sm:$0xff]
  %v1130 = vld [vmem:[%s1 + $0x21e0] sm:$0xff]
  %v1131 = vld [vmem:[%s1 + $0x21e8] sm:$0xff]
  %v1132 = vld [vmem:[%s1 + $0x21f0] sm:$0xff]
  %v1133 = vld [vmem:[%s1 + $0x21f8] sm:$0xff]
  %v1134 = vld [vmem:[%s1 + $0x2200] sm:$0xff]
  %v1135 = vld [vmem:[%s1 + $0x2208] sm:$0xff]
  %v1136 = vld [vmem:[%s1 + $0x2210] sm:$0xff]
  %v1137 = vld [vmem:[%s1 + $0x2218] sm:$0xff]
  %v1138 = vld [vmem:[%s1 + $0x2220] sm:$0xff]
  %v1139 = vld [vmem:[%s1 + $0x2228] sm:$0xff]
  %v1140 = vld [vmem:[%s1 + $0x2230] sm:$0xff]
  %v1141 = vld [vmem:[%s1 + $0x2238] sm:$0xff]
  %v1142 = vld [vmem:[%s1 + $0x2240] sm:$0xff]
  %v1143 = vld [vmem:[%s1 + $0x2248] sm:$0xff]
  %v1144 = vld [vmem:[%s1 + $0x2250] sm:$0xff]
  %v1145 = vld [vmem:[%s1 + $0x2258] sm:$0xff]
  %v1146 = vld [vmem:[%s1 + $0x2260] sm:$0xff]
  %v1147 = vld [vmem:[%s1 + $0x2268] sm:$0xff]
  %v1148 = vld [vmem:[%s1 + $0x2270] sm:$0xff]
  %v1149 = vld [vmem:[%s1 + $0x2278] sm:$0xff]
  %v1150 = vld [vmem:[%s1 + $0x2280] sm:$0xff]
  %v1151 = vld [vmem:[%s1 + $0x2288] sm:$0xff]
  %v1152 = vld [vmem:[%s1 + $0x2290] sm:$0xff]
  %v1153 = vld [vmem:[%s1 + $0x2298] sm:$0xff]
  %v1154 = vld [vmem:[%s1 + $0x22a0] sm:$0xff]
  %v1155 = vld [vmem:[%s1 + $0x22a8] sm:$0xff]
  %v1156 = vld [vmem:[%s1 + $0x22b0] sm:$0xff]
  %v1157 = vld [vmem:[%s1 + $0x22b8] sm:$0xff]
  %v1158 = vld [vmem:[%s1 + $0x22c0] sm:$0xff]
  %v1159 = vld [vmem:[%s1 + $0x22c8] sm:$0xff]
  %v1160 = vld [vmem:[%s1 + $0x22d0] sm:$0xff]
  %v1161 = vld [vmem:[%s1 + $0x22d8] sm:$0xff]
  %v1162 = vld [vmem:[%s1 + $0x22e0] sm:$0xff]
  %v1163 = vld [vmem:[%s1 + $0x22e8] sm:$0xff]
  %v1164 = vld [vmem:[%s1 + $0x22f0] sm:$0xff]
  %v1165 = vld [vmem:[%s1 + $0x22f8] sm:$0xff]
  %v1166 = vld [vmem:[%s1 + $0x2300] sm:$0xff]
  %v1167 = vld [vmem:[%s1 + $0x2308] sm:$0xff]
  %v1168 = vld [vmem:[%s1 + $0x2310] sm:$0xff]
  %v1169 = vld [vmem:[%s1 + $0x2318] sm:$0xff]
  %v1170 = vld [vmem:[%s1 + $0x2320] sm:$0xff]
  %v1171 = vld [vmem:[%s1 + $0x2328] sm:$0xff]
  %v1172 = vld [vmem:[%s1 + $0x2330] sm:$0xff]
  %v1173 = vld [vmem:[%s1 + $0x2338] sm:$0xff]
  %v1174 = vld [vmem:[%s1 + $0x2340] sm:$0xff]
  %v1175 = vld [vmem:[%s1 + $0x2348] sm:$0xff]
  %v1176 = vld [vmem:[%s1 + $0x2350] sm:$0xff]
  %v1177 = vld [vmem:[%s1 + $0x2358] sm:$0xff]
  %v1178 = vld [vmem:[%s1 + $0x2360] sm:$0xff]
  %v1179 = vld [vmem:[%s1 + $0x2368] sm:$0xff]
  %v1180 = vld [vmem:[%s1 + $0x2370] sm:$0xff]
  %v1181 = vld [vmem:[%s1 + $0x2378] sm:$0xff]
  %v1182 = vld [vmem:[%s1 + $0x2380] sm:$0xff]
  %v1183 = vld [vmem:[%s1 + $0x2388] sm:$0xff]
  %v1184 = vld [vmem:[%s1 + $0x2390] sm:$0xff]
  %v1185 = vld [vmem:[%s1 + $0x2398] sm:$0xff]
  %v1186 = vld [vmem:[%s1 + $0x23a0] sm:$0xff]
  %v1187 = vld [vmem:[%s1 + $0x23a8] sm:$0xff]
  %v1188 = vld [vmem:[%s1 + $0x23b0] sm:$0xff]
  %v1189 = vld [vmem:[%s1 + $0x23b8] sm:$0xff]
  %v1190 = vld [vmem:[%s1 + $0x23c0] sm:$0xff]
  %v1191 = vld [vmem:[%s1 + $0x23c8] sm:$0xff]
  %v1192 = vld [vmem:[%s1 + $0x23d0] sm:$0xff]
  %v1193 = vld [vmem:[%s1 + $0x23d8] sm:$0xff]
  %v1194 = vld [vmem:[%s1 + $0x23e0] sm:$0xff]
  %v1195 = vld [vmem:[%s1 + $0x23e8] sm:$0xff]
  %v1196 = vld [vmem:[%s1 + $0x23f0] sm:$0xff]
  %v1197 = vld [vmem:[%s1 + $0x23f8] sm:$0xff]
  %v1198 = vld [vmem:[%s1 + $0x2400] sm:$0xff]
  %v1199 = vld [vmem:[%s1 + $0x2408] sm:$0xff]
  %v1200 = vld [vmem:[%s1 + $0x2410] sm:$0xff]
  %v1201 = vld [vmem:[%s1 + $0x2418] sm:$0xff]
  %v1202 = vld [vmem:[%s1 + $0x2420] sm:$0xff]
  %v1203 = vld [vmem:[%s1 + $0x2428] sm:$0xff]
  %v1204 = vld [vmem:[%s1 + $0x2430] sm:$0xff]
  %v1205 = vld [vmem:[%s1 + $0x2438] sm:$0xff]
  %v1206 = vld [vmem:[%s1 + $0x2440] sm:$0xff]
  %v1207 = vld [vmem:[%s1 + $0x2448] sm:$0xff]
  %v1208 = vld [vmem:[%s1 + $0x2450] sm:$0xff]
  %v1209 = vld [vmem:[%s1 + $0x2458] sm:$0xff]
  %v1210 = vld [vmem:[%s1 + $0x2460] sm:$0xff]
  %v1211 = vld [vmem:[%s1 + $0x2468] sm:$0xff]
  %v1212 = vld [vmem:[%s1 + $0x2470] sm:$0xff]
  %v1213 = vld [vmem:[%s1 + $0x2478] sm:$0xff]
  %v1214 = vld [vmem:[%s1 + $0x2480] sm:$0xff]
  %v1215 = vld [vmem:[%s1 + $0x2488] sm:$0xff]
  %v1216 = vld [vmem:[%s1 + $0x2490] sm:$0xff]
  %v1217 = vld [vmem:[%s1 + $0x2498] sm:$0xff]
  %v1218 = vld [vmem:[%s1 + $0x24a0] sm:$0xff]
  %v1219 = vld [vmem:[%s1 + $0x24a8] sm:$0xff]
  %v1220 = vld [vmem:[%s1 + $0x24b0] sm:$0xff]
  %v1221 = vld [vmem:[%s1 + $0x24b8] sm:$0xff]
  %v1222 = vld [vmem:[%s1 + $0x24c0] sm:$0xff]
  %v1223 = vld [vmem:[%s1 + $0x24c8] sm:$0xff]
  %v1224 = vld [vmem:[%s1 + $0x24d0] sm:$0xff]
  %v1225 = vld [vmem:[%s1 + $0x24d8] sm:$0xff]
  %v1226 = vld [vmem:[%s1 + $0x24e0] sm:$0xff]
  %v1227 = vld [vmem:[%s1 + $0x24e8] sm:$0xff]
  %v1228 = vld [vmem:[%s1 + $0x24f0] sm:$0xff]
  %v1229 = vld [vmem:[%s1 + $0x24f8] sm:$0xff]
  %v1230 = vld [vmem:[%s1 + $0x2500] sm:$0xff]
  %v1231 = vld [vmem:[%s1 + $0x2508] sm:$0xff]
  %v1232 = vld [vmem:[%s1 + $0x2510] sm:$0xff]
  %v1233 = vld [vmem:[%s1 + $0x2518] sm:$0xff]
  %v1234 = vld [vmem:[%s1 + $0x2520] sm:$0xff]
  %v1235 = vld [vmem:[%s1 + $0x2528] sm:$0xff]
  %v1236 = vld [vmem:[%s1 + $0x2530] sm:$0xff]
  %v1237 = vld [vmem:[%s1 + $0x2538] sm:$0xff]
  %v1238 = vld [vmem:[%s1 + $0x2540] sm:$0xff]
  %v1239 = vld [vmem:[%s1 + $0x2548] sm:$0xff]
  %v1240 = vld [vmem:[%s1 + $0x2550] sm:$0xff]
  %v1241 = vld [vmem:[%s1 + $0x2558] sm:$0xff]
  %v1242 = vld [vmem:[%s1 + $0x2560] sm:$0xff]
  %v1243 = vld [vmem:[%s1 + $0x2568] sm:$0xff]
  %v1244 = vld [vmem:[%s1 + $0x2570] sm:$0xff]
  %v1245 = vld [vmem:[%s1 + $0x2578] sm:$0xff]
  %v1246 = vld [vmem:[%s1 + $0x2580] sm:$0xff]
  %v1247 = vld [vmem:[%s1 + $0x2588] sm:$0xff]
  %v1248 = vld [vmem:[%s1 + $0x2590] sm:$0xff]
  %v1249 = vld [vmem:[%s1 + $0x2598] sm:$0xff]
  %v1250 = vld [vmem:[%s1 + $0x25a0] sm:$0xff]
  %v1251 = vld [vmem:[%s1 + $0x25a8] sm:$0xff]
  %v1252 = vld [vmem:[%s1 + $0x25b0] sm:$0xff]
  %v1253 = vld [vmem:[%s1 + $0x25b8] sm:$0xff]
  %v1254 = vld [vmem:[%s1 + $0x25c0] sm:$0xff]
  %v1255 = vld [vmem:[%s1 + $0x25c8] sm:$0xff]
  %v1256 = vld [vmem:[%s1 + $0x25d0] sm:$0xff]
  %v1257 = vld [vmem:[%s1 + $0x25d8] sm:$0xff]
  %v1258 = vld [vmem:[%s1 + $0x25e0] sm:$0xff]
  %v1259 = vld [vmem:[%s1 + $0x25e8] sm:$0xff]
  %v1260 = vld [vmem:[%s1 + $0x25f0] sm:$0xff]
  %v1261 = vld [vmem:[%s1 + $0x25f8] sm:$0xff]
  %v1262 = vld [vmem:[%s1 + $0x2600] sm:$0xff]
  %v1263 = vld [vmem:[%s1 + $0x2608] sm:$0xff]
  %v1264 = vld [vmem:[%s1 + $0x2610] sm:$0xff]
  %v1265 = vld [vmem:[%s1 + $0x2618] sm:$0xff]
  %v1266 = vld [vmem:[%s1 + $0x2620] sm:$0xff]
  %v1267 = vld [vmem:[%s1 + $0x2628] sm:$0xff]
  %v1268 = vld [vmem:[%s1 + $0x2630] sm:$0xff]
  %v1269 = vld [vmem:[%s1 + $0x2638] sm:$0xff]
  %v1270 = vld [vmem:[%s1 + $0x2640] sm:$0xff]
  %v1271 = vld [vmem:[%s1 + $0x2648] sm:$0xff]
  %v1272 = vld [vmem:[%s1 + $0x2650] sm:$0xff]
  %v1273 = vld [vmem:[%s1 + $0x2658] sm:$0xff]
  %v1274 = vld [vmem:[%s1 + $0x2660] sm:$0xff]
  %v1275 = vld [vmem:[%s1 + $0x2668] sm:$0xff]
  %v1276 = vld [vmem:[%s1 + $0x2670] sm:$0xff]
  %v1277 = vld [vmem:[%s1 + $0x2678] sm:$0xff]
  %v1278 = vld [vmem:[%s1 + $0x2680] sm:$0xff]
  %v1279 = vld [vmem:[%s1 + $0x2688] sm:$0xff]
  %v1280 = vld [vmem:[%s1 + $0x2690] sm:$0xff]
  %v1281 = vld [vmem:[%s1 + $0x2698] sm:$0xff]
  %v1282 = vld [vmem:[%s1 + $0x26a0] sm:$0xff]
  %v1283 = vld [vmem:[%s1 + $0x26a8] sm:$0xff]
  %v1284 = vld [vmem:[%s1 + $0x26b0] sm:$0xff]
  %v1285 = vld [vmem:[%s1 + $0x26b8] sm:$0xff]
  %v1286 = vld [vmem:[%s1 + $0x26c0] sm:$0xff]
  %v1287 = vld [vmem:[%s1 + $0x26c8] sm:$0xff]
  %v1288 = vld [vmem:[%s1 + $0x26d0] sm:$0xff]
  %v1289 = vld [vmem:[%s1 + $0x26d8] sm:$0xff]
  %v1290 = vld [vmem:[%s1 + $0x26e0] sm:$0xff]
  %v1291 = vld [vmem:[%s1 + $0x26e8] sm:$0xff]
  %v1292 = vld [vmem:[%s1 + $0x26f0] sm:$0xff]
  %v1293 = vld [vmem:[%s1 + $0x26f8] sm:$0xff]
  %v1294 = vld [vmem:[%s1 + $0x2700] sm:$0xff]
  %v1295 = vld [vmem:[%s1 + $0x2708] sm:$0xff]
  %v1296 = vld [vmem:[%s1 + $0x2710] sm:$0xff]
  %v1297 = vld [vmem:[%s1 + $0x2718] sm:$0xff]
  %v1298 = vld [vmem:[%s1 + $0x2720] sm:$0xff]
  %v1299 = vld [vmem:[%s1 + $0x2728] sm:$0xff]
  %v1300 = vld [vmem:[%s1 + $0x2730] sm:$0xff]
  %v1301 = vld [vmem:[%s1 + $0x2738] sm:$0xff]
  %v1302 = vld [vmem:[%s1 + $0x2740] sm:$0xff]
  %v1303 = vld [vmem:[%s1 + $0x2748] sm:$0xff]
  %v1304 = vld [vmem:[%s1 + $0x2750] sm:$0xff]
  %v1305 = vld [vmem:[%s1 + $0x2758] sm:$0xff]
  %v1306 = vld [vmem:[%s1 + $0x2760] sm:$0xff]
  %v1307 = vld [vmem:[%s1 + $0x2768] sm:$0xff]
  %v1308 = vld [vmem:[%s1 + $0x2770] sm:$0xff]
  %v1309 = vld [vmem:[%s1 + $0x2778] sm:$0xff]
  %v1310 = vld [vmem:[%s1 + $0x2780] sm:$0xff]
  %v1311 = vld [vmem:[%s1 + $0x2788] sm:$0xff]
  %v1312 = vld [vmem:[%s1 + $0x2790] sm:$0xff]
  %v1313 = vld [vmem:[%s1 + $0x2798] sm:$0xff]
  %v1314 = vld [vmem:[%s1 + $0x27a0] sm:$0xff]
  %v1315 = vld [vmem:[%s1 + $0x27a8] sm:$0xff]
  %v1316 = vld [vmem:[%s1 + $0x27b0] sm:$0xff]
  %v1317 = vld [vmem:[%s1 + $0x27b8] sm:$0xff]
  %v1318 = vld [vmem:[%s1 + $0x27c0] sm:$0xff]
  %v1319 = vld [vmem:[%s1 + $0x27c8] sm:$0xff]
  %v1320 = vld [vmem:[%s1 + $0x27d0] sm:$0xff]
  %v1321 = vld [vmem:[%s1 + $0x27d8] sm:$0xff]
  %v1322 = vld [vmem:[%s1 + $0x27e0] sm:$0xff]
  %v1323 = vld [vmem:[%s1 + $0x27e8] sm:$0xff]
  %v1324 = vld [vmem:[%s1 + $0x27f0] sm:$0xff]
  %v1325 = vld [vmem:[%s1 + $0x27f8] sm:$0xff]
  %v1326 = vld [vmem:[%s1 + $0x2800] sm:$0xff]
  %v1327 = vld [vmem:[%s1 + $0x2808] sm:$0xff]
  %v1328 = vld [vmem:[%s1 + $0x2810] sm:$0xff]
  %v1329 = vld [vmem:[%s1 + $0x2818] sm:$0xff]
  %v1330 = vld [vmem:[%s1 + $0x2820] sm:$0xff]
  %v1331 = vld [vmem:[%s1 + $0x2828] sm:$0xff]
  %v1332 = vld [vmem:[%s1 + $0x2830] sm:$0xff]
  %v1333 = vld [vmem:[%s1 + $0x2838] sm:$0xff]
  %v1334 = vld [vmem:[%s1 + $0x2840] sm:$0xff]
  %v1335 = vld [vmem:[%s1 + $0x2848] sm:$0xff]
  %v1336 = vld [vmem:[%s1 + $0x2850] sm:$0xff]
  %v1337 = vld [vmem:[%s1 + $0x2858] sm:$0xff]
  %v1338 = vld [vmem:[%s1 + $0x2860] sm:$0xff]
  %v1339 = vld [vmem:[%s1 + $0x2868] sm:$0xff]
  %v1340 = vld [vmem:[%s1 + $0x2870] sm:$0xff]
  %v1341 = vld [vmem:[%s1 + $0x2878] sm:$0xff]
  %v1342 = vld [vmem:[%s1 + $0x2880] sm:$0xff]
  %v1343 = vld [vmem:[%s1 + $0x2888] sm:$0xff]
  %v1344 = vld [vmem:[%s1 + $0x2890] sm:$0xff]
  %v1345 = vld [vmem:[%s1 + $0x2898] sm:$0xff]
  %v1346 = vld [vmem:[%s1 + $0x28a0] sm:$0xff]
  %v1347 = vld [vmem:[%s1 + $0x28a8] sm:$0xff]
  %v1348 = vld [vmem:[%s1 + $0x28b0] sm:$0xff]
  %v1349 = vld [vmem:[%s1 + $0x28b8] sm:$0xff]
  %v1350 = vld [vmem:[%s1 + $0x28c0] sm:$0xff]
  %v1351 = vld [vmem:[%s1 + $0x28c8] sm:$0xff]
  %v1352 = vld [vmem:[%s1 + $0x28d0] sm:$0xff]
  %v1353 = vld [vmem:[%s1 + $0x28d8] sm:$0xff]
  %v1354 = vld [vmem:[%s1 + $0x28e0] sm:$0xff]
  %v1355 = vld [vmem:[%s1 + $0x28e8] sm:$0xff]
  %v1356 = vld [vmem:[%s1 + $0x28f0] sm:$0xff]
  %v1357 = vld [vmem:[%s1 + $0x28f8] sm:$0xff]
  %v1358 = vld [vmem:[%s1 + $0x2900] sm:$0xff]
  %v1359 = vld [vmem:[%s1 + $0x2908] sm:$0xff]
  %v1360 = vld [vmem:[%s1 + $0x2910] sm:$0xff]
  %v1361 = vld [vmem:[%s1 + $0x2918] sm:$0xff]
  %v1362 = vld [vmem:[%s1 + $0x2920] sm:$0xff]
  %v1363 = vld [vmem:[%s1 + $0x2928] sm:$0xff]
  %v1364 = vld [vmem:[%s1 + $0x2930] sm:$0xff]
  %v1365 = vld [vmem:[%s1 + $0x2938] sm:$0xff]
  %v1366 = vld [vmem:[%s1 + $0x2940] sm:$0xff]
  %v1367 = vld [vmem:[%s1 + $0x2948] sm:$0xff]
  %v1368 = vld [vmem:[%s1 + $0x2950] sm:$0xff]
  %v1369 = vld [vmem:[%s1 + $0x2958] sm:$0xff]
  %v1370 = vld [vmem:[%s1 + $0x2960] sm:$0xff]
  %v1371 = vld [vmem:[%s1 + $0x2968] sm:$0xff]
  %v1372 = vld [vmem:[%s1 + $0x2970] sm:$0xff]
  %v1373 = vld [vmem:[%s1 + $0x2978] sm:$0xff]
  %v1374 = vld [vmem:[%s1 + $0x2980] sm:$0xff]
  %v1375 = vld [vmem:[%s1 + $0x2988] sm:$0xff]
  %v1376 = vld [vmem:[%s1 + $0x2990] sm:$0xff]
  %v1377 = vld [vmem:[%s1 + $0x2998] sm:$0xff]
  %v1378 = vld [vmem:[%s1 + $0x29a0] sm:$0xff]
  %v1379 = vld [vmem:[%s1 + $0x29a8] sm:$0xff]
  %v1380 = vld [vmem:[%s1 + $0x29b0] sm:$0xff]
  %v1381 = vld [vmem:[%s1 + $0x29b8] sm:$0xff]
  %v1382 = vld [vmem:[%s1 + $0x29c0] sm:$0xff]
  %v1383 = vld [vmem:[%s1 + $0x29c8] sm:$0xff]
  %v1384 = vld [vmem:[%s1 + $0x29d0] sm:$0xff]
  %v1385 = vld [vmem:[%s1 + $0x29d8] sm:$0xff]
  %v1386 = vld [vmem:[%s1 + $0x29e0] sm:$0xff]
  %v1387 = vld [vmem:[%s1 + $0x29e8] sm:$0xff]
  %v1388 = vld [vmem:[%s1 + $0x29f0] sm:$0xff]
  %v1389 = vld [vmem:[%s1 + $0x29f8] sm:$0xff]
  %v1390 = vld [vmem:[%s1 + $0x2a00] sm:$0xff]
  %v1391 = vld [vmem:[%s1 + $0x2a08] sm:$0xff]
  %v1392 = vld [vmem:[%s1 + $0x2a10] sm:$0xff]
  %v1393 = vld [vmem:[%s1 + $0x2a18] sm:$0xff]
  %v1394 = vld [vmem:[%s1 + $0x2a20] sm:$0xff]
  %v1395 = vld [vmem:[%s1 + $0x2a28] sm:$0xff]
  %v1396 = vld [vmem:[%s1 + $0x2a30] sm:$0xff]
  %v1397 = vld [vmem:[%s1 + $0x2a38] sm:$0xff]
  %v1398 = vld [vmem:[%s1 + $0x2a40] sm:$0xff]
  %v1399 = vld [vmem:[%s1 + $0x2a48] sm:$0xff]
  %v1400 = vld [vmem:[%s1 + $0x2a50] sm:$0xff]
  %v1401 = vld [vmem:[%s1 + $0x2a58] sm:$0xff]
  %v1402 = vld [vmem:[%s1 + $0x2a60] sm:$0xff]
  %v1403 = vld [vmem:[%s1 + $0x2a68] sm:$0xff]
  %v1404 = vld [vmem:[%s1 + $0x2a70] sm:$0xff]
  %v1405 = vld [vmem:[%s1 + $0x2a78] sm:$0xff]
  %v1406 = vld [vmem:[%s1 + $0x2a80] sm:$0xff]
  %v1407 = vld [vmem:[%s1 + $0x2a88] sm:$0xff]
  %v1408 = vld [vmem:[%s1 + $0x2a90] sm:$0xff]
  %v1409 = vld [vmem:[%s1 + $0x2a98] sm:$0xff]
  %v1410 = vld [vmem:[%s1 + $0x2aa0] sm:$0xff]
  %v1411 = vld [vmem:[%s1 + $0x2aa8] sm:$0xff]
  %v1412 = vld [vmem:[%s1 + $0x2ab0] sm:$0xff]
  %v1413 = vld [vmem:[%s1 + $0x2ab8] sm:$0xff]
  %v1414 = vld [vmem:[%s1 + $0x2ac0] sm:$0xff]
  %v1415 = vld [vmem:[%s1 + $0x2ac8] sm:$0xff]
  %v1416 = vld [vmem:[%s1 + $0x2ad0] sm:$0xff]
  %v1417 = vld [vmem:[%s1 + $0x2ad8] sm:$0xff]
  %v1418 = vld [vmem:[%s1 + $0x2ae0] sm:$0xff]
  %v1419 = vld [vmem:[%s1 + $0x2ae8] sm:$0xff]
  %v1420 = vld [vmem:[%s1 + $0x2af0] sm:$0xff]
  %v1421 = vld [vmem:[%s1 + $0x2af8] sm:$0xff]
  %v1422 = vld [vmem:[%s1 + $0x2b00] sm:$0xff]
  %v1423 = vld [vmem:[%s1 + $0x2b08] sm:$0xff]
  %v1424 = vld [vmem:[%s1 + $0x2b10] sm:$0xff]
  %v1425 = vld [vmem:[%s1 + $0x2b18] sm:$0xff]
  %v1426 = vld [vmem:[%s1 + $0x2b20] sm:$0xff]
  %v1427 = vld [vmem:[%s1 + $0x2b28] sm:$0xff]
  %v1428 = vld [vmem:[%s1 + $0x2b30] sm:$0xff]
  %v1429 = vld [vmem:[%s1 + $0x2b38] sm:$0xff]
  %v1430 = vld [vmem:[%s1 + $0x2b40] sm:$0xff]
  %v1431 = vld [vmem:[%s1 + $0x2b48] sm:$0xff]
  %v1432 = vld [vmem:[%s1 + $0x2b50] sm:$0xff]
  %v1433 = vld [vmem:[%s1 + $0x2b58] sm:$0xff]
  %v1434 = vld [vmem:[%s1 + $0x2b60] sm:$0xff]
  %v1435 = vld [vmem:[%s1 + $0x2b68] sm:$0xff]
  %v1436 = vld [vmem:[%s1 + $0x2b70] sm:$0xff]
  %v1437 = vld [vmem:[%s1 + $0x2b78] sm:$0xff]
  %v1438 = vld [vmem:[%s1 + $0x2b80] sm:$0xff]
  %v1439 = vld [vmem:[%s1 + $0x2b88] sm:$0xff]
  %v1440 = vld [vmem:[%s1 + $0x2b90] sm:$0xff]
  %v1441 = vld [vmem:[%s1 + $0x2b98] sm:$0xff]
  %v1442 = vld [vmem:[%s1 + $0x2ba0] sm:$0xff]
  %v1443 = vld [vmem:[%s1 + $0x2ba8] sm:$0xff]
  %v1444 = vld [vmem:[%s1 + $0x2bb0] sm:$0xff]
  %v1445 = vld [vmem:[%s1 + $0x2bb8] sm:$0xff]
  %v1446 = vld [vmem:[%s1 + $0x2bc0] sm:$0xff]
  %v1447 = vld [vmem:[%s1 + $0x2bc8] sm:$0xff]
  %v1448 = vld [vmem:[%s1 + $0x2bd0] sm:$0xff]
  %v1449 = vld [vmem:[%s1 + $0x2bd8] sm:$0xff]
  %v1450 = vld [vmem:[%s1 + $0x2be0] sm:$0xff]
  %v1451 = vld [vmem:[%s1 + $0x2be8] sm:$0xff]
  %v1452 = vld [vmem:[%s1 + $0x2bf0] sm:$0xff]
  %v1453 = vld [vmem:[%s1 + $0x2bf8] sm:$0xff]
  %v1454 = vld [vmem:[%s1 + $0x2c00] sm:$0xff]
  %v1455 = vld [vmem:[%s1 + $0x2c08] sm:$0xff]
  %v1456 = vld [vmem:[%s1 + $0x2c10] sm:$0xff]
  %v1457 = vld [vmem:[%s1 + $0x2c18] sm:$0xff]
  %v1458 = vld [vmem:[%s1 + $0x2c20] sm:$0xff]
  %v1459 = vld [vmem:[%s1 + $0x2c28] sm:$0xff]
  %v1460 = vld [vmem:[%s1 + $0x2c30] sm:$0xff]
  %v1461 = vld [vmem:[%s1 + $0x2c38] sm:$0xff]
  %v1462 = vld [vmem:[%s1 + $0x2c40] sm:$0xff]
  %v1463 = vld [vmem:[%s1 + $0x2c48] sm:$0xff]
  %v1464 = vld [vmem:[%s1 + $0x2c50] sm:$0xff]
  %v1465 = vld [vmem:[%s1 + $0x2c58] sm:$0xff]
  %v1466 = vld [vmem:[%s1 + $0x2c60] sm:$0xff]
  %v1467 = vld [vmem:[%s1 + $0x2c68] sm:$0xff]
  %v1468 = vld [vmem:[%s1 + $0x2c70] sm:$0xff]
  %v1469 = vld [vmem:[%s1 + $0x2c78] sm:$0xff]
  %v1470 = vld [vmem:[%s1 + $0x2c80] sm:$0xff]
  %v1471 = vld [vmem:[%s1 + $0x2c88] sm:$0xff]
  %v1472 = vld [vmem:[%s1 + $0x2c90] sm:$0xff]
  %v1473 = vld [vmem:[%s1 + $0x2c98] sm:$0xff]
  %v1474 = vld [vmem:[%s1 + $0x2ca0] sm:$0xff]
  %v1475 = vld [vmem:[%s1 + $0x2ca8] sm:$0xff]
  %v1476 = vld [vmem:[%s1 + $0x2cb0] sm:$0xff]
  %v1477 = vld [vmem:[%s1 + $0x2cb8] sm:$0xff]
  %v1478 = vld [vmem:[%s1 + $0x2cc0] sm:$0xff]
  %v1479 = vld [vmem:[%s1 + $0x2cc8] sm:$0xff]
  %v1480 = vld [vmem:[%s1 + $0x2cd0] sm:$0xff]
  %v1481 = vld [vmem:[%s1 + $0x2cd8] sm:$0xff]
  %v1482 = vld [vmem:[%s1 + $0x2ce0] sm:$0xff]
  %v1483 = vld [vmem:[%s1 + $0x2ce8] sm:$0xff]
  %v1484 = vld [vmem:[%s1 + $0x2cf0] sm:$0xff]
  %v1485 = vld [vmem:[%s1 + $0x2cf8] sm:$0xff]
  %v1486 = vld [vmem:[%s1 + $0x2d00] sm:$0xff]
  %v1487 = vld [vmem:[%s1 + $0x2d08] sm:$0xff]
  %v1488 = vld [vmem:[%s1 + $0x2d10] sm:$0xff]
  %v1489 = vld [vmem:[%s1 + $0x2d18] sm:$0xff]
  %v1490 = vld [vmem:[%s1 + $0x2d20] sm:$0xff]
  %v1491 = vld [vmem:[%s1 + $0x2d28] sm:$0xff]
  %v1492 = vld [vmem:[%s1 + $0x2d30] sm:$0xff]
  %v1493 = vld [vmem:[%s1 + $0x2d38] sm:$0xff]
  %v1494 = vld [vmem:[%s1 + $0x2d40] sm:$0xff]
  %v1495 = vld [vmem:[%s1 + $0x2d48] sm:$0xff]
  %v1496 = vld [vmem:[%s1 + $0x2d50] sm:$0xff]
  %v1497 = vld [vmem:[%s1 + $0x2d58] sm:$0xff]
  %v1498 = vld [vmem:[%s1 + $0x2d60] sm:$0xff]
  %v1499 = vld [vmem:[%s1 + $0x2d68] sm:$0xff]
  %v1500 = vld [vmem:[%s1 + $0x2d70] sm:$0xff]
  %v1501 = vld [vmem:[%s1 + $0x2d78] sm:$0xff]
  %v1502 = vld [vmem:[%s1 + $0x2d80] sm:$0xff]
  %v1503 = vld [vmem:[%s1 + $0x2d88] sm:$0xff]
  %v1504 = vld [vmem:[%s1 + $0x2d90] sm:$0xff]
  %v1505 = vld [vmem:[%s1 + $0x2d98] sm:$0xff]
  %v1506 = vld [vmem:[%s1 + $0x2da0] sm:$0xff]
  %v1507 = vld [vmem:[%s1 + $0x2da8] sm:$0xff]
  %v1508 = vld [vmem:[%s1 + $0x2db0] sm:$0xff]
  %v1509 = vld [vmem:[%s1 + $0x2db8] sm:$0xff]
  %v1510 = vld [vmem:[%s1 + $0x2dc0] sm:$0xff]
  %v1511 = vld [vmem:[%s1 + $0x2dc8] sm:$0xff]
  %v1512 = vld [vmem:[%s1 + $0x2dd0] sm:$0xff]
  %v1513 = vld [vmem:[%s1 + $0x2dd8] sm:$0xff]
  %v1514 = vld [vmem:[%s1 + $0x2de0] sm:$0xff]
  %v1515 = vld [vmem:[%s1 + $0x2de8] sm:$0xff]
  %v1516 = vld [vmem:[%s1 + $0x2df0] sm:$0xff]
  %v1517 = vld [vmem:[%s1 + $0x2df8] sm:$0xff]
  %v1518 = vld [vmem:[%s1 + $0x2e00] sm:$0xff]
  %v1519 = vld [vmem:[%s1 + $0x2e08] sm:$0xff]
  %v1520 = vld [vmem:[%s1 + $0x2e10] sm:$0xff]
  %v1521 = vld [vmem:[%s1 + $0x2e18] sm:$0xff]
  %v1522 = vld [vmem:[%s1 + $0x2e20] sm:$0xff]
  %v1523 = vld [vmem:[%s1 + $0x2e28] sm:$0xff]
  %v1524 = vld [vmem:[%s1 + $0x2e30] sm:$0xff]
  %v1525 = vld [vmem:[%s1 + $0x2e38] sm:$0xff]
  %v1526 = vld [vmem:[%s1 + $0x2e40] sm:$0xff]
  %v1527 = vld [vmem:[%s1 + $0x2e48] sm:$0xff]
  %v1528 = vld [vmem:[%s1 + $0x2e50] sm:$0xff]
  %v1529 = vld [vmem:[%s1 + $0x2e58] sm:$0xff]
  %v1530 = vld [vmem:[%s1 + $0x2e60] sm:$0xff]
  %v1531 = vld [vmem:[%s1 + $0x2e68] sm:$0xff]
  %v1532 = vld [vmem:[%s1 + $0x2e70] sm:$0xff]
  %v1533 = vld [vmem:[%s1 + $0x2e78] sm:$0xff]
  %v1534 = vld [vmem:[%s1 + $0x2e80] sm:$0xff]
  %v1535 = vld [vmem:[%s1 + $0x2e88] sm:$0xff]
  %v1536 = vld [vmem:[%s1 + $0x2e90] sm:$0xff]
  %v1537 = vld [vmem:[%s1 + $0x2e98] sm:$0xff]
  %v1538 = vld [vmem:[%s1 + $0x2ea0] sm:$0xff]
  %v1539 = vld [vmem:[%s1 + $0x2ea8] sm:$0xff]
  %v1540 = vld [vmem:[%s1 + $0x2eb0] sm:$0xff]
  %v1541 = vld [vmem:[%s1 + $0x2eb8] sm:$0xff]
  %v1542 = vld [vmem:[%s1 + $0x2ec0] sm:$0xff]
  %v1543 = vld [vmem:[%s1 + $0x2ec8] sm:$0xff]
  %v1544 = vld [vmem:[%s1 + $0x2ed0] sm:$0xff]
  %v1545 = vld [vmem:[%s1 + $0x2ed8] sm:$0xff]
  %v1546 = vld [vmem:[%s1 + $0x2ee0] sm:$0xff]
  %v1547 = vld [vmem:[%s1 + $0x2ee8] sm:$0xff]
  %v1548 = vld [vmem:[%s1 + $0x2ef0] sm:$0xff]
  %v1549 = vld [vmem:[%s1 + $0x2ef8] sm:$0xff]
  %v1550 = vld [vmem:[%s1 + $0x2f00] sm:$0xff]
  %v1551 = vld [vmem:[%s1 + $0x2f08] sm:$0xff]
  %v1552 = vld [vmem:[%s1 + $0x2f10] sm:$0xff]
  %v1553 = vld [vmem:[%s1 + $0x2f18] sm:$0xff]
  %v1554 = vld [vmem:[%s1 + $0x2f20] sm:$0xff]
  %v1555 = vld [vmem:[%s1 + $0x2f28] sm:$0xff]
  %v1556 = vld [vmem:[%s1 + $0x2f30] sm:$0xff]
  %v1557 = vld [vmem:[%s1 + $0x2f38] sm:$0xff]
  %v1558 = vld [vmem:[%s1 + $0x2f40] sm:$0xff]
  %v1559 = vld [vmem:[%s1 + $0x2f48] sm:$0xff]
  %v1560 = vld [vmem:[%s1 + $0x2f50] sm:$0xff]
  %v1561 = vld [vmem:[%s1 + $0x2f58] sm:$0xff]
  %v1562 = vld [vmem:[%s1 + $0x2f60] sm:$0xff]
  %v1563 = vld [vmem:[%s1 + $0x2f68] sm:$0xff]
  %v1564 = vld [vmem:[%s1 + $0x2f70] sm:$0xff]
  %v1565 = vld [vmem:[%s1 + $0x2f78] sm:$0xff]
  %v1566 = vld [vmem:[%s1 + $0x2f80] sm:$0xff]
  %v1567 = vld [vmem:[%s1 + $0x2f88] sm:$0xff]
  %v1568 = vld [vmem:[%s1 + $0x2f90] sm:$0xff]
  %v1569 = vld [vmem:[%s1 + $0x2f98] sm:$0xff]
  %v1570 = vld [vmem:[%s1 + $0x2fa0] sm:$0xff]
  %v1571 = vld [vmem:[%s1 + $0x2fa8] sm:$0xff]
  %v1572 = vld [vmem:[%s1 + $0x2fb0] sm:$0xff]
  %v1573 = vld [vmem:[%s1 + $0x2fb8] sm:$0xff]
  %v1574 = vld [vmem:[%s1 + $0x2fc0] sm:$0xff]
  %v1575 = vld [vmem:[%s1 + $0x2fc8] sm:$0xff]
  %v1576 = vld [vmem:[%s1 + $0x2fd0] sm:$0xff]
  %v1577 = vld [vmem:[%s1 + $0x2fd8] sm:$0xff]
  %v1578 = vld [vmem:[%s1 + $0x2fe0] sm:$0xff]
  %v1579 = vld [vmem:[%s1 + $0x2fe8] sm:$0xff]
  %v1580 = vld [vmem:[%s1 + $0x2ff0] sm:$0xff]
  %v1581 = vld [vmem:[%s1 + $0x2ff8] sm:$0xff]
  %v1582 = vld [vmem:[%s1 + $0x3000] sm:$0xff]
  %v1583 = vld [vmem:[%s1 + $0x3008] sm:$0xff]
  %v1584 = vld [vmem:[%s1 + $0x3010] sm:$0xff]
  %v1585 = vld [vmem:[%s1 + $0x3018] sm:$0xff]
  %v1586 = vld [vmem:[%s1 + $0x3020] sm:$0xff]
  %v1587 = vld [vmem:[%s1 + $0x3028] sm:$0xff]
  %v1588 = vld [vmem:[%s1 + $0x3030] sm:$0xff]
  %v1589 = vld [vmem:[%s1 + $0x3038] sm:$0xff]
  %v1590 = vld [vmem:[%s1 + $0x3040] sm:$0xff]
  %v1591 = vld [vmem:[%s1 + $0x3048] sm:$0xff]
  %v1592 = vld [vmem:[%s1 + $0x3050] sm:$0xff]
  %v1593 = vld [vmem:[%s1 + $0x3058] sm:$0xff]
  %v1594 = vld [vmem:[%s1 + $0x3060] sm:$0xff]
  %v1595 = vld [vmem:[%s1 + $0x3068] sm:$0xff]
  %v1596 = vld [vmem:[%s1 + $0x3070] sm:$0xff]
  %v1597 = vld [vmem:[%s1 + $0x3078] sm:$0xff]
  %v1598 = vld [vmem:[%s1 + $0x3080] sm:$0xff]
  %v1599 = vld [vmem:[%s1 + $0x3088] sm:$0xff]
  %v1600 = vld [vmem:[%s1 + $0x3090] sm:$0xff]
  %v1601 = vld [vmem:[%s1 + $0x3098] sm:$0xff]
  %v1602 = vld [vmem:[%s1 + $0x30a0] sm:$0xff]
  %v1603 = vld [vmem:[%s1 + $0x30a8] sm:$0xff]
  %v1604 = vld [vmem:[%s1 + $0x30b0] sm:$0xff]
  %v1605 = vld [vmem:[%s1 + $0x30b8] sm:$0xff]
  %v1606 = vld [vmem:[%s1 + $0x30c0] sm:$0xff]
  %v1607 = vld [vmem:[%s1 + $0x30c8] sm:$0xff]
  %v1608 = vld [vmem:[%s1 + $0x30d0] sm:$0xff]
  %v1609 = vld [vmem:[%s1 + $0x30d8] sm:$0xff]
  %v1610 = vld [vmem:[%s1 + $0x30e0] sm:$0xff]
  %v1611 = vld [vmem:[%s1 + $0x30e8] sm:$0xff]
  %v1612 = vld [vmem:[%s1 + $0x30f0] sm:$0xff]
  %v1613 = vld [vmem:[%s1 + $0x30f8] sm:$0xff]
  %v1614 = vld [vmem:[%s2] sm:$0xf]
  %v1616 = vlaneseq
  %v1617 = vshrl.u32 %v1616, 7
  %v1618 = vsub.s32 0, %v1617
  %v1619 = vrot.slane %v1614, %v1618
  %v1620 = vlaneseq
  %v1621 = vshrl.u32 %v1620, 7
  %v1622 = vsub.s32 1, %v1621
  %v1623 = vrot.slane %v1614, %v1622
  %v1624 = vlaneseq
  %v1625 = vshrl.u32 %v1624, 7
  %v1626 = vsub.s32 2, %v1625
  %v1627 = vrot.slane %v1614, %v1626
  %v1628 = vlaneseq
  %v1629 = vshrl.u32 %v1628, 7
  %v1630 = vsub.s32 3, %v1629
  %v1631 = vrot.slane %v1614, %v1630
  %v1661 = vunpack.c.l.b16 %v21
  %v1662 = vunpack.c.h.b16 %v21
  %v1663 = vunpack.c.l.b16 %v22
  %v1664 = vunpack.c.h.b16 %v22
  %v1665 = vunpack.c.l.b16 %v23
  %v1666 = vunpack.c.h.b16 %v23
  %v1667 = vunpack.c.l.b16 %v24
  %v1668 = vunpack.c.h.b16 %v24
  %v1669 = vunpack.c.l.b16 %v25
  %v1670 = vunpack.c.h.b16 %v25
  %v1671 = vunpack.c.l.b16 %v26
  %v1672 = vunpack.c.h.b16 %v26
  %v1673 = vunpack.c.l.b16 %v27
  %v1674 = vunpack.c.h.b16 %v27
  %v1675 = vunpack.c.l.b16 %v28
  %v1676 = vunpack.c.h.b16 %v28
  %v1677 = vunpack.c.l.b16 %v29
  %v1678 = vunpack.c.h.b16 %v29
  %v1679 = vunpack.c.l.b16 %v30
  %v1680 = vunpack.c.h.b16 %v30
  %v1681 = vunpack.c.l.b16 %v31
  %v1682 = vunpack.c.h.b16 %v31
  %v1683 = vunpack.c.l.b16 %v32
  %v1684 = vunpack.c.h.b16 %v32
  %v1685 = vunpack.c.l.b16 %v33
  %v1686 = vunpack.c.h.b16 %v33
  %v1687 = vunpack.c.l.b16 %v34
  %v1688 = vunpack.c.h.b16 %v34
  %v1689 = vunpack.c.l.b16 %v35
  %v1690 = vunpack.c.h.b16 %v35
  %v1691 = vunpack.c.l.b16 %v36
  %v1692 = vunpack.c.h.b16 %v36
  %v1693 = vunpack.c.l.b16 %v37
  %v1694 = vunpack.c.h.b16 %v37
  %v1695 = vunpack.c.l.b16 %v38
  %v1696 = vunpack.c.h.b16 %v38
  %v1697 = vunpack.c.l.b16 %v39
  %v1698 = vunpack.c.h.b16 %v39
  %v1699 = vunpack.c.l.b16 %v40
  %v1700 = vunpack.c.h.b16 %v40
  %v1701 = vunpack.c.l.b16 %v41
  %v1702 = vunpack.c.h.b16 %v41
  %v1703 = vunpack.c.l.b16 %v42
  %v1704 = vunpack.c.h.b16 %v42
  %v1705 = vunpack.c.l.b16 %v43
  %v1706 = vunpack.c.h.b16 %v43
  %v1707 = vunpack.c.l.b16 %v44
  %v1708 = vunpack.c.h.b16 %v44
  %v1709 = vunpack.c.l.b16 %v45
  %v1710 = vpack.c.b16 %v1661, %v1661
  %v1711 = vpack.c.b16 %v1662, %v1662
  %v1712 = vpack.c.b16 %v1663, %v1663
  %v1713 = vpack.c.b16 %v1664, %v1664
  %v1714 = vpack.c.b16 %v1665, %v1665
  %v1715 = vpack.c.b16 %v1666, %v1666
  %v1716 = vpack.c.b16 %v1667, %v1667
  %v1717 = vpack.c.b16 %v1668, %v1668
  %v1718 = vpack.c.b16 %v1669, %v1669
  %v1719 = vpack.c.b16 %v1670, %v1670
  %v1720 = vpack.c.b16 %v1671, %v1671
  %v1721 = vpack.c.b16 %v1672, %v1672
  %v1722 = vpack.c.b16 %v1673, %v1673
  %v1723 = vpack.c.b16 %v1674, %v1674
  %v1724 = vpack.c.b16 %v1675, %v1675
  %v1725 = vpack.c.b16 %v1676, %v1676
  %v1726 = vpack.c.b16 %v1677, %v1677
  %v1727 = vpack.c.b16 %v1678, %v1678
  %v1728 = vpack.c.b16 %v1679, %v1679
  %v1729 = vpack.c.b16 %v1680, %v1680
  %v1730 = vpack.c.b16 %v1681, %v1681
  %v1731 = vpack.c.b16 %v1682, %v1682
  %v1732 = vpack.c.b16 %v1683, %v1683
  %v1733 = vpack.c.b16 %v1684, %v1684
  %v1734 = vpack.c.b16 %v1685, %v1685
  %v1735 = vpack.c.b16 %v1686, %v1686
  %v1736 = vpack.c.b16 %v1687, %v1687
  %v1737 = vpack.c.b16 %v1688, %v1688
  %v1738 = vpack.c.b16 %v1689, %v1689
  %v1739 = vpack.c.b16 %v1690, %v1690
  %v1740 = vpack.c.b16 %v1691, %v1691
  %v1741 = vpack.c.b16 %v1692, %v1692
  %v1742 = vpack.c.b16 %v1693, %v1693
  %v1743 = vpack.c.b16 %v1694, %v1694
  %v1744 = vpack.c.b16 %v1695, %v1695
  %v1745 = vpack.c.b16 %v1696, %v1696
  %v1746 = vpack.c.b16 %v1697, %v1697
  %v1747 = vpack.c.b16 %v1698, %v1698
  %v1748 = vpack.c.b16 %v1699, %v1699
  %v1749 = vpack.c.b16 %v1700, %v1700
  %v1750 = vpack.c.b16 %v1701, %v1701
  %v1751 = vpack.c.b16 %v1702, %v1702
  %v1752 = vpack.c.b16 %v1703, %v1703
  %v1753 = vpack.c.b16 %v1704, %v1704
  %v1754 = vpack.c.b16 %v1705, %v1705
  %v1755 = vpack.c.b16 %v1706, %v1706
  %v1756 = vpack.c.b16 %v1707, %v1707
  %v1757 = vpack.c.b16 %v1708, %v1708
  %v1758 = vpack.c.b16 %v1709, %v1709
  %v3376 = vunpack.c.l.b16 %v46
  %v3377 = vunpack.c.h.b16 %v46
  %v3378 = vunpack.c.l.b16 %v47
  %v3379 = vunpack.c.h.b16 %v47
  %v3380 = vunpack.c.l.b16 %v48
  %v3381 = vunpack.c.h.b16 %v48
  %v3382 = vunpack.c.l.b16 %v49
  %v3383 = vunpack.c.h.b16 %v49
  %v3384 = vunpack.c.l.b16 %v50
  %v3385 = vunpack.c.h.b16 %v50
  %v3386 = vunpack.c.l.b16 %v51
  %v3387 = vunpack.c.h.b16 %v51
  %v3388 = vunpack.c.l.b16 %v52
  %v3389 = vunpack.c.h.b16 %v52
  %v3390 = vunpack.c.l.b16 %v53
  %v3391 = vunpack.c.h.b16 %v53
  %v3392 = vunpack.c.l.b16 %v54
  %v3393 = vunpack.c.h.b16 %v54
  %v3394 = vunpack.c.l.b16 %v55
  %v3395 = vunpack.c.h.b16 %v55
  %v3396 = vunpack.c.l.b16 %v56
  %v3397 = vunpack.c.h.b16 %v56
  %v3398 = vunpack.c.l.b16 %v57
  %v3399 = vunpack.c.h.b16 %v57
  %v3400 = vunpack.c.l.b16 %v58
  %v3401 = vunpack.c.h.b16 %v58
  %v3402 = vunpack.c.l.b16 %v59
  %v3403 = vunpack.c.h.b16 %v59
  %v3404 = vunpack.c.l.b16 %v60
  %v3405 = vunpack.c.h.b16 %v60
  %v3406 = vunpack.c.l.b16 %v61
  %v3407 = vunpack.c.h.b16 %v61
  %v3408 = vunpack.c.l.b16 %v62
  %v3409 = vunpack.c.h.b16 %v62
  %v3410 = vunpack.c.l.b16 %v63
  %v3411 = vunpack.c.h.b16 %v63
  %v3412 = vunpack.c.l.b16 %v64
  %v3413 = vunpack.c.h.b16 %v64
  %v3414 = vunpack.c.l.b16 %v65
  %v3415 = vunpack.c.h.b16 %v65
  %v3416 = vunpack.c.l.b16 %v66
  %v3417 = vunpack.c.h.b16 %v66
  %v3418 = vunpack.c.l.b16 %v67
  %v3419 = vunpack.c.h.b16 %v67
  %v3420 = vunpack.c.l.b16 %v68
  %v3421 = vunpack.c.h.b16 %v68
  %v3422 = vunpack.c.l.b16 %v69
  %v3423 = vunpack.c.h.b16 %v69
  %v3424 = vunpack.c.l.b16 %v70
  %v3425 = vunpack.c.h.b16 %v70
  %v3426 = vunpack.c.l.b16 %v71
  %v3427 = vunpack.c.h.b16 %v71
  %v3428 = vunpack.c.l.b16 %v72
  %v3429 = vunpack.c.h.b16 %v72
  %v3430 = vunpack.c.l.b16 %v73
  %v3431 = vunpack.c.h.b16 %v73
  %v3432 = vunpack.c.l.b16 %v74
  %v3433 = vunpack.c.h.b16 %v74
  %v3434 = vunpack.c.l.b16 %v75
  %v3435 = vunpack.c.h.b16 %v75
  %v3436 = vunpack.c.l.b16 %v76
  %v3437 = vunpack.c.h.b16 %v76
  %v3438 = vunpack.c.l.b16 %v77
  %v3439 = vunpack.c.h.b16 %v77
  %v3440 = vunpack.c.l.b16 %v78
  %v3441 = vunpack.c.h.b16 %v78
  %v3442 = vunpack.c.l.b16 %v79
  %v3443 = vunpack.c.h.b16 %v79
  %v3444 = vunpack.c.l.b16 %v80
  %v3445 = vunpack.c.h.b16 %v80
  %v3446 = vunpack.c.l.b16 %v81
  %v3447 = vunpack.c.h.b16 %v81
  %v3448 = vunpack.c.l.b16 %v82
  %v3449 = vunpack.c.h.b16 %v82
  %v3450 = vunpack.c.l.b16 %v83
  %v3451 = vunpack.c.h.b16 %v83
  %v3452 = vunpack.c.l.b16 %v84
  %v3453 = vunpack.c.h.b16 %v84
  %v3454 = vunpack.c.l.b16 %v85
  %v3455 = vunpack.c.h.b16 %v85
  %v3456 = vunpack.c.l.b16 %v86
  %v3457 = vunpack.c.h.b16 %v86
  %v3458 = vunpack.c.l.b16 %v87
  %v3459 = vunpack.c.h.b16 %v87
  %v3460 = vunpack.c.l.b16 %v88
  %v3461 = vunpack.c.h.b16 %v88
  %v3462 = vunpack.c.l.b16 %v89
  %v3463 = vunpack.c.h.b16 %v89
  %v3464 = vunpack.c.l.b16 %v90
  %v3465 = vunpack.c.h.b16 %v90
  %v3466 = vunpack.c.l.b16 %v91
  %v3467 = vunpack.c.h.b16 %v91
  %v3468 = vunpack.c.l.b16 %v92
  %v3469 = vunpack.c.h.b16 %v92
  %v3470 = vunpack.c.l.b16 %v93
  %v3471 = vunpack.c.h.b16 %v93
  %v3472 = vunpack.c.l.b16 %v94
  %v3473 = vunpack.c.h.b16 %v94
  %v3474 = vunpack.c.l.b16 %v95
  %v3475 = vunpack.c.h.b16 %v95
  %v3476 = vunpack.c.l.b16 %v96
  %v3477 = vunpack.c.h.b16 %v96
  %v3478 = vunpack.c.l.b16 %v97
  %v3479 = vunpack.c.h.b16 %v97
  %v3480 = vunpack.c.l.b16 %v98
  %v3481 = vunpack.c.h.b16 %v98
  %v3482 = vunpack.c.l.b16 %v99
  %v3483 = vunpack.c.h.b16 %v99
  %v3484 = vunpack.c.l.b16 %v100
  %v3485 = vunpack.c.h.b16 %v100
  %v3486 = vunpack.c.l.b16 %v101
  %v3487 = vunpack.c.h.b16 %v101
  %v3488 = vunpack.c.l.b16 %v102
  %v3489 = vunpack.c.h.b16 %v102
  %v3490 = vunpack.c.l.b16 %v103
  %v3491 = vunpack.c.h.b16 %v103
  %v3492 = vunpack.c.l.b16 %v104
  %v3493 = vunpack.c.h.b16 %v104
  %v3494 = vunpack.c.l.b16 %v105
  %v3495 = vunpack.c.h.b16 %v105
  %v3496 = vunpack.c.l.b16 %v106
  %v3497 = vunpack.c.h.b16 %v106
  %v3498 = vunpack.c.l.b16 %v107
  %v3499 = vunpack.c.h.b16 %v107
  %v3500 = vunpack.c.l.b16 %v108
  %v3501 = vunpack.c.h.b16 %v108
  %v3502 = vunpack.c.l.b16 %v109
  %v3503 = vunpack.c.h.b16 %v109
  %v3504 = vunpack.c.l.b16 %v110
  %v3505 = vunpack.c.h.b16 %v110
  %v3506 = vunpack.c.l.b16 %v111
  %v3507 = vunpack.c.h.b16 %v111
  %v3508 = vunpack.c.l.b16 %v112
  %v3509 = vunpack.c.h.b16 %v112
  %v3510 = vunpack.c.l.b16 %v113
  %v3511 = vunpack.c.h.b16 %v113
  %v3512 = vunpack.c.l.b16 %v114
  %v3513 = vunpack.c.h.b16 %v114
  %v3514 = vunpack.c.l.b16 %v115
  %v3515 = vunpack.c.h.b16 %v115
  %v3516 = vunpack.c.l.b16 %v116
  %v3517 = vunpack.c.h.b16 %v116
  %v3518 = vunpack.c.l.b16 %v117
  %v3519 = vunpack.c.h.b16 %v117
  %v3520 = vunpack.c.l.b16 %v118
  %v3521 = vunpack.c.h.b16 %v118
  %v3522 = vunpack.c.l.b16 %v119
  %v3523 = vunpack.c.h.b16 %v119
  %v3524 = vunpack.c.l.b16 %v120
  %v3525 = vunpack.c.h.b16 %v120
  %v3526 = vunpack.c.l.b16 %v121
  %v3527 = vunpack.c.h.b16 %v121
  %v3528 = vunpack.c.l.b16 %v122
  %v3529 = vunpack.c.h.b16 %v122
  %v3530 = vunpack.c.l.b16 %v123
  %v3531 = vunpack.c.h.b16 %v123
  %v3532 = vunpack.c.l.b16 %v124
  %v3533 = vunpack.c.h.b16 %v124
  %v3534 = vunpack.c.l.b16 %v125
  %v3535 = vunpack.c.h.b16 %v125
  %v3536 = vunpack.c.l.b16 %v126
  %v3537 = vunpack.c.h.b16 %v126
  %v3538 = vunpack.c.l.b16 %v127
  %v3539 = vunpack.c.h.b16 %v127
  %v3540 = vunpack.c.l.b16 %v128
  %v3541 = vunpack.c.h.b16 %v128
  %v3542 = vunpack.c.l.b16 %v129
  %v3543 = vunpack.c.h.b16 %v129
  %v3544 = vunpack.c.l.b16 %v130
  %v3545 = vunpack.c.h.b16 %v130
  %v3546 = vunpack.c.l.b16 %v131
  %v3547 = vunpack.c.h.b16 %v131
  %v3548 = vunpack.c.l.b16 %v132
  %v3549 = vunpack.c.h.b16 %v132
  %v3550 = vunpack.c.l.b16 %v133
  %v3551 = vunpack.c.h.b16 %v133
  %v3552 = vunpack.c.l.b16 %v134
  %v3553 = vunpack.c.h.b16 %v134
  %v3554 = vunpack.c.l.b16 %v135
  %v3555 = vunpack.c.h.b16 %v135
  %v3556 = vunpack.c.l.b16 %v136
  %v3557 = vunpack.c.h.b16 %v136
  %v3558 = vunpack.c.l.b16 %v137
  %v3559 = vunpack.c.h.b16 %v137
  %v3560 = vunpack.c.l.b16 %v138
  %v3561 = vunpack.c.h.b16 %v138
  %v3562 = vunpack.c.l.b16 %v139
  %v3563 = vunpack.c.h.b16 %v139
  %v3564 = vunpack.c.l.b16 %v140
  %v3565 = vunpack.c.h.b16 %v140
  %v3566 = vunpack.c.l.b16 %v141
  %v3567 = vunpack.c.h.b16 %v141
  %v3568 = vunpack.c.l.b16 %v142
  %v3569 = vunpack.c.h.b16 %v142
  %v3570 = vunpack.c.l.b16 %v143
  %v3571 = vunpack.c.h.b16 %v143
  %v3572 = vunpack.c.l.b16 %v144
  %v3573 = vunpack.c.h.b16 %v144
  %v3574 = vunpack.c.l.b16 %v145
  %v3575 = vunpack.c.h.b16 %v145
  %v3576 = vunpack.c.l.b16 %v146
  %v3577 = vunpack.c.h.b16 %v146
  %v3578 = vunpack.c.l.b16 %v147
  %v3579 = vunpack.c.h.b16 %v147
  %v3580 = vunpack.c.l.b16 %v148
  %v3581 = vunpack.c.h.b16 %v148
  %v3582 = vunpack.c.l.b16 %v149
  %v3583 = vunpack.c.h.b16 %v149
  %v3584 = vunpack.c.l.b16 %v150
  %v3585 = vunpack.c.h.b16 %v150
  %v3586 = vunpack.c.l.b16 %v151
  %v3587 = vunpack.c.h.b16 %v151
  %v3588 = vunpack.c.l.b16 %v152
  %v3589 = vunpack.c.h.b16 %v152
  %v3590 = vunpack.c.l.b16 %v153
  %v3591 = vunpack.c.h.b16 %v153
  %v3592 = vunpack.c.l.b16 %v154
  %v3593 = vunpack.c.h.b16 %v154
  %v3594 = vunpack.c.l.b16 %v155
  %v3595 = vunpack.c.h.b16 %v155
  %v3596 = vunpack.c.l.b16 %v156
  %v3597 = vunpack.c.h.b16 %v156
  %v3598 = vunpack.c.l.b16 %v157
  %v3599 = vunpack.c.h.b16 %v157
  %v3600 = vunpack.c.l.b16 %v158
  %v3601 = vunpack.c.h.b16 %v158
  %v3602 = vunpack.c.l.b16 %v159
  %v3603 = vunpack.c.h.b16 %v159
  %v3604 = vunpack.c.l.b16 %v160
  %v3605 = vunpack.c.h.b16 %v160
  %v3606 = vunpack.c.l.b16 %v161
  %v3607 = vunpack.c.h.b16 %v161
  %v3608 = vunpack.c.l.b16 %v162
  %v3609 = vunpack.c.h.b16 %v162
  %v3610 = vunpack.c.l.b16 %v163
  %v3611 = vunpack.c.h.b16 %v163
  %v3612 = vunpack.c.l.b16 %v164
  %v3613 = vunpack.c.h.b16 %v164
  %v3614 = vunpack.c.l.b16 %v165
  %v3615 = vunpack.c.h.b16 %v165
  %v3616 = vunpack.c.l.b16 %v166
  %v3617 = vunpack.c.h.b16 %v166
  %v3618 = vunpack.c.l.b16 %v167
  %v3619 = vunpack.c.h.b16 %v167
  %v3620 = vunpack.c.l.b16 %v168
  %v3621 = vunpack.c.h.b16 %v168
  %v3622 = vunpack.c.l.b16 %v169
  %v3623 = vunpack.c.h.b16 %v169
  %v3624 = vunpack.c.l.b16 %v170
  %v3625 = vunpack.c.h.b16 %v170
  %v3626 = vunpack.c.l.b16 %v171
  %v3627 = vunpack.c.h.b16 %v171
  %v3628 = vunpack.c.l.b16 %v172
  %v3629 = vunpack.c.h.b16 %v172
  %v3630 = vunpack.c.l.b16 %v173
  %v3631 = vunpack.c.h.b16 %v173
  %v3632 = vunpack.c.l.b16 %v174
  %v3633 = vunpack.c.h.b16 %v174
  %v3634 = vunpack.c.l.b16 %v175
  %v3635 = vunpack.c.h.b16 %v175
  %v3636 = vunpack.c.l.b16 %v176
  %v3637 = vunpack.c.h.b16 %v176
  %v3638 = vunpack.c.l.b16 %v177
  %v3639 = vunpack.c.h.b16 %v177
  %v3640 = vunpack.c.l.b16 %v178
  %v3641 = vunpack.c.h.b16 %v178
  %v3642 = vunpack.c.l.b16 %v179
  %v3643 = vunpack.c.h.b16 %v179
  %v3644 = vunpack.c.l.b16 %v180
  %v3645 = vunpack.c.h.b16 %v180
  %v3646 = vunpack.c.l.b16 %v181
  %v3647 = vunpack.c.h.b16 %v181
  %v3648 = vunpack.c.l.b16 %v182
  %v3649 = vunpack.c.h.b16 %v182
  %v3650 = vunpack.c.l.b16 %v183
  %v3651 = vunpack.c.h.b16 %v183
  %v3652 = vunpack.c.l.b16 %v184
  %v3653 = vunpack.c.h.b16 %v184
  %v3654 = vunpack.c.l.b16 %v185
  %v3655 = vunpack.c.h.b16 %v185
  %v3656 = vunpack.c.l.b16 %v186
  %v3657 = vunpack.c.h.b16 %v186
  %v3658 = vunpack.c.l.b16 %v187
  %v3659 = vunpack.c.h.b16 %v187
  %v3660 = vunpack.c.l.b16 %v188
  %v3661 = vunpack.c.h.b16 %v188
  %v3662 = vunpack.c.l.b16 %v189
  %v3663 = vunpack.c.h.b16 %v189
  %v3664 = vunpack.c.l.b16 %v190
  %v3665 = vunpack.c.h.b16 %v190
  %v3666 = vunpack.c.l.b16 %v191
  %v3667 = vunpack.c.h.b16 %v191
  %v3668 = vunpack.c.l.b16 %v192
  %v3669 = vunpack.c.h.b16 %v192
  %v3670 = vunpack.c.l.b16 %v193
  %v3671 = vunpack.c.h.b16 %v193
  %v3672 = vunpack.c.l.b16 %v194
  %v3673 = vunpack.c.h.b16 %v194
  %v3674 = vunpack.c.l.b16 %v195
  %v3675 = vunpack.c.h.b16 %v195
  %v3676 = vunpack.c.l.b16 %v196
  %v3677 = vunpack.c.h.b16 %v196
  %v3678 = vunpack.c.l.b16 %v197
  %v3679 = vunpack.c.h.b16 %v197
  %v3680 = vunpack.c.l.b16 %v198
  %v3681 = vunpack.c.h.b16 %v198
  %v3682 = vunpack.c.l.b16 %v199
  %v3683 = vunpack.c.h.b16 %v199
  %v3684 = vunpack.c.l.b16 %v200
  %v3685 = vunpack.c.h.b16 %v200
  %v3686 = vunpack.c.l.b16 %v201
  %v3687 = vunpack.c.h.b16 %v201
  %v3688 = vunpack.c.l.b16 %v202
  %v3689 = vunpack.c.h.b16 %v202
  %v3690 = vunpack.c.l.b16 %v203
  %v3691 = vunpack.c.h.b16 %v203
  %v3692 = vunpack.c.l.b16 %v204
  %v3693 = vunpack.c.h.b16 %v204
  %v3694 = vunpack.c.l.b16 %v205
  %v3695 = vunpack.c.h.b16 %v205
  %v3696 = vunpack.c.l.b16 %v206
  %v3697 = vunpack.c.h.b16 %v206
  %v3698 = vunpack.c.l.b16 %v207
  %v3699 = vunpack.c.h.b16 %v207
  %v3700 = vunpack.c.l.b16 %v208
  %v3701 = vunpack.c.h.b16 %v208
  %v3702 = vunpack.c.l.b16 %v209
  %v3703 = vunpack.c.h.b16 %v209
  %v3704 = vunpack.c.l.b16 %v210
  %v3705 = vunpack.c.h.b16 %v210
  %v3706 = vunpack.c.l.b16 %v211
  %v3707 = vunpack.c.h.b16 %v211
  %v3708 = vunpack.c.l.b16 %v212
  %v3709 = vunpack.c.h.b16 %v212
  %v3710 = vunpack.c.l.b16 %v213
  %v3711 = vunpack.c.h.b16 %v213
  %v3712 = vunpack.c.l.b16 %v214
  %v3713 = vunpack.c.h.b16 %v214
  %v3714 = vunpack.c.l.b16 %v215
  %v3715 = vunpack.c.h.b16 %v215
  %v3716 = vunpack.c.l.b16 %v216
  %v3717 = vunpack.c.h.b16 %v216
  %v3718 = vunpack.c.l.b16 %v217
  %v3719 = vunpack.c.h.b16 %v217
  %v3720 = vunpack.c.l.b16 %v218
  %v3721 = vunpack.c.h.b16 %v218
  %v3722 = vunpack.c.l.b16 %v219
  %v3723 = vunpack.c.h.b16 %v219
  %v3724 = vunpack.c.l.b16 %v220
  %v3725 = vunpack.c.h.b16 %v220
  %v3726 = vunpack.c.l.b16 %v221
  %v3727 = vunpack.c.h.b16 %v221
  %v3728 = vunpack.c.l.b16 %v222
  %v3729 = vunpack.c.h.b16 %v222
  %v3730 = vunpack.c.l.b16 %v223
  %v3731 = vunpack.c.h.b16 %v223
  %v3732 = vunpack.c.l.b16 %v224
  %v3733 = vunpack.c.h.b16 %v224
  %v3734 = vunpack.c.l.b16 %v225
  %v3735 = vunpack.c.h.b16 %v225
  %v3736 = vunpack.c.l.b16 %v226
  %v3737 = vunpack.c.h.b16 %v226
  %v3738 = vunpack.c.l.b16 %v227
  %v3739 = vunpack.c.h.b16 %v227
  %v3740 = vunpack.c.l.b16 %v228
  %v3741 = vunpack.c.h.b16 %v228
  %v3742 = vunpack.c.l.b16 %v229
  %v3743 = vunpack.c.h.b16 %v229
  %v3744 = vunpack.c.l.b16 %v230
  %v3745 = vunpack.c.h.b16 %v230
  %v3746 = vunpack.c.l.b16 %v231
  %v3747 = vunpack.c.h.b16 %v231
  %v3748 = vunpack.c.l.b16 %v232
  %v3749 = vunpack.c.h.b16 %v232
  %v3750 = vunpack.c.l.b16 %v233
  %v3751 = vunpack.c.h.b16 %v233
  %v3752 = vunpack.c.l.b16 %v234
  %v3753 = vunpack.c.h.b16 %v234
  %v3754 = vunpack.c.l.b16 %v235
  %v3755 = vunpack.c.h.b16 %v235
  %v3756 = vunpack.c.l.b16 %v236
  %v3757 = vunpack.c.h.b16 %v236
  %v3758 = vunpack.c.l.b16 %v237
  %v3759 = vunpack.c.h.b16 %v237
  %v3760 = vunpack.c.l.b16 %v238
  %v3761 = vunpack.c.h.b16 %v238
  %v3762 = vunpack.c.l.b16 %v239
  %v3763 = vunpack.c.h.b16 %v239
  %v3764 = vunpack.c.l.b16 %v240
  %v3765 = vunpack.c.h.b16 %v240
  %v3766 = vunpack.c.l.b16 %v241
  %v3767 = vunpack.c.h.b16 %v241
  %v3768 = vunpack.c.l.b16 %v242
  %v3769 = vunpack.c.h.b16 %v242
  %v3770 = vunpack.c.l.b16 %v243
  %v3771 = vunpack.c.h.b16 %v243
  %v3772 = vunpack.c.l.b16 %v244
  %v3773 = vunpack.c.h.b16 %v244
  %v3774 = vunpack.c.l.b16 %v245
  %v3775 = vunpack.c.h.b16 %v245
  %v3776 = vunpack.c.l.b16 %v246
  %v3777 = vunpack.c.h.b16 %v246
  %v3778 = vunpack.c.l.b16 %v247
  %v3779 = vunpack.c.h.b16 %v247
  %v3780 = vunpack.c.l.b16 %v248
  %v3781 = vunpack.c.h.b16 %v248
  %v3782 = vunpack.c.l.b16 %v249
  %v3783 = vunpack.c.h.b16 %v249
  %v3784 = vunpack.c.l.b16 %v250
  %v3785 = vunpack.c.h.b16 %v250
  %v3786 = vunpack.c.l.b16 %v251
  %v3787 = vunpack.c.h.b16 %v251
  %v3788 = vunpack.c.l.b16 %v252
  %v3789 = vunpack.c.h.b16 %v252
  %v3790 = vunpack.c.l.b16 %v253
  %v3791 = vunpack.c.h.b16 %v253
  %v3792 = vunpack.c.l.b16 %v254
  %v3793 = vunpack.c.h.b16 %v254
  %v3794 = vunpack.c.l.b16 %v255
  %v3795 = vunpack.c.h.b16 %v255
  %v3796 = vunpack.c.l.b16 %v256
  %v3797 = vunpack.c.h.b16 %v256
  %v3798 = vunpack.c.l.b16 %v257
  %v3799 = vunpack.c.h.b16 %v257
  %v3800 = vunpack.c.l.b16 %v258
  %v3801 = vunpack.c.h.b16 %v258
  %v3802 = vunpack.c.l.b16 %v259
  %v3803 = vunpack.c.h.b16 %v259
  %v3804 = vunpack.c.l.b16 %v260
  %v3805 = vunpack.c.h.b16 %v260
  %v3806 = vunpack.c.l.b16 %v261
  %v3807 = vunpack.c.h.b16 %v261
  %v3808 = vunpack.c.l.b16 %v262
  %v3809 = vunpack.c.h.b16 %v262
  %v3810 = vunpack.c.l.b16 %v263
  %v3811 = vunpack.c.h.b16 %v263
  %v3812 = vunpack.c.l.b16 %v264
  %v3813 = vunpack.c.h.b16 %v264
  %v3814 = vunpack.c.l.b16 %v265
  %v3815 = vunpack.c.h.b16 %v265
  %v3816 = vunpack.c.l.b16 %v266
  %v3817 = vunpack.c.h.b16 %v266
  %v3818 = vunpack.c.l.b16 %v267
  %v3819 = vunpack.c.h.b16 %v267
  %v3820 = vunpack.c.l.b16 %v268
  %v3821 = vunpack.c.h.b16 %v268
  %v3822 = vunpack.c.l.b16 %v269
  %v3823 = vunpack.c.h.b16 %v269
  %v3824 = vunpack.c.l.b16 %v270
  %v3825 = vunpack.c.h.b16 %v270
  %v3826 = vunpack.c.l.b16 %v271
  %v3827 = vunpack.c.h.b16 %v271
  %v3828 = vunpack.c.l.b16 %v272
  %v3829 = vunpack.c.h.b16 %v272
  %v3830 = vunpack.c.l.b16 %v273
  %v3831 = vunpack.c.h.b16 %v273
  %v3832 = vunpack.c.l.b16 %v274
  %v3833 = vunpack.c.h.b16 %v274
  %v3834 = vunpack.c.l.b16 %v275
  %v3835 = vunpack.c.h.b16 %v275
  %v3836 = vunpack.c.l.b16 %v276
  %v3837 = vunpack.c.h.b16 %v276
  %v3838 = vunpack.c.l.b16 %v277
  %v3839 = vunpack.c.h.b16 %v277
  %v3840 = vunpack.c.l.b16 %v278
  %v3841 = vunpack.c.h.b16 %v278
  %v3842 = vunpack.c.l.b16 %v279
  %v3843 = vunpack.c.h.b16 %v279
  %v3844 = vunpack.c.l.b16 %v280
  %v3845 = vunpack.c.h.b16 %v280
  %v3846 = vunpack.c.l.b16 %v281
  %v3847 = vunpack.c.h.b16 %v281
  %v3848 = vunpack.c.l.b16 %v282
  %v3849 = vunpack.c.h.b16 %v282
  %v3850 = vunpack.c.l.b16 %v283
  %v3851 = vunpack.c.h.b16 %v283
  %v3852 = vunpack.c.l.b16 %v284
  %v3853 = vunpack.c.h.b16 %v284
  %v3854 = vunpack.c.l.b16 %v285
  %v3855 = vunpack.c.h.b16 %v285
  %v3856 = vunpack.c.l.b16 %v286
  %v3857 = vunpack.c.h.b16 %v286
  %v3858 = vunpack.c.l.b16 %v287
  %v3859 = vunpack.c.h.b16 %v287
  %v3860 = vunpack.c.l.b16 %v288
  %v3861 = vunpack.c.h.b16 %v288
  %v3862 = vunpack.c.l.b16 %v289
  %v3863 = vunpack.c.h.b16 %v289
  %v3864 = vunpack.c.l.b16 %v290
  %v3865 = vunpack.c.h.b16 %v290
  %v3866 = vunpack.c.l.b16 %v291
  %v3867 = vunpack.c.h.b16 %v291
  %v3868 = vunpack.c.l.b16 %v292
  %v3869 = vunpack.c.h.b16 %v292
  %v3870 = vunpack.c.l.b16 %v293
  %v3871 = vunpack.c.h.b16 %v293
  %v3872 = vunpack.c.l.b16 %v294
  %v3873 = vunpack.c.h.b16 %v294
  %v3874 = vunpack.c.l.b16 %v295
  %v3875 = vunpack.c.h.b16 %v295
  %v3876 = vunpack.c.l.b16 %v296
  %v3877 = vunpack.c.h.b16 %v296
  %v3878 = vunpack.c.l.b16 %v297
  %v3879 = vunpack.c.h.b16 %v297
  %v3880 = vunpack.c.l.b16 %v298
  %v3881 = vunpack.c.h.b16 %v298
  %v3882 = vunpack.c.l.b16 %v299
  %v3883 = vunpack.c.h.b16 %v299
  %v3884 = vunpack.c.l.b16 %v300
  %v3885 = vunpack.c.h.b16 %v300
  %v3886 = vunpack.c.l.b16 %v301
  %v3887 = vunpack.c.h.b16 %v301
  %v3888 = vunpack.c.l.b16 %v302
  %v3889 = vunpack.c.h.b16 %v302
  %v3890 = vunpack.c.l.b16 %v303
  %v3891 = vunpack.c.h.b16 %v303
  %v3892 = vunpack.c.l.b16 %v304
  %v3893 = vunpack.c.h.b16 %v304
  %v3894 = vunpack.c.l.b16 %v305
  %v3895 = vunpack.c.h.b16 %v305
  %v3896 = vunpack.c.l.b16 %v306
  %v3897 = vunpack.c.h.b16 %v306
  %v3898 = vunpack.c.l.b16 %v307
  %v3899 = vunpack.c.h.b16 %v307
  %v3900 = vunpack.c.l.b16 %v308
  %v3901 = vunpack.c.h.b16 %v308
  %v3902 = vunpack.c.l.b16 %v309
  %v3903 = vunpack.c.h.b16 %v309
  %v3904 = vunpack.c.l.b16 %v310
  %v3905 = vunpack.c.h.b16 %v310
  %v3906 = vunpack.c.l.b16 %v311
  %v3907 = vunpack.c.h.b16 %v311
  %v3908 = vunpack.c.l.b16 %v312
  %v3909 = vunpack.c.h.b16 %v312
  %v3910 = vunpack.c.l.b16 %v313
  %v3911 = vunpack.c.h.b16 %v313
  %v3912 = vunpack.c.l.b16 %v314
  %v3913 = vunpack.c.h.b16 %v314
  %v3914 = vunpack.c.l.b16 %v315
  %v3915 = vunpack.c.h.b16 %v315
  %v3916 = vunpack.c.l.b16 %v316
  %v3917 = vunpack.c.h.b16 %v316
  %v3918 = vunpack.c.l.b16 %v317
  %v3919 = vunpack.c.h.b16 %v317
  %v3920 = vunpack.c.l.b16 %v318
  %v3921 = vunpack.c.h.b16 %v318
  %v3922 = vunpack.c.l.b16 %v319
  %v3923 = vunpack.c.h.b16 %v319
  %v3924 = vunpack.c.l.b16 %v320
  %v3925 = vunpack.c.h.b16 %v320
  %v3926 = vunpack.c.l.b16 %v321
  %v3927 = vunpack.c.h.b16 %v321
  %v3928 = vunpack.c.l.b16 %v322
  %v3929 = vunpack.c.h.b16 %v322
  %v3930 = vunpack.c.l.b16 %v323
  %v3931 = vunpack.c.h.b16 %v323
  %v3932 = vunpack.c.l.b16 %v324
  %v3933 = vunpack.c.h.b16 %v324
  %v3934 = vunpack.c.l.b16 %v325
  %v3935 = vunpack.c.h.b16 %v325
  %v3936 = vunpack.c.l.b16 %v326
  %v3937 = vunpack.c.h.b16 %v326
  %v3938 = vunpack.c.l.b16 %v327
  %v3939 = vunpack.c.h.b16 %v327
  %v3940 = vunpack.c.l.b16 %v328
  %v3941 = vunpack.c.h.b16 %v328
  %v3942 = vunpack.c.l.b16 %v329
  %v3943 = vunpack.c.h.b16 %v329
  %v3944 = vunpack.c.l.b16 %v330
  %v3945 = vunpack.c.h.b16 %v330
  %v3946 = vunpack.c.l.b16 %v331
  %v3947 = vunpack.c.h.b16 %v331
  %v3948 = vunpack.c.l.b16 %v332
  %v3949 = vunpack.c.h.b16 %v332
  %v3950 = vunpack.c.l.b16 %v333
  %v3951 = vunpack.c.h.b16 %v333
  %v3952 = vunpack.c.l.b16 %v334
  %v3953 = vunpack.c.h.b16 %v334
  %v3954 = vunpack.c.l.b16 %v335
  %v3955 = vunpack.c.h.b16 %v335
  %v3956 = vunpack.c.l.b16 %v336
  %v3957 = vunpack.c.h.b16 %v336
  %v3958 = vunpack.c.l.b16 %v337
  %v3959 = vunpack.c.h.b16 %v337
  %v3960 = vunpack.c.l.b16 %v338
  %v3961 = vunpack.c.h.b16 %v338
  %v3962 = vunpack.c.l.b16 %v339
  %v3963 = vunpack.c.h.b16 %v339
  %v3964 = vunpack.c.l.b16 %v340
  %v3965 = vunpack.c.h.b16 %v340
  %v3966 = vunpack.c.l.b16 %v341
  %v3967 = vunpack.c.h.b16 %v341
  %v3968 = vunpack.c.l.b16 %v342
  %v3969 = vunpack.c.h.b16 %v342
  %v3970 = vunpack.c.l.b16 %v343
  %v3971 = vunpack.c.h.b16 %v343
  %v3972 = vunpack.c.l.b16 %v344
  %v3973 = vunpack.c.h.b16 %v344
  %v3974 = vunpack.c.l.b16 %v345
  %v3975 = vunpack.c.h.b16 %v345
  %v3976 = vunpack.c.l.b16 %v346
  %v3977 = vunpack.c.h.b16 %v346
  %v3978 = vunpack.c.l.b16 %v347
  %v3979 = vunpack.c.h.b16 %v347
  %v3980 = vunpack.c.l.b16 %v348
  %v3981 = vunpack.c.h.b16 %v348
  %v3982 = vunpack.c.l.b16 %v349
  %v3983 = vunpack.c.h.b16 %v349
  %v3984 = vunpack.c.l.b16 %v350
  %v3985 = vunpack.c.h.b16 %v350
  %v3986 = vunpack.c.l.b16 %v351
  %v3987 = vunpack.c.h.b16 %v351
  %v3988 = vunpack.c.l.b16 %v352
  %v3989 = vunpack.c.h.b16 %v352
  %v3990 = vunpack.c.l.b16 %v353
  %v3991 = vunpack.c.h.b16 %v353
  %v3992 = vunpack.c.l.b16 %v354
  %v3993 = vunpack.c.h.b16 %v354
  %v3994 = vunpack.c.l.b16 %v355
  %v3995 = vunpack.c.h.b16 %v355
  %v3996 = vunpack.c.l.b16 %v356
  %v3997 = vunpack.c.h.b16 %v356
  %v3998 = vunpack.c.l.b16 %v357
  %v3999 = vunpack.c.h.b16 %v357
  %v4000 = vunpack.c.l.b16 %v358
  %v4001 = vunpack.c.h.b16 %v358
  %v4002 = vunpack.c.l.b16 %v359
  %v4003 = vunpack.c.h.b16 %v359
  %v4004 = vunpack.c.l.b16 %v360
  %v4005 = vunpack.c.h.b16 %v360
  %v4006 = vunpack.c.l.b16 %v361
  %v4007 = vunpack.c.h.b16 %v361
  %v4008 = vunpack.c.l.b16 %v362
  %v4009 = vunpack.c.h.b16 %v362
  %v4010 = vunpack.c.l.b16 %v363
  %v4011 = vunpack.c.h.b16 %v363
  %v4012 = vunpack.c.l.b16 %v364
  %v4013 = vunpack.c.h.b16 %v364
  %v4014 = vunpack.c.l.b16 %v365
  %v4015 = vunpack.c.h.b16 %v365
  %v4016 = vunpack.c.l.b16 %v366
  %v4017 = vunpack.c.h.b16 %v366
  %v4018 = vunpack.c.l.b16 %v367
  %v4019 = vunpack.c.h.b16 %v367
  %v4020 = vunpack.c.l.b16 %v368
  %v4021 = vunpack.c.h.b16 %v368
  %v4022 = vunpack.c.l.b16 %v369
  %v4023 = vunpack.c.h.b16 %v369
  %v4024 = vunpack.c.l.b16 %v370
  %v4025 = vunpack.c.h.b16 %v370
  %v4026 = vunpack.c.l.b16 %v371
  %v4027 = vunpack.c.h.b16 %v371
  %v4028 = vunpack.c.l.b16 %v372
  %v4029 = vunpack.c.h.b16 %v372
  %v4030 = vunpack.c.l.b16 %v373
  %v4031 = vunpack.c.h.b16 %v373
  %v4032 = vunpack.c.l.b16 %v374
  %v4033 = vunpack.c.h.b16 %v374
  %v4034 = vunpack.c.l.b16 %v375
  %v4035 = vunpack.c.h.b16 %v375
  %v4036 = vunpack.c.l.b16 %v376
  %v4037 = vunpack.c.h.b16 %v376
  %v4038 = vunpack.c.l.b16 %v377
  %v4039 = vunpack.c.h.b16 %v377
  %v4040 = vunpack.c.l.b16 %v378
  %v4041 = vunpack.c.h.b16 %v378
  %v4042 = vunpack.c.l.b16 %v379
  %v4043 = vunpack.c.h.b16 %v379
  %v4044 = vunpack.c.l.b16 %v380
  %v4045 = vunpack.c.h.b16 %v380
  %v4046 = vunpack.c.l.b16 %v381
  %v4047 = vunpack.c.h.b16 %v381
  %v4048 = vunpack.c.l.b16 %v382
  %v4049 = vunpack.c.h.b16 %v382
  %v4050 = vunpack.c.l.b16 %v383
  %v4051 = vunpack.c.h.b16 %v383
  %v4052 = vunpack.c.l.b16 %v384
  %v4053 = vunpack.c.h.b16 %v384
  %v4054 = vunpack.c.l.b16 %v385
  %v4055 = vunpack.c.h.b16 %v385
  %v4056 = vunpack.c.l.b16 %v386
  %v4057 = vunpack.c.h.b16 %v386
  %v4058 = vunpack.c.l.b16 %v387
  %v4059 = vunpack.c.h.b16 %v387
  %v4060 = vunpack.c.l.b16 %v388
  %v4061 = vunpack.c.h.b16 %v388
  %v4062 = vunpack.c.l.b16 %v389
  %v4063 = vunpack.c.h.b16 %v389
  %v4064 = vunpack.c.l.b16 %v390
  %v4065 = vunpack.c.h.b16 %v390
  %v4066 = vunpack.c.l.b16 %v391
  %v4067 = vunpack.c.h.b16 %v391
  %v4068 = vunpack.c.l.b16 %v392
  %v4069 = vunpack.c.h.b16 %v392
  %v4070 = vunpack.c.l.b16 %v393
  %v4071 = vunpack.c.h.b16 %v393
  %v4072 = vunpack.c.l.b16 %v394
  %v4073 = vunpack.c.h.b16 %v394
  %v4074 = vunpack.c.l.b16 %v395
  %v4075 = vunpack.c.h.b16 %v395
  %v4076 = vunpack.c.l.b16 %v396
  %v4077 = vunpack.c.h.b16 %v396
  %v4078 = vunpack.c.l.b16 %v397
  %v4079 = vunpack.c.h.b16 %v397
  %v4080 = vunpack.c.l.b16 %v398
  %v4081 = vunpack.c.h.b16 %v398
  %v4082 = vunpack.c.l.b16 %v399
  %v4083 = vunpack.c.h.b16 %v399
  %v4084 = vunpack.c.l.b16 %v400
  %v4085 = vunpack.c.h.b16 %v400
  %v4086 = vunpack.c.l.b16 %v401
  %v4087 = vunpack.c.h.b16 %v401
  %v4088 = vunpack.c.l.b16 %v402
  %v4089 = vunpack.c.h.b16 %v402
  %v4090 = vunpack.c.l.b16 %v403
  %v4091 = vunpack.c.h.b16 %v403
  %v4092 = vunpack.c.l.b16 %v404
  %v4093 = vunpack.c.h.b16 %v404
  %v4094 = vunpack.c.l.b16 %v405
  %v4095 = vunpack.c.h.b16 %v405
  %v4096 = vunpack.c.l.b16 %v406
  %v4097 = vunpack.c.h.b16 %v406
  %v4098 = vunpack.c.l.b16 %v407
  %v4099 = vunpack.c.h.b16 %v407
  %v4100 = vunpack.c.l.b16 %v408
  %v4101 = vunpack.c.h.b16 %v408
  %v4102 = vunpack.c.l.b16 %v409
  %v4103 = vunpack.c.h.b16 %v409
  %v4104 = vunpack.c.l.b16 %v410
  %v4105 = vunpack.c.h.b16 %v410
  %v4106 = vunpack.c.l.b16 %v411
  %v4107 = vunpack.c.h.b16 %v411
  %v4108 = vunpack.c.l.b16 %v412
  %v4109 = vunpack.c.h.b16 %v412
  %v4110 = vunpack.c.l.b16 %v413
  %v4111 = vunpack.c.h.b16 %v413
  %v4112 = vunpack.c.l.b16 %v414
  %v4113 = vunpack.c.h.b16 %v414
  %v4114 = vunpack.c.l.b16 %v415
  %v4115 = vunpack.c.h.b16 %v415
  %v4116 = vunpack.c.l.b16 %v416
  %v4117 = vunpack.c.h.b16 %v416
  %v4118 = vunpack.c.l.b16 %v417
  %v4119 = vunpack.c.h.b16 %v417
  %v4120 = vunpack.c.l.b16 %v418
  %v4121 = vunpack.c.h.b16 %v418
  %v4122 = vunpack.c.l.b16 %v419
  %v4123 = vunpack.c.h.b16 %v419
  %v4124 = vunpack.c.l.b16 %v420
  %v4125 = vunpack.c.h.b16 %v420
  %v4126 = vunpack.c.l.b16 %v421
  %v4127 = vunpack.c.h.b16 %v421
  %v4128 = vunpack.c.l.b16 %v422
  %v4129 = vunpack.c.h.b16 %v422
  %v4130 = vunpack.c.l.b16 %v423
  %v4131 = vunpack.c.h.b16 %v423
  %v4132 = vunpack.c.l.b16 %v424
  %v4133 = vunpack.c.h.b16 %v424
  %v4134 = vunpack.c.l.b16 %v425
  %v4135 = vunpack.c.h.b16 %v425
  %v4136 = vunpack.c.l.b16 %v426
  %v4137 = vunpack.c.h.b16 %v426
  %v4138 = vunpack.c.l.b16 %v427
  %v4139 = vunpack.c.h.b16 %v427
  %v4140 = vunpack.c.l.b16 %v428
  %v4141 = vunpack.c.h.b16 %v428
  %v4142 = vunpack.c.l.b16 %v429
  %v4143 = vunpack.c.h.b16 %v429
  %v4144 = vunpack.c.l.b16 %v430
  %v4145 = vunpack.c.h.b16 %v430
  %v4146 = vunpack.c.l.b16 %v431
  %v4147 = vunpack.c.h.b16 %v431
  %v4148 = vunpack.c.l.b16 %v432
  %v4149 = vunpack.c.h.b16 %v432
  %v4150 = vunpack.c.l.b16 %v433
  %v4151 = vunpack.c.h.b16 %v433
  %v4152 = vunpack.c.l.b16 %v434
  %v4153 = vunpack.c.h.b16 %v434
  %v4154 = vunpack.c.l.b16 %v435
  %v4155 = vunpack.c.h.b16 %v435
  %v4156 = vunpack.c.l.b16 %v436
  %v4157 = vunpack.c.h.b16 %v436
  %v4158 = vunpack.c.l.b16 %v437
  %v4159 = vunpack.c.h.b16 %v437
  %v4160 = vunpack.c.l.b16 %v438
  %v4161 = vunpack.c.h.b16 %v438
  %v4162 = vunpack.c.l.b16 %v439
  %v4163 = vunpack.c.h.b16 %v439
  %v4164 = vunpack.c.l.b16 %v440
  %v4165 = vunpack.c.h.b16 %v440
  %v4166 = vunpack.c.l.b16 %v441
  %v4167 = vunpack.c.h.b16 %v441
  %v4168 = vunpack.c.l.b16 %v442
  %v4169 = vunpack.c.h.b16 %v442
  %v4170 = vunpack.c.l.b16 %v443
  %v4171 = vunpack.c.h.b16 %v443
  %v4172 = vunpack.c.l.b16 %v444
  %v4173 = vunpack.c.h.b16 %v444
  %v4174 = vunpack.c.l.b16 %v445
  %v4175 = vunpack.c.h.b16 %v445
  %v4176 = vunpack.c.l.b16 %v446
  %v4177 = vunpack.c.h.b16 %v446
  %v4178 = vunpack.c.l.b16 %v447
  %v4179 = vunpack.c.h.b16 %v447
  %v4180 = vunpack.c.l.b16 %v448
  %v4181 = vunpack.c.h.b16 %v448
  %v4182 = vunpack.c.l.b16 %v449
  %v4183 = vunpack.c.h.b16 %v449
  %v4184 = vunpack.c.l.b16 %v450
  %v4185 = vunpack.c.h.b16 %v450
  %v4186 = vunpack.c.l.b16 %v451
  %v4187 = vunpack.c.h.b16 %v451
  %v4188 = vunpack.c.l.b16 %v452
  %v4189 = vunpack.c.h.b16 %v452
  %v4190 = vunpack.c.l.b16 %v453
  %v4191 = vunpack.c.h.b16 %v453
  %v4192 = vunpack.c.l.b16 %v454
  %v4193 = vunpack.c.h.b16 %v454
  %v4194 = vunpack.c.l.b16 %v455
  %v4195 = vunpack.c.h.b16 %v455
  %v4196 = vunpack.c.l.b16 %v456
  %v4197 = vunpack.c.h.b16 %v456
  %v4198 = vunpack.c.l.b16 %v457
  %v4199 = vunpack.c.h.b16 %v457
  %v4200 = vunpack.c.l.b16 %v458
  %v4201 = vunpack.c.h.b16 %v458
  %v4202 = vunpack.c.l.b16 %v459
  %v4203 = vunpack.c.h.b16 %v459
  %v4204 = vunpack.c.l.b16 %v460
  %v4205 = vunpack.c.h.b16 %v460
  %v4206 = vunpack.c.l.b16 %v461
  %v4207 = vunpack.c.h.b16 %v461
  %v4208 = vunpack.c.l.b16 %v462
  %v4209 = vunpack.c.h.b16 %v462
  %v4210 = vunpack.c.l.b16 %v463
  %v4211 = vunpack.c.h.b16 %v463
  %v4212 = vunpack.c.l.b16 %v464
  %v4213 = vunpack.c.h.b16 %v464
  %v4214 = vunpack.c.l.b16 %v465
  %v4215 = vunpack.c.h.b16 %v465
  %v4216 = vunpack.c.l.b16 %v466
  %v4217 = vunpack.c.h.b16 %v466
  %v4218 = vunpack.c.l.b16 %v467
  %v4219 = vunpack.c.h.b16 %v467
  %v4220 = vunpack.c.l.b16 %v468
  %v4221 = vunpack.c.h.b16 %v468
  %v4222 = vunpack.c.l.b16 %v469
  %v4223 = vunpack.c.h.b16 %v469
  %v4224 = vunpack.c.l.b16 %v470
  %v4225 = vunpack.c.h.b16 %v470
  %v4226 = vunpack.c.l.b16 %v471
  %v4227 = vunpack.c.h.b16 %v471
  %v4228 = vunpack.c.l.b16 %v472
  %v4229 = vunpack.c.h.b16 %v472
  %v4230 = vunpack.c.l.b16 %v473
  %v4231 = vunpack.c.h.b16 %v473
  %v4232 = vunpack.c.l.b16 %v474
  %v4233 = vunpack.c.h.b16 %v474
  %v4234 = vunpack.c.l.b16 %v475
  %v4235 = vunpack.c.h.b16 %v475
  %v4236 = vunpack.c.l.b16 %v476
  %v4237 = vunpack.c.h.b16 %v476
  %v4238 = vunpack.c.l.b16 %v477
  %v4239 = vunpack.c.h.b16 %v477
  %v4240 = vunpack.c.l.b16 %v478
  %v4241 = vunpack.c.h.b16 %v478
  %v4242 = vunpack.c.l.b16 %v479
  %v4243 = vunpack.c.h.b16 %v479
  %v4244 = vunpack.c.l.b16 %v480
  %v4245 = vunpack.c.h.b16 %v480
  %v4246 = vunpack.c.l.b16 %v481
  %v4247 = vunpack.c.h.b16 %v481
  %v4248 = vunpack.c.l.b16 %v482
  %v4249 = vunpack.c.h.b16 %v482
  %v4250 = vunpack.c.l.b16 %v483
  %v4251 = vunpack.c.h.b16 %v483
  %v4252 = vunpack.c.l.b16 %v484
  %v4253 = vunpack.c.h.b16 %v484
  %v4254 = vunpack.c.l.b16 %v485
  %v4255 = vunpack.c.h.b16 %v485
  %v4256 = vunpack.c.l.b16 %v486
  %v4257 = vunpack.c.h.b16 %v486
  %v4258 = vunpack.c.l.b16 %v487
  %v4259 = vunpack.c.h.b16 %v487
  %v4260 = vunpack.c.l.b16 %v488
  %v4261 = vunpack.c.h.b16 %v488
  %v4262 = vunpack.c.l.b16 %v489
  %v4263 = vunpack.c.h.b16 %v489
  %v4264 = vunpack.c.l.b16 %v490
  %v4265 = vunpack.c.h.b16 %v490
  %v4266 = vunpack.c.l.b16 %v491
  %v4267 = vunpack.c.h.b16 %v491
  %v4268 = vunpack.c.l.b16 %v492
  %v4269 = vunpack.c.h.b16 %v492
  %v4270 = vunpack.c.l.b16 %v493
  %v4271 = vunpack.c.h.b16 %v493
  %v4272 = vunpack.c.l.b16 %v494
  %v4273 = vunpack.c.h.b16 %v494
  %v4274 = vunpack.c.l.b16 %v495
  %v4275 = vunpack.c.h.b16 %v495
  %v4276 = vunpack.c.l.b16 %v496
  %v4277 = vunpack.c.h.b16 %v496
  %v4278 = vunpack.c.l.b16 %v497
  %v4279 = vunpack.c.h.b16 %v497
  %v4280 = vunpack.c.l.b16 %v498
  %v4281 = vunpack.c.h.b16 %v498
  %v4282 = vunpack.c.l.b16 %v499
  %v4283 = vunpack.c.h.b16 %v499
  %v4284 = vunpack.c.l.b16 %v500
  %v4285 = vunpack.c.h.b16 %v500
  %v4286 = vunpack.c.l.b16 %v501
  %v4287 = vunpack.c.h.b16 %v501
  %v4288 = vunpack.c.l.b16 %v502
  %v4289 = vunpack.c.h.b16 %v502
  %v4290 = vunpack.c.l.b16 %v503
  %v4291 = vunpack.c.h.b16 %v503
  %v4292 = vunpack.c.l.b16 %v504
  %v4293 = vunpack.c.h.b16 %v504
  %v4294 = vunpack.c.l.b16 %v505
  %v4295 = vunpack.c.h.b16 %v505
  %v4296 = vunpack.c.l.b16 %v506
  %v4297 = vunpack.c.h.b16 %v506
  %v4298 = vunpack.c.l.b16 %v507
  %v4299 = vunpack.c.h.b16 %v507
  %v4300 = vunpack.c.l.b16 %v508
  %v4301 = vunpack.c.h.b16 %v508
  %v4302 = vunpack.c.l.b16 %v509
  %v4303 = vunpack.c.h.b16 %v509
  %v4304 = vunpack.c.l.b16 %v510
  %v4305 = vunpack.c.h.b16 %v510
  %v4306 = vunpack.c.l.b16 %v511
  %v4307 = vunpack.c.h.b16 %v511
  %v4308 = vunpack.c.l.b16 %v512
  %v4309 = vunpack.c.h.b16 %v512
  %v4310 = vunpack.c.l.b16 %v513
  %v4311 = vunpack.c.h.b16 %v513
  %v4312 = vunpack.c.l.b16 %v514
  %v4313 = vunpack.c.h.b16 %v514
  %v4314 = vunpack.c.l.b16 %v515
  %v4315 = vunpack.c.h.b16 %v515
  %v4316 = vunpack.c.l.b16 %v516
  %v4317 = vunpack.c.h.b16 %v516
  %v4318 = vunpack.c.l.b16 %v517
  %v4319 = vunpack.c.h.b16 %v517
  %v4320 = vunpack.c.l.b16 %v518
  %v4321 = vunpack.c.h.b16 %v518
  %v4322 = vunpack.c.l.b16 %v519
  %v4323 = vunpack.c.h.b16 %v519
  %v4324 = vunpack.c.l.b16 %v520
  %v4325 = vunpack.c.h.b16 %v520
  %v4326 = vunpack.c.l.b16 %v521
  %v4327 = vunpack.c.h.b16 %v521
  %v4328 = vunpack.c.l.b16 %v522
  %v4329 = vunpack.c.h.b16 %v522
  %v4330 = vunpack.c.l.b16 %v523
  %v4331 = vunpack.c.h.b16 %v523
  %v4332 = vunpack.c.l.b16 %v524
  %v4333 = vunpack.c.h.b16 %v524
  %v4334 = vunpack.c.l.b16 %v525
  %v4335 = vunpack.c.h.b16 %v525
  %v4336 = vunpack.c.l.b16 %v526
  %v4337 = vunpack.c.h.b16 %v526
  %v4338 = vunpack.c.l.b16 %v527
  %v4339 = vunpack.c.h.b16 %v527
  %v4340 = vunpack.c.l.b16 %v528
  %v4341 = vunpack.c.h.b16 %v528
  %v4342 = vunpack.c.l.b16 %v529
  %v4343 = vunpack.c.h.b16 %v529
  %v4344 = vunpack.c.l.b16 %v530
  %v4345 = vunpack.c.h.b16 %v530
  %v4346 = vunpack.c.l.b16 %v531
  %v4347 = vunpack.c.h.b16 %v531
  %v4348 = vunpack.c.l.b16 %v532
  %v4349 = vunpack.c.h.b16 %v532
  %v4350 = vunpack.c.l.b16 %v533
  %v4351 = vunpack.c.h.b16 %v533
  %v4352 = vunpack.c.l.b16 %v534
  %v4353 = vunpack.c.h.b16 %v534
  %v4354 = vunpack.c.l.b16 %v535
  %v4355 = vunpack.c.h.b16 %v535
  %v4356 = vunpack.c.l.b16 %v536
  %v4357 = vunpack.c.h.b16 %v536
  %v4358 = vunpack.c.l.b16 %v537
  %v4359 = vunpack.c.h.b16 %v537
  %v4360 = vunpack.c.l.b16 %v538
  %v4361 = vunpack.c.h.b16 %v538
  %v4362 = vunpack.c.l.b16 %v539
  %v4363 = vunpack.c.h.b16 %v539
  %v4364 = vunpack.c.l.b16 %v540
  %v4365 = vunpack.c.h.b16 %v540
  %v4366 = vunpack.c.l.b16 %v541
  %v4367 = vunpack.c.h.b16 %v541
  %v4368 = vunpack.c.l.b16 %v542
  %v4369 = vunpack.c.h.b16 %v542
  %v4370 = vunpack.c.l.b16 %v543
  %v4371 = vunpack.c.h.b16 %v543
  %v4372 = vunpack.c.l.b16 %v544
  %v4373 = vunpack.c.h.b16 %v544
  %v4374 = vunpack.c.l.b16 %v545
  %v4375 = vunpack.c.h.b16 %v545
  %v4376 = vunpack.c.l.b16 %v546
  %v4377 = vunpack.c.h.b16 %v546
  %v4378 = vunpack.c.l.b16 %v547
  %v4379 = vunpack.c.h.b16 %v547
  %v4380 = vunpack.c.l.b16 %v548
  %v4381 = vunpack.c.h.b16 %v548
  %v4382 = vunpack.c.l.b16 %v549
  %v4383 = vunpack.c.h.b16 %v549
  %v4384 = vunpack.c.l.b16 %v550
  %v4385 = vunpack.c.h.b16 %v550
  %v4386 = vunpack.c.l.b16 %v551
  %v4387 = vunpack.c.h.b16 %v551
  %v4388 = vunpack.c.l.b16 %v552
  %v4389 = vunpack.c.h.b16 %v552
  %v4390 = vunpack.c.l.b16 %v553
  %v4391 = vunpack.c.h.b16 %v553
  %v4392 = vunpack.c.l.b16 %v554
  %v4393 = vunpack.c.h.b16 %v554
  %v4394 = vunpack.c.l.b16 %v555
  %v4395 = vunpack.c.h.b16 %v555
  %v4396 = vunpack.c.l.b16 %v556
  %v4397 = vunpack.c.h.b16 %v556
  %v4398 = vunpack.c.l.b16 %v557
  %v4399 = vunpack.c.h.b16 %v557
  %v4400 = vunpack.c.l.b16 %v558
  %v4401 = vunpack.c.h.b16 %v558
  %v4402 = vunpack.c.l.b16 %v559
  %v4403 = vunpack.c.h.b16 %v559
  %v4404 = vunpack.c.l.b16 %v560
  %v4405 = vunpack.c.h.b16 %v560
  %v4406 = vunpack.c.l.b16 %v561
  %v4407 = vunpack.c.h.b16 %v561
  %v4408 = vunpack.c.l.b16 %v562
  %v4409 = vunpack.c.h.b16 %v562
  %v4410 = vunpack.c.l.b16 %v563
  %v4411 = vunpack.c.h.b16 %v563
  %v4412 = vunpack.c.l.b16 %v564
  %v4413 = vunpack.c.h.b16 %v564
  %v4414 = vunpack.c.l.b16 %v565
  %v4415 = vunpack.c.h.b16 %v565
  %v4416 = vunpack.c.l.b16 %v566
  %v4417 = vunpack.c.h.b16 %v566
  %v4418 = vunpack.c.l.b16 %v567
  %v4419 = vunpack.c.h.b16 %v567
  %v4420 = vunpack.c.l.b16 %v568
  %v4421 = vunpack.c.h.b16 %v568
  %v4422 = vunpack.c.l.b16 %v569
  %v4423 = vunpack.c.h.b16 %v569
  %v4424 = vunpack.c.l.b16 %v570
  %v4425 = vunpack.c.h.b16 %v570
  %v4426 = vunpack.c.l.b16 %v571
  %v4427 = vunpack.c.h.b16 %v571
  %v4428 = vunpack.c.l.b16 %v572
  %v4429 = vunpack.c.h.b16 %v572
  %v4430 = vunpack.c.l.b16 %v573
  %v4431 = vunpack.c.h.b16 %v573
  %v4432 = vunpack.c.l.b16 %v574
  %v4433 = vunpack.c.h.b16 %v574
  %v4434 = vunpack.c.l.b16 %v575
  %v4435 = vunpack.c.h.b16 %v575
  %v4436 = vunpack.c.l.b16 %v576
  %v4437 = vunpack.c.h.b16 %v576
  %v4438 = vunpack.c.l.b16 %v577
  %v4439 = vunpack.c.h.b16 %v577
  %v4440 = vunpack.c.l.b16 %v578
  %v4441 = vunpack.c.h.b16 %v578
  %v4442 = vunpack.c.l.b16 %v579
  %v4443 = vunpack.c.h.b16 %v579
  %v4444 = vunpack.c.l.b16 %v580
  %v4445 = vunpack.c.h.b16 %v580
  %v4446 = vunpack.c.l.b16 %v581
  %v4447 = vunpack.c.h.b16 %v581
  %v4448 = vunpack.c.l.b16 %v582
  %v4449 = vunpack.c.h.b16 %v582
  %v4450 = vunpack.c.l.b16 %v583
  %v4451 = vunpack.c.h.b16 %v583
  %v4452 = vunpack.c.l.b16 %v584
  %v4453 = vunpack.c.h.b16 %v584
  %v4454 = vunpack.c.l.b16 %v585
  %v4455 = vunpack.c.h.b16 %v585
  %v4456 = vunpack.c.l.b16 %v586
  %v4457 = vunpack.c.h.b16 %v586
  %v4458 = vunpack.c.l.b16 %v587
  %v4459 = vunpack.c.h.b16 %v587
  %v4460 = vunpack.c.l.b16 %v588
  %v4461 = vunpack.c.h.b16 %v588
  %v4462 = vunpack.c.l.b16 %v589
  %v4463 = vunpack.c.h.b16 %v589
  %v4464 = vunpack.c.l.b16 %v590
  %v4465 = vunpack.c.h.b16 %v590
  %v4466 = vunpack.c.l.b16 %v591
  %v4467 = vunpack.c.h.b16 %v591
  %v4468 = vunpack.c.l.b16 %v592
  %v4469 = vunpack.c.h.b16 %v592
  %v4470 = vunpack.c.l.b16 %v593
  %v4471 = vunpack.c.h.b16 %v593
  %v4472 = vunpack.c.l.b16 %v594
  %v4473 = vunpack.c.h.b16 %v594
  %v4474 = vunpack.c.l.b16 %v595
  %v4475 = vunpack.c.h.b16 %v595
  %v4476 = vunpack.c.l.b16 %v596
  %v4477 = vunpack.c.h.b16 %v596
  %v4478 = vunpack.c.l.b16 %v597
  %v4479 = vunpack.c.h.b16 %v597
  %v4480 = vunpack.c.l.b16 %v598
  %v4481 = vunpack.c.h.b16 %v598
  %v4482 = vunpack.c.l.b16 %v599
  %v4483 = vunpack.c.h.b16 %v599
  %v4484 = vunpack.c.l.b16 %v600
  %v4485 = vunpack.c.h.b16 %v600
  %v4486 = vunpack.c.l.b16 %v601
  %v4487 = vunpack.c.h.b16 %v601
  %v4488 = vunpack.c.l.b16 %v602
  %v4489 = vunpack.c.h.b16 %v602
  %v4490 = vunpack.c.l.b16 %v603
  %v4491 = vunpack.c.h.b16 %v603
  %v4492 = vunpack.c.l.b16 %v604
  %v4493 = vunpack.c.h.b16 %v604
  %v4494 = vunpack.c.l.b16 %v605
  %v4495 = vunpack.c.h.b16 %v605
  %v4496 = vunpack.c.l.b16 %v606
  %v4497 = vunpack.c.h.b16 %v606
  %v4498 = vunpack.c.l.b16 %v607
  %v4499 = vunpack.c.h.b16 %v607
  %v4500 = vunpack.c.l.b16 %v608
  %v4501 = vunpack.c.h.b16 %v608
  %v4502 = vunpack.c.l.b16 %v609
  %v4503 = vunpack.c.h.b16 %v609
  %v4504 = vunpack.c.l.b16 %v610
  %v4505 = vunpack.c.h.b16 %v610
  %v4506 = vunpack.c.l.b16 %v611
  %v4507 = vunpack.c.h.b16 %v611
  %v4508 = vunpack.c.l.b16 %v612
  %v4509 = vunpack.c.h.b16 %v612
  %v4510 = vunpack.c.l.b16 %v613
  %v4511 = vunpack.c.h.b16 %v613
  %v4512 = vunpack.c.l.b16 %v614
  %v4513 = vunpack.c.h.b16 %v614
  %v4514 = vunpack.c.l.b16 %v615
  %v4515 = vunpack.c.h.b16 %v615
  %v4516 = vunpack.c.l.b16 %v616
  %v4517 = vunpack.c.h.b16 %v616
  %v4518 = vunpack.c.l.b16 %v617
  %v4519 = vunpack.c.h.b16 %v617
  %v4520 = vunpack.c.l.b16 %v618
  %v4521 = vunpack.c.h.b16 %v618
  %v4522 = vunpack.c.l.b16 %v619
  %v4523 = vunpack.c.h.b16 %v619
  %v4524 = vunpack.c.l.b16 %v620
  %v4525 = vunpack.c.h.b16 %v620
  %v4526 = vunpack.c.l.b16 %v621
  %v4527 = vunpack.c.h.b16 %v621
  %v4528 = vunpack.c.l.b16 %v622
  %v4529 = vunpack.c.h.b16 %v622
  %v4530 = vunpack.c.l.b16 %v623
  %v4531 = vunpack.c.h.b16 %v623
  %v4532 = vunpack.c.l.b16 %v624
  %v4533 = vunpack.c.h.b16 %v624
  %v4534 = vunpack.c.l.b16 %v625
  %v4535 = vunpack.c.h.b16 %v625
  %v4536 = vunpack.c.l.b16 %v626
  %v4537 = vunpack.c.h.b16 %v626
  %v4538 = vunpack.c.l.b16 %v627
  %v4539 = vunpack.c.h.b16 %v627
  %v4540 = vunpack.c.l.b16 %v628
  %v4541 = vunpack.c.h.b16 %v628
  %v4542 = vunpack.c.l.b16 %v629
  %v4543 = vunpack.c.h.b16 %v629
  %v4544 = vunpack.c.l.b16 %v630
  %v4545 = vunpack.c.h.b16 %v630
  %v4546 = vunpack.c.l.b16 %v631
  %v4547 = vunpack.c.h.b16 %v631
  %v4548 = vunpack.c.l.b16 %v632
  %v4549 = vunpack.c.h.b16 %v632
  %v4550 = vunpack.c.l.b16 %v633
  %v4551 = vunpack.c.h.b16 %v633
  %v4552 = vunpack.c.l.b16 %v634
  %v4553 = vunpack.c.h.b16 %v634
  %v4554 = vunpack.c.l.b16 %v635
  %v4555 = vunpack.c.h.b16 %v635
  %v4556 = vunpack.c.l.b16 %v636
  %v4557 = vunpack.c.h.b16 %v636
  %v4558 = vunpack.c.l.b16 %v637
  %v4559 = vunpack.c.h.b16 %v637
  %v4560 = vunpack.c.l.b16 %v638
  %v4561 = vunpack.c.h.b16 %v638
  %v4562 = vunpack.c.l.b16 %v639
  %v4563 = vunpack.c.h.b16 %v639
  %v4564 = vunpack.c.l.b16 %v640
  %v4565 = vunpack.c.h.b16 %v640
  %v4566 = vunpack.c.l.b16 %v641
  %v4567 = vunpack.c.h.b16 %v641
  %v4568 = vunpack.c.l.b16 %v642
  %v4569 = vunpack.c.h.b16 %v642
  %v4570 = vunpack.c.l.b16 %v643
  %v4571 = vunpack.c.h.b16 %v643
  %v4572 = vunpack.c.l.b16 %v644
  %v4573 = vunpack.c.h.b16 %v644
  %v4574 = vunpack.c.l.b16 %v645
  %v4575 = vunpack.c.h.b16 %v645
  %v4576 = vunpack.c.l.b16 %v646
  %v4577 = vunpack.c.h.b16 %v646
  %v4578 = vunpack.c.l.b16 %v647
  %v4579 = vunpack.c.h.b16 %v647
  %v4580 = vunpack.c.l.b16 %v648
  %v4581 = vunpack.c.h.b16 %v648
  %v4582 = vunpack.c.l.b16 %v649
  %v4583 = vunpack.c.h.b16 %v649
  %v4584 = vunpack.c.l.b16 %v650
  %v4585 = vunpack.c.h.b16 %v650
  %v4586 = vunpack.c.l.b16 %v651
  %v4587 = vunpack.c.h.b16 %v651
  %v4588 = vunpack.c.l.b16 %v652
  %v4589 = vunpack.c.h.b16 %v652
  %v4590 = vunpack.c.l.b16 %v653
  %v4591 = vunpack.c.h.b16 %v653
  %v4592 = vunpack.c.l.b16 %v654
  %v4593 = vunpack.c.h.b16 %v654
  %v4594 = vunpack.c.l.b16 %v655
  %v4595 = vunpack.c.h.b16 %v655
  %v4596 = vunpack.c.l.b16 %v656
  %v4597 = vunpack.c.h.b16 %v656
  %v4598 = vunpack.c.l.b16 %v657
  %v4599 = vunpack.c.h.b16 %v657
  %v4600 = vunpack.c.l.b16 %v658
  %v4601 = vunpack.c.h.b16 %v658
  %v4602 = vunpack.c.l.b16 %v659
  %v4603 = vunpack.c.h.b16 %v659
  %v4604 = vunpack.c.l.b16 %v660
  %v4605 = vunpack.c.h.b16 %v660
  %v4606 = vunpack.c.l.b16 %v661
  %v4607 = vunpack.c.h.b16 %v661
  %v4608 = vunpack.c.l.b16 %v662
  %v4609 = vunpack.c.h.b16 %v662
  %v4610 = vunpack.c.l.b16 %v663
  %v4611 = vunpack.c.h.b16 %v663
  %v4612 = vunpack.c.l.b16 %v664
  %v4613 = vunpack.c.h.b16 %v664
  %v4614 = vunpack.c.l.b16 %v665
  %v4615 = vunpack.c.h.b16 %v665
  %v4616 = vunpack.c.l.b16 %v666
  %v4617 = vunpack.c.h.b16 %v666
  %v4618 = vunpack.c.l.b16 %v667
  %v4619 = vunpack.c.h.b16 %v667
  %v4620 = vunpack.c.l.b16 %v668
  %v4621 = vunpack.c.h.b16 %v668
  %v4622 = vunpack.c.l.b16 %v669
  %v4623 = vunpack.c.h.b16 %v669
  %v4624 = vunpack.c.l.b16 %v670
  %v4625 = vunpack.c.h.b16 %v670
  %v4626 = vunpack.c.l.b16 %v671
  %v4627 = vunpack.c.h.b16 %v671
  %v4628 = vunpack.c.l.b16 %v672
  %v4629 = vunpack.c.h.b16 %v672
  %v4630 = vunpack.c.l.b16 %v673
  %v4631 = vunpack.c.h.b16 %v673
  %v4632 = vunpack.c.l.b16 %v674
  %v4633 = vunpack.c.h.b16 %v674
  %v4634 = vunpack.c.l.b16 %v675
  %v4635 = vunpack.c.h.b16 %v675
  %v4636 = vunpack.c.l.b16 %v676
  %v4637 = vunpack.c.h.b16 %v676
  %v4638 = vunpack.c.l.b16 %v677
  %v4639 = vunpack.c.h.b16 %v677
  %v4640 = vunpack.c.l.b16 %v678
  %v4641 = vunpack.c.h.b16 %v678
  %v4642 = vunpack.c.l.b16 %v679
  %v4643 = vunpack.c.h.b16 %v679
  %v4644 = vunpack.c.l.b16 %v680
  %v4645 = vunpack.c.h.b16 %v680
  %v4646 = vunpack.c.l.b16 %v681
  %v4647 = vunpack.c.h.b16 %v681
  %v4648 = vunpack.c.l.b16 %v682
  %v4649 = vunpack.c.h.b16 %v682
  %v4650 = vunpack.c.l.b16 %v683
  %v4651 = vunpack.c.h.b16 %v683
  %v4652 = vunpack.c.l.b16 %v684
  %v4653 = vunpack.c.h.b16 %v684
  %v4654 = vunpack.c.l.b16 %v685
  %v4655 = vunpack.c.h.b16 %v685
  %v4656 = vunpack.c.l.b16 %v686
  %v4657 = vunpack.c.h.b16 %v686
  %v4658 = vunpack.c.l.b16 %v687
  %v4659 = vunpack.c.h.b16 %v687
  %v4660 = vunpack.c.l.b16 %v688
  %v4661 = vunpack.c.h.b16 %v688
  %v4662 = vunpack.c.l.b16 %v689
  %v4663 = vunpack.c.h.b16 %v689
  %v4664 = vunpack.c.l.b16 %v690
  %v4665 = vunpack.c.h.b16 %v690
  %v4666 = vunpack.c.l.b16 %v691
  %v4667 = vunpack.c.h.b16 %v691
  %v4668 = vunpack.c.l.b16 %v692
  %v4669 = vunpack.c.h.b16 %v692
  %v4670 = vunpack.c.l.b16 %v693
  %v4671 = vunpack.c.h.b16 %v693
  %v4672 = vunpack.c.l.b16 %v694
  %v4673 = vunpack.c.h.b16 %v694
  %v4674 = vunpack.c.l.b16 %v695
  %v4675 = vunpack.c.h.b16 %v695
  %v4676 = vunpack.c.l.b16 %v696
  %v4677 = vunpack.c.h.b16 %v696
  %v4678 = vunpack.c.l.b16 %v697
  %v4679 = vunpack.c.h.b16 %v697
  %v4680 = vunpack.c.l.b16 %v698
  %v4681 = vunpack.c.h.b16 %v698
  %v4682 = vunpack.c.l.b16 %v699
  %v4683 = vunpack.c.h.b16 %v699
  %v4684 = vunpack.c.l.b16 %v700
  %v4685 = vunpack.c.h.b16 %v700
  %v4686 = vunpack.c.l.b16 %v701
  %v4687 = vunpack.c.h.b16 %v701
  %v4688 = vunpack.c.l.b16 %v702
  %v4689 = vunpack.c.h.b16 %v702
  %v4690 = vunpack.c.l.b16 %v703
  %v4691 = vunpack.c.h.b16 %v703
  %v4692 = vunpack.c.l.b16 %v704
  %v4693 = vunpack.c.h.b16 %v704
  %v4694 = vunpack.c.l.b16 %v705
  %v4695 = vunpack.c.h.b16 %v705
  %v4696 = vunpack.c.l.b16 %v706
  %v4697 = vunpack.c.h.b16 %v706
  %v4698 = vunpack.c.l.b16 %v707
  %v4699 = vunpack.c.h.b16 %v707
  %v4700 = vunpack.c.l.b16 %v708
  %v4701 = vunpack.c.h.b16 %v708
  %v4702 = vunpack.c.l.b16 %v709
  %v4703 = vunpack.c.h.b16 %v709
  %v4704 = vunpack.c.l.b16 %v710
  %v4705 = vunpack.c.h.b16 %v710
  %v4706 = vunpack.c.l.b16 %v711
  %v4707 = vunpack.c.h.b16 %v711
  %v4708 = vunpack.c.l.b16 %v712
  %v4709 = vunpack.c.h.b16 %v712
  %v4710 = vunpack.c.l.b16 %v713
  %v4711 = vunpack.c.h.b16 %v713
  %v4712 = vunpack.c.l.b16 %v714
  %v4713 = vunpack.c.h.b16 %v714
  %v4714 = vunpack.c.l.b16 %v715
  %v4715 = vunpack.c.h.b16 %v715
  %v4716 = vunpack.c.l.b16 %v716
  %v4717 = vunpack.c.h.b16 %v716
  %v4718 = vunpack.c.l.b16 %v717
  %v4719 = vunpack.c.h.b16 %v717
  %v4720 = vunpack.c.l.b16 %v718
  %v4721 = vunpack.c.h.b16 %v718
  %v4722 = vunpack.c.l.b16 %v719
  %v4723 = vunpack.c.h.b16 %v719
  %v4724 = vunpack.c.l.b16 %v720
  %v4725 = vunpack.c.h.b16 %v720
  %v4726 = vunpack.c.l.b16 %v721
  %v4727 = vunpack.c.h.b16 %v721
  %v4728 = vunpack.c.l.b16 %v722
  %v4729 = vunpack.c.h.b16 %v722
  %v4730 = vunpack.c.l.b16 %v723
  %v4731 = vunpack.c.h.b16 %v723
  %v4732 = vunpack.c.l.b16 %v724
  %v4733 = vunpack.c.h.b16 %v724
  %v4734 = vunpack.c.l.b16 %v725
  %v4735 = vunpack.c.h.b16 %v725
  %v4736 = vunpack.c.l.b16 %v726
  %v4737 = vunpack.c.h.b16 %v726
  %v4738 = vunpack.c.l.b16 %v727
  %v4739 = vunpack.c.h.b16 %v727
  %v4740 = vunpack.c.l.b16 %v728
  %v4741 = vunpack.c.h.b16 %v728
  %v4742 = vunpack.c.l.b16 %v729
  %v4743 = vunpack.c.h.b16 %v729
  %v4744 = vunpack.c.l.b16 %v730
  %v4745 = vunpack.c.h.b16 %v730
  %v4746 = vunpack.c.l.b16 %v731
  %v4747 = vunpack.c.h.b16 %v731
  %v4748 = vunpack.c.l.b16 %v732
  %v4749 = vunpack.c.h.b16 %v732
  %v4750 = vunpack.c.l.b16 %v733
  %v4751 = vunpack.c.h.b16 %v733
  %v4752 = vunpack.c.l.b16 %v734
  %v4753 = vunpack.c.h.b16 %v734
  %v4754 = vunpack.c.l.b16 %v735
  %v4755 = vunpack.c.h.b16 %v735
  %v4756 = vunpack.c.l.b16 %v736
  %v4757 = vunpack.c.h.b16 %v736
  %v4758 = vunpack.c.l.b16 %v737
  %v4759 = vunpack.c.h.b16 %v737
  %v4760 = vunpack.c.l.b16 %v738
  %v4761 = vunpack.c.h.b16 %v738
  %v4762 = vunpack.c.l.b16 %v739
  %v4763 = vunpack.c.h.b16 %v739
  %v4764 = vunpack.c.l.b16 %v740
  %v4765 = vunpack.c.h.b16 %v740
  %v4766 = vunpack.c.l.b16 %v741
  %v4767 = vunpack.c.h.b16 %v741
  %v4768 = vunpack.c.l.b16 %v742
  %v4769 = vunpack.c.h.b16 %v742
  %v4770 = vunpack.c.l.b16 %v743
  %v4771 = vunpack.c.h.b16 %v743
  %v4772 = vunpack.c.l.b16 %v744
  %v4773 = vunpack.c.h.b16 %v744
  %v4774 = vunpack.c.l.b16 %v745
  %v4775 = vunpack.c.h.b16 %v745
  %v4776 = vunpack.c.l.b16 %v746
  %v4777 = vunpack.c.h.b16 %v746
  %v4778 = vunpack.c.l.b16 %v747
  %v4779 = vunpack.c.h.b16 %v747
  %v4780 = vunpack.c.l.b16 %v748
  %v4781 = vunpack.c.h.b16 %v748
  %v4782 = vunpack.c.l.b16 %v749
  %v4783 = vunpack.c.h.b16 %v749
  %v4784 = vunpack.c.l.b16 %v750
  %v4785 = vunpack.c.h.b16 %v750
  %v4786 = vunpack.c.l.b16 %v751
  %v4787 = vunpack.c.h.b16 %v751
  %v4788 = vunpack.c.l.b16 %v752
  %v4789 = vunpack.c.h.b16 %v752
  %v4790 = vunpack.c.l.b16 %v753
  %v4791 = vunpack.c.h.b16 %v753
  %v4792 = vunpack.c.l.b16 %v754
  %v4793 = vunpack.c.h.b16 %v754
  %v4794 = vunpack.c.l.b16 %v755
  %v4795 = vunpack.c.h.b16 %v755
  %v4796 = vunpack.c.l.b16 %v756
  %v4797 = vunpack.c.h.b16 %v756
  %v4798 = vunpack.c.l.b16 %v757
  %v4799 = vunpack.c.h.b16 %v757
  %v4800 = vunpack.c.l.b16 %v758
  %v4801 = vunpack.c.h.b16 %v758
  %v4802 = vunpack.c.l.b16 %v759
  %v4803 = vunpack.c.h.b16 %v759
  %v4804 = vunpack.c.l.b16 %v760
  %v4805 = vunpack.c.h.b16 %v760
  %v4806 = vunpack.c.l.b16 %v761
  %v4807 = vunpack.c.h.b16 %v761
  %v4808 = vunpack.c.l.b16 %v762
  %v4809 = vunpack.c.h.b16 %v762
  %v4810 = vunpack.c.l.b16 %v763
  %v4811 = vunpack.c.h.b16 %v763
  %v4812 = vunpack.c.l.b16 %v764
  %v4813 = vunpack.c.h.b16 %v764
  %v4814 = vunpack.c.l.b16 %v765
  %v4815 = vunpack.c.h.b16 %v765
  %v4816 = vunpack.c.l.b16 %v766
  %v4817 = vunpack.c.h.b16 %v766
  %v4818 = vunpack.c.l.b16 %v767
  %v4819 = vunpack.c.h.b16 %v767
  %v4820 = vunpack.c.l.b16 %v768
  %v4821 = vunpack.c.h.b16 %v768
  %v4822 = vunpack.c.l.b16 %v769
  %v4823 = vunpack.c.h.b16 %v769
  %v4824 = vunpack.c.l.b16 %v770
  %v4825 = vunpack.c.h.b16 %v770
  %v4826 = vunpack.c.l.b16 %v771
  %v4827 = vunpack.c.h.b16 %v771
  %v4828 = vunpack.c.l.b16 %v772
  %v4829 = vunpack.c.h.b16 %v772
  %v4830 = vunpack.c.l.b16 %v773
  %v4831 = vunpack.c.h.b16 %v773
  %v4832 = vunpack.c.l.b16 %v774
  %v4833 = vunpack.c.h.b16 %v774
  %v4834 = vunpack.c.l.b16 %v775
  %v4835 = vunpack.c.h.b16 %v775
  %v4836 = vunpack.c.l.b16 %v776
  %v4837 = vunpack.c.h.b16 %v776
  %v4838 = vunpack.c.l.b16 %v777
  %v4839 = vunpack.c.h.b16 %v777
  %v4840 = vunpack.c.l.b16 %v778
  %v4841 = vunpack.c.h.b16 %v778
  %v4842 = vunpack.c.l.b16 %v779
  %v4843 = vunpack.c.h.b16 %v779
  %v4844 = vunpack.c.l.b16 %v780
  %v4845 = vunpack.c.h.b16 %v780
  %v4846 = vunpack.c.l.b16 %v781
  %v4847 = vunpack.c.h.b16 %v781
  %v4848 = vunpack.c.l.b16 %v782
  %v4849 = vunpack.c.h.b16 %v782
  %v4850 = vunpack.c.l.b16 %v783
  %v4851 = vunpack.c.h.b16 %v783
  %v4852 = vunpack.c.l.b16 %v784
  %v4853 = vunpack.c.h.b16 %v784
  %v4854 = vunpack.c.l.b16 %v785
  %v4855 = vunpack.c.h.b16 %v785
  %v4856 = vunpack.c.l.b16 %v786
  %v4857 = vunpack.c.h.b16 %v786
  %v4858 = vunpack.c.l.b16 %v787
  %v4859 = vunpack.c.h.b16 %v787
  %v4860 = vunpack.c.l.b16 %v788
  %v4861 = vunpack.c.h.b16 %v788
  %v4862 = vunpack.c.l.b16 %v789
  %v4863 = vunpack.c.h.b16 %v789
  %v4864 = vunpack.c.l.b16 %v790
  %v4865 = vunpack.c.h.b16 %v790
  %v4866 = vunpack.c.l.b16 %v791
  %v4867 = vunpack.c.h.b16 %v791
  %v4868 = vunpack.c.l.b16 %v792
  %v4869 = vunpack.c.h.b16 %v792
  %v4870 = vunpack.c.l.b16 %v793
  %v4871 = vunpack.c.h.b16 %v793
  %v4872 = vunpack.c.l.b16 %v794
  %v4873 = vunpack.c.h.b16 %v794
  %v4874 = vunpack.c.l.b16 %v795
  %v4875 = vunpack.c.h.b16 %v795
  %v4876 = vunpack.c.l.b16 %v796
  %v4877 = vunpack.c.h.b16 %v796
  %v4878 = vunpack.c.l.b16 %v797
  %v4879 = vunpack.c.h.b16 %v797
  %v4880 = vunpack.c.l.b16 %v798
  %v4881 = vunpack.c.h.b16 %v798
  %v4882 = vunpack.c.l.b16 %v799
  %v4883 = vunpack.c.h.b16 %v799
  %v4884 = vunpack.c.l.b16 %v800
  %v4885 = vunpack.c.h.b16 %v800
  %v4886 = vunpack.c.l.b16 %v801
  %v4887 = vunpack.c.h.b16 %v801
  %v4888 = vunpack.c.l.b16 %v802
  %v4889 = vunpack.c.h.b16 %v802
  %v4890 = vunpack.c.l.b16 %v803
  %v4891 = vunpack.c.h.b16 %v803
  %v4892 = vunpack.c.l.b16 %v804
  %v4893 = vunpack.c.h.b16 %v804
  %v4894 = vunpack.c.l.b16 %v805
  %v4895 = vunpack.c.h.b16 %v805
  %v4896 = vunpack.c.l.b16 %v806
  %v4897 = vunpack.c.h.b16 %v806
  %v4898 = vunpack.c.l.b16 %v807
  %v4899 = vunpack.c.h.b16 %v807
  %v4900 = vunpack.c.l.b16 %v808
  %v4901 = vunpack.c.h.b16 %v808
  %v4902 = vunpack.c.l.b16 %v809
  %v4903 = vunpack.c.h.b16 %v809
  %v4904 = vunpack.c.l.b16 %v810
  %v4905 = vunpack.c.h.b16 %v810
  %v4906 = vunpack.c.l.b16 %v811
  %v4907 = vunpack.c.h.b16 %v811
  %v4908 = vunpack.c.l.b16 %v812
  %v4909 = vunpack.c.h.b16 %v812
  %v4910 = vunpack.c.l.b16 %v813
  %v4911 = vunpack.c.h.b16 %v813
  %v4912 = vunpack.c.l.b16 %v814
  %v4913 = vunpack.c.h.b16 %v814
  %v4914 = vunpack.c.l.b16 %v815
  %v4915 = vunpack.c.h.b16 %v815
  %v4916 = vunpack.c.l.b16 %v816
  %v4917 = vunpack.c.h.b16 %v816
  %v4918 = vunpack.c.l.b16 %v817
  %v4919 = vunpack.c.h.b16 %v817
  %v4920 = vunpack.c.l.b16 %v818
  %v4921 = vunpack.c.h.b16 %v818
  %v4922 = vunpack.c.l.b16 %v819
  %v4923 = vunpack.c.h.b16 %v819
  %v4924 = vunpack.c.l.b16 %v820
  %v4925 = vunpack.c.h.b16 %v820
  %v4926 = vunpack.c.l.b16 %v821
  %v4927 = vunpack.c.h.b16 %v821
  %v4928 = vunpack.c.l.b16 %v822
  %v4929 = vunpack.c.h.b16 %v822
  %v4930 = vunpack.c.l.b16 %v823
  %v4931 = vunpack.c.h.b16 %v823
  %v4932 = vunpack.c.l.b16 %v824
  %v4933 = vunpack.c.h.b16 %v824
  %v4934 = vunpack.c.l.b16 %v825
  %v4935 = vunpack.c.h.b16 %v825
  %v4936 = vunpack.c.l.b16 %v826
  %v4937 = vunpack.c.h.b16 %v826
  %v4938 = vunpack.c.l.b16 %v827
  %v4939 = vunpack.c.h.b16 %v827
  %v4940 = vunpack.c.l.b16 %v828
  %v4941 = vunpack.c.h.b16 %v828
  %v4942 = vunpack.c.l.b16 %v829
  %v4943 = vunpack.c.h.b16 %v829
  %v4944 = vunpack.c.l.b16 %v830
  %v4945 = vunpack.c.h.b16 %v830
  %v4946 = vunpack.c.l.b16 %v831
  %v4947 = vunpack.c.h.b16 %v831
  %v4948 = vunpack.c.l.b16 %v832
  %v4949 = vunpack.c.h.b16 %v832
  %v4950 = vunpack.c.l.b16 %v833
  %v4951 = vunpack.c.h.b16 %v833
  %v4952 = vunpack.c.l.b16 %v834
  %v4953 = vunpack.c.h.b16 %v834
  %v4954 = vunpack.c.l.b16 %v835
  %v4955 = vunpack.c.h.b16 %v835
  %v4956 = vunpack.c.l.b16 %v836
  %v4957 = vunpack.c.h.b16 %v836
  %v4958 = vunpack.c.l.b16 %v837
  %v4959 = vunpack.c.h.b16 %v837
  %v4960 = vunpack.c.l.b16 %v838
  %v4961 = vunpack.c.h.b16 %v838
  %v4962 = vunpack.c.l.b16 %v839
  %v4963 = vunpack.c.h.b16 %v839
  %v4964 = vunpack.c.l.b16 %v840
  %v4965 = vunpack.c.h.b16 %v840
  %v4966 = vunpack.c.l.b16 %v841
  %v4967 = vunpack.c.h.b16 %v841
  %v4968 = vunpack.c.l.b16 %v842
  %v4969 = vunpack.c.h.b16 %v842
  %v4970 = vunpack.c.l.b16 %v843
  %v4971 = vunpack.c.h.b16 %v843
  %v4972 = vunpack.c.l.b16 %v844
  %v4973 = vunpack.c.h.b16 %v844
  %v4974 = vunpack.c.l.b16 %v845
  %v4975 = vunpack.c.h.b16 %v845
  %v4976 = vunpack.c.l.b16 %v846
  %v4977 = vunpack.c.h.b16 %v846
  %v4978 = vunpack.c.l.b16 %v847
  %v4979 = vunpack.c.h.b16 %v847
  %v4980 = vunpack.c.l.b16 %v848
  %v4981 = vunpack.c.h.b16 %v848
  %v4982 = vunpack.c.l.b16 %v849
  %v4983 = vunpack.c.h.b16 %v849
  %v4984 = vunpack.c.l.b16 %v850
  %v4985 = vunpack.c.h.b16 %v850
  %v4986 = vunpack.c.l.b16 %v851
  %v4987 = vunpack.c.h.b16 %v851
  %v4988 = vunpack.c.l.b16 %v852
  %v4989 = vunpack.c.h.b16 %v852
  %v4990 = vunpack.c.l.b16 %v853
  %v4991 = vunpack.c.h.b16 %v853
  %v4992 = vunpack.c.l.b16 %v854
  %v4993 = vunpack.c.h.b16 %v854
  %v4994 = vunpack.c.l.b16 %v855
  %v4995 = vunpack.c.h.b16 %v855
  %v4996 = vunpack.c.l.b16 %v856
  %v4997 = vunpack.c.h.b16 %v856
  %v4998 = vunpack.c.l.b16 %v857
  %v4999 = vunpack.c.h.b16 %v857
  %v5000 = vunpack.c.l.b16 %v858
  %v5001 = vunpack.c.h.b16 %v858
  %v5002 = vunpack.c.l.b16 %v859
  %v5003 = vunpack.c.h.b16 %v859
  %v5004 = vunpack.c.l.b16 %v860
  %v5005 = vunpack.c.h.b16 %v860
  %v5006 = vunpack.c.l.b16 %v861
  %v5007 = vunpack.c.h.b16 %v861
  %v5008 = vunpack.c.l.b16 %v862
  %v5009 = vunpack.c.h.b16 %v862
  %v5010 = vunpack.c.l.b16 %v863
  %v5011 = vunpack.c.h.b16 %v863
  %v5012 = vunpack.c.l.b16 %v864
  %v5013 = vunpack.c.h.b16 %v864
  %v5014 = vunpack.c.l.b16 %v865
  %v5015 = vunpack.c.h.b16 %v865
  %v5016 = vunpack.c.l.b16 %v866
  %v5017 = vunpack.c.h.b16 %v866
  %v5018 = vunpack.c.l.b16 %v867
  %v5019 = vunpack.c.h.b16 %v867
  %v5020 = vunpack.c.l.b16 %v868
  %v5021 = vunpack.c.h.b16 %v868
  %v5022 = vunpack.c.l.b16 %v869
  %v5023 = vunpack.c.h.b16 %v869
  %v5024 = vunpack.c.l.b16 %v870
  %v5025 = vunpack.c.h.b16 %v870
  %v5026 = vunpack.c.l.b16 %v871
  %v5027 = vunpack.c.h.b16 %v871
  %v5028 = vunpack.c.l.b16 %v872
  %v5029 = vunpack.c.h.b16 %v872
  %v5030 = vunpack.c.l.b16 %v873
  %v5031 = vunpack.c.h.b16 %v873
  %v5032 = vunpack.c.l.b16 %v874
  %v5033 = vunpack.c.h.b16 %v874
  %v5034 = vunpack.c.l.b16 %v875
  %v5035 = vunpack.c.h.b16 %v875
  %v5036 = vunpack.c.l.b16 %v876
  %v5037 = vunpack.c.h.b16 %v876
  %v5038 = vunpack.c.l.b16 %v877
  %v5039 = vunpack.c.h.b16 %v877
  %v5040 = vunpack.c.l.b16 %v878
  %v5041 = vunpack.c.h.b16 %v878
  %v5042 = vunpack.c.l.b16 %v879
  %v5043 = vunpack.c.h.b16 %v879
  %v5044 = vunpack.c.l.b16 %v880
  %v5045 = vunpack.c.h.b16 %v880
  %v5046 = vunpack.c.l.b16 %v881
  %v5047 = vunpack.c.h.b16 %v881
  %v5048 = vunpack.c.l.b16 %v882
  %v5049 = vunpack.c.h.b16 %v882
  %v5050 = vunpack.c.l.b16 %v883
  %v5051 = vunpack.c.h.b16 %v883
  %v5052 = vunpack.c.l.b16 %v884
  %v5053 = vunpack.c.h.b16 %v884
  %v5054 = vunpack.c.l.b16 %v885
  %v5055 = vunpack.c.h.b16 %v885
  %v5056 = vunpack.c.l.b16 %v886
  %v5057 = vunpack.c.h.b16 %v886
  %v5058 = vunpack.c.l.b16 %v887
  %v5059 = vunpack.c.h.b16 %v887
  %v5060 = vunpack.c.l.b16 %v888
  %v5061 = vunpack.c.h.b16 %v888
  %v5062 = vunpack.c.l.b16 %v889
  %v5063 = vunpack.c.h.b16 %v889
  %v5064 = vunpack.c.l.b16 %v890
  %v5065 = vunpack.c.h.b16 %v890
  %v5066 = vunpack.c.l.b16 %v891
  %v5067 = vunpack.c.h.b16 %v891
  %v5068 = vunpack.c.l.b16 %v892
  %v5069 = vunpack.c.h.b16 %v892
  %v5070 = vunpack.c.l.b16 %v893
  %v5071 = vunpack.c.h.b16 %v893
  %v5072 = vunpack.c.l.b16 %v894
  %v5073 = vunpack.c.h.b16 %v894
  %v5074 = vunpack.c.l.b16 %v895
  %v5075 = vunpack.c.h.b16 %v895
  %v5076 = vunpack.c.l.b16 %v896
  %v5077 = vunpack.c.h.b16 %v896
  %v5078 = vunpack.c.l.b16 %v897
  %v5079 = vunpack.c.h.b16 %v897
  %v5080 = vunpack.c.l.b16 %v898
  %v5081 = vunpack.c.h.b16 %v898
  %v5082 = vunpack.c.l.b16 %v899
  %v5083 = vunpack.c.h.b16 %v899
  %v5084 = vunpack.c.l.b16 %v900
  %v5085 = vunpack.c.h.b16 %v900
  %v5086 = vunpack.c.l.b16 %v901
  %v5087 = vunpack.c.h.b16 %v901
  %v5088 = vunpack.c.l.b16 %v902
  %v5089 = vunpack.c.h.b16 %v902
  %v5090 = vunpack.c.l.b16 %v903
  %v5091 = vunpack.c.h.b16 %v903
  %v5092 = vunpack.c.l.b16 %v904
  %v5093 = vunpack.c.h.b16 %v904
  %v5094 = vunpack.c.l.b16 %v905
  %v5095 = vunpack.c.h.b16 %v905
  %v5096 = vunpack.c.l.b16 %v906
  %v5097 = vunpack.c.h.b16 %v906
  %v5098 = vunpack.c.l.b16 %v907
  %v5099 = vunpack.c.h.b16 %v907
  %v5100 = vunpack.c.l.b16 %v908
  %v5101 = vunpack.c.h.b16 %v908
  %v5102 = vunpack.c.l.b16 %v909
  %v5103 = vunpack.c.h.b16 %v909
  %v5104 = vunpack.c.l.b16 %v910
  %v5105 = vunpack.c.h.b16 %v910
  %v5106 = vunpack.c.l.b16 %v911
  %v5107 = vunpack.c.h.b16 %v911
  %v5108 = vunpack.c.l.b16 %v912
  %v5109 = vunpack.c.h.b16 %v912
  %v5110 = vunpack.c.l.b16 %v913
  %v5111 = vunpack.c.h.b16 %v913
  %v5112 = vunpack.c.l.b16 %v914
  %v5113 = vunpack.c.h.b16 %v914
  %v5114 = vunpack.c.l.b16 %v915
  %v5115 = vunpack.c.h.b16 %v915
  %v5116 = vunpack.c.l.b16 %v916
  %v5117 = vunpack.c.h.b16 %v916
  %v5118 = vunpack.c.l.b16 %v917
  %v5119 = vunpack.c.h.b16 %v917
  %v5120 = vunpack.c.l.b16 %v918
  %v5121 = vunpack.c.h.b16 %v918
  %v5122 = vunpack.c.l.b16 %v919
  %v5123 = vunpack.c.h.b16 %v919
  %v5124 = vunpack.c.l.b16 %v920
  %v5125 = vunpack.c.h.b16 %v920
  %v5126 = vunpack.c.l.b16 %v921
  %v5127 = vunpack.c.h.b16 %v921
  %v5128 = vunpack.c.l.b16 %v922
  %v5129 = vunpack.c.h.b16 %v922
  %v5130 = vunpack.c.l.b16 %v923
  %v5131 = vunpack.c.h.b16 %v923
  %v5132 = vunpack.c.l.b16 %v924
  %v5133 = vunpack.c.h.b16 %v924
  %v5134 = vunpack.c.l.b16 %v925
  %v5135 = vunpack.c.h.b16 %v925
  %v5136 = vunpack.c.l.b16 %v926
  %v5137 = vunpack.c.h.b16 %v926
  %v5138 = vunpack.c.l.b16 %v927
  %v5139 = vunpack.c.h.b16 %v927
  %v5140 = vunpack.c.l.b16 %v928
  %v5141 = vunpack.c.h.b16 %v928
  %v5142 = vunpack.c.l.b16 %v929
  %v5143 = vunpack.c.h.b16 %v929
  %v5144 = vunpack.c.l.b16 %v930
  %v5145 = vunpack.c.h.b16 %v930
  %v5146 = vunpack.c.l.b16 %v931
  %v5147 = vunpack.c.h.b16 %v931
  %v5148 = vunpack.c.l.b16 %v932
  %v5149 = vunpack.c.h.b16 %v932
  %v5150 = vunpack.c.l.b16 %v933
  %v5151 = vunpack.c.h.b16 %v933
  %v5152 = vunpack.c.l.b16 %v934
  %v5153 = vunpack.c.h.b16 %v934
  %v5154 = vunpack.c.l.b16 %v935
  %v5155 = vunpack.c.h.b16 %v935
  %v5156 = vunpack.c.l.b16 %v936
  %v5157 = vunpack.c.h.b16 %v936
  %v5158 = vunpack.c.l.b16 %v937
  %v5159 = vunpack.c.h.b16 %v937
  %v5160 = vunpack.c.l.b16 %v938
  %v5161 = vunpack.c.h.b16 %v938
  %v5162 = vunpack.c.l.b16 %v939
  %v5163 = vunpack.c.h.b16 %v939
  %v5164 = vunpack.c.l.b16 %v940
  %v5165 = vunpack.c.h.b16 %v940
  %v5166 = vunpack.c.l.b16 %v941
  %v5167 = vunpack.c.h.b16 %v941
  %v5168 = vunpack.c.l.b16 %v942
  %v5169 = vunpack.c.h.b16 %v942
  %v5170 = vunpack.c.l.b16 %v943
  %v5171 = vunpack.c.h.b16 %v943
  %v5172 = vunpack.c.l.b16 %v944
  %v5173 = vunpack.c.h.b16 %v944
  %v5174 = vunpack.c.l.b16 %v945
  %v5175 = vunpack.c.h.b16 %v945
  %v5176 = vunpack.c.l.b16 %v946
  %v5177 = vunpack.c.h.b16 %v946
  %v5178 = vunpack.c.l.b16 %v947
  %v5179 = vunpack.c.h.b16 %v947
  %v5180 = vunpack.c.l.b16 %v948
  %v5181 = vunpack.c.h.b16 %v948
  %v5182 = vunpack.c.l.b16 %v949
  %v5183 = vunpack.c.h.b16 %v949
  %v5184 = vunpack.c.l.b16 %v950
  %v5185 = vunpack.c.h.b16 %v950
  %v5186 = vunpack.c.l.b16 %v951
  %v5187 = vunpack.c.h.b16 %v951
  %v5188 = vunpack.c.l.b16 %v952
  %v5189 = vunpack.c.h.b16 %v952
  %v5190 = vunpack.c.l.b16 %v953
  %v5191 = vunpack.c.h.b16 %v953
  %v5192 = vunpack.c.l.b16 %v954
  %v5193 = vunpack.c.h.b16 %v954
  %v5194 = vunpack.c.l.b16 %v955
  %v5195 = vunpack.c.h.b16 %v955
  %v5196 = vunpack.c.l.b16 %v956
  %v5197 = vunpack.c.h.b16 %v956
  %v5198 = vunpack.c.l.b16 %v957
  %v5199 = vunpack.c.h.b16 %v957
  %v5200 = vunpack.c.l.b16 %v958
  %v5201 = vunpack.c.h.b16 %v958
  %v5202 = vunpack.c.l.b16 %v959
  %v5203 = vunpack.c.h.b16 %v959
  %v5204 = vunpack.c.l.b16 %v960
  %v5205 = vunpack.c.h.b16 %v960
  %v5206 = vunpack.c.l.b16 %v961
  %v5207 = vunpack.c.h.b16 %v961
  %v5208 = vunpack.c.l.b16 %v962
  %v5209 = vunpack.c.h.b16 %v962
  %v5210 = vunpack.c.l.b16 %v963
  %v5211 = vunpack.c.h.b16 %v963
  %v5212 = vunpack.c.l.b16 %v964
  %v5213 = vunpack.c.h.b16 %v964
  %v5214 = vunpack.c.l.b16 %v965
  %v5215 = vunpack.c.h.b16 %v965
  %v5216 = vunpack.c.l.b16 %v966
  %v5217 = vunpack.c.h.b16 %v966
  %v5218 = vunpack.c.l.b16 %v967
  %v5219 = vunpack.c.h.b16 %v967
  %v5220 = vunpack.c.l.b16 %v968
  %v5221 = vunpack.c.h.b16 %v968
  %v5222 = vunpack.c.l.b16 %v969
  %v5223 = vunpack.c.h.b16 %v969
  %v5224 = vunpack.c.l.b16 %v970
  %v5225 = vunpack.c.h.b16 %v970
  %v5226 = vunpack.c.l.b16 %v971
  %v5227 = vunpack.c.h.b16 %v971
  %v5228 = vunpack.c.l.b16 %v972
  %v5229 = vunpack.c.h.b16 %v972
  %v5230 = vunpack.c.l.b16 %v973
  %v5231 = vunpack.c.h.b16 %v973
  %v5232 = vunpack.c.l.b16 %v974
  %v5233 = vunpack.c.h.b16 %v974
  %v5234 = vunpack.c.l.b16 %v975
  %v5235 = vunpack.c.h.b16 %v975
  %v5236 = vunpack.c.l.b16 %v976
  %v5237 = vunpack.c.h.b16 %v976
  %v5238 = vunpack.c.l.b16 %v977
  %v5239 = vunpack.c.h.b16 %v977
  %v5240 = vunpack.c.l.b16 %v978
  %v5241 = vunpack.c.h.b16 %v978
  %v5242 = vunpack.c.l.b16 %v979
  %v5243 = vunpack.c.h.b16 %v979
  %v5244 = vunpack.c.l.b16 %v980
  %v5245 = vunpack.c.h.b16 %v980
  %v5246 = vunpack.c.l.b16 %v981
  %v5247 = vunpack.c.h.b16 %v981
  %v5248 = vunpack.c.l.b16 %v982
  %v5249 = vunpack.c.h.b16 %v982
  %v5250 = vunpack.c.l.b16 %v983
  %v5251 = vunpack.c.h.b16 %v983
  %v5252 = vunpack.c.l.b16 %v984
  %v5253 = vunpack.c.h.b16 %v984
  %v5254 = vunpack.c.l.b16 %v985
  %v5255 = vunpack.c.h.b16 %v985
  %v5256 = vunpack.c.l.b16 %v986
  %v5257 = vunpack.c.h.b16 %v986
  %v5258 = vunpack.c.l.b16 %v987
  %v5259 = vunpack.c.h.b16 %v987
  %v5260 = vunpack.c.l.b16 %v988
  %v5261 = vunpack.c.h.b16 %v988
  %v5262 = vunpack.c.l.b16 %v989
  %v5263 = vunpack.c.h.b16 %v989
  %v5264 = vunpack.c.l.b16 %v990
  %v5265 = vunpack.c.h.b16 %v990
  %v5266 = vunpack.c.l.b16 %v991
  %v5267 = vunpack.c.h.b16 %v991
  %v5268 = vunpack.c.l.b16 %v992
  %v5269 = vunpack.c.h.b16 %v992
  %v5270 = vunpack.c.l.b16 %v993
  %v5271 = vunpack.c.h.b16 %v993
  %v5272 = vunpack.c.l.b16 %v994
  %v5273 = vunpack.c.h.b16 %v994
  %v5274 = vunpack.c.l.b16 %v995
  %v5275 = vunpack.c.h.b16 %v995
  %v5276 = vunpack.c.l.b16 %v996
  %v5277 = vunpack.c.h.b16 %v996
  %v5278 = vunpack.c.l.b16 %v997
  %v5279 = vunpack.c.h.b16 %v997
  %v5280 = vunpack.c.l.b16 %v998
  %v5281 = vunpack.c.h.b16 %v998
  %v5282 = vunpack.c.l.b16 %v999
  %v5283 = vunpack.c.h.b16 %v999
  %v5284 = vunpack.c.l.b16 %v1000
  %v5285 = vunpack.c.h.b16 %v1000
  %v5286 = vunpack.c.l.b16 %v1001
  %v5287 = vunpack.c.h.b16 %v1001
  %v5288 = vunpack.c.l.b16 %v1002
  %v5289 = vunpack.c.h.b16 %v1002
  %v5290 = vunpack.c.l.b16 %v1003
  %v5291 = vunpack.c.h.b16 %v1003
  %v5292 = vunpack.c.l.b16 %v1004
  %v5293 = vunpack.c.h.b16 %v1004
  %v5294 = vunpack.c.l.b16 %v1005
  %v5295 = vunpack.c.h.b16 %v1005
  %v5296 = vunpack.c.l.b16 %v1006
  %v5297 = vunpack.c.h.b16 %v1006
  %v5298 = vunpack.c.l.b16 %v1007
  %v5299 = vunpack.c.h.b16 %v1007
  %v5300 = vunpack.c.l.b16 %v1008
  %v5301 = vunpack.c.h.b16 %v1008
  %v5302 = vunpack.c.l.b16 %v1009
  %v5303 = vunpack.c.h.b16 %v1009
  %v5304 = vunpack.c.l.b16 %v1010
  %v5305 = vunpack.c.h.b16 %v1010
  %v5306 = vunpack.c.l.b16 %v1011
  %v5307 = vunpack.c.h.b16 %v1011
  %v5308 = vunpack.c.l.b16 %v1012
  %v5309 = vunpack.c.h.b16 %v1012
  %v5310 = vunpack.c.l.b16 %v1013
  %v5311 = vunpack.c.h.b16 %v1013
  %v5312 = vunpack.c.l.b16 %v1014
  %v5313 = vunpack.c.h.b16 %v1014
  %v5314 = vunpack.c.l.b16 %v1015
  %v5315 = vunpack.c.h.b16 %v1015
  %v5316 = vunpack.c.l.b16 %v1016
  %v5317 = vunpack.c.h.b16 %v1016
  %v5318 = vunpack.c.l.b16 %v1017
  %v5319 = vunpack.c.h.b16 %v1017
  %v5320 = vunpack.c.l.b16 %v1018
  %v5321 = vunpack.c.h.b16 %v1018
  %v5322 = vunpack.c.l.b16 %v1019
  %v5323 = vunpack.c.h.b16 %v1019
  %v5324 = vunpack.c.l.b16 %v1020
  %v5325 = vunpack.c.h.b16 %v1020
  %v5326 = vunpack.c.l.b16 %v1021
  %v5327 = vunpack.c.h.b16 %v1021
  %v5328 = vunpack.c.l.b16 %v1022
  %v5329 = vunpack.c.h.b16 %v1022
  %v5330 = vunpack.c.l.b16 %v1023
  %v5331 = vunpack.c.h.b16 %v1023
  %v5332 = vunpack.c.l.b16 %v1024
  %v5333 = vunpack.c.h.b16 %v1024
  %v5334 = vunpack.c.l.b16 %v1025
  %v5335 = vunpack.c.h.b16 %v1025
  %v5336 = vunpack.c.l.b16 %v1026
  %v5337 = vunpack.c.h.b16 %v1026
  %v5338 = vunpack.c.l.b16 %v1027
  %v5339 = vunpack.c.h.b16 %v1027
  %v5340 = vunpack.c.l.b16 %v1028
  %v5341 = vunpack.c.h.b16 %v1028
  %v5342 = vunpack.c.l.b16 %v1029
  %v5343 = vunpack.c.h.b16 %v1029
  %v5344 = vunpack.c.l.b16 %v1030
  %v5345 = vunpack.c.h.b16 %v1030
  %v5346 = vunpack.c.l.b16 %v1031
  %v5347 = vunpack.c.h.b16 %v1031
  %v5348 = vunpack.c.l.b16 %v1032
  %v5349 = vunpack.c.h.b16 %v1032
  %v5350 = vunpack.c.l.b16 %v1033
  %v5351 = vunpack.c.h.b16 %v1033
  %v5352 = vunpack.c.l.b16 %v1034
  %v5353 = vunpack.c.h.b16 %v1034
  %v5354 = vunpack.c.l.b16 %v1035
  %v5355 = vunpack.c.h.b16 %v1035
  %v5356 = vunpack.c.l.b16 %v1036
  %v5357 = vunpack.c.h.b16 %v1036
  %v5358 = vunpack.c.l.b16 %v1037
  %v5359 = vunpack.c.h.b16 %v1037
  %v5360 = vunpack.c.l.b16 %v1038
  %v5361 = vunpack.c.h.b16 %v1038
  %v5362 = vunpack.c.l.b16 %v1039
  %v5363 = vunpack.c.h.b16 %v1039
  %v5364 = vunpack.c.l.b16 %v1040
  %v5365 = vunpack.c.h.b16 %v1040
  %v5366 = vunpack.c.l.b16 %v1041
  %v5367 = vunpack.c.h.b16 %v1041
  %v5368 = vunpack.c.l.b16 %v1042
  %v5369 = vunpack.c.h.b16 %v1042
  %v5370 = vunpack.c.l.b16 %v1043
  %v5371 = vunpack.c.h.b16 %v1043
  %v5372 = vunpack.c.l.b16 %v1044
  %v5373 = vunpack.c.h.b16 %v1044
  %v5374 = vunpack.c.l.b16 %v1045
  %v5375 = vunpack.c.h.b16 %v1045
  %v5376 = vunpack.c.l.b16 %v1046
  %v5377 = vunpack.c.h.b16 %v1046
  %v5378 = vunpack.c.l.b16 %v1047
  %v5379 = vunpack.c.h.b16 %v1047
  %v5380 = vunpack.c.l.b16 %v1048
  %v5381 = vunpack.c.h.b16 %v1048
  %v5382 = vunpack.c.l.b16 %v1049
  %v5383 = vunpack.c.h.b16 %v1049
  %v5384 = vunpack.c.l.b16 %v1050
  %v5385 = vunpack.c.h.b16 %v1050
  %v5386 = vunpack.c.l.b16 %v1051
  %v5387 = vunpack.c.h.b16 %v1051
  %v5388 = vunpack.c.l.b16 %v1052
  %v5389 = vunpack.c.h.b16 %v1052
  %v5390 = vunpack.c.l.b16 %v1053
  %v5391 = vunpack.c.h.b16 %v1053
  %v5392 = vunpack.c.l.b16 %v1054
  %v5393 = vunpack.c.h.b16 %v1054
  %v5394 = vunpack.c.l.b16 %v1055
  %v5395 = vunpack.c.h.b16 %v1055
  %v5396 = vunpack.c.l.b16 %v1056
  %v5397 = vunpack.c.h.b16 %v1056
  %v5398 = vunpack.c.l.b16 %v1057
  %v5399 = vunpack.c.h.b16 %v1057
  %v5400 = vunpack.c.l.b16 %v1058
  %v5401 = vunpack.c.h.b16 %v1058
  %v5402 = vunpack.c.l.b16 %v1059
  %v5403 = vunpack.c.h.b16 %v1059
  %v5404 = vunpack.c.l.b16 %v1060
  %v5405 = vunpack.c.h.b16 %v1060
  %v5406 = vunpack.c.l.b16 %v1061
  %v5407 = vunpack.c.h.b16 %v1061
  %v5408 = vunpack.c.l.b16 %v1062
  %v5409 = vunpack.c.h.b16 %v1062
  %v5410 = vunpack.c.l.b16 %v1063
  %v5411 = vunpack.c.h.b16 %v1063
  %v5412 = vunpack.c.l.b16 %v1064
  %v5413 = vunpack.c.h.b16 %v1064
  %v5414 = vunpack.c.l.b16 %v1065
  %v5415 = vunpack.c.h.b16 %v1065
  %v5416 = vunpack.c.l.b16 %v1066
  %v5417 = vunpack.c.h.b16 %v1066
  %v5418 = vunpack.c.l.b16 %v1067
  %v5419 = vunpack.c.h.b16 %v1067
  %v5420 = vunpack.c.l.b16 %v1068
  %v5421 = vunpack.c.h.b16 %v1068
  %v5422 = vunpack.c.l.b16 %v1069
  %v5423 = vunpack.c.h.b16 %v1069
  %v5424 = vunpack.c.l.b16 %v1070
  %v5425 = vunpack.c.h.b16 %v1070
  %v5426 = vunpack.c.l.b16 %v1071
  %v5427 = vunpack.c.h.b16 %v1071
  %v5428 = vunpack.c.l.b16 %v1072
  %v5429 = vunpack.c.h.b16 %v1072
  %v5430 = vunpack.c.l.b16 %v1073
  %v5431 = vunpack.c.h.b16 %v1073
  %v5432 = vunpack.c.l.b16 %v1074
  %v5433 = vunpack.c.h.b16 %v1074
  %v5434 = vunpack.c.l.b16 %v1075
  %v5435 = vunpack.c.h.b16 %v1075
  %v5436 = vunpack.c.l.b16 %v1076
  %v5437 = vunpack.c.h.b16 %v1076
  %v5438 = vunpack.c.l.b16 %v1077
  %v5439 = vunpack.c.h.b16 %v1077
  %v5440 = vunpack.c.l.b16 %v1078
  %v5441 = vunpack.c.h.b16 %v1078
  %v5442 = vunpack.c.l.b16 %v1079
  %v5443 = vunpack.c.h.b16 %v1079
  %v5444 = vunpack.c.l.b16 %v1080
  %v5445 = vunpack.c.h.b16 %v1080
  %v5446 = vunpack.c.l.b16 %v1081
  %v5447 = vunpack.c.h.b16 %v1081
  %v5448 = vunpack.c.l.b16 %v1082
  %v5449 = vunpack.c.h.b16 %v1082
  %v5450 = vunpack.c.l.b16 %v1083
  %v5451 = vunpack.c.h.b16 %v1083
  %v5452 = vunpack.c.l.b16 %v1084
  %v5453 = vunpack.c.h.b16 %v1084
  %v5454 = vunpack.c.l.b16 %v1085
  %v5455 = vunpack.c.h.b16 %v1085
  %v5456 = vunpack.c.l.b16 %v1086
  %v5457 = vunpack.c.h.b16 %v1086
  %v5458 = vunpack.c.l.b16 %v1087
  %v5459 = vunpack.c.h.b16 %v1087
  %v5460 = vunpack.c.l.b16 %v1088
  %v5461 = vunpack.c.h.b16 %v1088
  %v5462 = vunpack.c.l.b16 %v1089
  %v5463 = vunpack.c.h.b16 %v1089
  %v5464 = vunpack.c.l.b16 %v1090
  %v5465 = vunpack.c.h.b16 %v1090
  %v5466 = vunpack.c.l.b16 %v1091
  %v5467 = vunpack.c.h.b16 %v1091
  %v5468 = vunpack.c.l.b16 %v1092
  %v5469 = vunpack.c.h.b16 %v1092
  %v5470 = vunpack.c.l.b16 %v1093
  %v5471 = vunpack.c.h.b16 %v1093
  %v5472 = vunpack.c.l.b16 %v1094
  %v5473 = vunpack.c.h.b16 %v1094
  %v5474 = vunpack.c.l.b16 %v1095
  %v5475 = vunpack.c.h.b16 %v1095
  %v5476 = vunpack.c.l.b16 %v1096
  %v5477 = vunpack.c.h.b16 %v1096
  %v5478 = vunpack.c.l.b16 %v1097
  %v5479 = vunpack.c.h.b16 %v1097
  %v5480 = vunpack.c.l.b16 %v1098
  %v5481 = vunpack.c.h.b16 %v1098
  %v5482 = vunpack.c.l.b16 %v1099
  %v5483 = vunpack.c.h.b16 %v1099
  %v5484 = vunpack.c.l.b16 %v1100
  %v5485 = vunpack.c.h.b16 %v1100
  %v5486 = vunpack.c.l.b16 %v1101
  %v5487 = vunpack.c.h.b16 %v1101
  %v5488 = vunpack.c.l.b16 %v1102
  %v5489 = vunpack.c.h.b16 %v1102
  %v5490 = vunpack.c.l.b16 %v1103
  %v5491 = vunpack.c.h.b16 %v1103
  %v5492 = vunpack.c.l.b16 %v1104
  %v5493 = vunpack.c.h.b16 %v1104
  %v5494 = vunpack.c.l.b16 %v1105
  %v5495 = vunpack.c.h.b16 %v1105
  %v5496 = vunpack.c.l.b16 %v1106
  %v5497 = vunpack.c.h.b16 %v1106
  %v5498 = vunpack.c.l.b16 %v1107
  %v5499 = vunpack.c.h.b16 %v1107
  %v5500 = vunpack.c.l.b16 %v1108
  %v5501 = vunpack.c.h.b16 %v1108
  %v5502 = vunpack.c.l.b16 %v1109
  %v5503 = vunpack.c.h.b16 %v1109
  %v5504 = vunpack.c.l.b16 %v1110
  %v5505 = vunpack.c.h.b16 %v1110
  %v5506 = vunpack.c.l.b16 %v1111
  %v5507 = vunpack.c.h.b16 %v1111
  %v5508 = vunpack.c.l.b16 %v1112
  %v5509 = vunpack.c.h.b16 %v1112
  %v5510 = vunpack.c.l.b16 %v1113
  %v5511 = vunpack.c.h.b16 %v1113
  %v5512 = vunpack.c.l.b16 %v1114
  %v5513 = vunpack.c.h.b16 %v1114
  %v5514 = vunpack.c.l.b16 %v1115
  %v5515 = vunpack.c.h.b16 %v1115
  %v5516 = vunpack.c.l.b16 %v1116
  %v5517 = vunpack.c.h.b16 %v1116
  %v5518 = vunpack.c.l.b16 %v1117
  %v5519 = vunpack.c.h.b16 %v1117
  %v5520 = vunpack.c.l.b16 %v1118
  %v5521 = vunpack.c.h.b16 %v1118
  %v5522 = vunpack.c.l.b16 %v1119
  %v5523 = vunpack.c.h.b16 %v1119
  %v5524 = vunpack.c.l.b16 %v1120
  %v5525 = vunpack.c.h.b16 %v1120
  %v5526 = vunpack.c.l.b16 %v1121
  %v5527 = vunpack.c.h.b16 %v1121
  %v5528 = vunpack.c.l.b16 %v1122
  %v5529 = vunpack.c.h.b16 %v1122
  %v5530 = vunpack.c.l.b16 %v1123
  %v5531 = vunpack.c.h.b16 %v1123
  %v5532 = vunpack.c.l.b16 %v1124
  %v5533 = vunpack.c.h.b16 %v1124
  %v5534 = vunpack.c.l.b16 %v1125
  %v5535 = vunpack.c.h.b16 %v1125
  %v5536 = vunpack.c.l.b16 %v1126
  %v5537 = vunpack.c.h.b16 %v1126
  %v5538 = vunpack.c.l.b16 %v1127
  %v5539 = vunpack.c.h.b16 %v1127
  %v5540 = vunpack.c.l.b16 %v1128
  %v5541 = vunpack.c.h.b16 %v1128
  %v5542 = vunpack.c.l.b16 %v1129
  %v5543 = vunpack.c.h.b16 %v1129
  %v5544 = vunpack.c.l.b16 %v1130
  %v5545 = vunpack.c.h.b16 %v1130
  %v5546 = vunpack.c.l.b16 %v1131
  %v5547 = vunpack.c.h.b16 %v1131
  %v5548 = vunpack.c.l.b16 %v1132
  %v5549 = vunpack.c.h.b16 %v1132
  %v5550 = vunpack.c.l.b16 %v1133
  %v5551 = vunpack.c.h.b16 %v1133
  %v5552 = vunpack.c.l.b16 %v1134
  %v5553 = vunpack.c.h.b16 %v1134
  %v5554 = vunpack.c.l.b16 %v1135
  %v5555 = vunpack.c.h.b16 %v1135
  %v5556 = vunpack.c.l.b16 %v1136
  %v5557 = vunpack.c.h.b16 %v1136
  %v5558 = vunpack.c.l.b16 %v1137
  %v5559 = vunpack.c.h.b16 %v1137
  %v5560 = vunpack.c.l.b16 %v1138
  %v5561 = vunpack.c.h.b16 %v1138
  %v5562 = vunpack.c.l.b16 %v1139
  %v5563 = vunpack.c.h.b16 %v1139
  %v5564 = vunpack.c.l.b16 %v1140
  %v5565 = vunpack.c.h.b16 %v1140
  %v5566 = vunpack.c.l.b16 %v1141
  %v5567 = vunpack.c.h.b16 %v1141
  %v5568 = vunpack.c.l.b16 %v1142
  %v5569 = vunpack.c.h.b16 %v1142
  %v5570 = vunpack.c.l.b16 %v1143
  %v5571 = vunpack.c.h.b16 %v1143
  %v5572 = vunpack.c.l.b16 %v1144
  %v5573 = vunpack.c.h.b16 %v1144
  %v5574 = vunpack.c.l.b16 %v1145
  %v5575 = vunpack.c.h.b16 %v1145
  %v5576 = vunpack.c.l.b16 %v1146
  %v5577 = vunpack.c.h.b16 %v1146
  %v5578 = vunpack.c.l.b16 %v1147
  %v5579 = vunpack.c.h.b16 %v1147
  %v5580 = vunpack.c.l.b16 %v1148
  %v5581 = vunpack.c.h.b16 %v1148
  %v5582 = vunpack.c.l.b16 %v1149
  %v5583 = vunpack.c.h.b16 %v1149
  %v5584 = vunpack.c.l.b16 %v1150
  %v5585 = vunpack.c.h.b16 %v1150
  %v5586 = vunpack.c.l.b16 %v1151
  %v5587 = vunpack.c.h.b16 %v1151
  %v5588 = vunpack.c.l.b16 %v1152
  %v5589 = vunpack.c.h.b16 %v1152
  %v5590 = vunpack.c.l.b16 %v1153
  %v5591 = vunpack.c.h.b16 %v1153
  %v5592 = vunpack.c.l.b16 %v1154
  %v5593 = vunpack.c.h.b16 %v1154
  %v5594 = vunpack.c.l.b16 %v1155
  %v5595 = vunpack.c.h.b16 %v1155
  %v5596 = vunpack.c.l.b16 %v1156
  %v5597 = vunpack.c.h.b16 %v1156
  %v5598 = vunpack.c.l.b16 %v1157
  %v5599 = vunpack.c.h.b16 %v1157
  %v5600 = vunpack.c.l.b16 %v1158
  %v5601 = vunpack.c.h.b16 %v1158
  %v5602 = vunpack.c.l.b16 %v1159
  %v5603 = vunpack.c.h.b16 %v1159
  %v5604 = vunpack.c.l.b16 %v1160
  %v5605 = vunpack.c.h.b16 %v1160
  %v5606 = vunpack.c.l.b16 %v1161
  %v5607 = vunpack.c.h.b16 %v1161
  %v5608 = vunpack.c.l.b16 %v1162
  %v5609 = vunpack.c.h.b16 %v1162
  %v5610 = vunpack.c.l.b16 %v1163
  %v5611 = vunpack.c.h.b16 %v1163
  %v5612 = vunpack.c.l.b16 %v1164
  %v5613 = vunpack.c.h.b16 %v1164
  %v5614 = vunpack.c.l.b16 %v1165
  %v5615 = vunpack.c.h.b16 %v1165
  %v5616 = vunpack.c.l.b16 %v1166
  %v5617 = vunpack.c.h.b16 %v1166
  %v5618 = vunpack.c.l.b16 %v1167
  %v5619 = vunpack.c.h.b16 %v1167
  %v5620 = vunpack.c.l.b16 %v1168
  %v5621 = vunpack.c.h.b16 %v1168
  %v5622 = vunpack.c.l.b16 %v1169
  %v5623 = vunpack.c.h.b16 %v1169
  %v5624 = vunpack.c.l.b16 %v1170
  %v5625 = vunpack.c.h.b16 %v1170
  %v5626 = vunpack.c.l.b16 %v1171
  %v5627 = vunpack.c.h.b16 %v1171
  %v5628 = vunpack.c.l.b16 %v1172
  %v5629 = vunpack.c.h.b16 %v1172
  %v5630 = vunpack.c.l.b16 %v1173
  %v5631 = vunpack.c.h.b16 %v1173
  %v5632 = vunpack.c.l.b16 %v1174
  %v5633 = vunpack.c.h.b16 %v1174
  %v5634 = vunpack.c.l.b16 %v1175
  %v5635 = vunpack.c.h.b16 %v1175
  %v5636 = vunpack.c.l.b16 %v1176
  %v5637 = vunpack.c.h.b16 %v1176
  %v5638 = vunpack.c.l.b16 %v1177
  %v5639 = vunpack.c.h.b16 %v1177
  %v5640 = vunpack.c.l.b16 %v1178
  %v5641 = vunpack.c.h.b16 %v1178
  %v5642 = vunpack.c.l.b16 %v1179
  %v5643 = vunpack.c.h.b16 %v1179
  %v5644 = vunpack.c.l.b16 %v1180
  %v5645 = vunpack.c.h.b16 %v1180
  %v5646 = vunpack.c.l.b16 %v1181
  %v5647 = vunpack.c.h.b16 %v1181
  %v5648 = vunpack.c.l.b16 %v1182
  %v5649 = vunpack.c.h.b16 %v1182
  %v5650 = vunpack.c.l.b16 %v1183
  %v5651 = vunpack.c.h.b16 %v1183
  %v5652 = vunpack.c.l.b16 %v1184
  %v5653 = vunpack.c.h.b16 %v1184
  %v5654 = vunpack.c.l.b16 %v1185
  %v5655 = vunpack.c.h.b16 %v1185
  %v5656 = vunpack.c.l.b16 %v1186
  %v5657 = vunpack.c.h.b16 %v1186
  %v5658 = vunpack.c.l.b16 %v1187
  %v5659 = vunpack.c.h.b16 %v1187
  %v5660 = vunpack.c.l.b16 %v1188
  %v5661 = vunpack.c.h.b16 %v1188
  %v5662 = vunpack.c.l.b16 %v1189
  %v5663 = vunpack.c.h.b16 %v1189
  %v5664 = vunpack.c.l.b16 %v1190
  %v5665 = vunpack.c.h.b16 %v1190
  %v5666 = vunpack.c.l.b16 %v1191
  %v5667 = vunpack.c.h.b16 %v1191
  %v5668 = vunpack.c.l.b16 %v1192
  %v5669 = vunpack.c.h.b16 %v1192
  %v5670 = vunpack.c.l.b16 %v1193
  %v5671 = vunpack.c.h.b16 %v1193
  %v5672 = vunpack.c.l.b16 %v1194
  %v5673 = vunpack.c.h.b16 %v1194
  %v5674 = vunpack.c.l.b16 %v1195
  %v5675 = vunpack.c.h.b16 %v1195
  %v5676 = vunpack.c.l.b16 %v1196
  %v5677 = vunpack.c.h.b16 %v1196
  %v5678 = vunpack.c.l.b16 %v1197
  %v5679 = vunpack.c.h.b16 %v1197
  %v5680 = vunpack.c.l.b16 %v1198
  %v5681 = vunpack.c.h.b16 %v1198
  %v5682 = vunpack.c.l.b16 %v1199
  %v5683 = vunpack.c.h.b16 %v1199
  %v5684 = vunpack.c.l.b16 %v1200
  %v5685 = vunpack.c.h.b16 %v1200
  %v5686 = vunpack.c.l.b16 %v1201
  %v5687 = vunpack.c.h.b16 %v1201
  %v5688 = vunpack.c.l.b16 %v1202
  %v5689 = vunpack.c.h.b16 %v1202
  %v5690 = vunpack.c.l.b16 %v1203
  %v5691 = vunpack.c.h.b16 %v1203
  %v5692 = vunpack.c.l.b16 %v1204
  %v5693 = vunpack.c.h.b16 %v1204
  %v5694 = vunpack.c.l.b16 %v1205
  %v5695 = vunpack.c.h.b16 %v1205
  %v5696 = vunpack.c.l.b16 %v1206
  %v5697 = vunpack.c.h.b16 %v1206
  %v5698 = vunpack.c.l.b16 %v1207
  %v5699 = vunpack.c.h.b16 %v1207
  %v5700 = vunpack.c.l.b16 %v1208
  %v5701 = vunpack.c.h.b16 %v1208
  %v5702 = vunpack.c.l.b16 %v1209
  %v5703 = vunpack.c.h.b16 %v1209
  %v5704 = vunpack.c.l.b16 %v1210
  %v5705 = vunpack.c.h.b16 %v1210
  %v5706 = vunpack.c.l.b16 %v1211
  %v5707 = vunpack.c.h.b16 %v1211
  %v5708 = vunpack.c.l.b16 %v1212
  %v5709 = vunpack.c.h.b16 %v1212
  %v5710 = vunpack.c.l.b16 %v1213
  %v5711 = vunpack.c.h.b16 %v1213
  %v5712 = vunpack.c.l.b16 %v1214
  %v5713 = vunpack.c.h.b16 %v1214
  %v5714 = vunpack.c.l.b16 %v1215
  %v5715 = vunpack.c.h.b16 %v1215
  %v5716 = vunpack.c.l.b16 %v1216
  %v5717 = vunpack.c.h.b16 %v1216
  %v5718 = vunpack.c.l.b16 %v1217
  %v5719 = vunpack.c.h.b16 %v1217
  %v5720 = vunpack.c.l.b16 %v1218
  %v5721 = vunpack.c.h.b16 %v1218
  %v5722 = vunpack.c.l.b16 %v1219
  %v5723 = vunpack.c.h.b16 %v1219
  %v5724 = vunpack.c.l.b16 %v1220
  %v5725 = vunpack.c.h.b16 %v1220
  %v5726 = vunpack.c.l.b16 %v1221
  %v5727 = vunpack.c.h.b16 %v1221
  %v5728 = vunpack.c.l.b16 %v1222
  %v5729 = vunpack.c.h.b16 %v1222
  %v5730 = vunpack.c.l.b16 %v1223
  %v5731 = vunpack.c.h.b16 %v1223
  %v5732 = vunpack.c.l.b16 %v1224
  %v5733 = vunpack.c.h.b16 %v1224
  %v5734 = vunpack.c.l.b16 %v1225
  %v5735 = vunpack.c.h.b16 %v1225
  %v5736 = vunpack.c.l.b16 %v1226
  %v5737 = vunpack.c.h.b16 %v1226
  %v5738 = vunpack.c.l.b16 %v1227
  %v5739 = vunpack.c.h.b16 %v1227
  %v5740 = vunpack.c.l.b16 %v1228
  %v5741 = vunpack.c.h.b16 %v1228
  %v5742 = vunpack.c.l.b16 %v1229
  %v5743 = vunpack.c.h.b16 %v1229
  %v5744 = vunpack.c.l.b16 %v1230
  %v5745 = vunpack.c.h.b16 %v1230
  %v5746 = vunpack.c.l.b16 %v1231
  %v5747 = vunpack.c.h.b16 %v1231
  %v5748 = vunpack.c.l.b16 %v1232
  %v5749 = vunpack.c.h.b16 %v1232
  %v5750 = vunpack.c.l.b16 %v1233
  %v5751 = vunpack.c.h.b16 %v1233
  %v5752 = vunpack.c.l.b16 %v1234
  %v5753 = vunpack.c.h.b16 %v1234
  %v5754 = vunpack.c.l.b16 %v1235
  %v5755 = vunpack.c.h.b16 %v1235
  %v5756 = vunpack.c.l.b16 %v1236
  %v5757 = vunpack.c.h.b16 %v1236
  %v5758 = vunpack.c.l.b16 %v1237
  %v5759 = vunpack.c.h.b16 %v1237
  %v5760 = vunpack.c.l.b16 %v1238
  %v5761 = vunpack.c.h.b16 %v1238
  %v5762 = vunpack.c.l.b16 %v1239
  %v5763 = vunpack.c.h.b16 %v1239
  %v5764 = vunpack.c.l.b16 %v1240
  %v5765 = vunpack.c.h.b16 %v1240
  %v5766 = vunpack.c.l.b16 %v1241
  %v5767 = vunpack.c.h.b16 %v1241
  %v5768 = vunpack.c.l.b16 %v1242
  %v5769 = vunpack.c.h.b16 %v1242
  %v5770 = vunpack.c.l.b16 %v1243
  %v5771 = vunpack.c.h.b16 %v1243
  %v5772 = vunpack.c.l.b16 %v1244
  %v5773 = vunpack.c.h.b16 %v1244
  %v5774 = vunpack.c.l.b16 %v1245
  %v5775 = vunpack.c.h.b16 %v1245
  %v5776 = vunpack.c.l.b16 %v1246
  %v5777 = vunpack.c.h.b16 %v1246
  %v5778 = vunpack.c.l.b16 %v1247
  %v5779 = vunpack.c.h.b16 %v1247
  %v5780 = vunpack.c.l.b16 %v1248
  %v5781 = vunpack.c.h.b16 %v1248
  %v5782 = vunpack.c.l.b16 %v1249
  %v5783 = vunpack.c.h.b16 %v1249
  %v5784 = vunpack.c.l.b16 %v1250
  %v5785 = vunpack.c.h.b16 %v1250
  %v5786 = vunpack.c.l.b16 %v1251
  %v5787 = vunpack.c.h.b16 %v1251
  %v5788 = vunpack.c.l.b16 %v1252
  %v5789 = vunpack.c.h.b16 %v1252
  %v5790 = vunpack.c.l.b16 %v1253
  %v5791 = vunpack.c.h.b16 %v1253
  %v5792 = vunpack.c.l.b16 %v1254
  %v5793 = vunpack.c.h.b16 %v1254
  %v5794 = vunpack.c.l.b16 %v1255
  %v5795 = vunpack.c.h.b16 %v1255
  %v5796 = vunpack.c.l.b16 %v1256
  %v5797 = vunpack.c.h.b16 %v1256
  %v5798 = vunpack.c.l.b16 %v1257
  %v5799 = vunpack.c.h.b16 %v1257
  %v5800 = vunpack.c.l.b16 %v1258
  %v5801 = vunpack.c.h.b16 %v1258
  %v5802 = vunpack.c.l.b16 %v1259
  %v5803 = vunpack.c.h.b16 %v1259
  %v5804 = vunpack.c.l.b16 %v1260
  %v5805 = vunpack.c.h.b16 %v1260
  %v5806 = vunpack.c.l.b16 %v1261
  %v5807 = vunpack.c.h.b16 %v1261
  %v5808 = vunpack.c.l.b16 %v1262
  %v5809 = vunpack.c.h.b16 %v1262
  %v5810 = vunpack.c.l.b16 %v1263
  %v5811 = vunpack.c.h.b16 %v1263
  %v5812 = vunpack.c.l.b16 %v1264
  %v5813 = vunpack.c.h.b16 %v1264
  %v5814 = vunpack.c.l.b16 %v1265
  %v5815 = vunpack.c.h.b16 %v1265
  %v5816 = vunpack.c.l.b16 %v1266
  %v5817 = vunpack.c.h.b16 %v1266
  %v5818 = vunpack.c.l.b16 %v1267
  %v5819 = vunpack.c.h.b16 %v1267
  %v5820 = vunpack.c.l.b16 %v1268
  %v5821 = vunpack.c.h.b16 %v1268
  %v5822 = vunpack.c.l.b16 %v1269
  %v5823 = vunpack.c.h.b16 %v1269
  %v5824 = vunpack.c.l.b16 %v1270
  %v5825 = vunpack.c.h.b16 %v1270
  %v5826 = vunpack.c.l.b16 %v1271
  %v5827 = vunpack.c.h.b16 %v1271
  %v5828 = vunpack.c.l.b16 %v1272
  %v5829 = vunpack.c.h.b16 %v1272
  %v5830 = vunpack.c.l.b16 %v1273
  %v5831 = vunpack.c.h.b16 %v1273
  %v5832 = vunpack.c.l.b16 %v1274
  %v5833 = vunpack.c.h.b16 %v1274
  %v5834 = vunpack.c.l.b16 %v1275
  %v5835 = vunpack.c.h.b16 %v1275
  %v5836 = vunpack.c.l.b16 %v1276
  %v5837 = vunpack.c.h.b16 %v1276
  %v5838 = vunpack.c.l.b16 %v1277
  %v5839 = vunpack.c.h.b16 %v1277
  %v5840 = vunpack.c.l.b16 %v1278
  %v5841 = vunpack.c.h.b16 %v1278
  %v5842 = vunpack.c.l.b16 %v1279
  %v5843 = vunpack.c.h.b16 %v1279
  %v5844 = vunpack.c.l.b16 %v1280
  %v5845 = vunpack.c.h.b16 %v1280
  %v5846 = vunpack.c.l.b16 %v1281
  %v5847 = vunpack.c.h.b16 %v1281
  %v5848 = vunpack.c.l.b16 %v1282
  %v5849 = vunpack.c.h.b16 %v1282
  %v5850 = vunpack.c.l.b16 %v1283
  %v5851 = vunpack.c.h.b16 %v1283
  %v5852 = vunpack.c.l.b16 %v1284
  %v5853 = vunpack.c.h.b16 %v1284
  %v5854 = vunpack.c.l.b16 %v1285
  %v5855 = vunpack.c.h.b16 %v1285
  %v5856 = vunpack.c.l.b16 %v1286
  %v5857 = vunpack.c.h.b16 %v1286
  %v5858 = vunpack.c.l.b16 %v1287
  %v5859 = vunpack.c.h.b16 %v1287
  %v5860 = vunpack.c.l.b16 %v1288
  %v5861 = vunpack.c.h.b16 %v1288
  %v5862 = vunpack.c.l.b16 %v1289
  %v5863 = vunpack.c.h.b16 %v1289
  %v5864 = vunpack.c.l.b16 %v1290
  %v5865 = vunpack.c.h.b16 %v1290
  %v5866 = vunpack.c.l.b16 %v1291
  %v5867 = vunpack.c.h.b16 %v1291
  %v5868 = vunpack.c.l.b16 %v1292
  %v5869 = vunpack.c.h.b16 %v1292
  %v5870 = vunpack.c.l.b16 %v1293
  %v5871 = vunpack.c.h.b16 %v1293
  %v5872 = vunpack.c.l.b16 %v1294
  %v5873 = vunpack.c.h.b16 %v1294
  %v5874 = vunpack.c.l.b16 %v1295
  %v5875 = vunpack.c.h.b16 %v1295
  %v5876 = vunpack.c.l.b16 %v1296
  %v5877 = vunpack.c.h.b16 %v1296
  %v5878 = vunpack.c.l.b16 %v1297
  %v5879 = vunpack.c.h.b16 %v1297
  %v5880 = vunpack.c.l.b16 %v1298
  %v5881 = vunpack.c.h.b16 %v1298
  %v5882 = vunpack.c.l.b16 %v1299
  %v5883 = vunpack.c.h.b16 %v1299
  %v5884 = vunpack.c.l.b16 %v1300
  %v5885 = vunpack.c.h.b16 %v1300
  %v5886 = vunpack.c.l.b16 %v1301
  %v5887 = vunpack.c.h.b16 %v1301
  %v5888 = vunpack.c.l.b16 %v1302
  %v5889 = vunpack.c.h.b16 %v1302
  %v5890 = vunpack.c.l.b16 %v1303
  %v5891 = vunpack.c.h.b16 %v1303
  %v5892 = vunpack.c.l.b16 %v1304
  %v5893 = vunpack.c.h.b16 %v1304
  %v5894 = vunpack.c.l.b16 %v1305
  %v5895 = vunpack.c.h.b16 %v1305
  %v5896 = vunpack.c.l.b16 %v1306
  %v5897 = vunpack.c.h.b16 %v1306
  %v5898 = vunpack.c.l.b16 %v1307
  %v5899 = vunpack.c.h.b16 %v1307
  %v5900 = vunpack.c.l.b16 %v1308
  %v5901 = vunpack.c.h.b16 %v1308
  %v5902 = vunpack.c.l.b16 %v1309
  %v5903 = vunpack.c.h.b16 %v1309
  %v5904 = vunpack.c.l.b16 %v1310
  %v5905 = vunpack.c.h.b16 %v1310
  %v5906 = vunpack.c.l.b16 %v1311
  %v5907 = vunpack.c.h.b16 %v1311
  %v5908 = vunpack.c.l.b16 %v1312
  %v5909 = vunpack.c.h.b16 %v1312
  %v5910 = vunpack.c.l.b16 %v1313
  %v5911 = vunpack.c.h.b16 %v1313
  %v5912 = vunpack.c.l.b16 %v1314
  %v5913 = vunpack.c.h.b16 %v1314
  %v5914 = vunpack.c.l.b16 %v1315
  %v5915 = vunpack.c.h.b16 %v1315
  %v5916 = vunpack.c.l.b16 %v1316
  %v5917 = vunpack.c.h.b16 %v1316
  %v5918 = vunpack.c.l.b16 %v1317
  %v5919 = vunpack.c.h.b16 %v1317
  %v5920 = vunpack.c.l.b16 %v1318
  %v5921 = vunpack.c.h.b16 %v1318
  %v5922 = vunpack.c.l.b16 %v1319
  %v5923 = vunpack.c.h.b16 %v1319
  %v5924 = vunpack.c.l.b16 %v1320
  %v5925 = vunpack.c.h.b16 %v1320
  %v5926 = vunpack.c.l.b16 %v1321
  %v5927 = vunpack.c.h.b16 %v1321
  %v5928 = vunpack.c.l.b16 %v1322
  %v5929 = vunpack.c.h.b16 %v1322
  %v5930 = vunpack.c.l.b16 %v1323
  %v5931 = vunpack.c.h.b16 %v1323
  %v5932 = vunpack.c.l.b16 %v1324
  %v5933 = vunpack.c.h.b16 %v1324
  %v5934 = vunpack.c.l.b16 %v1325
  %v5935 = vunpack.c.h.b16 %v1325
  %v5936 = vunpack.c.l.b16 %v1326
  %v5937 = vunpack.c.h.b16 %v1326
  %v5938 = vunpack.c.l.b16 %v1327
  %v5939 = vunpack.c.h.b16 %v1327
  %v5940 = vunpack.c.l.b16 %v1328
  %v5941 = vunpack.c.h.b16 %v1328
  %v5942 = vunpack.c.l.b16 %v1329
  %v5943 = vunpack.c.h.b16 %v1329
  %v5944 = vunpack.c.l.b16 %v1330
  %v5945 = vunpack.c.h.b16 %v1330
  %v5946 = vunpack.c.l.b16 %v1331
  %v5947 = vunpack.c.h.b16 %v1331
  %v5948 = vunpack.c.l.b16 %v1332
  %v5949 = vunpack.c.h.b16 %v1332
  %v5950 = vunpack.c.l.b16 %v1333
  %v5951 = vunpack.c.h.b16 %v1333
  %v5952 = vunpack.c.l.b16 %v1334
  %v5953 = vunpack.c.h.b16 %v1334
  %v5954 = vunpack.c.l.b16 %v1335
  %v5955 = vunpack.c.h.b16 %v1335
  %v5956 = vunpack.c.l.b16 %v1336
  %v5957 = vunpack.c.h.b16 %v1336
  %v5958 = vunpack.c.l.b16 %v1337
  %v5959 = vunpack.c.h.b16 %v1337
  %v5960 = vunpack.c.l.b16 %v1338
  %v5961 = vunpack.c.h.b16 %v1338
  %v5962 = vunpack.c.l.b16 %v1339
  %v5963 = vunpack.c.h.b16 %v1339
  %v5964 = vunpack.c.l.b16 %v1340
  %v5965 = vunpack.c.h.b16 %v1340
  %v5966 = vunpack.c.l.b16 %v1341
  %v5967 = vunpack.c.h.b16 %v1341
  %v5968 = vunpack.c.l.b16 %v1342
  %v5969 = vunpack.c.h.b16 %v1342
  %v5970 = vunpack.c.l.b16 %v1343
  %v5971 = vunpack.c.h.b16 %v1343
  %v5972 = vunpack.c.l.b16 %v1344
  %v5973 = vunpack.c.h.b16 %v1344
  %v5974 = vunpack.c.l.b16 %v1345
  %v5975 = vunpack.c.h.b16 %v1345
  %v5976 = vunpack.c.l.b16 %v1346
  %v5977 = vunpack.c.h.b16 %v1346
  %v5978 = vunpack.c.l.b16 %v1347
  %v5979 = vunpack.c.h.b16 %v1347
  %v5980 = vunpack.c.l.b16 %v1348
  %v5981 = vunpack.c.h.b16 %v1348
  %v5982 = vunpack.c.l.b16 %v1349
  %v5983 = vunpack.c.h.b16 %v1349
  %v5984 = vunpack.c.l.b16 %v1350
  %v5985 = vunpack.c.h.b16 %v1350
  %v5986 = vunpack.c.l.b16 %v1351
  %v5987 = vunpack.c.h.b16 %v1351
  %v5988 = vunpack.c.l.b16 %v1352
  %v5989 = vunpack.c.h.b16 %v1352
  %v5990 = vunpack.c.l.b16 %v1353
  %v5991 = vunpack.c.h.b16 %v1353
  %v5992 = vunpack.c.l.b16 %v1354
  %v5993 = vunpack.c.h.b16 %v1354
  %v5994 = vunpack.c.l.b16 %v1355
  %v5995 = vunpack.c.h.b16 %v1355
  %v5996 = vunpack.c.l.b16 %v1356
  %v5997 = vunpack.c.h.b16 %v1356
  %v5998 = vunpack.c.l.b16 %v1357
  %v5999 = vunpack.c.h.b16 %v1357
  %v6000 = vunpack.c.l.b16 %v1358
  %v6001 = vunpack.c.h.b16 %v1358
  %v6002 = vunpack.c.l.b16 %v1359
  %v6003 = vunpack.c.h.b16 %v1359
  %v6004 = vunpack.c.l.b16 %v1360
  %v6005 = vunpack.c.h.b16 %v1360
  %v6006 = vunpack.c.l.b16 %v1361
  %v6007 = vunpack.c.h.b16 %v1361
  %v6008 = vunpack.c.l.b16 %v1362
  %v6009 = vunpack.c.h.b16 %v1362
  %v6010 = vunpack.c.l.b16 %v1363
  %v6011 = vunpack.c.h.b16 %v1363
  %v6012 = vunpack.c.l.b16 %v1364
  %v6013 = vunpack.c.h.b16 %v1364
  %v6014 = vunpack.c.l.b16 %v1365
  %v6015 = vunpack.c.h.b16 %v1365
  %v6016 = vunpack.c.l.b16 %v1366
  %v6017 = vunpack.c.h.b16 %v1366
  %v6018 = vunpack.c.l.b16 %v1367
  %v6019 = vunpack.c.h.b16 %v1367
  %v6020 = vunpack.c.l.b16 %v1368
  %v6021 = vunpack.c.h.b16 %v1368
  %v6022 = vunpack.c.l.b16 %v1369
  %v6023 = vunpack.c.h.b16 %v1369
  %v6024 = vunpack.c.l.b16 %v1370
  %v6025 = vunpack.c.h.b16 %v1370
  %v6026 = vunpack.c.l.b16 %v1371
  %v6027 = vunpack.c.h.b16 %v1371
  %v6028 = vunpack.c.l.b16 %v1372
  %v6029 = vunpack.c.h.b16 %v1372
  %v6030 = vunpack.c.l.b16 %v1373
  %v6031 = vunpack.c.h.b16 %v1373
  %v6032 = vunpack.c.l.b16 %v1374
  %v6033 = vunpack.c.h.b16 %v1374
  %v6034 = vunpack.c.l.b16 %v1375
  %v6035 = vunpack.c.h.b16 %v1375
  %v6036 = vunpack.c.l.b16 %v1376
  %v6037 = vunpack.c.h.b16 %v1376
  %v6038 = vunpack.c.l.b16 %v1377
  %v6039 = vunpack.c.h.b16 %v1377
  %v6040 = vunpack.c.l.b16 %v1378
  %v6041 = vunpack.c.h.b16 %v1378
  %v6042 = vunpack.c.l.b16 %v1379
  %v6043 = vunpack.c.h.b16 %v1379
  %v6044 = vunpack.c.l.b16 %v1380
  %v6045 = vunpack.c.h.b16 %v1380
  %v6046 = vunpack.c.l.b16 %v1381
  %v6047 = vunpack.c.h.b16 %v1381
  %v6048 = vunpack.c.l.b16 %v1382
  %v6049 = vunpack.c.h.b16 %v1382
  %v6050 = vunpack.c.l.b16 %v1383
  %v6051 = vunpack.c.h.b16 %v1383
  %v6052 = vunpack.c.l.b16 %v1384
  %v6053 = vunpack.c.h.b16 %v1384
  %v6054 = vunpack.c.l.b16 %v1385
  %v6055 = vunpack.c.h.b16 %v1385
  %v6056 = vunpack.c.l.b16 %v1386
  %v6057 = vunpack.c.h.b16 %v1386
  %v6058 = vunpack.c.l.b16 %v1387
  %v6059 = vunpack.c.h.b16 %v1387
  %v6060 = vunpack.c.l.b16 %v1388
  %v6061 = vunpack.c.h.b16 %v1388
  %v6062 = vunpack.c.l.b16 %v1389
  %v6063 = vunpack.c.h.b16 %v1389
  %v6064 = vunpack.c.l.b16 %v1390
  %v6065 = vunpack.c.h.b16 %v1390
  %v6066 = vunpack.c.l.b16 %v1391
  %v6067 = vunpack.c.h.b16 %v1391
  %v6068 = vunpack.c.l.b16 %v1392
  %v6069 = vunpack.c.h.b16 %v1392
  %v6070 = vunpack.c.l.b16 %v1393
  %v6071 = vunpack.c.h.b16 %v1393
  %v6072 = vunpack.c.l.b16 %v1394
  %v6073 = vunpack.c.h.b16 %v1394
  %v6074 = vunpack.c.l.b16 %v1395
  %v6075 = vunpack.c.h.b16 %v1395
  %v6076 = vunpack.c.l.b16 %v1396
  %v6077 = vunpack.c.h.b16 %v1396
  %v6078 = vunpack.c.l.b16 %v1397
  %v6079 = vunpack.c.h.b16 %v1397
  %v6080 = vunpack.c.l.b16 %v1398
  %v6081 = vunpack.c.h.b16 %v1398
  %v6082 = vunpack.c.l.b16 %v1399
  %v6083 = vunpack.c.h.b16 %v1399
  %v6084 = vunpack.c.l.b16 %v1400
  %v6085 = vunpack.c.h.b16 %v1400
  %v6086 = vunpack.c.l.b16 %v1401
  %v6087 = vunpack.c.h.b16 %v1401
  %v6088 = vunpack.c.l.b16 %v1402
  %v6089 = vunpack.c.h.b16 %v1402
  %v6090 = vunpack.c.l.b16 %v1403
  %v6091 = vunpack.c.h.b16 %v1403
  %v6092 = vunpack.c.l.b16 %v1404
  %v6093 = vunpack.c.h.b16 %v1404
  %v6094 = vunpack.c.l.b16 %v1405
  %v6095 = vunpack.c.h.b16 %v1405
  %v6096 = vunpack.c.l.b16 %v1406
  %v6097 = vunpack.c.h.b16 %v1406
  %v6098 = vunpack.c.l.b16 %v1407
  %v6099 = vunpack.c.h.b16 %v1407
  %v6100 = vunpack.c.l.b16 %v1408
  %v6101 = vunpack.c.h.b16 %v1408
  %v6102 = vunpack.c.l.b16 %v1409
  %v6103 = vunpack.c.h.b16 %v1409
  %v6104 = vunpack.c.l.b16 %v1410
  %v6105 = vunpack.c.h.b16 %v1410
  %v6106 = vunpack.c.l.b16 %v1411
  %v6107 = vunpack.c.h.b16 %v1411
  %v6108 = vunpack.c.l.b16 %v1412
  %v6109 = vunpack.c.h.b16 %v1412
  %v6110 = vunpack.c.l.b16 %v1413
  %v6111 = vunpack.c.h.b16 %v1413
  %v6112 = vunpack.c.l.b16 %v1414
  %v6113 = vunpack.c.h.b16 %v1414
  %v6114 = vunpack.c.l.b16 %v1415
  %v6115 = vunpack.c.h.b16 %v1415
  %v6116 = vunpack.c.l.b16 %v1416
  %v6117 = vunpack.c.h.b16 %v1416
  %v6118 = vunpack.c.l.b16 %v1417
  %v6119 = vunpack.c.h.b16 %v1417
  %v6120 = vunpack.c.l.b16 %v1418
  %v6121 = vunpack.c.h.b16 %v1418
  %v6122 = vunpack.c.l.b16 %v1419
  %v6123 = vunpack.c.h.b16 %v1419
  %v6124 = vunpack.c.l.b16 %v1420
  %v6125 = vunpack.c.h.b16 %v1420
  %v6126 = vunpack.c.l.b16 %v1421
  %v6127 = vunpack.c.h.b16 %v1421
  %v6128 = vunpack.c.l.b16 %v1422
  %v6129 = vunpack.c.h.b16 %v1422
  %v6130 = vunpack.c.l.b16 %v1423
  %v6131 = vunpack.c.h.b16 %v1423
  %v6132 = vunpack.c.l.b16 %v1424
  %v6133 = vunpack.c.h.b16 %v1424
  %v6134 = vunpack.c.l.b16 %v1425
  %v6135 = vunpack.c.h.b16 %v1425
  %v6136 = vunpack.c.l.b16 %v1426
  %v6137 = vunpack.c.h.b16 %v1426
  %v6138 = vunpack.c.l.b16 %v1427
  %v6139 = vunpack.c.h.b16 %v1427
  %v6140 = vunpack.c.l.b16 %v1428
  %v6141 = vunpack.c.h.b16 %v1428
  %v6142 = vunpack.c.l.b16 %v1429
  %v6143 = vunpack.c.h.b16 %v1429
  %v6144 = vunpack.c.l.b16 %v1430
  %v6145 = vunpack.c.h.b16 %v1430
  %v6146 = vunpack.c.l.b16 %v1431
  %v6147 = vunpack.c.h.b16 %v1431
  %v6148 = vunpack.c.l.b16 %v1432
  %v6149 = vunpack.c.h.b16 %v1432
  %v6150 = vunpack.c.l.b16 %v1433
  %v6151 = vunpack.c.h.b16 %v1433
  %v6152 = vunpack.c.l.b16 %v1434
  %v6153 = vunpack.c.h.b16 %v1434
  %v6154 = vunpack.c.l.b16 %v1435
  %v6155 = vunpack.c.h.b16 %v1435
  %v6156 = vunpack.c.l.b16 %v1436
  %v6157 = vunpack.c.h.b16 %v1436
  %v6158 = vunpack.c.l.b16 %v1437
  %v6159 = vunpack.c.h.b16 %v1437
  %v6160 = vunpack.c.l.b16 %v1438
  %v6161 = vunpack.c.h.b16 %v1438
  %v6162 = vunpack.c.l.b16 %v1439
  %v6163 = vunpack.c.h.b16 %v1439
  %v6164 = vunpack.c.l.b16 %v1440
  %v6165 = vunpack.c.h.b16 %v1440
  %v6166 = vunpack.c.l.b16 %v1441
  %v6167 = vunpack.c.h.b16 %v1441
  %v6168 = vunpack.c.l.b16 %v1442
  %v6169 = vunpack.c.h.b16 %v1442
  %v6170 = vunpack.c.l.b16 %v1443
  %v6171 = vunpack.c.h.b16 %v1443
  %v6172 = vunpack.c.l.b16 %v1444
  %v6173 = vunpack.c.h.b16 %v1444
  %v6174 = vunpack.c.l.b16 %v1445
  %v6175 = vunpack.c.h.b16 %v1445
  %v6176 = vunpack.c.l.b16 %v1446
  %v6177 = vunpack.c.h.b16 %v1446
  %v6178 = vunpack.c.l.b16 %v1447
  %v6179 = vunpack.c.h.b16 %v1447
  %v6180 = vunpack.c.l.b16 %v1448
  %v6181 = vunpack.c.h.b16 %v1448
  %v6182 = vunpack.c.l.b16 %v1449
  %v6183 = vunpack.c.h.b16 %v1449
  %v6184 = vunpack.c.l.b16 %v1450
  %v6185 = vunpack.c.h.b16 %v1450
  %v6186 = vunpack.c.l.b16 %v1451
  %v6187 = vunpack.c.h.b16 %v1451
  %v6188 = vunpack.c.l.b16 %v1452
  %v6189 = vunpack.c.h.b16 %v1452
  %v6190 = vunpack.c.l.b16 %v1453
  %v6191 = vunpack.c.h.b16 %v1453
  %v6192 = vunpack.c.l.b16 %v1454
  %v6193 = vunpack.c.h.b16 %v1454
  %v6194 = vunpack.c.l.b16 %v1455
  %v6195 = vunpack.c.h.b16 %v1455
  %v6196 = vunpack.c.l.b16 %v1456
  %v6197 = vunpack.c.h.b16 %v1456
  %v6198 = vunpack.c.l.b16 %v1457
  %v6199 = vunpack.c.h.b16 %v1457
  %v6200 = vunpack.c.l.b16 %v1458
  %v6201 = vunpack.c.h.b16 %v1458
  %v6202 = vunpack.c.l.b16 %v1459
  %v6203 = vunpack.c.h.b16 %v1459
  %v6204 = vunpack.c.l.b16 %v1460
  %v6205 = vunpack.c.h.b16 %v1460
  %v6206 = vunpack.c.l.b16 %v1461
  %v6207 = vunpack.c.h.b16 %v1461
  %v6208 = vunpack.c.l.b16 %v1462
  %v6209 = vunpack.c.h.b16 %v1462
  %v6210 = vunpack.c.l.b16 %v1463
  %v6211 = vunpack.c.h.b16 %v1463
  %v6212 = vunpack.c.l.b16 %v1464
  %v6213 = vunpack.c.h.b16 %v1464
  %v6214 = vunpack.c.l.b16 %v1465
  %v6215 = vunpack.c.h.b16 %v1465
  %v6216 = vunpack.c.l.b16 %v1466
  %v6217 = vunpack.c.h.b16 %v1466
  %v6218 = vunpack.c.l.b16 %v1467
  %v6219 = vunpack.c.h.b16 %v1467
  %v6220 = vunpack.c.l.b16 %v1468
  %v6221 = vunpack.c.h.b16 %v1468
  %v6222 = vunpack.c.l.b16 %v1469
  %v6223 = vunpack.c.h.b16 %v1469
  %v6224 = vunpack.c.l.b16 %v1470
  %v6225 = vunpack.c.h.b16 %v1470
  %v6226 = vunpack.c.l.b16 %v1471
  %v6227 = vunpack.c.h.b16 %v1471
  %v6228 = vunpack.c.l.b16 %v1472
  %v6229 = vunpack.c.h.b16 %v1472
  %v6230 = vunpack.c.l.b16 %v1473
  %v6231 = vunpack.c.h.b16 %v1473
  %v6232 = vunpack.c.l.b16 %v1474
  %v6233 = vunpack.c.h.b16 %v1474
  %v6234 = vunpack.c.l.b16 %v1475
  %v6235 = vunpack.c.h.b16 %v1475
  %v6236 = vunpack.c.l.b16 %v1476
  %v6237 = vunpack.c.h.b16 %v1476
  %v6238 = vunpack.c.l.b16 %v1477
  %v6239 = vunpack.c.h.b16 %v1477
  %v6240 = vunpack.c.l.b16 %v1478
  %v6241 = vunpack.c.h.b16 %v1478
  %v6242 = vunpack.c.l.b16 %v1479
  %v6243 = vunpack.c.h.b16 %v1479
  %v6244 = vunpack.c.l.b16 %v1480
  %v6245 = vunpack.c.h.b16 %v1480
  %v6246 = vunpack.c.l.b16 %v1481
  %v6247 = vunpack.c.h.b16 %v1481
  %v6248 = vunpack.c.l.b16 %v1482
  %v6249 = vunpack.c.h.b16 %v1482
  %v6250 = vunpack.c.l.b16 %v1483
  %v6251 = vunpack.c.h.b16 %v1483
  %v6252 = vunpack.c.l.b16 %v1484
  %v6253 = vunpack.c.h.b16 %v1484
  %v6254 = vunpack.c.l.b16 %v1485
  %v6255 = vunpack.c.h.b16 %v1485
  %v6256 = vunpack.c.l.b16 %v1486
  %v6257 = vunpack.c.h.b16 %v1486
  %v6258 = vunpack.c.l.b16 %v1487
  %v6259 = vunpack.c.h.b16 %v1487
  %v6260 = vunpack.c.l.b16 %v1488
  %v6261 = vunpack.c.h.b16 %v1488
  %v6262 = vunpack.c.l.b16 %v1489
  %v6263 = vunpack.c.h.b16 %v1489
  %v6264 = vunpack.c.l.b16 %v1490
  %v6265 = vunpack.c.h.b16 %v1490
  %v6266 = vunpack.c.l.b16 %v1491
  %v6267 = vunpack.c.h.b16 %v1491
  %v6268 = vunpack.c.l.b16 %v1492
  %v6269 = vunpack.c.h.b16 %v1492
  %v6270 = vunpack.c.l.b16 %v1493
  %v6271 = vunpack.c.h.b16 %v1493
  %v6272 = vunpack.c.l.b16 %v1494
  %v6273 = vunpack.c.h.b16 %v1494
  %v6274 = vunpack.c.l.b16 %v1495
  %v6275 = vunpack.c.h.b16 %v1495
  %v6276 = vunpack.c.l.b16 %v1496
  %v6277 = vunpack.c.h.b16 %v1496
  %v6278 = vunpack.c.l.b16 %v1497
  %v6279 = vunpack.c.h.b16 %v1497
  %v6280 = vunpack.c.l.b16 %v1498
  %v6281 = vunpack.c.h.b16 %v1498
  %v6282 = vunpack.c.l.b16 %v1499
  %v6283 = vunpack.c.h.b16 %v1499
  %v6284 = vunpack.c.l.b16 %v1500
  %v6285 = vunpack.c.h.b16 %v1500
  %v6286 = vunpack.c.l.b16 %v1501
  %v6287 = vunpack.c.h.b16 %v1501
  %v6288 = vunpack.c.l.b16 %v1502
  %v6289 = vunpack.c.h.b16 %v1502
  %v6290 = vunpack.c.l.b16 %v1503
  %v6291 = vunpack.c.h.b16 %v1503
  %v6292 = vunpack.c.l.b16 %v1504
  %v6293 = vunpack.c.h.b16 %v1504
  %v6294 = vunpack.c.l.b16 %v1505
  %v6295 = vunpack.c.h.b16 %v1505
  %v6296 = vunpack.c.l.b16 %v1506
  %v6297 = vunpack.c.h.b16 %v1506
  %v6298 = vunpack.c.l.b16 %v1507
  %v6299 = vunpack.c.h.b16 %v1507
  %v6300 = vunpack.c.l.b16 %v1508
  %v6301 = vunpack.c.h.b16 %v1508
  %v6302 = vunpack.c.l.b16 %v1509
  %v6303 = vunpack.c.h.b16 %v1509
  %v6304 = vunpack.c.l.b16 %v1510
  %v6305 = vunpack.c.h.b16 %v1510
  %v6306 = vunpack.c.l.b16 %v1511
  %v6307 = vunpack.c.h.b16 %v1511
  %v6308 = vunpack.c.l.b16 %v1512
  %v6309 = vunpack.c.h.b16 %v1512
  %v6310 = vunpack.c.l.b16 %v1513
  %v6311 = vunpack.c.h.b16 %v1513
  %v6312 = vunpack.c.l.b16 %v1514
  %v6313 = vunpack.c.h.b16 %v1514
  %v6314 = vunpack.c.l.b16 %v1515
  %v6315 = vunpack.c.h.b16 %v1515
  %v6316 = vunpack.c.l.b16 %v1516
  %v6317 = vunpack.c.h.b16 %v1516
  %v6318 = vunpack.c.l.b16 %v1517
  %v6319 = vunpack.c.h.b16 %v1517
  %v6320 = vunpack.c.l.b16 %v1518
  %v6321 = vunpack.c.h.b16 %v1518
  %v6322 = vunpack.c.l.b16 %v1519
  %v6323 = vunpack.c.h.b16 %v1519
  %v6324 = vunpack.c.l.b16 %v1520
  %v6325 = vunpack.c.h.b16 %v1520
  %v6326 = vunpack.c.l.b16 %v1521
  %v6327 = vunpack.c.h.b16 %v1521
  %v6328 = vunpack.c.l.b16 %v1522
  %v6329 = vunpack.c.h.b16 %v1522
  %v6330 = vunpack.c.l.b16 %v1523
  %v6331 = vunpack.c.h.b16 %v1523
  %v6332 = vunpack.c.l.b16 %v1524
  %v6333 = vunpack.c.h.b16 %v1524
  %v6334 = vunpack.c.l.b16 %v1525
  %v6335 = vunpack.c.h.b16 %v1525
  %v6336 = vunpack.c.l.b16 %v1526
  %v6337 = vunpack.c.h.b16 %v1526
  %v6338 = vunpack.c.l.b16 %v1527
  %v6339 = vunpack.c.h.b16 %v1527
  %v6340 = vunpack.c.l.b16 %v1528
  %v6341 = vunpack.c.h.b16 %v1528
  %v6342 = vunpack.c.l.b16 %v1529
  %v6343 = vunpack.c.h.b16 %v1529
  %v6344 = vunpack.c.l.b16 %v1530
  %v6345 = vunpack.c.h.b16 %v1530
  %v6346 = vunpack.c.l.b16 %v1531
  %v6347 = vunpack.c.h.b16 %v1531
  %v6348 = vunpack.c.l.b16 %v1532
  %v6349 = vunpack.c.h.b16 %v1532
  %v6350 = vunpack.c.l.b16 %v1533
  %v6351 = vunpack.c.h.b16 %v1533
  %v6352 = vunpack.c.l.b16 %v1534
  %v6353 = vunpack.c.h.b16 %v1534
  %v6354 = vunpack.c.l.b16 %v1535
  %v6355 = vunpack.c.h.b16 %v1535
  %v6356 = vunpack.c.l.b16 %v1536
  %v6357 = vunpack.c.h.b16 %v1536
  %v6358 = vunpack.c.l.b16 %v1537
  %v6359 = vunpack.c.h.b16 %v1537
  %v6360 = vunpack.c.l.b16 %v1538
  %v6361 = vunpack.c.h.b16 %v1538
  %v6362 = vunpack.c.l.b16 %v1539
  %v6363 = vunpack.c.h.b16 %v1539
  %v6364 = vunpack.c.l.b16 %v1540
  %v6365 = vunpack.c.h.b16 %v1540
  %v6366 = vunpack.c.l.b16 %v1541
  %v6367 = vunpack.c.h.b16 %v1541
  %v6368 = vunpack.c.l.b16 %v1542
  %v6369 = vunpack.c.h.b16 %v1542
  %v6370 = vunpack.c.l.b16 %v1543
  %v6371 = vunpack.c.h.b16 %v1543
  %v6372 = vunpack.c.l.b16 %v1544
  %v6373 = vunpack.c.h.b16 %v1544
  %v6374 = vunpack.c.l.b16 %v1545
  %v6375 = vunpack.c.h.b16 %v1545
  %v6376 = vunpack.c.l.b16 %v1546
  %v6377 = vunpack.c.h.b16 %v1546
  %v6378 = vunpack.c.l.b16 %v1547
  %v6379 = vunpack.c.h.b16 %v1547
  %v6380 = vunpack.c.l.b16 %v1548
  %v6381 = vunpack.c.h.b16 %v1548
  %v6382 = vunpack.c.l.b16 %v1549
  %v6383 = vunpack.c.h.b16 %v1549
  %v6384 = vunpack.c.l.b16 %v1550
  %v6385 = vunpack.c.h.b16 %v1550
  %v6386 = vunpack.c.l.b16 %v1551
  %v6387 = vunpack.c.h.b16 %v1551
  %v6388 = vunpack.c.l.b16 %v1552
  %v6389 = vunpack.c.h.b16 %v1552
  %v6390 = vunpack.c.l.b16 %v1553
  %v6391 = vunpack.c.h.b16 %v1553
  %v6392 = vunpack.c.l.b16 %v1554
  %v6393 = vunpack.c.h.b16 %v1554
  %v6394 = vunpack.c.l.b16 %v1555
  %v6395 = vunpack.c.h.b16 %v1555
  %v6396 = vunpack.c.l.b16 %v1556
  %v6397 = vunpack.c.h.b16 %v1556
  %v6398 = vunpack.c.l.b16 %v1557
  %v6399 = vunpack.c.h.b16 %v1557
  %v6400 = vunpack.c.l.b16 %v1558
  %v6401 = vunpack.c.h.b16 %v1558
  %v6402 = vunpack.c.l.b16 %v1559
  %v6403 = vunpack.c.h.b16 %v1559
  %v6404 = vunpack.c.l.b16 %v1560
  %v6405 = vunpack.c.h.b16 %v1560
  %v6406 = vunpack.c.l.b16 %v1561
  %v6407 = vunpack.c.h.b16 %v1561
  %v6408 = vunpack.c.l.b16 %v1562
  %v6409 = vunpack.c.h.b16 %v1562
  %v6410 = vunpack.c.l.b16 %v1563
  %v6411 = vunpack.c.h.b16 %v1563
  %v6412 = vunpack.c.l.b16 %v1564
  %v6413 = vunpack.c.h.b16 %v1564
  %v6414 = vunpack.c.l.b16 %v1565
  %v6415 = vunpack.c.h.b16 %v1565
  %v6416 = vunpack.c.l.b16 %v1566
  %v6417 = vunpack.c.h.b16 %v1566
  %v6418 = vunpack.c.l.b16 %v1567
  %v6419 = vunpack.c.h.b16 %v1567
  %v6420 = vunpack.c.l.b16 %v1568
  %v6421 = vunpack.c.h.b16 %v1568
  %v6422 = vunpack.c.l.b16 %v1569
  %v6423 = vunpack.c.h.b16 %v1569
  %v6424 = vunpack.c.l.b16 %v1570
  %v6425 = vunpack.c.h.b16 %v1570
  %v6426 = vunpack.c.l.b16 %v1571
  %v6427 = vunpack.c.h.b16 %v1571
  %v6428 = vunpack.c.l.b16 %v1572
  %v6429 = vunpack.c.h.b16 %v1572
  %v6430 = vunpack.c.l.b16 %v1573
  %v6431 = vunpack.c.h.b16 %v1573
  %v6432 = vunpack.c.l.b16 %v1574
  %v6433 = vunpack.c.h.b16 %v1574
  %v6434 = vunpack.c.l.b16 %v1575
  %v6435 = vunpack.c.h.b16 %v1575
  %v6436 = vunpack.c.l.b16 %v1576
  %v6437 = vunpack.c.h.b16 %v1576
  %v6438 = vunpack.c.l.b16 %v1577
  %v6439 = vunpack.c.h.b16 %v1577
  %v6440 = vunpack.c.l.b16 %v1578
  %v6441 = vunpack.c.h.b16 %v1578
  %v6442 = vunpack.c.l.b16 %v1579
  %v6443 = vunpack.c.h.b16 %v1579
  %v6444 = vunpack.c.l.b16 %v1580
  %v6445 = vunpack.c.h.b16 %v1580
  %v6446 = vunpack.c.l.b16 %v1581
  %v6447 = vunpack.c.h.b16 %v1581
  %v6448 = vunpack.c.l.b16 %v1582
  %v6449 = vunpack.c.h.b16 %v1582
  %v6450 = vunpack.c.l.b16 %v1583
  %v6451 = vunpack.c.h.b16 %v1583
  %v6452 = vunpack.c.l.b16 %v1584
  %v6453 = vunpack.c.h.b16 %v1584
  %v6454 = vunpack.c.l.b16 %v1585
  %v6455 = vunpack.c.h.b16 %v1585
  %v6456 = vunpack.c.l.b16 %v1586
  %v6457 = vunpack.c.h.b16 %v1586
  %v6458 = vunpack.c.l.b16 %v1587
  %v6459 = vunpack.c.h.b16 %v1587
  %v6460 = vunpack.c.l.b16 %v1588
  %v6461 = vunpack.c.h.b16 %v1588
  %v6462 = vunpack.c.l.b16 %v1589
  %v6463 = vunpack.c.h.b16 %v1589
  %v6464 = vunpack.c.l.b16 %v1590
  %v6465 = vunpack.c.h.b16 %v1590
  %v6466 = vunpack.c.l.b16 %v1591
  %v6467 = vunpack.c.h.b16 %v1591
  %v6468 = vunpack.c.l.b16 %v1592
  %v6469 = vunpack.c.h.b16 %v1592
  %v6470 = vunpack.c.l.b16 %v1593
  %v6471 = vunpack.c.h.b16 %v1593
  %v6472 = vunpack.c.l.b16 %v1594
  %v6473 = vunpack.c.h.b16 %v1594
  %v6474 = vunpack.c.l.b16 %v1595
  %v6475 = vunpack.c.h.b16 %v1595
  %v6476 = vunpack.c.l.b16 %v1596
  %v6477 = vunpack.c.h.b16 %v1596
  %v6478 = vunpack.c.l.b16 %v1597
  %v6479 = vunpack.c.h.b16 %v1597
  %v6480 = vunpack.c.l.b16 %v1598
  %v6481 = vunpack.c.h.b16 %v1598
  %v6482 = vunpack.c.l.b16 %v1599
  %v6483 = vunpack.c.h.b16 %v1599
  %v6484 = vunpack.c.l.b16 %v1600
  %v6485 = vunpack.c.h.b16 %v1600
  %v6486 = vunpack.c.l.b16 %v1601
  %v6487 = vunpack.c.h.b16 %v1601
  %v6488 = vunpack.c.l.b16 %v1602
  %v6489 = vunpack.c.h.b16 %v1602
  %v6490 = vunpack.c.l.b16 %v1603
  %v6491 = vunpack.c.h.b16 %v1603
  %v6492 = vunpack.c.l.b16 %v1604
  %v6493 = vunpack.c.h.b16 %v1604
  %v6494 = vunpack.c.l.b16 %v1605
  %v6495 = vunpack.c.h.b16 %v1605
  %v6496 = vunpack.c.l.b16 %v1606
  %v6497 = vunpack.c.h.b16 %v1606
  %v6498 = vunpack.c.l.b16 %v1607
  %v6499 = vunpack.c.h.b16 %v1607
  %v6500 = vunpack.c.l.b16 %v1608
  %v6501 = vunpack.c.h.b16 %v1608
  %v6502 = vunpack.c.l.b16 %v1609
  %v6503 = vunpack.c.h.b16 %v1609
  %v6504 = vunpack.c.l.b16 %v1610
  %v6505 = vunpack.c.h.b16 %v1610
  %v6506 = vunpack.c.l.b16 %v1611
  %v6507 = vunpack.c.h.b16 %v1611
  %v6508 = vunpack.c.l.b16 %v1612
  %v6509 = vunpack.c.h.b16 %v1612
  %v6510 = vunpack.c.l.b16 %v1613
  %v6511 = vunpack.c.h.b16 %v1613
  %v6512 = vpack.c.b16 %v3380, %v3376
  %v6513 = vpack.c.b16 %v3381, %v3377
  %v6514 = vpack.c.b16 %v3382, %v3378
  %v6515 = vpack.c.b16 %v3383, %v3379
  %v6516 = vpack.c.b16 %v3388, %v3384
  %v6517 = vpack.c.b16 %v3389, %v3385
  %v6518 = vpack.c.b16 %v3390, %v3386
  %v6519 = vpack.c.b16 %v3391, %v3387
  %v6520 = vpack.c.b16 %v3396, %v3392
  %v6521 = vpack.c.b16 %v3397, %v3393
  %v6522 = vpack.c.b16 %v3398, %v3394
  %v6523 = vpack.c.b16 %v3399, %v3395
  %v6524 = vpack.c.b16 %v3404, %v3400
  %v6525 = vpack.c.b16 %v3405, %v3401
  %v6526 = vpack.c.b16 %v3406, %v3402
  %v6527 = vpack.c.b16 %v3407, %v3403
  %v6528 = vpack.c.b16 %v3412, %v3408
  %v6529 = vpack.c.b16 %v3413, %v3409
  %v6530 = vpack.c.b16 %v3414, %v3410
  %v6531 = vpack.c.b16 %v3415, %v3411
  %v6532 = vpack.c.b16 %v3420, %v3416
  %v6533 = vpack.c.b16 %v3421, %v3417
  %v6534 = vpack.c.b16 %v3422, %v3418
  %v6535 = vpack.c.b16 %v3423, %v3419
  %v6536 = vpack.c.b16 %v3428, %v3424
  %v6537 = vpack.c.b16 %v3429, %v3425
  %v6538 = vpack.c.b16 %v3430, %v3426
  %v6539 = vpack.c.b16 %v3431, %v3427
  %v6540 = vpack.c.b16 %v3436, %v3432
  %v6541 = vpack.c.b16 %v3437, %v3433
  %v6542 = vpack.c.b16 %v3438, %v3434
  %v6543 = vpack.c.b16 %v3439, %v3435
  %v6544 = vpack.c.b16 %v3444, %v3440
  %v6545 = vpack.c.b16 %v3445, %v3441
  %v6546 = vpack.c.b16 %v3446, %v3442
  %v6547 = vpack.c.b16 %v3447, %v3443
  %v6548 = vpack.c.b16 %v3452, %v3448
  %v6549 = vpack.c.b16 %v3453, %v3449
  %v6550 = vpack.c.b16 %v3454, %v3450
  %v6551 = vpack.c.b16 %v3455, %v3451
  %v6552 = vpack.c.b16 %v3460, %v3456
  %v6553 = vpack.c.b16 %v3461, %v3457
  %v6554 = vpack.c.b16 %v3462, %v3458
  %v6555 = vpack.c.b16 %v3463, %v3459
  %v6556 = vpack.c.b16 %v3468, %v3464
  %v6557 = vpack.c.b16 %v3469, %v3465
  %v6558 = vpack.c.b16 %v3470, %v3466
  %v6559 = vpack.c.b16 %v3471, %v3467
  %v6560 = vpack.c.b16 %v3476, %v3472
  %v6561 = vpack.c.b16 %v3477, %v3473
  %v6562 = vpack.c.b16 %v3478, %v3474
  %v6563 = vpack.c.b16 %v3479, %v3475
  %v6564 = vpack.c.b16 %v3484, %v3480
  %v6565 = vpack.c.b16 %v3485, %v3481
  %v6566 = vpack.c.b16 %v3486, %v3482
  %v6567 = vpack.c.b16 %v3487, %v3483
  %v6568 = vpack.c.b16 %v3492, %v3488
  %v6569 = vpack.c.b16 %v3493, %v3489
  %v6570 = vpack.c.b16 %v3494, %v3490
  %v6571 = vpack.c.b16 %v3495, %v3491
  %v6572 = vpack.c.b16 %v3500, %v3496
  %v6573 = vpack.c.b16 %v3501, %v3497
  %v6574 = vpack.c.b16 %v3502, %v3498
  %v6575 = vpack.c.b16 %v3503, %v3499
  %v6576 = vpack.c.b16 %v3508, %v3504
  %v6577 = vpack.c.b16 %v3509, %v3505
  %v6578 = vpack.c.b16 %v3510, %v3506
  %v6579 = vpack.c.b16 %v3511, %v3507
  %v6580 = vpack.c.b16 %v3516, %v3512
  %v6581 = vpack.c.b16 %v3517, %v3513
  %v6582 = vpack.c.b16 %v3518, %v3514
  %v6583 = vpack.c.b16 %v3519, %v3515
  %v6584 = vpack.c.b16 %v3524, %v3520
  %v6585 = vpack.c.b16 %v3525, %v3521
  %v6586 = vpack.c.b16 %v3526, %v3522
  %v6587 = vpack.c.b16 %v3527, %v3523
  %v6588 = vpack.c.b16 %v3532, %v3528
  %v6589 = vpack.c.b16 %v3533, %v3529
  %v6590 = vpack.c.b16 %v3534, %v3530
  %v6591 = vpack.c.b16 %v3535, %v3531
  %v6592 = vpack.c.b16 %v3540, %v3536
  %v6593 = vpack.c.b16 %v3541, %v3537
  %v6594 = vpack.c.b16 %v3542, %v3538
  %v6595 = vpack.c.b16 %v3543, %v3539
  %v6596 = vpack.c.b16 %v3548, %v3544
  %v6597 = vpack.c.b16 %v3549, %v3545
  %v6598 = vpack.c.b16 %v3550, %v3546
  %v6599 = vpack.c.b16 %v3551, %v3547
  %v6600 = vpack.c.b16 %v3556, %v3552
  %v6601 = vpack.c.b16 %v3557, %v3553
  %v6602 = vpack.c.b16 %v3558, %v3554
  %v6603 = vpack.c.b16 %v3559, %v3555
  %v6604 = vpack.c.b16 %v3564, %v3560
  %v6605 = vpack.c.b16 %v3565, %v3561
  %v6606 = vpack.c.b16 %v3566, %v3562
  %v6607 = vpack.c.b16 %v3567, %v3563
  %v6608 = vpack.c.b16 %v3572, %v3568
  %v6609 = vpack.c.b16 %v3573, %v3569
  %v6610 = vpack.c.b16 %v3574, %v3570
  %v6611 = vpack.c.b16 %v3575, %v3571
  %v6612 = vpack.c.b16 %v3580, %v3576
  %v6613 = vpack.c.b16 %v3581, %v3577
  %v6614 = vpack.c.b16 %v3582, %v3578
  %v6615 = vpack.c.b16 %v3583, %v3579
  %v6616 = vpack.c.b16 %v3588, %v3584
  %v6617 = vpack.c.b16 %v3589, %v3585
  %v6618 = vpack.c.b16 %v3590, %v3586
  %v6619 = vpack.c.b16 %v3591, %v3587
  %v6620 = vpack.c.b16 %v3596, %v3592
  %v6621 = vpack.c.b16 %v3597, %v3593
  %v6622 = vpack.c.b16 %v3598, %v3594
  %v6623 = vpack.c.b16 %v3599, %v3595
  %v6624 = vpack.c.b16 %v3604, %v3600
  %v6625 = vpack.c.b16 %v3605, %v3601
  %v6626 = vpack.c.b16 %v3606, %v3602
  %v6627 = vpack.c.b16 %v3607, %v3603
  %v6628 = vpack.c.b16 %v3612, %v3608
  %v6629 = vpack.c.b16 %v3613, %v3609
  %v6630 = vpack.c.b16 %v3614, %v3610
  %v6631 = vpack.c.b16 %v3615, %v3611
  %v6632 = vpack.c.b16 %v3620, %v3616
  %v6633 = vpack.c.b16 %v3621, %v3617
  %v6634 = vpack.c.b16 %v3622, %v3618
  %v6635 = vpack.c.b16 %v3623, %v3619
  %v6636 = vpack.c.b16 %v3628, %v3624
  %v6637 = vpack.c.b16 %v3629, %v3625
  %v6638 = vpack.c.b16 %v3630, %v3626
  %v6639 = vpack.c.b16 %v3631, %v3627
  %v6640 = vpack.c.b16 %v3636, %v3632
  %v6641 = vpack.c.b16 %v3637, %v3633
  %v6642 = vpack.c.b16 %v3638, %v3634
  %v6643 = vpack.c.b16 %v3639, %v3635
  %v6644 = vpack.c.b16 %v3644, %v3640
  %v6645 = vpack.c.b16 %v3645, %v3641
  %v6646 = vpack.c.b16 %v3646, %v3642
  %v6647 = vpack.c.b16 %v3647, %v3643
  %v6648 = vpack.c.b16 %v3652, %v3648
  %v6649 = vpack.c.b16 %v3653, %v3649
  %v6650 = vpack.c.b16 %v3654, %v3650
  %v6651 = vpack.c.b16 %v3655, %v3651
  %v6652 = vpack.c.b16 %v3660, %v3656
  %v6653 = vpack.c.b16 %v3661, %v3657
  %v6654 = vpack.c.b16 %v3662, %v3658
  %v6655 = vpack.c.b16 %v3663, %v3659
  %v6656 = vpack.c.b16 %v3668, %v3664
  %v6657 = vpack.c.b16 %v3669, %v3665
  %v6658 = vpack.c.b16 %v3670, %v3666
  %v6659 = vpack.c.b16 %v3671, %v3667
  %v6660 = vpack.c.b16 %v3676, %v3672
  %v6661 = vpack.c.b16 %v3677, %v3673
  %v6662 = vpack.c.b16 %v3678, %v3674
  %v6663 = vpack.c.b16 %v3679, %v3675
  %v6664 = vpack.c.b16 %v3684, %v3680
  %v6665 = vpack.c.b16 %v3685, %v3681
  %v6666 = vpack.c.b16 %v3686, %v3682
  %v6667 = vpack.c.b16 %v3687, %v3683
  %v6668 = vpack.c.b16 %v3692, %v3688
  %v6669 = vpack.c.b16 %v3693, %v3689
  %v6670 = vpack.c.b16 %v3694, %v3690
  %v6671 = vpack.c.b16 %v3695, %v3691
  %v6672 = vpack.c.b16 %v3700, %v3696
  %v6673 = vpack.c.b16 %v3701, %v3697
  %v6674 = vpack.c.b16 %v3702, %v3698
  %v6675 = vpack.c.b16 %v3703, %v3699
  %v6676 = vpack.c.b16 %v3708, %v3704
  %v6677 = vpack.c.b16 %v3709, %v3705
  %v6678 = vpack.c.b16 %v3710, %v3706
  %v6679 = vpack.c.b16 %v3711, %v3707
  %v6680 = vpack.c.b16 %v3716, %v3712
  %v6681 = vpack.c.b16 %v3717, %v3713
  %v6682 = vpack.c.b16 %v3718, %v3714
  %v6683 = vpack.c.b16 %v3719, %v3715
  %v6684 = vpack.c.b16 %v3724, %v3720
  %v6685 = vpack.c.b16 %v3725, %v3721
  %v6686 = vpack.c.b16 %v3726, %v3722
  %v6687 = vpack.c.b16 %v3727, %v3723
  %v6688 = vpack.c.b16 %v3732, %v3728
  %v6689 = vpack.c.b16 %v3733, %v3729
  %v6690 = vpack.c.b16 %v3734, %v3730
  %v6691 = vpack.c.b16 %v3735, %v3731
  %v6692 = vpack.c.b16 %v3740, %v3736
  %v6693 = vpack.c.b16 %v3741, %v3737
  %v6694 = vpack.c.b16 %v3742, %v3738
  %v6695 = vpack.c.b16 %v3743, %v3739
  %v6696 = vpack.c.b16 %v3748, %v3744
  %v6697 = vpack.c.b16 %v3749, %v3745
  %v6698 = vpack.c.b16 %v3750, %v3746
  %v6699 = vpack.c.b16 %v3751, %v3747
  %v6700 = vpack.c.b16 %v3756, %v3752
  %v6701 = vpack.c.b16 %v3757, %v3753
  %v6702 = vpack.c.b16 %v3758, %v3754
  %v6703 = vpack.c.b16 %v3759, %v3755
  %v6704 = vpack.c.b16 %v3764, %v3760
  %v6705 = vpack.c.b16 %v3765, %v3761
  %v6706 = vpack.c.b16 %v3766, %v3762
  %v6707 = vpack.c.b16 %v3767, %v3763
  %v6708 = vpack.c.b16 %v3772, %v3768
  %v6709 = vpack.c.b16 %v3773, %v3769
  %v6710 = vpack.c.b16 %v3774, %v3770
  %v6711 = vpack.c.b16 %v3775, %v3771
  %v6712 = vpack.c.b16 %v3780, %v3776
  %v6713 = vpack.c.b16 %v3781, %v3777
  %v6714 = vpack.c.b16 %v3782, %v3778
  %v6715 = vpack.c.b16 %v3783, %v3779
  %v6716 = vpack.c.b16 %v3788, %v3784
  %v6717 = vpack.c.b16 %v3789, %v3785
  %v6718 = vpack.c.b16 %v3790, %v3786
  %v6719 = vpack.c.b16 %v3791, %v3787
  %v6720 = vpack.c.b16 %v3796, %v3792
  %v6721 = vpack.c.b16 %v3797, %v3793
  %v6722 = vpack.c.b16 %v3798, %v3794
  %v6723 = vpack.c.b16 %v3799, %v3795
  %v6724 = vpack.c.b16 %v3804, %v3800
  %v6725 = vpack.c.b16 %v3805, %v3801
  %v6726 = vpack.c.b16 %v3806, %v3802
  %v6727 = vpack.c.b16 %v3807, %v3803
  %v6728 = vpack.c.b16 %v3812, %v3808
  %v6729 = vpack.c.b16 %v3813, %v3809
  %v6730 = vpack.c.b16 %v3814, %v3810
  %v6731 = vpack.c.b16 %v3815, %v3811
  %v6732 = vpack.c.b16 %v3820, %v3816
  %v6733 = vpack.c.b16 %v3821, %v3817
  %v6734 = vpack.c.b16 %v3822, %v3818
  %v6735 = vpack.c.b16 %v3823, %v3819
  %v6736 = vpack.c.b16 %v3828, %v3824
  %v6737 = vpack.c.b16 %v3829, %v3825
  %v6738 = vpack.c.b16 %v3830, %v3826
  %v6739 = vpack.c.b16 %v3831, %v3827
  %v6740 = vpack.c.b16 %v3836, %v3832
  %v6741 = vpack.c.b16 %v3837, %v3833
  %v6742 = vpack.c.b16 %v3838, %v3834
  %v6743 = vpack.c.b16 %v3839, %v3835
  %v6744 = vpack.c.b16 %v3844, %v3840
  %v6745 = vpack.c.b16 %v3845, %v3841
  %v6746 = vpack.c.b16 %v3846, %v3842
  %v6747 = vpack.c.b16 %v3847, %v3843
  %v6748 = vpack.c.b16 %v3852, %v3848
  %v6749 = vpack.c.b16 %v3853, %v3849
  %v6750 = vpack.c.b16 %v3854, %v3850
  %v6751 = vpack.c.b16 %v3855, %v3851
  %v6752 = vpack.c.b16 %v3860, %v3856
  %v6753 = vpack.c.b16 %v3861, %v3857
  %v6754 = vpack.c.b16 %v3862, %v3858
  %v6755 = vpack.c.b16 %v3863, %v3859
  %v6756 = vpack.c.b16 %v3868, %v3864
  %v6757 = vpack.c.b16 %v3869, %v3865
  %v6758 = vpack.c.b16 %v3870, %v3866
  %v6759 = vpack.c.b16 %v3871, %v3867
  %v6760 = vpack.c.b16 %v3876, %v3872
  %v6761 = vpack.c.b16 %v3877, %v3873
  %v6762 = vpack.c.b16 %v3878, %v3874
  %v6763 = vpack.c.b16 %v3879, %v3875
  %v6764 = vpack.c.b16 %v3884, %v3880
  %v6765 = vpack.c.b16 %v3885, %v3881
  %v6766 = vpack.c.b16 %v3886, %v3882
  %v6767 = vpack.c.b16 %v3887, %v3883
  %v6768 = vpack.c.b16 %v3892, %v3888
  %v6769 = vpack.c.b16 %v3893, %v3889
  %v6770 = vpack.c.b16 %v3894, %v3890
  %v6771 = vpack.c.b16 %v3895, %v3891
  %v6772 = vpack.c.b16 %v3900, %v3896
  %v6773 = vpack.c.b16 %v3901, %v3897
  %v6774 = vpack.c.b16 %v3902, %v3898
  %v6775 = vpack.c.b16 %v3903, %v3899
  %v6776 = vpack.c.b16 %v3908, %v3904
  %v6777 = vpack.c.b16 %v3909, %v3905
  %v6778 = vpack.c.b16 %v3910, %v3906
  %v6779 = vpack.c.b16 %v3911, %v3907
  %v6780 = vpack.c.b16 %v3916, %v3912
  %v6781 = vpack.c.b16 %v3917, %v3913
  %v6782 = vpack.c.b16 %v3918, %v3914
  %v6783 = vpack.c.b16 %v3919, %v3915
  %v6784 = vpack.c.b16 %v3924, %v3920
  %v6785 = vpack.c.b16 %v3925, %v3921
  %v6786 = vpack.c.b16 %v3926, %v3922
  %v6787 = vpack.c.b16 %v3927, %v3923
  %v6788 = vpack.c.b16 %v3932, %v3928
  %v6789 = vpack.c.b16 %v3933, %v3929
  %v6790 = vpack.c.b16 %v3934, %v3930
  %v6791 = vpack.c.b16 %v3935, %v3931
  %v6792 = vpack.c.b16 %v3940, %v3936
  %v6793 = vpack.c.b16 %v3941, %v3937
  %v6794 = vpack.c.b16 %v3942, %v3938
  %v6795 = vpack.c.b16 %v3943, %v3939
  %v6796 = vpack.c.b16 %v3948, %v3944
  %v6797 = vpack.c.b16 %v3949, %v3945
  %v6798 = vpack.c.b16 %v3950, %v3946
  %v6799 = vpack.c.b16 %v3951, %v3947
  %v6800 = vpack.c.b16 %v3956, %v3952
  %v6801 = vpack.c.b16 %v3957, %v3953
  %v6802 = vpack.c.b16 %v3958, %v3954
  %v6803 = vpack.c.b16 %v3959, %v3955
  %v6804 = vpack.c.b16 %v3964, %v3960
  %v6805 = vpack.c.b16 %v3965, %v3961
  %v6806 = vpack.c.b16 %v3966, %v3962
  %v6807 = vpack.c.b16 %v3967, %v3963
  %v6808 = vpack.c.b16 %v3972, %v3968
  %v6809 = vpack.c.b16 %v3973, %v3969
  %v6810 = vpack.c.b16 %v3974, %v3970
  %v6811 = vpack.c.b16 %v3975, %v3971
  %v6812 = vpack.c.b16 %v3980, %v3976
  %v6813 = vpack.c.b16 %v3981, %v3977
  %v6814 = vpack.c.b16 %v3982, %v3978
  %v6815 = vpack.c.b16 %v3983, %v3979
  %v6816 = vpack.c.b16 %v3988, %v3984
  %v6817 = vpack.c.b16 %v3989, %v3985
  %v6818 = vpack.c.b16 %v3990, %v3986
  %v6819 = vpack.c.b16 %v3991, %v3987
  %v6820 = vpack.c.b16 %v3996, %v3992
  %v6821 = vpack.c.b16 %v3997, %v3993
  %v6822 = vpack.c.b16 %v3998, %v3994
  %v6823 = vpack.c.b16 %v3999, %v3995
  %v6824 = vpack.c.b16 %v4004, %v4000
  %v6825 = vpack.c.b16 %v4005, %v4001
  %v6826 = vpack.c.b16 %v4006, %v4002
  %v6827 = vpack.c.b16 %v4007, %v4003
  %v6828 = vpack.c.b16 %v4012, %v4008
  %v6829 = vpack.c.b16 %v4013, %v4009
  %v6830 = vpack.c.b16 %v4014, %v4010
  %v6831 = vpack.c.b16 %v4015, %v4011
  %v6832 = vpack.c.b16 %v4020, %v4016
  %v6833 = vpack.c.b16 %v4021, %v4017
  %v6834 = vpack.c.b16 %v4022, %v4018
  %v6835 = vpack.c.b16 %v4023, %v4019
  %v6836 = vpack.c.b16 %v4028, %v4024
  %v6837 = vpack.c.b16 %v4029, %v4025
  %v6838 = vpack.c.b16 %v4030, %v4026
  %v6839 = vpack.c.b16 %v4031, %v4027
  %v6840 = vpack.c.b16 %v4036, %v4032
  %v6841 = vpack.c.b16 %v4037, %v4033
  %v6842 = vpack.c.b16 %v4038, %v4034
  %v6843 = vpack.c.b16 %v4039, %v4035
  %v6844 = vpack.c.b16 %v4044, %v4040
  %v6845 = vpack.c.b16 %v4045, %v4041
  %v6846 = vpack.c.b16 %v4046, %v4042
  %v6847 = vpack.c.b16 %v4047, %v4043
  %v6848 = vpack.c.b16 %v4052, %v4048
  %v6849 = vpack.c.b16 %v4053, %v4049
  %v6850 = vpack.c.b16 %v4054, %v4050
  %v6851 = vpack.c.b16 %v4055, %v4051
  %v6852 = vpack.c.b16 %v4060, %v4056
  %v6853 = vpack.c.b16 %v4061, %v4057
  %v6854 = vpack.c.b16 %v4062, %v4058
  %v6855 = vpack.c.b16 %v4063, %v4059
  %v6856 = vpack.c.b16 %v4068, %v4064
  %v6857 = vpack.c.b16 %v4069, %v4065
  %v6858 = vpack.c.b16 %v4070, %v4066
  %v6859 = vpack.c.b16 %v4071, %v4067
  %v6860 = vpack.c.b16 %v4076, %v4072
  %v6861 = vpack.c.b16 %v4077, %v4073
  %v6862 = vpack.c.b16 %v4078, %v4074
  %v6863 = vpack.c.b16 %v4079, %v4075
  %v6864 = vpack.c.b16 %v4084, %v4080
  %v6865 = vpack.c.b16 %v4085, %v4081
  %v6866 = vpack.c.b16 %v4086, %v4082
  %v6867 = vpack.c.b16 %v4087, %v4083
  %v6868 = vpack.c.b16 %v4092, %v4088
  %v6869 = vpack.c.b16 %v4093, %v4089
  %v6870 = vpack.c.b16 %v4094, %v4090
  %v6871 = vpack.c.b16 %v4095, %v4091
  %v6872 = vpack.c.b16 %v4100, %v4096
  %v6873 = vpack.c.b16 %v4101, %v4097
  %v6874 = vpack.c.b16 %v4102, %v4098
  %v6875 = vpack.c.b16 %v4103, %v4099
  %v6876 = vpack.c.b16 %v4108, %v4104
  %v6877 = vpack.c.b16 %v4109, %v4105
  %v6878 = vpack.c.b16 %v4110, %v4106
  %v6879 = vpack.c.b16 %v4111, %v4107
  %v6880 = vpack.c.b16 %v4116, %v4112
  %v6881 = vpack.c.b16 %v4117, %v4113
  %v6882 = vpack.c.b16 %v4118, %v4114
  %v6883 = vpack.c.b16 %v4119, %v4115
  %v6884 = vpack.c.b16 %v4124, %v4120
  %v6885 = vpack.c.b16 %v4125, %v4121
  %v6886 = vpack.c.b16 %v4126, %v4122
  %v6887 = vpack.c.b16 %v4127, %v4123
  %v6888 = vpack.c.b16 %v4132, %v4128
  %v6889 = vpack.c.b16 %v4133, %v4129
  %v6890 = vpack.c.b16 %v4134, %v4130
  %v6891 = vpack.c.b16 %v4135, %v4131
  %v6892 = vpack.c.b16 %v4140, %v4136
  %v6893 = vpack.c.b16 %v4141, %v4137
  %v6894 = vpack.c.b16 %v4142, %v4138
  %v6895 = vpack.c.b16 %v4143, %v4139
  %v6896 = vpack.c.b16 %v4148, %v4144
  %v6897 = vpack.c.b16 %v4149, %v4145
  %v6898 = vpack.c.b16 %v4150, %v4146
  %v6899 = vpack.c.b16 %v4151, %v4147
  %v6900 = vpack.c.b16 %v4156, %v4152
  %v6901 = vpack.c.b16 %v4157, %v4153
  %v6902 = vpack.c.b16 %v4158, %v4154
  %v6903 = vpack.c.b16 %v4159, %v4155
  %v6904 = vpack.c.b16 %v4164, %v4160
  %v6905 = vpack.c.b16 %v4165, %v4161
  %v6906 = vpack.c.b16 %v4166, %v4162
  %v6907 = vpack.c.b16 %v4167, %v4163
  %v6908 = vpack.c.b16 %v4172, %v4168
  %v6909 = vpack.c.b16 %v4173, %v4169
  %v6910 = vpack.c.b16 %v4174, %v4170
  %v6911 = vpack.c.b16 %v4175, %v4171
  %v6912 = vpack.c.b16 %v4180, %v4176
  %v6913 = vpack.c.b16 %v4181, %v4177
  %v6914 = vpack.c.b16 %v4182, %v4178
  %v6915 = vpack.c.b16 %v4183, %v4179
  %v6916 = vpack.c.b16 %v4188, %v4184
  %v6917 = vpack.c.b16 %v4189, %v4185
  %v6918 = vpack.c.b16 %v4190, %v4186
  %v6919 = vpack.c.b16 %v4191, %v4187
  %v6920 = vpack.c.b16 %v4196, %v4192
  %v6921 = vpack.c.b16 %v4197, %v4193
  %v6922 = vpack.c.b16 %v4198, %v4194
  %v6923 = vpack.c.b16 %v4199, %v4195
  %v6924 = vpack.c.b16 %v4204, %v4200
  %v6925 = vpack.c.b16 %v4205, %v4201
  %v6926 = vpack.c.b16 %v4206, %v4202
  %v6927 = vpack.c.b16 %v4207, %v4203
  %v6928 = vpack.c.b16 %v4212, %v4208
  %v6929 = vpack.c.b16 %v4213, %v4209
  %v6930 = vpack.c.b16 %v4214, %v4210
  %v6931 = vpack.c.b16 %v4215, %v4211
  %v6932 = vpack.c.b16 %v4220, %v4216
  %v6933 = vpack.c.b16 %v4221, %v4217
  %v6934 = vpack.c.b16 %v4222, %v4218
  %v6935 = vpack.c.b16 %v4223, %v4219
  %v6936 = vpack.c.b16 %v4228, %v4224
  %v6937 = vpack.c.b16 %v4229, %v4225
  %v6938 = vpack.c.b16 %v4230, %v4226
  %v6939 = vpack.c.b16 %v4231, %v4227
  %v6940 = vpack.c.b16 %v4236, %v4232
  %v6941 = vpack.c.b16 %v4237, %v4233
  %v6942 = vpack.c.b16 %v4238, %v4234
  %v6943 = vpack.c.b16 %v4239, %v4235
  %v6944 = vpack.c.b16 %v4244, %v4240
  %v6945 = vpack.c.b16 %v4245, %v4241
  %v6946 = vpack.c.b16 %v4246, %v4242
  %v6947 = vpack.c.b16 %v4247, %v4243
  %v6948 = vpack.c.b16 %v4252, %v4248
  %v6949 = vpack.c.b16 %v4253, %v4249
  %v6950 = vpack.c.b16 %v4254, %v4250
  %v6951 = vpack.c.b16 %v4255, %v4251
  %v6952 = vpack.c.b16 %v4260, %v4256
  %v6953 = vpack.c.b16 %v4261, %v4257
  %v6954 = vpack.c.b16 %v4262, %v4258
  %v6955 = vpack.c.b16 %v4263, %v4259
  %v6956 = vpack.c.b16 %v4268, %v4264
  %v6957 = vpack.c.b16 %v4269, %v4265
  %v6958 = vpack.c.b16 %v4270, %v4266
  %v6959 = vpack.c.b16 %v4271, %v4267
  %v6960 = vpack.c.b16 %v4276, %v4272
  %v6961 = vpack.c.b16 %v4277, %v4273
  %v6962 = vpack.c.b16 %v4278, %v4274
  %v6963 = vpack.c.b16 %v4279, %v4275
  %v6964 = vpack.c.b16 %v4284, %v4280
  %v6965 = vpack.c.b16 %v4285, %v4281
  %v6966 = vpack.c.b16 %v4286, %v4282
  %v6967 = vpack.c.b16 %v4287, %v4283
  %v6968 = vpack.c.b16 %v4292, %v4288
  %v6969 = vpack.c.b16 %v4293, %v4289
  %v6970 = vpack.c.b16 %v4294, %v4290
  %v6971 = vpack.c.b16 %v4295, %v4291
  %v6972 = vpack.c.b16 %v4300, %v4296
  %v6973 = vpack.c.b16 %v4301, %v4297
  %v6974 = vpack.c.b16 %v4302, %v4298
  %v6975 = vpack.c.b16 %v4303, %v4299
  %v6976 = vpack.c.b16 %v4308, %v4304
  %v6977 = vpack.c.b16 %v4309, %v4305
  %v6978 = vpack.c.b16 %v4310, %v4306
  %v6979 = vpack.c.b16 %v4311, %v4307
  %v6980 = vpack.c.b16 %v4316, %v4312
  %v6981 = vpack.c.b16 %v4317, %v4313
  %v6982 = vpack.c.b16 %v4318, %v4314
  %v6983 = vpack.c.b16 %v4319, %v4315
  %v6984 = vpack.c.b16 %v4324, %v4320
  %v6985 = vpack.c.b16 %v4325, %v4321
  %v6986 = vpack.c.b16 %v4326, %v4322
  %v6987 = vpack.c.b16 %v4327, %v4323
  %v6988 = vpack.c.b16 %v4332, %v4328
  %v6989 = vpack.c.b16 %v4333, %v4329
  %v6990 = vpack.c.b16 %v4334, %v4330
  %v6991 = vpack.c.b16 %v4335, %v4331
  %v6992 = vpack.c.b16 %v4340, %v4336
  %v6993 = vpack.c.b16 %v4341, %v4337
  %v6994 = vpack.c.b16 %v4342, %v4338
  %v6995 = vpack.c.b16 %v4343, %v4339
  %v6996 = vpack.c.b16 %v4348, %v4344
  %v6997 = vpack.c.b16 %v4349, %v4345
  %v6998 = vpack.c.b16 %v4350, %v4346
  %v6999 = vpack.c.b16 %v4351, %v4347
  %v7000 = vpack.c.b16 %v4356, %v4352
  %v7001 = vpack.c.b16 %v4357, %v4353
  %v7002 = vpack.c.b16 %v4358, %v4354
  %v7003 = vpack.c.b16 %v4359, %v4355
  %v7004 = vpack.c.b16 %v4364, %v4360
  %v7005 = vpack.c.b16 %v4365, %v4361
  %v7006 = vpack.c.b16 %v4366, %v4362
  %v7007 = vpack.c.b16 %v4367, %v4363
  %v7008 = vpack.c.b16 %v4372, %v4368
  %v7009 = vpack.c.b16 %v4373, %v4369
  %v7010 = vpack.c.b16 %v4374, %v4370
  %v7011 = vpack.c.b16 %v4375, %v4371
  %v7012 = vpack.c.b16 %v4380, %v4376
  %v7013 = vpack.c.b16 %v4381, %v4377
  %v7014 = vpack.c.b16 %v4382, %v4378
  %v7015 = vpack.c.b16 %v4383, %v4379
  %v7016 = vpack.c.b16 %v4388, %v4384
  %v7017 = vpack.c.b16 %v4389, %v4385
  %v7018 = vpack.c.b16 %v4390, %v4386
  %v7019 = vpack.c.b16 %v4391, %v4387
  %v7020 = vpack.c.b16 %v4396, %v4392
  %v7021 = vpack.c.b16 %v4397, %v4393
  %v7022 = vpack.c.b16 %v4398, %v4394
  %v7023 = vpack.c.b16 %v4399, %v4395
  %v7024 = vpack.c.b16 %v4404, %v4400
  %v7025 = vpack.c.b16 %v4405, %v4401
  %v7026 = vpack.c.b16 %v4406, %v4402
  %v7027 = vpack.c.b16 %v4407, %v4403
  %v7028 = vpack.c.b16 %v4412, %v4408
  %v7029 = vpack.c.b16 %v4413, %v4409
  %v7030 = vpack.c.b16 %v4414, %v4410
  %v7031 = vpack.c.b16 %v4415, %v4411
  %v7032 = vpack.c.b16 %v4420, %v4416
  %v7033 = vpack.c.b16 %v4421, %v4417
  %v7034 = vpack.c.b16 %v4422, %v4418
  %v7035 = vpack.c.b16 %v4423, %v4419
  %v7036 = vpack.c.b16 %v4428, %v4424
  %v7037 = vpack.c.b16 %v4429, %v4425
  %v7038 = vpack.c.b16 %v4430, %v4426
  %v7039 = vpack.c.b16 %v4431, %v4427
  %v7040 = vpack.c.b16 %v4436, %v4432
  %v7041 = vpack.c.b16 %v4437, %v4433
  %v7042 = vpack.c.b16 %v4438, %v4434
  %v7043 = vpack.c.b16 %v4439, %v4435
  %v7044 = vpack.c.b16 %v4444, %v4440
  %v7045 = vpack.c.b16 %v4445, %v4441
  %v7046 = vpack.c.b16 %v4446, %v4442
  %v7047 = vpack.c.b16 %v4447, %v4443
  %v7048 = vpack.c.b16 %v4452, %v4448
  %v7049 = vpack.c.b16 %v4453, %v4449
  %v7050 = vpack.c.b16 %v4454, %v4450
  %v7051 = vpack.c.b16 %v4455, %v4451
  %v7052 = vpack.c.b16 %v4460, %v4456
  %v7053 = vpack.c.b16 %v4461, %v4457
  %v7054 = vpack.c.b16 %v4462, %v4458
  %v7055 = vpack.c.b16 %v4463, %v4459
  %v7056 = vpack.c.b16 %v4468, %v4464
  %v7057 = vpack.c.b16 %v4469, %v4465
  %v7058 = vpack.c.b16 %v4470, %v4466
  %v7059 = vpack.c.b16 %v4471, %v4467
  %v7060 = vpack.c.b16 %v4476, %v4472
  %v7061 = vpack.c.b16 %v4477, %v4473
  %v7062 = vpack.c.b16 %v4478, %v4474
  %v7063 = vpack.c.b16 %v4479, %v4475
  %v7064 = vpack.c.b16 %v4484, %v4480
  %v7065 = vpack.c.b16 %v4485, %v4481
  %v7066 = vpack.c.b16 %v4486, %v4482
  %v7067 = vpack.c.b16 %v4487, %v4483
  %v7068 = vpack.c.b16 %v4492, %v4488
  %v7069 = vpack.c.b16 %v4493, %v4489
  %v7070 = vpack.c.b16 %v4494, %v4490
  %v7071 = vpack.c.b16 %v4495, %v4491
  %v7072 = vpack.c.b16 %v4500, %v4496
  %v7073 = vpack.c.b16 %v4501, %v4497
  %v7074 = vpack.c.b16 %v4502, %v4498
  %v7075 = vpack.c.b16 %v4503, %v4499
  %v7076 = vpack.c.b16 %v4508, %v4504
  %v7077 = vpack.c.b16 %v4509, %v4505
  %v7078 = vpack.c.b16 %v4510, %v4506
  %v7079 = vpack.c.b16 %v4511, %v4507
  %v7080 = vpack.c.b16 %v4516, %v4512
  %v7081 = vpack.c.b16 %v4517, %v4513
  %v7082 = vpack.c.b16 %v4518, %v4514
  %v7083 = vpack.c.b16 %v4519, %v4515
  %v7084 = vpack.c.b16 %v4524, %v4520
  %v7085 = vpack.c.b16 %v4525, %v4521
  %v7086 = vpack.c.b16 %v4526, %v4522
  %v7087 = vpack.c.b16 %v4527, %v4523
  %v7088 = vpack.c.b16 %v4532, %v4528
  %v7089 = vpack.c.b16 %v4533, %v4529
  %v7090 = vpack.c.b16 %v4534, %v4530
  %v7091 = vpack.c.b16 %v4535, %v4531
  %v7092 = vpack.c.b16 %v4540, %v4536
  %v7093 = vpack.c.b16 %v4541, %v4537
  %v7094 = vpack.c.b16 %v4542, %v4538
  %v7095 = vpack.c.b16 %v4543, %v4539
  %v7096 = vpack.c.b16 %v4548, %v4544
  %v7097 = vpack.c.b16 %v4549, %v4545
  %v7098 = vpack.c.b16 %v4550, %v4546
  %v7099 = vpack.c.b16 %v4551, %v4547
  %v7100 = vpack.c.b16 %v4556, %v4552
  %v7101 = vpack.c.b16 %v4557, %v4553
  %v7102 = vpack.c.b16 %v4558, %v4554
  %v7103 = vpack.c.b16 %v4559, %v4555
  %v7104 = vpack.c.b16 %v4564, %v4560
  %v7105 = vpack.c.b16 %v4565, %v4561
  %v7106 = vpack.c.b16 %v4566, %v4562
  %v7107 = vpack.c.b16 %v4567, %v4563
  %v7108 = vpack.c.b16 %v4572, %v4568
  %v7109 = vpack.c.b16 %v4573, %v4569
  %v7110 = vpack.c.b16 %v4574, %v4570
  %v7111 = vpack.c.b16 %v4575, %v4571
  %v7112 = vpack.c.b16 %v4580, %v4576
  %v7113 = vpack.c.b16 %v4581, %v4577
  %v7114 = vpack.c.b16 %v4582, %v4578
  %v7115 = vpack.c.b16 %v4583, %v4579
  %v7116 = vpack.c.b16 %v4588, %v4584
  %v7117 = vpack.c.b16 %v4589, %v4585
  %v7118 = vpack.c.b16 %v4590, %v4586
  %v7119 = vpack.c.b16 %v4591, %v4587
  %v7120 = vpack.c.b16 %v4596, %v4592
  %v7121 = vpack.c.b16 %v4597, %v4593
  %v7122 = vpack.c.b16 %v4598, %v4594
  %v7123 = vpack.c.b16 %v4599, %v4595
  %v7124 = vpack.c.b16 %v4604, %v4600
  %v7125 = vpack.c.b16 %v4605, %v4601
  %v7126 = vpack.c.b16 %v4606, %v4602
  %v7127 = vpack.c.b16 %v4607, %v4603
  %v7128 = vpack.c.b16 %v4612, %v4608
  %v7129 = vpack.c.b16 %v4613, %v4609
  %v7130 = vpack.c.b16 %v4614, %v4610
  %v7131 = vpack.c.b16 %v4615, %v4611
  %v7132 = vpack.c.b16 %v4620, %v4616
  %v7133 = vpack.c.b16 %v4621, %v4617
  %v7134 = vpack.c.b16 %v4622, %v4618
  %v7135 = vpack.c.b16 %v4623, %v4619
  %v7136 = vpack.c.b16 %v4628, %v4624
  %v7137 = vpack.c.b16 %v4629, %v4625
  %v7138 = vpack.c.b16 %v4630, %v4626
  %v7139 = vpack.c.b16 %v4631, %v4627
  %v7140 = vpack.c.b16 %v4636, %v4632
  %v7141 = vpack.c.b16 %v4637, %v4633
  %v7142 = vpack.c.b16 %v4638, %v4634
  %v7143 = vpack.c.b16 %v4639, %v4635
  %v7144 = vpack.c.b16 %v4644, %v4640
  %v7145 = vpack.c.b16 %v4645, %v4641
  %v7146 = vpack.c.b16 %v4646, %v4642
  %v7147 = vpack.c.b16 %v4647, %v4643
  %v7148 = vpack.c.b16 %v4652, %v4648
  %v7149 = vpack.c.b16 %v4653, %v4649
  %v7150 = vpack.c.b16 %v4654, %v4650
  %v7151 = vpack.c.b16 %v4655, %v4651
  %v7152 = vpack.c.b16 %v4660, %v4656
  %v7153 = vpack.c.b16 %v4661, %v4657
  %v7154 = vpack.c.b16 %v4662, %v4658
  %v7155 = vpack.c.b16 %v4663, %v4659
  %v7156 = vpack.c.b16 %v4668, %v4664
  %v7157 = vpack.c.b16 %v4669, %v4665
  %v7158 = vpack.c.b16 %v4670, %v4666
  %v7159 = vpack.c.b16 %v4671, %v4667
  %v7160 = vpack.c.b16 %v4676, %v4672
  %v7161 = vpack.c.b16 %v4677, %v4673
  %v7162 = vpack.c.b16 %v4678, %v4674
  %v7163 = vpack.c.b16 %v4679, %v4675
  %v7164 = vpack.c.b16 %v4684, %v4680
  %v7165 = vpack.c.b16 %v4685, %v4681
  %v7166 = vpack.c.b16 %v4686, %v4682
  %v7167 = vpack.c.b16 %v4687, %v4683
  %v7168 = vpack.c.b16 %v4692, %v4688
  %v7169 = vpack.c.b16 %v4693, %v4689
  %v7170 = vpack.c.b16 %v4694, %v4690
  %v7171 = vpack.c.b16 %v4695, %v4691
  %v7172 = vpack.c.b16 %v4700, %v4696
  %v7173 = vpack.c.b16 %v4701, %v4697
  %v7174 = vpack.c.b16 %v4702, %v4698
  %v7175 = vpack.c.b16 %v4703, %v4699
  %v7176 = vpack.c.b16 %v4708, %v4704
  %v7177 = vpack.c.b16 %v4709, %v4705
  %v7178 = vpack.c.b16 %v4710, %v4706
  %v7179 = vpack.c.b16 %v4711, %v4707
  %v7180 = vpack.c.b16 %v4716, %v4712
  %v7181 = vpack.c.b16 %v4717, %v4713
  %v7182 = vpack.c.b16 %v4718, %v4714
  %v7183 = vpack.c.b16 %v4719, %v4715
  %v7184 = vpack.c.b16 %v4724, %v4720
  %v7185 = vpack.c.b16 %v4725, %v4721
  %v7186 = vpack.c.b16 %v4726, %v4722
  %v7187 = vpack.c.b16 %v4727, %v4723
  %v7188 = vpack.c.b16 %v4732, %v4728
  %v7189 = vpack.c.b16 %v4733, %v4729
  %v7190 = vpack.c.b16 %v4734, %v4730
  %v7191 = vpack.c.b16 %v4735, %v4731
  %v7192 = vpack.c.b16 %v4740, %v4736
  %v7193 = vpack.c.b16 %v4741, %v4737
  %v7194 = vpack.c.b16 %v4742, %v4738
  %v7195 = vpack.c.b16 %v4743, %v4739
  %v7196 = vpack.c.b16 %v4748, %v4744
  %v7197 = vpack.c.b16 %v4749, %v4745
  %v7198 = vpack.c.b16 %v4750, %v4746
  %v7199 = vpack.c.b16 %v4751, %v4747
  %v7200 = vpack.c.b16 %v4756, %v4752
  %v7201 = vpack.c.b16 %v4757, %v4753
  %v7202 = vpack.c.b16 %v4758, %v4754
  %v7203 = vpack.c.b16 %v4759, %v4755
  %v7204 = vpack.c.b16 %v4764, %v4760
  %v7205 = vpack.c.b16 %v4765, %v4761
  %v7206 = vpack.c.b16 %v4766, %v4762
  %v7207 = vpack.c.b16 %v4767, %v4763
  %v7208 = vpack.c.b16 %v4772, %v4768
  %v7209 = vpack.c.b16 %v4773, %v4769
  %v7210 = vpack.c.b16 %v4774, %v4770
  %v7211 = vpack.c.b16 %v4775, %v4771
  %v7212 = vpack.c.b16 %v4780, %v4776
  %v7213 = vpack.c.b16 %v4781, %v4777
  %v7214 = vpack.c.b16 %v4782, %v4778
  %v7215 = vpack.c.b16 %v4783, %v4779
  %v7216 = vpack.c.b16 %v4788, %v4784
  %v7217 = vpack.c.b16 %v4789, %v4785
  %v7218 = vpack.c.b16 %v4790, %v4786
  %v7219 = vpack.c.b16 %v4791, %v4787
  %v7220 = vpack.c.b16 %v4796, %v4792
  %v7221 = vpack.c.b16 %v4797, %v4793
  %v7222 = vpack.c.b16 %v4798, %v4794
  %v7223 = vpack.c.b16 %v4799, %v4795
  %v7224 = vpack.c.b16 %v4804, %v4800
  %v7225 = vpack.c.b16 %v4805, %v4801
  %v7226 = vpack.c.b16 %v4806, %v4802
  %v7227 = vpack.c.b16 %v4807, %v4803
  %v7228 = vpack.c.b16 %v4812, %v4808
  %v7229 = vpack.c.b16 %v4813, %v4809
  %v7230 = vpack.c.b16 %v4814, %v4810
  %v7231 = vpack.c.b16 %v4815, %v4811
  %v7232 = vpack.c.b16 %v4820, %v4816
  %v7233 = vpack.c.b16 %v4821, %v4817
  %v7234 = vpack.c.b16 %v4822, %v4818
  %v7235 = vpack.c.b16 %v4823, %v4819
  %v7236 = vpack.c.b16 %v4828, %v4824
  %v7237 = vpack.c.b16 %v4829, %v4825
  %v7238 = vpack.c.b16 %v4830, %v4826
  %v7239 = vpack.c.b16 %v4831, %v4827
  %v7240 = vpack.c.b16 %v4836, %v4832
  %v7241 = vpack.c.b16 %v4837, %v4833
  %v7242 = vpack.c.b16 %v4838, %v4834
  %v7243 = vpack.c.b16 %v4839, %v4835
  %v7244 = vpack.c.b16 %v4844, %v4840
  %v7245 = vpack.c.b16 %v4845, %v4841
  %v7246 = vpack.c.b16 %v4846, %v4842
  %v7247 = vpack.c.b16 %v4847, %v4843
  %v7248 = vpack.c.b16 %v4852, %v4848
  %v7249 = vpack.c.b16 %v4853, %v4849
  %v7250 = vpack.c.b16 %v4854, %v4850
  %v7251 = vpack.c.b16 %v4855, %v4851
  %v7252 = vpack.c.b16 %v4860, %v4856
  %v7253 = vpack.c.b16 %v4861, %v4857
  %v7254 = vpack.c.b16 %v4862, %v4858
  %v7255 = vpack.c.b16 %v4863, %v4859
  %v7256 = vpack.c.b16 %v4868, %v4864
  %v7257 = vpack.c.b16 %v4869, %v4865
  %v7258 = vpack.c.b16 %v4870, %v4866
  %v7259 = vpack.c.b16 %v4871, %v4867
  %v7260 = vpack.c.b16 %v4876, %v4872
  %v7261 = vpack.c.b16 %v4877, %v4873
  %v7262 = vpack.c.b16 %v4878, %v4874
  %v7263 = vpack.c.b16 %v4879, %v4875
  %v7264 = vpack.c.b16 %v4884, %v4880
  %v7265 = vpack.c.b16 %v4885, %v4881
  %v7266 = vpack.c.b16 %v4886, %v4882
  %v7267 = vpack.c.b16 %v4887, %v4883
  %v7268 = vpack.c.b16 %v4892, %v4888
  %v7269 = vpack.c.b16 %v4893, %v4889
  %v7270 = vpack.c.b16 %v4894, %v4890
  %v7271 = vpack.c.b16 %v4895, %v4891
  %v7272 = vpack.c.b16 %v4900, %v4896
  %v7273 = vpack.c.b16 %v4901, %v4897
  %v7274 = vpack.c.b16 %v4902, %v4898
  %v7275 = vpack.c.b16 %v4903, %v4899
  %v7276 = vpack.c.b16 %v4908, %v4904
  %v7277 = vpack.c.b16 %v4909, %v4905
  %v7278 = vpack.c.b16 %v4910, %v4906
  %v7279 = vpack.c.b16 %v4911, %v4907
  %v7280 = vpack.c.b16 %v4916, %v4912
  %v7281 = vpack.c.b16 %v4917, %v4913
  %v7282 = vpack.c.b16 %v4918, %v4914
  %v7283 = vpack.c.b16 %v4919, %v4915
  %v7284 = vpack.c.b16 %v4924, %v4920
  %v7285 = vpack.c.b16 %v4925, %v4921
  %v7286 = vpack.c.b16 %v4926, %v4922
  %v7287 = vpack.c.b16 %v4927, %v4923
  %v7288 = vpack.c.b16 %v4932, %v4928
  %v7289 = vpack.c.b16 %v4933, %v4929
  %v7290 = vpack.c.b16 %v4934, %v4930
  %v7291 = vpack.c.b16 %v4935, %v4931
  %v7292 = vpack.c.b16 %v4940, %v4936
  %v7293 = vpack.c.b16 %v4941, %v4937
  %v7294 = vpack.c.b16 %v4942, %v4938
  %v7295 = vpack.c.b16 %v4943, %v4939
  %v7296 = vpack.c.b16 %v4948, %v4944
  %v7297 = vpack.c.b16 %v4949, %v4945
  %v7298 = vpack.c.b16 %v4950, %v4946
  %v7299 = vpack.c.b16 %v4951, %v4947
  %v7300 = vpack.c.b16 %v4956, %v4952
  %v7301 = vpack.c.b16 %v4957, %v4953
  %v7302 = vpack.c.b16 %v4958, %v4954
  %v7303 = vpack.c.b16 %v4959, %v4955
  %v7304 = vpack.c.b16 %v4964, %v4960
  %v7305 = vpack.c.b16 %v4965, %v4961
  %v7306 = vpack.c.b16 %v4966, %v4962
  %v7307 = vpack.c.b16 %v4967, %v4963
  %v7308 = vpack.c.b16 %v4972, %v4968
  %v7309 = vpack.c.b16 %v4973, %v4969
  %v7310 = vpack.c.b16 %v4974, %v4970
  %v7311 = vpack.c.b16 %v4975, %v4971
  %v7312 = vpack.c.b16 %v4980, %v4976
  %v7313 = vpack.c.b16 %v4981, %v4977
  %v7314 = vpack.c.b16 %v4982, %v4978
  %v7315 = vpack.c.b16 %v4983, %v4979
  %v7316 = vpack.c.b16 %v4988, %v4984
  %v7317 = vpack.c.b16 %v4989, %v4985
  %v7318 = vpack.c.b16 %v4990, %v4986
  %v7319 = vpack.c.b16 %v4991, %v4987
  %v7320 = vpack.c.b16 %v4996, %v4992
  %v7321 = vpack.c.b16 %v4997, %v4993
  %v7322 = vpack.c.b16 %v4998, %v4994
  %v7323 = vpack.c.b16 %v4999, %v4995
  %v7324 = vpack.c.b16 %v5004, %v5000
  %v7325 = vpack.c.b16 %v5005, %v5001
  %v7326 = vpack.c.b16 %v5006, %v5002
  %v7327 = vpack.c.b16 %v5007, %v5003
  %v7328 = vpack.c.b16 %v5012, %v5008
  %v7329 = vpack.c.b16 %v5013, %v5009
  %v7330 = vpack.c.b16 %v5014, %v5010
  %v7331 = vpack.c.b16 %v5015, %v5011
  %v7332 = vpack.c.b16 %v5020, %v5016
  %v7333 = vpack.c.b16 %v5021, %v5017
  %v7334 = vpack.c.b16 %v5022, %v5018
  %v7335 = vpack.c.b16 %v5023, %v5019
  %v7336 = vpack.c.b16 %v5028, %v5024
  %v7337 = vpack.c.b16 %v5029, %v5025
  %v7338 = vpack.c.b16 %v5030, %v5026
  %v7339 = vpack.c.b16 %v5031, %v5027
  %v7340 = vpack.c.b16 %v5036, %v5032
  %v7341 = vpack.c.b16 %v5037, %v5033
  %v7342 = vpack.c.b16 %v5038, %v5034
  %v7343 = vpack.c.b16 %v5039, %v5035
  %v7344 = vpack.c.b16 %v5044, %v5040
  %v7345 = vpack.c.b16 %v5045, %v5041
  %v7346 = vpack.c.b16 %v5046, %v5042
  %v7347 = vpack.c.b16 %v5047, %v5043
  %v7348 = vpack.c.b16 %v5052, %v5048
  %v7349 = vpack.c.b16 %v5053, %v5049
  %v7350 = vpack.c.b16 %v5054, %v5050
  %v7351 = vpack.c.b16 %v5055, %v5051
  %v7352 = vpack.c.b16 %v5060, %v5056
  %v7353 = vpack.c.b16 %v5061, %v5057
  %v7354 = vpack.c.b16 %v5062, %v5058
  %v7355 = vpack.c.b16 %v5063, %v5059
  %v7356 = vpack.c.b16 %v5068, %v5064
  %v7357 = vpack.c.b16 %v5069, %v5065
  %v7358 = vpack.c.b16 %v5070, %v5066
  %v7359 = vpack.c.b16 %v5071, %v5067
  %v7360 = vpack.c.b16 %v5076, %v5072
  %v7361 = vpack.c.b16 %v5077, %v5073
  %v7362 = vpack.c.b16 %v5078, %v5074
  %v7363 = vpack.c.b16 %v5079, %v5075
  %v7364 = vpack.c.b16 %v5084, %v5080
  %v7365 = vpack.c.b16 %v5085, %v5081
  %v7366 = vpack.c.b16 %v5086, %v5082
  %v7367 = vpack.c.b16 %v5087, %v5083
  %v7368 = vpack.c.b16 %v5092, %v5088
  %v7369 = vpack.c.b16 %v5093, %v5089
  %v7370 = vpack.c.b16 %v5094, %v5090
  %v7371 = vpack.c.b16 %v5095, %v5091
  %v7372 = vpack.c.b16 %v5100, %v5096
  %v7373 = vpack.c.b16 %v5101, %v5097
  %v7374 = vpack.c.b16 %v5102, %v5098
  %v7375 = vpack.c.b16 %v5103, %v5099
  %v7376 = vpack.c.b16 %v5108, %v5104
  %v7377 = vpack.c.b16 %v5109, %v5105
  %v7378 = vpack.c.b16 %v5110, %v5106
  %v7379 = vpack.c.b16 %v5111, %v5107
  %v7380 = vpack.c.b16 %v5116, %v5112
  %v7381 = vpack.c.b16 %v5117, %v5113
  %v7382 = vpack.c.b16 %v5118, %v5114
  %v7383 = vpack.c.b16 %v5119, %v5115
  %v7384 = vpack.c.b16 %v5124, %v5120
  %v7385 = vpack.c.b16 %v5125, %v5121
  %v7386 = vpack.c.b16 %v5126, %v5122
  %v7387 = vpack.c.b16 %v5127, %v5123
  %v7388 = vpack.c.b16 %v5132, %v5128
  %v7389 = vpack.c.b16 %v5133, %v5129
  %v7390 = vpack.c.b16 %v5134, %v5130
  %v7391 = vpack.c.b16 %v5135, %v5131
  %v7392 = vpack.c.b16 %v5140, %v5136
  %v7393 = vpack.c.b16 %v5141, %v5137
  %v7394 = vpack.c.b16 %v5142, %v5138
  %v7395 = vpack.c.b16 %v5143, %v5139
  %v7396 = vpack.c.b16 %v5148, %v5144
  %v7397 = vpack.c.b16 %v5149, %v5145
  %v7398 = vpack.c.b16 %v5150, %v5146
  %v7399 = vpack.c.b16 %v5151, %v5147
  %v7400 = vpack.c.b16 %v5156, %v5152
  %v7401 = vpack.c.b16 %v5157, %v5153
  %v7402 = vpack.c.b16 %v5158, %v5154
  %v7403 = vpack.c.b16 %v5159, %v5155
  %v7404 = vpack.c.b16 %v5164, %v5160
  %v7405 = vpack.c.b16 %v5165, %v5161
  %v7406 = vpack.c.b16 %v5166, %v5162
  %v7407 = vpack.c.b16 %v5167, %v5163
  %v7408 = vpack.c.b16 %v5172, %v5168
  %v7409 = vpack.c.b16 %v5173, %v5169
  %v7410 = vpack.c.b16 %v5174, %v5170
  %v7411 = vpack.c.b16 %v5175, %v5171
  %v7412 = vpack.c.b16 %v5180, %v5176
  %v7413 = vpack.c.b16 %v5181, %v5177
  %v7414 = vpack.c.b16 %v5182, %v5178
  %v7415 = vpack.c.b16 %v5183, %v5179
  %v7416 = vpack.c.b16 %v5188, %v5184
  %v7417 = vpack.c.b16 %v5189, %v5185
  %v7418 = vpack.c.b16 %v5190, %v5186
  %v7419 = vpack.c.b16 %v5191, %v5187
  %v7420 = vpack.c.b16 %v5196, %v5192
  %v7421 = vpack.c.b16 %v5197, %v5193
  %v7422 = vpack.c.b16 %v5198, %v5194
  %v7423 = vpack.c.b16 %v5199, %v5195
  %v7424 = vpack.c.b16 %v5204, %v5200
  %v7425 = vpack.c.b16 %v5205, %v5201
  %v7426 = vpack.c.b16 %v5206, %v5202
  %v7427 = vpack.c.b16 %v5207, %v5203
  %v7428 = vpack.c.b16 %v5212, %v5208
  %v7429 = vpack.c.b16 %v5213, %v5209
  %v7430 = vpack.c.b16 %v5214, %v5210
  %v7431 = vpack.c.b16 %v5215, %v5211
  %v7432 = vpack.c.b16 %v5220, %v5216
  %v7433 = vpack.c.b16 %v5221, %v5217
  %v7434 = vpack.c.b16 %v5222, %v5218
  %v7435 = vpack.c.b16 %v5223, %v5219
  %v7436 = vpack.c.b16 %v5228, %v5224
  %v7437 = vpack.c.b16 %v5229, %v5225
  %v7438 = vpack.c.b16 %v5230, %v5226
  %v7439 = vpack.c.b16 %v5231, %v5227
  %v7440 = vpack.c.b16 %v5236, %v5232
  %v7441 = vpack.c.b16 %v5237, %v5233
  %v7442 = vpack.c.b16 %v5238, %v5234
  %v7443 = vpack.c.b16 %v5239, %v5235
  %v7444 = vpack.c.b16 %v5244, %v5240
  %v7445 = vpack.c.b16 %v5245, %v5241
  %v7446 = vpack.c.b16 %v5246, %v5242
  %v7447 = vpack.c.b16 %v5247, %v5243
  %v7448 = vpack.c.b16 %v5252, %v5248
  %v7449 = vpack.c.b16 %v5253, %v5249
  %v7450 = vpack.c.b16 %v5254, %v5250
  %v7451 = vpack.c.b16 %v5255, %v5251
  %v7452 = vpack.c.b16 %v5260, %v5256
  %v7453 = vpack.c.b16 %v5261, %v5257
  %v7454 = vpack.c.b16 %v5262, %v5258
  %v7455 = vpack.c.b16 %v5263, %v5259
  %v7456 = vpack.c.b16 %v5268, %v5264
  %v7457 = vpack.c.b16 %v5269, %v5265
  %v7458 = vpack.c.b16 %v5270, %v5266
  %v7459 = vpack.c.b16 %v5271, %v5267
  %v7460 = vpack.c.b16 %v5276, %v5272
  %v7461 = vpack.c.b16 %v5277, %v5273
  %v7462 = vpack.c.b16 %v5278, %v5274
  %v7463 = vpack.c.b16 %v5279, %v5275
  %v7464 = vpack.c.b16 %v5284, %v5280
  %v7465 = vpack.c.b16 %v5285, %v5281
  %v7466 = vpack.c.b16 %v5286, %v5282
  %v7467 = vpack.c.b16 %v5287, %v5283
  %v7468 = vpack.c.b16 %v5292, %v5288
  %v7469 = vpack.c.b16 %v5293, %v5289
  %v7470 = vpack.c.b16 %v5294, %v5290
  %v7471 = vpack.c.b16 %v5295, %v5291
  %v7472 = vpack.c.b16 %v5300, %v5296
  %v7473 = vpack.c.b16 %v5301, %v5297
  %v7474 = vpack.c.b16 %v5302, %v5298
  %v7475 = vpack.c.b16 %v5303, %v5299
  %v7476 = vpack.c.b16 %v5308, %v5304
  %v7477 = vpack.c.b16 %v5309, %v5305
  %v7478 = vpack.c.b16 %v5310, %v5306
  %v7479 = vpack.c.b16 %v5311, %v5307
  %v7480 = vpack.c.b16 %v5316, %v5312
  %v7481 = vpack.c.b16 %v5317, %v5313
  %v7482 = vpack.c.b16 %v5318, %v5314
  %v7483 = vpack.c.b16 %v5319, %v5315
  %v7484 = vpack.c.b16 %v5324, %v5320
  %v7485 = vpack.c.b16 %v5325, %v5321
  %v7486 = vpack.c.b16 %v5326, %v5322
  %v7487 = vpack.c.b16 %v5327, %v5323
  %v7488 = vpack.c.b16 %v5332, %v5328
  %v7489 = vpack.c.b16 %v5333, %v5329
  %v7490 = vpack.c.b16 %v5334, %v5330
  %v7491 = vpack.c.b16 %v5335, %v5331
  %v7492 = vpack.c.b16 %v5340, %v5336
  %v7493 = vpack.c.b16 %v5341, %v5337
  %v7494 = vpack.c.b16 %v5342, %v5338
  %v7495 = vpack.c.b16 %v5343, %v5339
  %v7496 = vpack.c.b16 %v5348, %v5344
  %v7497 = vpack.c.b16 %v5349, %v5345
  %v7498 = vpack.c.b16 %v5350, %v5346
  %v7499 = vpack.c.b16 %v5351, %v5347
  %v7500 = vpack.c.b16 %v5356, %v5352
  %v7501 = vpack.c.b16 %v5357, %v5353
  %v7502 = vpack.c.b16 %v5358, %v5354
  %v7503 = vpack.c.b16 %v5359, %v5355
  %v7504 = vpack.c.b16 %v5364, %v5360
  %v7505 = vpack.c.b16 %v5365, %v5361
  %v7506 = vpack.c.b16 %v5366, %v5362
  %v7507 = vpack.c.b16 %v5367, %v5363
  %v7508 = vpack.c.b16 %v5372, %v5368
  %v7509 = vpack.c.b16 %v5373, %v5369
  %v7510 = vpack.c.b16 %v5374, %v5370
  %v7511 = vpack.c.b16 %v5375, %v5371
  %v7512 = vpack.c.b16 %v5380, %v5376
  %v7513 = vpack.c.b16 %v5381, %v5377
  %v7514 = vpack.c.b16 %v5382, %v5378
  %v7515 = vpack.c.b16 %v5383, %v5379
  %v7516 = vpack.c.b16 %v5388, %v5384
  %v7517 = vpack.c.b16 %v5389, %v5385
  %v7518 = vpack.c.b16 %v5390, %v5386
  %v7519 = vpack.c.b16 %v5391, %v5387
  %v7520 = vpack.c.b16 %v5396, %v5392
  %v7521 = vpack.c.b16 %v5397, %v5393
  %v7522 = vpack.c.b16 %v5398, %v5394
  %v7523 = vpack.c.b16 %v5399, %v5395
  %v7524 = vpack.c.b16 %v5404, %v5400
  %v7525 = vpack.c.b16 %v5405, %v5401
  %v7526 = vpack.c.b16 %v5406, %v5402
  %v7527 = vpack.c.b16 %v5407, %v5403
  %v7528 = vpack.c.b16 %v5412, %v5408
  %v7529 = vpack.c.b16 %v5413, %v5409
  %v7530 = vpack.c.b16 %v5414, %v5410
  %v7531 = vpack.c.b16 %v5415, %v5411
  %v7532 = vpack.c.b16 %v5420, %v5416
  %v7533 = vpack.c.b16 %v5421, %v5417
  %v7534 = vpack.c.b16 %v5422, %v5418
  %v7535 = vpack.c.b16 %v5423, %v5419
  %v7536 = vpack.c.b16 %v5428, %v5424
  %v7537 = vpack.c.b16 %v5429, %v5425
  %v7538 = vpack.c.b16 %v5430, %v5426
  %v7539 = vpack.c.b16 %v5431, %v5427
  %v7540 = vpack.c.b16 %v5436, %v5432
  %v7541 = vpack.c.b16 %v5437, %v5433
  %v7542 = vpack.c.b16 %v5438, %v5434
  %v7543 = vpack.c.b16 %v5439, %v5435
  %v7544 = vpack.c.b16 %v5444, %v5440
  %v7545 = vpack.c.b16 %v5445, %v5441
  %v7546 = vpack.c.b16 %v5446, %v5442
  %v7547 = vpack.c.b16 %v5447, %v5443
  %v7548 = vpack.c.b16 %v5452, %v5448
  %v7549 = vpack.c.b16 %v5453, %v5449
  %v7550 = vpack.c.b16 %v5454, %v5450
  %v7551 = vpack.c.b16 %v5455, %v5451
  %v7552 = vpack.c.b16 %v5460, %v5456
  %v7553 = vpack.c.b16 %v5461, %v5457
  %v7554 = vpack.c.b16 %v5462, %v5458
  %v7555 = vpack.c.b16 %v5463, %v5459
  %v7556 = vpack.c.b16 %v5468, %v5464
  %v7557 = vpack.c.b16 %v5469, %v5465
  %v7558 = vpack.c.b16 %v5470, %v5466
  %v7559 = vpack.c.b16 %v5471, %v5467
  %v7560 = vpack.c.b16 %v5476, %v5472
  %v7561 = vpack.c.b16 %v5477, %v5473
  %v7562 = vpack.c.b16 %v5478, %v5474
  %v7563 = vpack.c.b16 %v5479, %v5475
  %v7564 = vpack.c.b16 %v5484, %v5480
  %v7565 = vpack.c.b16 %v5485, %v5481
  %v7566 = vpack.c.b16 %v5486, %v5482
  %v7567 = vpack.c.b16 %v5487, %v5483
  %v7568 = vpack.c.b16 %v5492, %v5488
  %v7569 = vpack.c.b16 %v5493, %v5489
  %v7570 = vpack.c.b16 %v5494, %v5490
  %v7571 = vpack.c.b16 %v5495, %v5491
  %v7572 = vpack.c.b16 %v5500, %v5496
  %v7573 = vpack.c.b16 %v5501, %v5497
  %v7574 = vpack.c.b16 %v5502, %v5498
  %v7575 = vpack.c.b16 %v5503, %v5499
  %v7576 = vpack.c.b16 %v5508, %v5504
  %v7577 = vpack.c.b16 %v5509, %v5505
  %v7578 = vpack.c.b16 %v5510, %v5506
  %v7579 = vpack.c.b16 %v5511, %v5507
  %v7580 = vpack.c.b16 %v5516, %v5512
  %v7581 = vpack.c.b16 %v5517, %v5513
  %v7582 = vpack.c.b16 %v5518, %v5514
  %v7583 = vpack.c.b16 %v5519, %v5515
  %v7584 = vpack.c.b16 %v5524, %v5520
  %v7585 = vpack.c.b16 %v5525, %v5521
  %v7586 = vpack.c.b16 %v5526, %v5522
  %v7587 = vpack.c.b16 %v5527, %v5523
  %v7588 = vpack.c.b16 %v5532, %v5528
  %v7589 = vpack.c.b16 %v5533, %v5529
  %v7590 = vpack.c.b16 %v5534, %v5530
  %v7591 = vpack.c.b16 %v5535, %v5531
  %v7592 = vpack.c.b16 %v5540, %v5536
  %v7593 = vpack.c.b16 %v5541, %v5537
  %v7594 = vpack.c.b16 %v5542, %v5538
  %v7595 = vpack.c.b16 %v5543, %v5539
  %v7596 = vpack.c.b16 %v5548, %v5544
  %v7597 = vpack.c.b16 %v5549, %v5545
  %v7598 = vpack.c.b16 %v5550, %v5546
  %v7599 = vpack.c.b16 %v5551, %v5547
  %v7600 = vpack.c.b16 %v5556, %v5552
  %v7601 = vpack.c.b16 %v5557, %v5553
  %v7602 = vpack.c.b16 %v5558, %v5554
  %v7603 = vpack.c.b16 %v5559, %v5555
  %v7604 = vpack.c.b16 %v5564, %v5560
  %v7605 = vpack.c.b16 %v5565, %v5561
  %v7606 = vpack.c.b16 %v5566, %v5562
  %v7607 = vpack.c.b16 %v5567, %v5563
  %v7608 = vpack.c.b16 %v5572, %v5568
  %v7609 = vpack.c.b16 %v5573, %v5569
  %v7610 = vpack.c.b16 %v5574, %v5570
  %v7611 = vpack.c.b16 %v5575, %v5571
  %v7612 = vpack.c.b16 %v5580, %v5576
  %v7613 = vpack.c.b16 %v5581, %v5577
  %v7614 = vpack.c.b16 %v5582, %v5578
  %v7615 = vpack.c.b16 %v5583, %v5579
  %v7616 = vpack.c.b16 %v5588, %v5584
  %v7617 = vpack.c.b16 %v5589, %v5585
  %v7618 = vpack.c.b16 %v5590, %v5586
  %v7619 = vpack.c.b16 %v5591, %v5587
  %v7620 = vpack.c.b16 %v5596, %v5592
  %v7621 = vpack.c.b16 %v5597, %v5593
  %v7622 = vpack.c.b16 %v5598, %v5594
  %v7623 = vpack.c.b16 %v5599, %v5595
  %v7624 = vpack.c.b16 %v5604, %v5600
  %v7625 = vpack.c.b16 %v5605, %v5601
  %v7626 = vpack.c.b16 %v5606, %v5602
  %v7627 = vpack.c.b16 %v5607, %v5603
  %v7628 = vpack.c.b16 %v5612, %v5608
  %v7629 = vpack.c.b16 %v5613, %v5609
  %v7630 = vpack.c.b16 %v5614, %v5610
  %v7631 = vpack.c.b16 %v5615, %v5611
  %v7632 = vpack.c.b16 %v5620, %v5616
  %v7633 = vpack.c.b16 %v5621, %v5617
  %v7634 = vpack.c.b16 %v5622, %v5618
  %v7635 = vpack.c.b16 %v5623, %v5619
  %v7636 = vpack.c.b16 %v5628, %v5624
  %v7637 = vpack.c.b16 %v5629, %v5625
  %v7638 = vpack.c.b16 %v5630, %v5626
  %v7639 = vpack.c.b16 %v5631, %v5627
  %v7640 = vpack.c.b16 %v5636, %v5632
  %v7641 = vpack.c.b16 %v5637, %v5633
  %v7642 = vpack.c.b16 %v5638, %v5634
  %v7643 = vpack.c.b16 %v5639, %v5635
  %v7644 = vpack.c.b16 %v5644, %v5640
  %v7645 = vpack.c.b16 %v5645, %v5641
  %v7646 = vpack.c.b16 %v5646, %v5642
  %v7647 = vpack.c.b16 %v5647, %v5643
  %v7648 = vpack.c.b16 %v5652, %v5648
  %v7649 = vpack.c.b16 %v5653, %v5649
  %v7650 = vpack.c.b16 %v5654, %v5650
  %v7651 = vpack.c.b16 %v5655, %v5651
  %v7652 = vpack.c.b16 %v5660, %v5656
  %v7653 = vpack.c.b16 %v5661, %v5657
  %v7654 = vpack.c.b16 %v5662, %v5658
  %v7655 = vpack.c.b16 %v5663, %v5659
  %v7656 = vpack.c.b16 %v5668, %v5664
  %v7657 = vpack.c.b16 %v5669, %v5665
  %v7658 = vpack.c.b16 %v5670, %v5666
  %v7659 = vpack.c.b16 %v5671, %v5667
  %v7660 = vpack.c.b16 %v5676, %v5672
  %v7661 = vpack.c.b16 %v5677, %v5673
  %v7662 = vpack.c.b16 %v5678, %v5674
  %v7663 = vpack.c.b16 %v5679, %v5675
  %v7664 = vpack.c.b16 %v5684, %v5680
  %v7665 = vpack.c.b16 %v5685, %v5681
  %v7666 = vpack.c.b16 %v5686, %v5682
  %v7667 = vpack.c.b16 %v5687, %v5683
  %v7668 = vpack.c.b16 %v5692, %v5688
  %v7669 = vpack.c.b16 %v5693, %v5689
  %v7670 = vpack.c.b16 %v5694, %v5690
  %v7671 = vpack.c.b16 %v5695, %v5691
  %v7672 = vpack.c.b16 %v5700, %v5696
  %v7673 = vpack.c.b16 %v5701, %v5697
  %v7674 = vpack.c.b16 %v5702, %v5698
  %v7675 = vpack.c.b16 %v5703, %v5699
  %v7676 = vpack.c.b16 %v5708, %v5704
  %v7677 = vpack.c.b16 %v5709, %v5705
  %v7678 = vpack.c.b16 %v5710, %v5706
  %v7679 = vpack.c.b16 %v5711, %v5707
  %v7680 = vpack.c.b16 %v5716, %v5712
  %v7681 = vpack.c.b16 %v5717, %v5713
  %v7682 = vpack.c.b16 %v5718, %v5714
  %v7683 = vpack.c.b16 %v5719, %v5715
  %v7684 = vpack.c.b16 %v5724, %v5720
  %v7685 = vpack.c.b16 %v5725, %v5721
  %v7686 = vpack.c.b16 %v5726, %v5722
  %v7687 = vpack.c.b16 %v5727, %v5723
  %v7688 = vpack.c.b16 %v5732, %v5728
  %v7689 = vpack.c.b16 %v5733, %v5729
  %v7690 = vpack.c.b16 %v5734, %v5730
  %v7691 = vpack.c.b16 %v5735, %v5731
  %v7692 = vpack.c.b16 %v5740, %v5736
  %v7693 = vpack.c.b16 %v5741, %v5737
  %v7694 = vpack.c.b16 %v5742, %v5738
  %v7695 = vpack.c.b16 %v5743, %v5739
  %v7696 = vpack.c.b16 %v5748, %v5744
  %v7697 = vpack.c.b16 %v5749, %v5745
  %v7698 = vpack.c.b16 %v5750, %v5746
  %v7699 = vpack.c.b16 %v5751, %v5747
  %v7700 = vpack.c.b16 %v5756, %v5752
  %v7701 = vpack.c.b16 %v5757, %v5753
  %v7702 = vpack.c.b16 %v5758, %v5754
  %v7703 = vpack.c.b16 %v5759, %v5755
  %v7704 = vpack.c.b16 %v5764, %v5760
  %v7705 = vpack.c.b16 %v5765, %v5761
  %v7706 = vpack.c.b16 %v5766, %v5762
  %v7707 = vpack.c.b16 %v5767, %v5763
  %v7708 = vpack.c.b16 %v5772, %v5768
  %v7709 = vpack.c.b16 %v5773, %v5769
  %v7710 = vpack.c.b16 %v5774, %v5770
  %v7711 = vpack.c.b16 %v5775, %v5771
  %v7712 = vpack.c.b16 %v5780, %v5776
  %v7713 = vpack.c.b16 %v5781, %v5777
  %v7714 = vpack.c.b16 %v5782, %v5778
  %v7715 = vpack.c.b16 %v5783, %v5779
  %v7716 = vpack.c.b16 %v5788, %v5784
  %v7717 = vpack.c.b16 %v5789, %v5785
  %v7718 = vpack.c.b16 %v5790, %v5786
  %v7719 = vpack.c.b16 %v5791, %v5787
  %v7720 = vpack.c.b16 %v5796, %v5792
  %v7721 = vpack.c.b16 %v5797, %v5793
  %v7722 = vpack.c.b16 %v5798, %v5794
  %v7723 = vpack.c.b16 %v5799, %v5795
  %v7724 = vpack.c.b16 %v5804, %v5800
  %v7725 = vpack.c.b16 %v5805, %v5801
  %v7726 = vpack.c.b16 %v5806, %v5802
  %v7727 = vpack.c.b16 %v5807, %v5803
  %v7728 = vpack.c.b16 %v5812, %v5808
  %v7729 = vpack.c.b16 %v5813, %v5809
  %v7730 = vpack.c.b16 %v5814, %v5810
  %v7731 = vpack.c.b16 %v5815, %v5811
  %v7732 = vpack.c.b16 %v5820, %v5816
  %v7733 = vpack.c.b16 %v5821, %v5817
  %v7734 = vpack.c.b16 %v5822, %v5818
  %v7735 = vpack.c.b16 %v5823, %v5819
  %v7736 = vpack.c.b16 %v5828, %v5824
  %v7737 = vpack.c.b16 %v5829, %v5825
  %v7738 = vpack.c.b16 %v5830, %v5826
  %v7739 = vpack.c.b16 %v5831, %v5827
  %v7740 = vpack.c.b16 %v5836, %v5832
  %v7741 = vpack.c.b16 %v5837, %v5833
  %v7742 = vpack.c.b16 %v5838, %v5834
  %v7743 = vpack.c.b16 %v5839, %v5835
  %v7744 = vpack.c.b16 %v5844, %v5840
  %v7745 = vpack.c.b16 %v5845, %v5841
  %v7746 = vpack.c.b16 %v5846, %v5842
  %v7747 = vpack.c.b16 %v5847, %v5843
  %v7748 = vpack.c.b16 %v5852, %v5848
  %v7749 = vpack.c.b16 %v5853, %v5849
  %v7750 = vpack.c.b16 %v5854, %v5850
  %v7751 = vpack.c.b16 %v5855, %v5851
  %v7752 = vpack.c.b16 %v5860, %v5856
  %v7753 = vpack.c.b16 %v5861, %v5857
  %v7754 = vpack.c.b16 %v5862, %v5858
  %v7755 = vpack.c.b16 %v5863, %v5859
  %v7756 = vpack.c.b16 %v5868, %v5864
  %v7757 = vpack.c.b16 %v5869, %v5865
  %v7758 = vpack.c.b16 %v5870, %v5866
  %v7759 = vpack.c.b16 %v5871, %v5867
  %v7760 = vpack.c.b16 %v5876, %v5872
  %v7761 = vpack.c.b16 %v5877, %v5873
  %v7762 = vpack.c.b16 %v5878, %v5874
  %v7763 = vpack.c.b16 %v5879, %v5875
  %v7764 = vpack.c.b16 %v5884, %v5880
  %v7765 = vpack.c.b16 %v5885, %v5881
  %v7766 = vpack.c.b16 %v5886, %v5882
  %v7767 = vpack.c.b16 %v5887, %v5883
  %v7768 = vpack.c.b16 %v5892, %v5888
  %v7769 = vpack.c.b16 %v5893, %v5889
  %v7770 = vpack.c.b16 %v5894, %v5890
  %v7771 = vpack.c.b16 %v5895, %v5891
  %v7772 = vpack.c.b16 %v5900, %v5896
  %v7773 = vpack.c.b16 %v5901, %v5897
  %v7774 = vpack.c.b16 %v5902, %v5898
  %v7775 = vpack.c.b16 %v5903, %v5899
  %v7776 = vpack.c.b16 %v5908, %v5904
  %v7777 = vpack.c.b16 %v5909, %v5905
  %v7778 = vpack.c.b16 %v5910, %v5906
  %v7779 = vpack.c.b16 %v5911, %v5907
  %v7780 = vpack.c.b16 %v5916, %v5912
  %v7781 = vpack.c.b16 %v5917, %v5913
  %v7782 = vpack.c.b16 %v5918, %v5914
  %v7783 = vpack.c.b16 %v5919, %v5915
  %v7784 = vpack.c.b16 %v5924, %v5920
  %v7785 = vpack.c.b16 %v5925, %v5921
  %v7786 = vpack.c.b16 %v5926, %v5922
  %v7787 = vpack.c.b16 %v5927, %v5923
  %v7788 = vpack.c.b16 %v5932, %v5928
  %v7789 = vpack.c.b16 %v5933, %v5929
  %v7790 = vpack.c.b16 %v5934, %v5930
  %v7791 = vpack.c.b16 %v5935, %v5931
  %v7792 = vpack.c.b16 %v5940, %v5936
  %v7793 = vpack.c.b16 %v5941, %v5937
  %v7794 = vpack.c.b16 %v5942, %v5938
  %v7795 = vpack.c.b16 %v5943, %v5939
  %v7796 = vpack.c.b16 %v5948, %v5944
  %v7797 = vpack.c.b16 %v5949, %v5945
  %v7798 = vpack.c.b16 %v5950, %v5946
  %v7799 = vpack.c.b16 %v5951, %v5947
  %v7800 = vpack.c.b16 %v5956, %v5952
  %v7801 = vpack.c.b16 %v5957, %v5953
  %v7802 = vpack.c.b16 %v5958, %v5954
  %v7803 = vpack.c.b16 %v5959, %v5955
  %v7804 = vpack.c.b16 %v5964, %v5960
  %v7805 = vpack.c.b16 %v5965, %v5961
  %v7806 = vpack.c.b16 %v5966, %v5962
  %v7807 = vpack.c.b16 %v5967, %v5963
  %v7808 = vpack.c.b16 %v5972, %v5968
  %v7809 = vpack.c.b16 %v5973, %v5969
  %v7810 = vpack.c.b16 %v5974, %v5970
  %v7811 = vpack.c.b16 %v5975, %v5971
  %v7812 = vpack.c.b16 %v5980, %v5976
  %v7813 = vpack.c.b16 %v5981, %v5977
  %v7814 = vpack.c.b16 %v5982, %v5978
  %v7815 = vpack.c.b16 %v5983, %v5979
  %v7816 = vpack.c.b16 %v5988, %v5984
  %v7817 = vpack.c.b16 %v5989, %v5985
  %v7818 = vpack.c.b16 %v5990, %v5986
  %v7819 = vpack.c.b16 %v5991, %v5987
  %v7820 = vpack.c.b16 %v5996, %v5992
  %v7821 = vpack.c.b16 %v5997, %v5993
  %v7822 = vpack.c.b16 %v5998, %v5994
  %v7823 = vpack.c.b16 %v5999, %v5995
  %v7824 = vpack.c.b16 %v6004, %v6000
  %v7825 = vpack.c.b16 %v6005, %v6001
  %v7826 = vpack.c.b16 %v6006, %v6002
  %v7827 = vpack.c.b16 %v6007, %v6003
  %v7828 = vpack.c.b16 %v6012, %v6008
  %v7829 = vpack.c.b16 %v6013, %v6009
  %v7830 = vpack.c.b16 %v6014, %v6010
  %v7831 = vpack.c.b16 %v6015, %v6011
  %v7832 = vpack.c.b16 %v6020, %v6016
  %v7833 = vpack.c.b16 %v6021, %v6017
  %v7834 = vpack.c.b16 %v6022, %v6018
  %v7835 = vpack.c.b16 %v6023, %v6019
  %v7836 = vpack.c.b16 %v6028, %v6024
  %v7837 = vpack.c.b16 %v6029, %v6025
  %v7838 = vpack.c.b16 %v6030, %v6026
  %v7839 = vpack.c.b16 %v6031, %v6027
  %v7840 = vpack.c.b16 %v6036, %v6032
  %v7841 = vpack.c.b16 %v6037, %v6033
  %v7842 = vpack.c.b16 %v6038, %v6034
  %v7843 = vpack.c.b16 %v6039, %v6035
  %v7844 = vpack.c.b16 %v6044, %v6040
  %v7845 = vpack.c.b16 %v6045, %v6041
  %v7846 = vpack.c.b16 %v6046, %v6042
  %v7847 = vpack.c.b16 %v6047, %v6043
  %v7848 = vpack.c.b16 %v6052, %v6048
  %v7849 = vpack.c.b16 %v6053, %v6049
  %v7850 = vpack.c.b16 %v6054, %v6050
  %v7851 = vpack.c.b16 %v6055, %v6051
  %v7852 = vpack.c.b16 %v6060, %v6056
  %v7853 = vpack.c.b16 %v6061, %v6057
  %v7854 = vpack.c.b16 %v6062, %v6058
  %v7855 = vpack.c.b16 %v6063, %v6059
  %v7856 = vpack.c.b16 %v6068, %v6064
  %v7857 = vpack.c.b16 %v6069, %v6065
  %v7858 = vpack.c.b16 %v6070, %v6066
  %v7859 = vpack.c.b16 %v6071, %v6067
  %v7860 = vpack.c.b16 %v6076, %v6072
  %v7861 = vpack.c.b16 %v6077, %v6073
  %v7862 = vpack.c.b16 %v6078, %v6074
  %v7863 = vpack.c.b16 %v6079, %v6075
  %v7864 = vpack.c.b16 %v6084, %v6080
  %v7865 = vpack.c.b16 %v6085, %v6081
  %v7866 = vpack.c.b16 %v6086, %v6082
  %v7867 = vpack.c.b16 %v6087, %v6083
  %v7868 = vpack.c.b16 %v6092, %v6088
  %v7869 = vpack.c.b16 %v6093, %v6089
  %v7870 = vpack.c.b16 %v6094, %v6090
  %v7871 = vpack.c.b16 %v6095, %v6091
  %v7872 = vpack.c.b16 %v6100, %v6096
  %v7873 = vpack.c.b16 %v6101, %v6097
  %v7874 = vpack.c.b16 %v6102, %v6098
  %v7875 = vpack.c.b16 %v6103, %v6099
  %v7876 = vpack.c.b16 %v6108, %v6104
  %v7877 = vpack.c.b16 %v6109, %v6105
  %v7878 = vpack.c.b16 %v6110, %v6106
  %v7879 = vpack.c.b16 %v6111, %v6107
  %v7880 = vpack.c.b16 %v6116, %v6112
  %v7881 = vpack.c.b16 %v6117, %v6113
  %v7882 = vpack.c.b16 %v6118, %v6114
  %v7883 = vpack.c.b16 %v6119, %v6115
  %v7884 = vpack.c.b16 %v6124, %v6120
  %v7885 = vpack.c.b16 %v6125, %v6121
  %v7886 = vpack.c.b16 %v6126, %v6122
  %v7887 = vpack.c.b16 %v6127, %v6123
  %v7888 = vpack.c.b16 %v6132, %v6128
  %v7889 = vpack.c.b16 %v6133, %v6129
  %v7890 = vpack.c.b16 %v6134, %v6130
  %v7891 = vpack.c.b16 %v6135, %v6131
  %v7892 = vpack.c.b16 %v6140, %v6136
  %v7893 = vpack.c.b16 %v6141, %v6137
  %v7894 = vpack.c.b16 %v6142, %v6138
  %v7895 = vpack.c.b16 %v6143, %v6139
  %v7896 = vpack.c.b16 %v6148, %v6144
  %v7897 = vpack.c.b16 %v6149, %v6145
  %v7898 = vpack.c.b16 %v6150, %v6146
  %v7899 = vpack.c.b16 %v6151, %v6147
  %v7900 = vpack.c.b16 %v6156, %v6152
  %v7901 = vpack.c.b16 %v6157, %v6153
  %v7902 = vpack.c.b16 %v6158, %v6154
  %v7903 = vpack.c.b16 %v6159, %v6155
  %v7904 = vpack.c.b16 %v6164, %v6160
  %v7905 = vpack.c.b16 %v6165, %v6161
  %v7906 = vpack.c.b16 %v6166, %v6162
  %v7907 = vpack.c.b16 %v6167, %v6163
  %v7908 = vpack.c.b16 %v6172, %v6168
  %v7909 = vpack.c.b16 %v6173, %v6169
  %v7910 = vpack.c.b16 %v6174, %v6170
  %v7911 = vpack.c.b16 %v6175, %v6171
  %v7912 = vpack.c.b16 %v6180, %v6176
  %v7913 = vpack.c.b16 %v6181, %v6177
  %v7914 = vpack.c.b16 %v6182, %v6178
  %v7915 = vpack.c.b16 %v6183, %v6179
  %v7916 = vpack.c.b16 %v6188, %v6184
  %v7917 = vpack.c.b16 %v6189, %v6185
  %v7918 = vpack.c.b16 %v6190, %v6186
  %v7919 = vpack.c.b16 %v6191, %v6187
  %v7920 = vpack.c.b16 %v6196, %v6192
  %v7921 = vpack.c.b16 %v6197, %v6193
  %v7922 = vpack.c.b16 %v6198, %v6194
  %v7923 = vpack.c.b16 %v6199, %v6195
  %v7924 = vpack.c.b16 %v6204, %v6200
  %v7925 = vpack.c.b16 %v6205, %v6201
  %v7926 = vpack.c.b16 %v6206, %v6202
  %v7927 = vpack.c.b16 %v6207, %v6203
  %v7928 = vpack.c.b16 %v6212, %v6208
  %v7929 = vpack.c.b16 %v6213, %v6209
  %v7930 = vpack.c.b16 %v6214, %v6210
  %v7931 = vpack.c.b16 %v6215, %v6211
  %v7932 = vpack.c.b16 %v6220, %v6216
  %v7933 = vpack.c.b16 %v6221, %v6217
  %v7934 = vpack.c.b16 %v6222, %v6218
  %v7935 = vpack.c.b16 %v6223, %v6219
  %v7936 = vpack.c.b16 %v6228, %v6224
  %v7937 = vpack.c.b16 %v6229, %v6225
  %v7938 = vpack.c.b16 %v6230, %v6226
  %v7939 = vpack.c.b16 %v6231, %v6227
  %v7940 = vpack.c.b16 %v6236, %v6232
  %v7941 = vpack.c.b16 %v6237, %v6233
  %v7942 = vpack.c.b16 %v6238, %v6234
  %v7943 = vpack.c.b16 %v6239, %v6235
  %v7944 = vpack.c.b16 %v6244, %v6240
  %v7945 = vpack.c.b16 %v6245, %v6241
  %v7946 = vpack.c.b16 %v6246, %v6242
  %v7947 = vpack.c.b16 %v6247, %v6243
  %v7948 = vpack.c.b16 %v6252, %v6248
  %v7949 = vpack.c.b16 %v6253, %v6249
  %v7950 = vpack.c.b16 %v6254, %v6250
  %v7951 = vpack.c.b16 %v6255, %v6251
  %v7952 = vpack.c.b16 %v6260, %v6256
  %v7953 = vpack.c.b16 %v6261, %v6257
  %v7954 = vpack.c.b16 %v6262, %v6258
  %v7955 = vpack.c.b16 %v6263, %v6259
  %v7956 = vpack.c.b16 %v6268, %v6264
  %v7957 = vpack.c.b16 %v6269, %v6265
  %v7958 = vpack.c.b16 %v6270, %v6266
  %v7959 = vpack.c.b16 %v6271, %v6267
  %v7960 = vpack.c.b16 %v6276, %v6272
  %v7961 = vpack.c.b16 %v6277, %v6273
  %v7962 = vpack.c.b16 %v6278, %v6274
  %v7963 = vpack.c.b16 %v6279, %v6275
  %v7964 = vpack.c.b16 %v6284, %v6280
  %v7965 = vpack.c.b16 %v6285, %v6281
  %v7966 = vpack.c.b16 %v6286, %v6282
  %v7967 = vpack.c.b16 %v6287, %v6283
  %v7968 = vpack.c.b16 %v6292, %v6288
  %v7969 = vpack.c.b16 %v6293, %v6289
  %v7970 = vpack.c.b16 %v6294, %v6290
  %v7971 = vpack.c.b16 %v6295, %v6291
  %v7972 = vpack.c.b16 %v6300, %v6296
  %v7973 = vpack.c.b16 %v6301, %v6297
  %v7974 = vpack.c.b16 %v6302, %v6298
  %v7975 = vpack.c.b16 %v6303, %v6299
  %v7976 = vpack.c.b16 %v6308, %v6304
  %v7977 = vpack.c.b16 %v6309, %v6305
  %v7978 = vpack.c.b16 %v6310, %v6306
  %v7979 = vpack.c.b16 %v6311, %v6307
  %v7980 = vpack.c.b16 %v6316, %v6312
  %v7981 = vpack.c.b16 %v6317, %v6313
  %v7982 = vpack.c.b16 %v6318, %v6314
  %v7983 = vpack.c.b16 %v6319, %v6315
  %v7984 = vpack.c.b16 %v6324, %v6320
  %v7985 = vpack.c.b16 %v6325, %v6321
  %v7986 = vpack.c.b16 %v6326, %v6322
  %v7987 = vpack.c.b16 %v6327, %v6323
  %v7988 = vpack.c.b16 %v6332, %v6328
  %v7989 = vpack.c.b16 %v6333, %v6329
  %v7990 = vpack.c.b16 %v6334, %v6330
  %v7991 = vpack.c.b16 %v6335, %v6331
  %v7992 = vpack.c.b16 %v6340, %v6336
  %v7993 = vpack.c.b16 %v6341, %v6337
  %v7994 = vpack.c.b16 %v6342, %v6338
  %v7995 = vpack.c.b16 %v6343, %v6339
  %v7996 = vpack.c.b16 %v6348, %v6344
  %v7997 = vpack.c.b16 %v6349, %v6345
  %v7998 = vpack.c.b16 %v6350, %v6346
  %v7999 = vpack.c.b16 %v6351, %v6347
  %v8000 = vpack.c.b16 %v6356, %v6352
  %v8001 = vpack.c.b16 %v6357, %v6353
  %v8002 = vpack.c.b16 %v6358, %v6354
  %v8003 = vpack.c.b16 %v6359, %v6355
  %v8004 = vpack.c.b16 %v6364, %v6360
  %v8005 = vpack.c.b16 %v6365, %v6361
  %v8006 = vpack.c.b16 %v6366, %v6362
  %v8007 = vpack.c.b16 %v6367, %v6363
  %v8008 = vpack.c.b16 %v6372, %v6368
  %v8009 = vpack.c.b16 %v6373, %v6369
  %v8010 = vpack.c.b16 %v6374, %v6370
  %v8011 = vpack.c.b16 %v6375, %v6371
  %v8012 = vpack.c.b16 %v6380, %v6376
  %v8013 = vpack.c.b16 %v6381, %v6377
  %v8014 = vpack.c.b16 %v6382, %v6378
  %v8015 = vpack.c.b16 %v6383, %v6379
  %v8016 = vpack.c.b16 %v6388, %v6384
  %v8017 = vpack.c.b16 %v6389, %v6385
  %v8018 = vpack.c.b16 %v6390, %v6386
  %v8019 = vpack.c.b16 %v6391, %v6387
  %v8020 = vpack.c.b16 %v6396, %v6392
  %v8021 = vpack.c.b16 %v6397, %v6393
  %v8022 = vpack.c.b16 %v6398, %v6394
  %v8023 = vpack.c.b16 %v6399, %v6395
  %v8024 = vpack.c.b16 %v6404, %v6400
  %v8025 = vpack.c.b16 %v6405, %v6401
  %v8026 = vpack.c.b16 %v6406, %v6402
  %v8027 = vpack.c.b16 %v6407, %v6403
  %v8028 = vpack.c.b16 %v6412, %v6408
  %v8029 = vpack.c.b16 %v6413, %v6409
  %v8030 = vpack.c.b16 %v6414, %v6410
  %v8031 = vpack.c.b16 %v6415, %v6411
  %v8032 = vpack.c.b16 %v6420, %v6416
  %v8033 = vpack.c.b16 %v6421, %v6417
  %v8034 = vpack.c.b16 %v6422, %v6418
  %v8035 = vpack.c.b16 %v6423, %v6419
  %v8036 = vpack.c.b16 %v6428, %v6424
  %v8037 = vpack.c.b16 %v6429, %v6425
  %v8038 = vpack.c.b16 %v6430, %v6426
  %v8039 = vpack.c.b16 %v6431, %v6427
  %v8040 = vpack.c.b16 %v6436, %v6432
  %v8041 = vpack.c.b16 %v6437, %v6433
  %v8042 = vpack.c.b16 %v6438, %v6434
  %v8043 = vpack.c.b16 %v6439, %v6435
  %v8044 = vpack.c.b16 %v6444, %v6440
  %v8045 = vpack.c.b16 %v6445, %v6441
  %v8046 = vpack.c.b16 %v6446, %v6442
  %v8047 = vpack.c.b16 %v6447, %v6443
  %v8048 = vpack.c.b16 %v6452, %v6448
  %v8049 = vpack.c.b16 %v6453, %v6449
  %v8050 = vpack.c.b16 %v6454, %v6450
  %v8051 = vpack.c.b16 %v6455, %v6451
  %v8052 = vpack.c.b16 %v6460, %v6456
  %v8053 = vpack.c.b16 %v6461, %v6457
  %v8054 = vpack.c.b16 %v6462, %v6458
  %v8055 = vpack.c.b16 %v6463, %v6459
  %v8056 = vpack.c.b16 %v6468, %v6464
  %v8057 = vpack.c.b16 %v6469, %v6465
  %v8058 = vpack.c.b16 %v6470, %v6466
  %v8059 = vpack.c.b16 %v6471, %v6467
  %v8060 = vpack.c.b16 %v6476, %v6472
  %v8061 = vpack.c.b16 %v6477, %v6473
  %v8062 = vpack.c.b16 %v6478, %v6474
  %v8063 = vpack.c.b16 %v6479, %v6475
  %v8064 = vpack.c.b16 %v6484, %v6480
  %v8065 = vpack.c.b16 %v6485, %v6481
  %v8066 = vpack.c.b16 %v6486, %v6482
  %v8067 = vpack.c.b16 %v6487, %v6483
  %v8068 = vpack.c.b16 %v6492, %v6488
  %v8069 = vpack.c.b16 %v6493, %v6489
  %v8070 = vpack.c.b16 %v6494, %v6490
  %v8071 = vpack.c.b16 %v6495, %v6491
  %v8072 = vpack.c.b16 %v6500, %v6496
  %v8073 = vpack.c.b16 %v6501, %v6497
  %v8074 = vpack.c.b16 %v6502, %v6498
  %v8075 = vpack.c.b16 %v6503, %v6499
  %v8076 = vpack.c.b16 %v6508, %v6504
  %v8077 = vpack.c.b16 %v6509, %v6505
  %v8078 = vpack.c.b16 %v6510, %v6506
  %v8079 = vpack.c.b16 %v6511, %v6507
  %9648 = vmatprep.subr.bf16.mxu0 %v6513
  %9649 = vmatpush1.bf16.msra.mxu0 %v6512
  %9650 = vmatprep.subr.bf16.mxu0 %v6517
  %9651 = vmatpush1.bf16.msra.mxu0 %v6516
  %9652 = vmatprep.subr.bf16.mxu0 %v6521
  %9653 = vmatpush1.bf16.msra.mxu0 %v6520
  %9654 = vmatprep.subr.bf16.mxu0 %v6525
  %9655 = vmatpush1.bf16.msra.mxu0 %v6524
  %9656 = vmatprep.subr.bf16.mxu0 %v6529
  %9657 = vmatpush1.bf16.msra.mxu0 %v6528
  %9658 = vmatprep.subr.bf16.mxu0 %v6533
  %9659 = vmatpush1.bf16.msra.mxu0 %v6532
  %9660 = vmatprep.subr.bf16.mxu0 %v6537
  %9661 = vmatpush1.bf16.msra.mxu0 %v6536
  %9662 = vmatprep.subr.bf16.mxu0 %v6541
  %9663 = vmatpush1.bf16.msra.mxu0 %v6540
  %9664 = vmatprep.subr.bf16.mxu0 %v6545
  %9665 = vmatpush1.bf16.msra.mxu0 %v6544
  %9666 = vmatprep.subr.bf16.mxu0 %v6549
  %9667 = vmatpush1.bf16.msra.mxu0 %v6548
  %9668 = vmatprep.subr.bf16.mxu0 %v6553
  %9669 = vmatpush1.bf16.msra.mxu0 %v6552
  %9670 = vmatprep.subr.bf16.mxu0 %v6557
  %9671 = vmatpush1.bf16.msra.mxu0 %v6556
  %9672 = vmatprep.subr.bf16.mxu0 %v6561
  %9673 = vmatpush1.bf16.msra.mxu0 %v6560
  %9674 = vmatprep.subr.bf16.mxu0 %v6565
  %9675 = vmatpush1.bf16.msra.mxu0 %v6564
  %9676 = vmatprep.subr.bf16.mxu0 %v6569
  %9677 = vmatpush1.bf16.msra.mxu0 %v6568
  %9678 = vmatprep.subr.bf16.mxu0 %v6573
  %9679 = vmatpush1.bf16.msra.mxu0 %v6572
  %9680 = vmatprep.mubr.bf16.mxu0 %v1711
  %9681 = vmatmul.mubr.bf16.gmra.mrb[0].mxu0 %v1710
  %v9682 = vpop.f32.mrb[0].mxu0
  %v9683 = vadd.f32 %v1619, %v9682
  %v9684 = vpop.f32.mrb[0].mxu0
  %v9685 = vadd.f32 %v1623, %v9684
  %v9686 = vpop.f32.mrb[0].mxu0
  %v9687 = vpop.f32.mrb[0].mxu0
  %9688 = vdwg.mxu0
  %9689 = vmatprep.subr.bf16.mxu0 %v6577
  %9690 = vmatpush1.bf16.msra.mxu0 %v6576
  %9691 = vmatprep.subr.bf16.mxu0 %v6581
  %9692 = vmatpush1.bf16.msra.mxu0 %v6580
  %9693 = vmatprep.subr.bf16.mxu0 %v6585
  %9694 = vmatpush1.bf16.msra.mxu0 %v6584
  %9695 = vmatprep.subr.bf16.mxu0 %v6589
  %9696 = vmatpush1.bf16.msra.mxu0 %v6588
  %9697 = vmatprep.subr.bf16.mxu0 %v6593
  %9698 = vmatpush1.bf16.msra.mxu0 %v6592
  %9699 = vmatprep.subr.bf16.mxu0 %v6597
  %9700 = vmatpush1.bf16.msra.mxu0 %v6596
  %9701 = vmatprep.subr.bf16.mxu0 %v6601
  %9702 = vmatpush1.bf16.msra.mxu0 %v6600
  %9703 = vmatprep.subr.bf16.mxu0 %v6605
  %9704 = vmatpush1.bf16.msra.mxu0 %v6604
  %9705 = vmatprep.subr.bf16.mxu0 %v6609
  %9706 = vmatpush1.bf16.msra.mxu0 %v6608
  %9707 = vmatprep.subr.bf16.mxu0 %v6613
  %9708 = vmatpush1.bf16.msra.mxu0 %v6612
  %9709 = vmatprep.subr.bf16.mxu0 %v6617
  %9710 = vmatpush1.bf16.msra.mxu0 %v6616
  %9711 = vmatprep.subr.bf16.mxu0 %v6621
  %9712 = vmatpush1.bf16.msra.mxu0 %v6620
  %9713 = vmatprep.subr.bf16.mxu0 %v6625
  %9714 = vmatpush1.bf16.msra.mxu0 %v6624
  %9715 = vmatprep.subr.bf16.mxu0 %v6629
  %9716 = vmatpush1.bf16.msra.mxu0 %v6628
  %9717 = vmatprep.subr.bf16.mxu0 %v6633
  %9718 = vmatpush1.bf16.msra.mxu0 %v6632
  %9719 = vmatprep.subr.bf16.mxu0 %v6637
  %9720 = vmatpush1.bf16.msra.mxu0 %v6636
  %9721 = vmatprep.mubr.bf16.mxu0 %v1713
  %9722 = vmatmul.mubr.bf16.gmra.mrb[0].mxu0 %v1712
  %v9723 = vpop.f32.mrb[0].mxu0
  %v9724 = vadd.f32 %v9683, %v9723
  %v9725 = vpop.f32.mrb[0].mxu0
  %v9726 = vadd.f32 %v9685, %v9725
  %v9727 = vpop.f32.mrb[0].mxu0
  %v9728 = vpop.f32.mrb[0].mxu0
  %9729 = vdwg.mxu0
  %9730 = vmatprep.subr.bf16.mxu0 %v6641
  %9731 = vmatpush1.bf16.msra.mxu0 %v6640
  %9732 = vmatprep.subr.bf16.mxu0 %v6645
  %9733 = vmatpush1.bf16.msra.mxu0 %v6644
  %9734 = vmatprep.subr.bf16.mxu0 %v6649
  %9735 = vmatpush1.bf16.msra.mxu0 %v6648
  %9736 = vmatprep.subr.bf16.mxu0 %v6653
  %9737 = vmatpush1.bf16.msra.mxu0 %v6652
  %9738 = vmatprep.subr.bf16.mxu0 %v6657
  %9739 = vmatpush1.bf16.msra.mxu0 %v6656
  %9740 = vmatprep.subr.bf16.mxu0 %v6661
  %9741 = vmatpush1.bf16.msra.mxu0 %v6660
  %9742 = vmatprep.subr.bf16.mxu0 %v6665
  %9743 = vmatpush1.bf16.msra.mxu0 %v6664
  %9744 = vmatprep.subr.bf16.mxu0 %v6669
  %9745 = vmatpush1.bf16.msra.mxu0 %v6668
  %9746 = vmatprep.subr.bf16.mxu0 %v6673
  %9747 = vmatpush1.bf16.msra.mxu0 %v6672
  %9748 = vmatprep.subr.bf16.mxu0 %v6677
  %9749 = vmatpush1.bf16.msra.mxu0 %v6676
  %9750 = vmatprep.subr.bf16.mxu0 %v6681
  %9751 = vmatpush1.bf16.msra.mxu0 %v6680
  %9752 = vmatprep.subr.bf16.mxu0 %v6685
  %9753 = vmatpush1.bf16.msra.mxu0 %v6684
  %9754 = vmatprep.subr.bf16.mxu0 %v6689
  %9755 = vmatpush1.bf16.msra.mxu0 %v6688
  %9756 = vmatprep.subr.bf16.mxu0 %v6693
  %9757 = vmatpush1.bf16.msra.mxu0 %v6692
  %9758 = vmatprep.subr.bf16.mxu0 %v6697
  %9759 = vmatpush1.bf16.msra.mxu0 %v6696
  %9760 = vmatprep.subr.bf16.mxu0 %v6701
  %9761 = vmatpush1.bf16.msra.mxu0 %v6700
  %9762 = vmatprep.mubr.bf16.mxu0 %v1715
  %9763 = vmatmul.mubr.bf16.gmra.mrb[0].mxu0 %v1714
  %v9764 = vpop.f32.mrb[0].mxu0
  %v9765 = vadd.f32 %v9724, %v9764
  %v9766 = vpop.f32.mrb[0].mxu0
  %v9767 = vadd.f32 %v9726, %v9766
  %v9768 = vpop.f32.mrb[0].mxu0
  %v9769 = vpop.f32.mrb[0].mxu0
  %9770 = vdwg.mxu0
  %9771 = vmatprep.subr.bf16.mxu0 %v6705
  %9772 = vmatpush1.bf16.msra.mxu0 %v6704
  %9773 = vmatprep.subr.bf16.mxu0 %v6709
  %9774 = vmatpush1.bf16.msra.mxu0 %v6708
  %9775 = vmatprep.subr.bf16.mxu0 %v6713
  %9776 = vmatpush1.bf16.msra.mxu0 %v6712
  %9777 = vmatprep.subr.bf16.mxu0 %v6717
  %9778 = vmatpush1.bf16.msra.mxu0 %v6716
  %9779 = vmatprep.subr.bf16.mxu0 %v6721
  %9780 = vmatpush1.bf16.msra.mxu0 %v6720
  %9781 = vmatprep.subr.bf16.mxu0 %v6725
  %9782 = vmatpush1.bf16.msra.mxu0 %v6724
  %9783 = vmatprep.subr.bf16.mxu0 %v6729
  %9784 = vmatpush1.bf16.msra.mxu0 %v6728
  %9785 = vmatprep.subr.bf16.mxu0 %v6733
  %9786 = vmatpush1.bf16.msra.mxu0 %v6732
  %9787 = vmatprep.subr.bf16.mxu0 %v6737
  %9788 = vmatpush1.bf16.msra.mxu0 %v6736
  %9789 = vmatprep.subr.bf16.mxu0 %v6741
  %9790 = vmatpush1.bf16.msra.mxu0 %v6740
  %9791 = vmatprep.subr.bf16.mxu0 %v6745
  %9792 = vmatpush1.bf16.msra.mxu0 %v6744
  %9793 = vmatprep.subr.bf16.mxu0 %v6749
  %9794 = vmatpush1.bf16.msra.mxu0 %v6748
  %9795 = vmatprep.subr.bf16.mxu0 %v6753
  %9796 = vmatpush1.bf16.msra.mxu0 %v6752
  %9797 = vmatprep.subr.bf16.mxu0 %v6757
  %9798 = vmatpush1.bf16.msra.mxu0 %v6756
  %9799 = vmatprep.subr.bf16.mxu0 %v6761
  %9800 = vmatpush1.bf16.msra.mxu0 %v6760
  %9801 = vmatprep.subr.bf16.mxu0 %v6765
  %9802 = vmatpush1.bf16.msra.mxu0 %v6764
  %9803 = vmatprep.mubr.bf16.mxu0 %v1717
  %9804 = vmatmul.mubr.bf16.gmra.mrb[0].mxu0 %v1716
  %v9805 = vpop.f32.mrb[0].mxu0
  %v9806 = vadd.f32 %v9765, %v9805
  %v9807 = vpop.f32.mrb[0].mxu0
  %v9808 = vadd.f32 %v9767, %v9807
  %v9809 = vpop.f32.mrb[0].mxu0
  %v9810 = vpop.f32.mrb[0].mxu0
  %9811 = vdwg.mxu0
  %9812 = vmatprep.subr.bf16.mxu0 %v6769
  %9813 = vmatpush1.bf16.msra.mxu0 %v6768
  %9814 = vmatprep.subr.bf16.mxu0 %v6773
  %9815 = vmatpush1.bf16.msra.mxu0 %v6772
  %9816 = vmatprep.subr.bf16.mxu0 %v6777
  %9817 = vmatpush1.bf16.msra.mxu0 %v6776
  %9818 = vmatprep.subr.bf16.mxu0 %v6781
  %9819 = vmatpush1.bf16.msra.mxu0 %v6780
  %9820 = vmatprep.subr.bf16.mxu0 %v6785
  %9821 = vmatpush1.bf16.msra.mxu0 %v6784
  %9822 = vmatprep.subr.bf16.mxu0 %v6789
  %9823 = vmatpush1.bf16.msra.mxu0 %v6788
  %9824 = vmatprep.subr.bf16.mxu0 %v6793
  %9825 = vmatpush1.bf16.msra.mxu0 %v6792
  %9826 = vmatprep.subr.bf16.mxu0 %v6797
  %9827 = vmatpush1.bf16.msra.mxu0 %v6796
  %9828 = vmatprep.subr.bf16.mxu0 %v6801
  %9829 = vmatpush1.bf16.msra.mxu0 %v6800
  %9830 = vmatprep.subr.bf16.mxu0 %v6805
  %9831 = vmatpush1.bf16.msra.mxu0 %v6804
  %9832 = vmatprep.subr.bf16.mxu0 %v6809
  %9833 = vmatpush1.bf16.msra.mxu0 %v6808
  %9834 = vmatprep.subr.bf16.mxu0 %v6813
  %9835 = vmatpush1.bf16.msra.mxu0 %v6812
  %9836 = vmatprep.subr.bf16.mxu0 %v6817
  %9837 = vmatpush1.bf16.msra.mxu0 %v6816
  %9838 = vmatprep.subr.bf16.mxu0 %v6821
  %9839 = vmatpush1.bf16.msra.mxu0 %v6820
  %9840 = vmatprep.subr.bf16.mxu0 %v6825
  %9841 = vmatpush1.bf16.msra.mxu0 %v6824
  %9842 = vmatprep.subr.bf16.mxu0 %v6829
  %9843 = vmatpush1.bf16.msra.mxu0 %v6828
  %9844 = vmatprep.mubr.bf16.mxu0 %v1719
  %9845 = vmatmul.mubr.bf16.gmra.mrb[0].mxu0 %v1718
  %v9846 = vpop.f32.mrb[0].mxu0
  %v9847 = vadd.f32 %v9806, %v9846
  %v9848 = vpop.f32.mrb[0].mxu0
  %v9849 = vadd.f32 %v9808, %v9848
  %v9850 = vpop.f32.mrb[0].mxu0
  %v9851 = vpop.f32.mrb[0].mxu0
  %9852 = vdwg.mxu0
  %9853 = vmatprep.subr.bf16.mxu0 %v6833
  %9854 = vmatpush1.bf16.msra.mxu0 %v6832
  %9855 = vmatprep.subr.bf16.mxu0 %v6837
  %9856 = vmatpush1.bf16.msra.mxu0 %v6836
  %9857 = vmatprep.subr.bf16.mxu0 %v6841
  %9858 = vmatpush1.bf16.msra.mxu0 %v6840
  %9859 = vmatprep.subr.bf16.mxu0 %v6845
  %9860 = vmatpush1.bf16.msra.mxu0 %v6844
  %9861 = vmatprep.subr.bf16.mxu0 %v6849
  %9862 = vmatpush1.bf16.msra.mxu0 %v6848
  %9863 = vmatprep.subr.bf16.mxu0 %v6853
  %9864 = vmatpush1.bf16.msra.mxu0 %v6852
  %9865 = vmatprep.subr.bf16.mxu0 %v6857
  %9866 = vmatpush1.bf16.msra.mxu0 %v6856
  %9867 = vmatprep.subr.bf16.mxu0 %v6861
  %9868 = vmatpush1.bf16.msra.mxu0 %v6860
  %9869 = vmatprep.subr.bf16.mxu0 %v6865
  %9870 = vmatpush1.bf16.msra.mxu0 %v6864
  %9871 = vmatprep.subr.bf16.mxu0 %v6869
  %9872 = vmatpush1.bf16.msra.mxu0 %v6868
  %9873 = vmatprep.subr.bf16.mxu0 %v6873
  %9874 = vmatpush1.bf16.msra.mxu0 %v6872
  %9875 = vmatprep.subr.bf16.mxu0 %v6877
  %9876 = vmatpush1.bf16.msra.mxu0 %v6876
  %9877 = vmatprep.subr.bf16.mxu0 %v6881
  %9878 = vmatpush1.bf16.msra.mxu0 %v6880
  %9879 = vmatprep.subr.bf16.mxu0 %v6885
  %9880 = vmatpush1.bf16.msra.mxu0 %v6884
  %9881 = vmatprep.subr.bf16.mxu0 %v6889
  %9882 = vmatpush1.bf16.msra.mxu0 %v6888
  %9883 = vmatprep.subr.bf16.mxu0 %v6893
  %9884 = vmatpush1.bf16.msra.mxu0 %v6892
  %9885 = vmatprep.mubr.bf16.mxu0 %v1721
  %9886 = vmatmul.mubr.bf16.gmra.mrb[0].mxu0 %v1720
  %v9887 = vpop.f32.mrb[0].mxu0
  %v9888 = vadd.f32 %v9847, %v9887
  %v9889 = vpop.f32.mrb[0].mxu0
  %v9890 = vadd.f32 %v9849, %v9889
  %v9891 = vpop.f32.mrb[0].mxu0
  %v9892 = vpop.f32.mrb[0].mxu0
  %9893 = vdwg.mxu0
  %9894 = vmatprep.subr.bf16.mxu0 %v6897
  %9895 = vmatpush1.bf16.msra.mxu0 %v6896
  %9896 = vmatprep.subr.bf16.mxu0 %v6901
  %9897 = vmatpush1.bf16.msra.mxu0 %v6900
  %9898 = vmatprep.subr.bf16.mxu0 %v6905
  %9899 = vmatpush1.bf16.msra.mxu0 %v6904
  %9900 = vmatprep.subr.bf16.mxu0 %v6909
  %9901 = vmatpush1.bf16.msra.mxu0 %v6908
  %9902 = vmatprep.subr.bf16.mxu0 %v6913
  %9903 = vmatpush1.bf16.msra.mxu0 %v6912
  %9904 = vmatprep.subr.bf16.mxu0 %v6917
  %9905 = vmatpush1.bf16.msra.mxu0 %v6916
  %9906 = vmatprep.subr.bf16.mxu0 %v6921
  %9907 = vmatpush1.bf16.msra.mxu0 %v6920
  %9908 = vmatprep.subr.bf16.mxu0 %v6925
  %9909 = vmatpush1.bf16.msra.mxu0 %v6924
  %9910 = vmatprep.subr.bf16.mxu0 %v6929
  %9911 = vmatpush1.bf16.msra.mxu0 %v6928
  %9912 = vmatprep.subr.bf16.mxu0 %v6933
  %9913 = vmatpush1.bf16.msra.mxu0 %v6932
  %9914 = vmatprep.subr.bf16.mxu0 %v6937
  %9915 = vmatpush1.bf16.msra.mxu0 %v6936
  %9916 = vmatprep.subr.bf16.mxu0 %v6941
  %9917 = vmatpush1.bf16.msra.mxu0 %v6940
  %9918 = vmatprep.subr.bf16.mxu0 %v6945
  %9919 = vmatpush1.bf16.msra.mxu0 %v6944
  %9920 = vmatprep.subr.bf16.mxu0 %v6949
  %9921 = vmatpush1.bf16.msra.mxu0 %v6948
  %9922 = vmatprep.subr.bf16.mxu0 %v6953
  %9923 = vmatpush1.bf16.msra.mxu0 %v6952
  %9924 = vmatprep.subr.bf16.mxu0 %v6957
  %9925 = vmatpush1.bf16.msra.mxu0 %v6956
  %9926 = vmatprep.mubr.bf16.mxu0 %v1723
  %9927 = vmatmul.mubr.bf16.gmra.mrb[0].mxu0 %v1722
  %v9928 = vpop.f32.mrb[0].mxu0
  %v9929 = vadd.f32 %v9888, %v9928
  %v9930 = vpop.f32.mrb[0].mxu0
  %v9931 = vadd.f32 %v9890, %v9930
  %v9932 = vpop.f32.mrb[0].mxu0
  %v9933 = vpop.f32.mrb[0].mxu0
  %9934 = vdwg.mxu0
  %9935 = vmatprep.subr.bf16.mxu0 %v6961
  %9936 = vmatpush1.bf16.msra.mxu0 %v6960
  %9937 = vmatprep.subr.bf16.mxu0 %v6965
  %9938 = vmatpush1.bf16.msra.mxu0 %v6964
  %9939 = vmatprep.subr.bf16.mxu0 %v6969
  %9940 = vmatpush1.bf16.msra.mxu0 %v6968
  %9941 = vmatprep.subr.bf16.mxu0 %v6973
  %9942 = vmatpush1.bf16.msra.mxu0 %v6972
  %9943 = vmatprep.subr.bf16.mxu0 %v6977
  %9944 = vmatpush1.bf16.msra.mxu0 %v6976
  %9945 = vmatprep.subr.bf16.mxu0 %v6981
  %9946 = vmatpush1.bf16.msra.mxu0 %v6980
  %9947 = vmatprep.subr.bf16.mxu0 %v6985
  %9948 = vmatpush1.bf16.msra.mxu0 %v6984
  %9949 = vmatprep.subr.bf16.mxu0 %v6989
  %9950 = vmatpush1.bf16.msra.mxu0 %v6988
  %9951 = vmatprep.subr.bf16.mxu0 %v6993
  %9952 = vmatpush1.bf16.msra.mxu0 %v6992
  %9953 = vmatprep.subr.bf16.mxu0 %v6997
  %9954 = vmatpush1.bf16.msra.mxu0 %v6996
  %9955 = vmatprep.subr.bf16.mxu0 %v7001
  %9956 = vmatpush1.bf16.msra.mxu0 %v7000
  %9957 = vmatprep.subr.bf16.mxu0 %v7005
  %9958 = vmatpush1.bf16.msra.mxu0 %v7004
  %9959 = vmatprep.subr.bf16.mxu0 %v7009
  %9960 = vmatpush1.bf16.msra.mxu0 %v7008
  %9961 = vmatprep.subr.bf16.mxu0 %v7013
  %9962 = vmatpush1.bf16.msra.mxu0 %v7012
  %9963 = vmatprep.subr.bf16.mxu0 %v7017
  %9964 = vmatpush1.bf16.msra.mxu0 %v7016
  %9965 = vmatprep.subr.bf16.mxu0 %v7021
  %9966 = vmatpush1.bf16.msra.mxu0 %v7020
  %9967 = vmatprep.mubr.bf16.mxu0 %v1725
  %9968 = vmatmul.mubr.bf16.gmra.mrb[0].mxu0 %v1724
  %v9969 = vpop.f32.mrb[0].mxu0
  %v9970 = vadd.f32 %v9929, %v9969
  %v9971 = vpop.f32.mrb[0].mxu0
  %v9972 = vadd.f32 %v9931, %v9971
  %v9973 = vpop.f32.mrb[0].mxu0
  %v9974 = vpop.f32.mrb[0].mxu0
  %9975 = vdwg.mxu0
  %9976 = vmatprep.subr.bf16.mxu0 %v7025
  %9977 = vmatpush1.bf16.msra.mxu0 %v7024
  %9978 = vmatprep.subr.bf16.mxu0 %v7029
  %9979 = vmatpush1.bf16.msra.mxu0 %v7028
  %9980 = vmatprep.subr.bf16.mxu0 %v7033
  %9981 = vmatpush1.bf16.msra.mxu0 %v7032
  %9982 = vmatprep.subr.bf16.mxu0 %v7037
  %9983 = vmatpush1.bf16.msra.mxu0 %v7036
  %9984 = vmatprep.subr.bf16.mxu0 %v7041
  %9985 = vmatpush1.bf16.msra.mxu0 %v7040
  %9986 = vmatprep.subr.bf16.mxu0 %v7045
  %9987 = vmatpush1.bf16.msra.mxu0 %v7044
  %9988 = vmatprep.subr.bf16.mxu0 %v7049
  %9989 = vmatpush1.bf16.msra.mxu0 %v7048
  %9990 = vmatprep.subr.bf16.mxu0 %v7053
  %9991 = vmatpush1.bf16.msra.mxu0 %v7052
  %9992 = vmatprep.subr.bf16.mxu0 %v7057
  %9993 = vmatpush1.bf16.msra.mxu0 %v7056
  %9994 = vmatprep.subr.bf16.mxu0 %v7061
  %9995 = vmatpush1.bf16.msra.mxu0 %v7060
  %9996 = vmatprep.subr.bf16.mxu0 %v7065
  %9997 = vmatpush1.bf16.msra.mxu0 %v7064
  %9998 = vmatprep.subr.bf16.mxu0 %v7069
  %9999 = vmatpush1.bf16.msra.mxu0 %v7068
  %10000 = vmatprep.subr.bf16.mxu0 %v7073
  %10001 = vmatpush1.bf16.msra.mxu0 %v7072
  %10002 = vmatprep.subr.bf16.mxu0 %v7077
  %10003 = vmatpush1.bf16.msra.mxu0 %v7076
  %10004 = vmatprep.subr.bf16.mxu0 %v7081
  %10005 = vmatpush1.bf16.msra.mxu0 %v7080
  %10006 = vmatprep.subr.bf16.mxu0 %v7085
  %10007 = vmatpush1.bf16.msra.mxu0 %v7084
  %10008 = vmatprep.mubr.bf16.mxu0 %v1727
  %10009 = vmatmul.mubr.bf16.gmra.mrb[0].mxu0 %v1726
  %v10010 = vpop.f32.mrb[0].mxu0
  %v10011 = vadd.f32 %v9970, %v10010
  %v10012 = vpop.f32.mrb[0].mxu0
  %v10013 = vadd.f32 %v9972, %v10012
  %v10014 = vpop.f32.mrb[0].mxu0
  %v10015 = vpop.f32.mrb[0].mxu0
  %10016 = vdwg.mxu0
  %10017 = vmatprep.subr.bf16.mxu0 %v7089
  %10018 = vmatpush1.bf16.msra.mxu0 %v7088
  %10019 = vmatprep.subr.bf16.mxu0 %v7093
  %10020 = vmatpush1.bf16.msra.mxu0 %v7092
  %10021 = vmatprep.subr.bf16.mxu0 %v7097
  %10022 = vmatpush1.bf16.msra.mxu0 %v7096
  %10023 = vmatprep.subr.bf16.mxu0 %v7101
  %10024 = vmatpush1.bf16.msra.mxu0 %v7100
  %10025 = vmatprep.subr.bf16.mxu0 %v7105
  %10026 = vmatpush1.bf16.msra.mxu0 %v7104
  %10027 = vmatprep.subr.bf16.mxu0 %v7109
  %10028 = vmatpush1.bf16.msra.mxu0 %v7108
  %10029 = vmatprep.subr.bf16.mxu0 %v7113
  %10030 = vmatpush1.bf16.msra.mxu0 %v7112
  %10031 = vmatprep.subr.bf16.mxu0 %v7117
  %10032 = vmatpush1.bf16.msra.mxu0 %v7116
  %10033 = vmatprep.subr.bf16.mxu0 %v7121
  %10034 = vmatpush1.bf16.msra.mxu0 %v7120
  %10035 = vmatprep.subr.bf16.mxu0 %v7125
  %10036 = vmatpush1.bf16.msra.mxu0 %v7124
  %10037 = vmatprep.subr.bf16.mxu0 %v7129
  %10038 = vmatpush1.bf16.msra.mxu0 %v7128
  %10039 = vmatprep.subr.bf16.mxu0 %v7133
  %10040 = vmatpush1.bf16.msra.mxu0 %v7132
  %10041 = vmatprep.subr.bf16.mxu0 %v7137
  %10042 = vmatpush1.bf16.msra.mxu0 %v7136
  %10043 = vmatprep.subr.bf16.mxu0 %v7141
  %10044 = vmatpush1.bf16.msra.mxu0 %v7140
  %10045 = vmatprep.subr.bf16.mxu0 %v7145
  %10046 = vmatpush1.bf16.msra.mxu0 %v7144
  %10047 = vmatprep.subr.bf16.mxu0 %v7149
  %10048 = vmatpush1.bf16.msra.mxu0 %v7148
  %10049 = vmatprep.mubr.bf16.mxu0 %v1729
  %10050 = vmatmul.mubr.bf16.gmra.mrb[0].mxu0 %v1728
  %v10051 = vpop.f32.mrb[0].mxu0
  %v10052 = vadd.f32 %v10011, %v10051
  %v10053 = vpop.f32.mrb[0].mxu0
  %v10054 = vadd.f32 %v10013, %v10053
  %v10055 = vpop.f32.mrb[0].mxu0
  %v10056 = vpop.f32.mrb[0].mxu0
  %10057 = vdwg.mxu0
  %10058 = vmatprep.subr.bf16.mxu0 %v7153
  %10059 = vmatpush1.bf16.msra.mxu0 %v7152
  %10060 = vmatprep.subr.bf16.mxu0 %v7157
  %10061 = vmatpush1.bf16.msra.mxu0 %v7156
  %10062 = vmatprep.subr.bf16.mxu0 %v7161
  %10063 = vmatpush1.bf16.msra.mxu0 %v7160
  %10064 = vmatprep.subr.bf16.mxu0 %v7165
  %10065 = vmatpush1.bf16.msra.mxu0 %v7164
  %10066 = vmatprep.subr.bf16.mxu0 %v7169
  %10067 = vmatpush1.bf16.msra.mxu0 %v7168
  %10068 = vmatprep.subr.bf16.mxu0 %v7173
  %10069 = vmatpush1.bf16.msra.mxu0 %v7172
  %10070 = vmatprep.subr.bf16.mxu0 %v7177
  %10071 = vmatpush1.bf16.msra.mxu0 %v7176
  %10072 = vmatprep.subr.bf16.mxu0 %v7181
  %10073 = vmatpush1.bf16.msra.mxu0 %v7180
  %10074 = vmatprep.subr.bf16.mxu0 %v7185
  %10075 = vmatpush1.bf16.msra.mxu0 %v7184
  %10076 = vmatprep.subr.bf16.mxu0 %v7189
  %10077 = vmatpush1.bf16.msra.mxu0 %v7188
  %10078 = vmatprep.subr.bf16.mxu0 %v7193
  %10079 = vmatpush1.bf16.msra.mxu0 %v7192
  %10080 = vmatprep.subr.bf16.mxu0 %v7197
  %10081 = vmatpush1.bf16.msra.mxu0 %v7196
  %10082 = vmatprep.subr.bf16.mxu0 %v7201
  %10083 = vmatpush1.bf16.msra.mxu0 %v7200
  %10084 = vmatprep.subr.bf16.mxu0 %v7205
  %10085 = vmatpush1.bf16.msra.mxu0 %v7204
  %10086 = vmatprep.subr.bf16.mxu0 %v7209
  %10087 = vmatpush1.bf16.msra.mxu0 %v7208
  %10088 = vmatprep.subr.bf16.mxu0 %v7213
  %10089 = vmatpush1.bf16.msra.mxu0 %v7212
  %10090 = vmatprep.mubr.bf16.mxu0 %v1731
  %10091 = vmatmul.mubr.bf16.gmra.mrb[0].mxu0 %v1730
  %v10092 = vpop.f32.mrb[0].mxu0
  %v10093 = vadd.f32 %v10052, %v10092
  %v10094 = vpop.f32.mrb[0].mxu0
  %v10095 = vadd.f32 %v10054, %v10094
  %v10096 = vpop.f32.mrb[0].mxu0
  %v10097 = vpop.f32.mrb[0].mxu0
  %10098 = vdwg.mxu0
  %10099 = vmatprep.subr.bf16.mxu0 %v7217
  %10100 = vmatpush1.bf16.msra.mxu0 %v7216
  %10101 = vmatprep.subr.bf16.mxu0 %v7221
  %10102 = vmatpush1.bf16.msra.mxu0 %v7220
  %10103 = vmatprep.subr.bf16.mxu0 %v7225
  %10104 = vmatpush1.bf16.msra.mxu0 %v7224
  %10105 = vmatprep.subr.bf16.mxu0 %v7229
  %10106 = vmatpush1.bf16.msra.mxu0 %v7228
  %10107 = vmatprep.subr.bf16.mxu0 %v7233
  %10108 = vmatpush1.bf16.msra.mxu0 %v7232
  %10109 = vmatprep.subr.bf16.mxu0 %v7237
  %10110 = vmatpush1.bf16.msra.mxu0 %v7236
  %10111 = vmatprep.subr.bf16.mxu0 %v7241
  %10112 = vmatpush1.bf16.msra.mxu0 %v7240
  %10113 = vmatprep.subr.bf16.mxu0 %v7245
  %10114 = vmatpush1.bf16.msra.mxu0 %v7244
  %10115 = vmatprep.subr.bf16.mxu0 %v7249
  %10116 = vmatpush1.bf16.msra.mxu0 %v7248
  %10117 = vmatprep.subr.bf16.mxu0 %v7253
  %10118 = vmatpush1.bf16.msra.mxu0 %v7252
  %10119 = vmatprep.subr.bf16.mxu0 %v7257
  %10120 = vmatpush1.bf16.msra.mxu0 %v7256
  %10121 = vmatprep.subr.bf16.mxu0 %v7261
  %10122 = vmatpush1.bf16.msra.mxu0 %v7260
  %10123 = vmatprep.subr.bf16.mxu0 %v7265
  %10124 = vmatpush1.bf16.msra.mxu0 %v7264
  %10125 = vmatprep.subr.bf16.mxu0 %v7269
  %10126 = vmatpush1.bf16.msra.mxu0 %v7268
  %10127 = vmatprep.subr.bf16.mxu0 %v7273
  %10128 = vmatpush1.bf16.msra.mxu0 %v7272
  %10129 = vmatprep.subr.bf16.mxu0 %v7277
  %10130 = vmatpush1.bf16.msra.mxu0 %v7276
  %10131 = vmatprep.mubr.bf16.mxu0 %v1733
  %10132 = vmatmul.mubr.bf16.gmra.mrb[0].mxu0 %v1732
  %v10133 = vpop.f32.mrb[0].mxu0
  %v10134 = vadd.f32 %v10093, %v10133
  %v10135 = vpop.f32.mrb[0].mxu0
  %v10136 = vadd.f32 %v10095, %v10135
  %v10137 = vpop.f32.mrb[0].mxu0
  %v10138 = vpop.f32.mrb[0].mxu0
  %10139 = vdwg.mxu0
  %10140 = vmatprep.subr.bf16.mxu0 %v7281
  %10141 = vmatpush1.bf16.msra.mxu0 %v7280
  %10142 = vmatprep.subr.bf16.mxu0 %v7285
  %10143 = vmatpush1.bf16.msra.mxu0 %v7284
  %10144 = vmatprep.subr.bf16.mxu0 %v7289
  %10145 = vmatpush1.bf16.msra.mxu0 %v7288
  %10146 = vmatprep.subr.bf16.mxu0 %v7293
  %10147 = vmatpush1.bf16.msra.mxu0 %v7292
  %10148 = vmatprep.subr.bf16.mxu0 %v7297
  %10149 = vmatpush1.bf16.msra.mxu0 %v7296
  %10150 = vmatprep.subr.bf16.mxu0 %v7301
  %10151 = vmatpush1.bf16.msra.mxu0 %v7300
  %10152 = vmatprep.subr.bf16.mxu0 %v7305
  %10153 = vmatpush1.bf16.msra.mxu0 %v7304
  %10154 = vmatprep.subr.bf16.mxu0 %v7309
  %10155 = vmatpush1.bf16.msra.mxu0 %v7308
  %10156 = vmatprep.subr.bf16.mxu0 %v7313
  %10157 = vmatpush1.bf16.msra.mxu0 %v7312
  %10158 = vmatprep.subr.bf16.mxu0 %v7317
  %10159 = vmatpush1.bf16.msra.mxu0 %v7316
  %10160 = vmatprep.subr.bf16.mxu0 %v7321
  %10161 = vmatpush1.bf16.msra.mxu0 %v7320
  %10162 = vmatprep.subr.bf16.mxu0 %v7325
  %10163 = vmatpush1.bf16.msra.mxu0 %v7324
  %10164 = vmatprep.subr.bf16.mxu0 %v7329
  %10165 = vmatpush1.bf16.msra.mxu0 %v7328
  %10166 = vmatprep.subr.bf16.mxu0 %v7333
  %10167 = vmatpush1.bf16.msra.mxu0 %v7332
  %10168 = vmatprep.subr.bf16.mxu0 %v7337
  %10169 = vmatpush1.bf16.msra.mxu0 %v7336
  %10170 = vmatprep.subr.bf16.mxu0 %v7341
  %10171 = vmatpush1.bf16.msra.mxu0 %v7340
  %10172 = vmatprep.mubr.bf16.mxu0 %v1735
  %10173 = vmatmul.mubr.bf16.gmra.mrb[0].mxu0 %v1734
  %v10174 = vpop.f32.mrb[0].mxu0
  %v10175 = vadd.f32 %v10134, %v10174
  %v10176 = vpop.f32.mrb[0].mxu0
  %v10177 = vadd.f32 %v10136, %v10176
  %v10178 = vpop.f32.mrb[0].mxu0
  %v10179 = vpop.f32.mrb[0].mxu0
  %10180 = vdwg.mxu0
  %10181 = vmatprep.subr.bf16.mxu0 %v7345
  %10182 = vmatpush1.bf16.msra.mxu0 %v7344
  %10183 = vmatprep.subr.bf16.mxu0 %v7349
  %10184 = vmatpush1.bf16.msra.mxu0 %v7348
  %10185 = vmatprep.subr.bf16.mxu0 %v7353
  %10186 = vmatpush1.bf16.msra.mxu0 %v7352
  %10187 = vmatprep.subr.bf16.mxu0 %v7357
  %10188 = vmatpush1.bf16.msra.mxu0 %v7356
  %10189 = vmatprep.subr.bf16.mxu0 %v7361
  %10190 = vmatpush1.bf16.msra.mxu0 %v7360
  %10191 = vmatprep.subr.bf16.mxu0 %v7365
  %10192 = vmatpush1.bf16.msra.mxu0 %v7364
  %10193 = vmatprep.subr.bf16.mxu0 %v7369
  %10194 = vmatpush1.bf16.msra.mxu0 %v7368
  %10195 = vmatprep.subr.bf16.mxu0 %v7373
  %10196 = vmatpush1.bf16.msra.mxu0 %v7372
  %10197 = vmatprep.subr.bf16.mxu0 %v7377
  %10198 = vmatpush1.bf16.msra.mxu0 %v7376
  %10199 = vmatprep.subr.bf16.mxu0 %v7381
  %10200 = vmatpush1.bf16.msra.mxu0 %v7380
  %10201 = vmatprep.subr.bf16.mxu0 %v7385
  %10202 = vmatpush1.bf16.msra.mxu0 %v7384
  %10203 = vmatprep.subr.bf16.mxu0 %v7389
  %10204 = vmatpush1.bf16.msra.mxu0 %v7388
  %10205 = vmatprep.subr.bf16.mxu0 %v7393
  %10206 = vmatpush1.bf16.msra.mxu0 %v7392
  %10207 = vmatprep.subr.bf16.mxu0 %v7397
  %10208 = vmatpush1.bf16.msra.mxu0 %v7396
  %10209 = vmatprep.subr.bf16.mxu0 %v7401
  %10210 = vmatpush1.bf16.msra.mxu0 %v7400
  %10211 = vmatprep.subr.bf16.mxu0 %v7405
  %10212 = vmatpush1.bf16.msra.mxu0 %v7404
  %10213 = vmatprep.mubr.bf16.mxu0 %v1737
  %10214 = vmatmul.mubr.bf16.gmra.mrb[0].mxu0 %v1736
  %v10215 = vpop.f32.mrb[0].mxu0
  %v10216 = vadd.f32 %v10175, %v10215
  %v10217 = vpop.f32.mrb[0].mxu0
  %v10218 = vadd.f32 %v10177, %v10217
  %v10219 = vpop.f32.mrb[0].mxu0
  %v10220 = vpop.f32.mrb[0].mxu0
  %10221 = vdwg.mxu0
  %10222 = vmatprep.subr.bf16.mxu0 %v7409
  %10223 = vmatpush1.bf16.msra.mxu0 %v7408
  %10224 = vmatprep.subr.bf16.mxu0 %v7413
  %10225 = vmatpush1.bf16.msra.mxu0 %v7412
  %10226 = vmatprep.subr.bf16.mxu0 %v7417
  %10227 = vmatpush1.bf16.msra.mxu0 %v7416
  %10228 = vmatprep.subr.bf16.mxu0 %v7421
  %10229 = vmatpush1.bf16.msra.mxu0 %v7420
  %10230 = vmatprep.subr.bf16.mxu0 %v7425
  %10231 = vmatpush1.bf16.msra.mxu0 %v7424
  %10232 = vmatprep.subr.bf16.mxu0 %v7429
  %10233 = vmatpush1.bf16.msra.mxu0 %v7428
  %10234 = vmatprep.subr.bf16.mxu0 %v7433
  %10235 = vmatpush1.bf16.msra.mxu0 %v7432
  %10236 = vmatprep.subr.bf16.mxu0 %v7437
  %10237 = vmatpush1.bf16.msra.mxu0 %v7436
  %10238 = vmatprep.subr.bf16.mxu0 %v7441
  %10239 = vmatpush1.bf16.msra.mxu0 %v7440
  %10240 = vmatprep.subr.bf16.mxu0 %v7445
  %10241 = vmatpush1.bf16.msra.mxu0 %v7444
  %10242 = vmatprep.subr.bf16.mxu0 %v7449
  %10243 = vmatpush1.bf16.msra.mxu0 %v7448
  %10244 = vmatprep.subr.bf16.mxu0 %v7453
  %10245 = vmatpush1.bf16.msra.mxu0 %v7452
  %10246 = vmatprep.subr.bf16.mxu0 %v7457
  %10247 = vmatpush1.bf16.msra.mxu0 %v7456
  %10248 = vmatprep.subr.bf16.mxu0 %v7461
  %10249 = vmatpush1.bf16.msra.mxu0 %v7460
  %10250 = vmatprep.subr.bf16.mxu0 %v7465
  %10251 = vmatpush1.bf16.msra.mxu0 %v7464
  %10252 = vmatprep.subr.bf16.mxu0 %v7469
  %10253 = vmatpush1.bf16.msra.mxu0 %v7468
  %10254 = vmatprep.mubr.bf16.mxu0 %v1739
  %10255 = vmatmul.mubr.bf16.gmra.mrb[0].mxu0 %v1738
  %v10256 = vpop.f32.mrb[0].mxu0
  %v10257 = vadd.f32 %v10216, %v10256
  %v10258 = vpop.f32.mrb[0].mxu0
  %v10259 = vadd.f32 %v10218, %v10258
  %v10260 = vpop.f32.mrb[0].mxu0
  %v10261 = vpop.f32.mrb[0].mxu0
  %10262 = vdwg.mxu0
  %10263 = vmatprep.subr.bf16.mxu0 %v7473
  %10264 = vmatpush1.bf16.msra.mxu0 %v7472
  %10265 = vmatprep.subr.bf16.mxu0 %v7477
  %10266 = vmatpush1.bf16.msra.mxu0 %v7476
  %10267 = vmatprep.subr.bf16.mxu0 %v7481
  %10268 = vmatpush1.bf16.msra.mxu0 %v7480
  %10269 = vmatprep.subr.bf16.mxu0 %v7485
  %10270 = vmatpush1.bf16.msra.mxu0 %v7484
  %10271 = vmatprep.subr.bf16.mxu0 %v7489
  %10272 = vmatpush1.bf16.msra.mxu0 %v7488
  %10273 = vmatprep.subr.bf16.mxu0 %v7493
  %10274 = vmatpush1.bf16.msra.mxu0 %v7492
  %10275 = vmatprep.subr.bf16.mxu0 %v7497
  %10276 = vmatpush1.bf16.msra.mxu0 %v7496
  %10277 = vmatprep.subr.bf16.mxu0 %v7501
  %10278 = vmatpush1.bf16.msra.mxu0 %v7500
  %10279 = vmatprep.subr.bf16.mxu0 %v7505
  %10280 = vmatpush1.bf16.msra.mxu0 %v7504
  %10281 = vmatprep.subr.bf16.mxu0 %v7509
  %10282 = vmatpush1.bf16.msra.mxu0 %v7508
  %10283 = vmatprep.subr.bf16.mxu0 %v7513
  %10284 = vmatpush1.bf16.msra.mxu0 %v7512
  %10285 = vmatprep.subr.bf16.mxu0 %v7517
  %10286 = vmatpush1.bf16.msra.mxu0 %v7516
  %10287 = vmatprep.subr.bf16.mxu0 %v7521
  %10288 = vmatpush1.bf16.msra.mxu0 %v7520
  %10289 = vmatprep.subr.bf16.mxu0 %v7525
  %10290 = vmatpush1.bf16.msra.mxu0 %v7524
  %10291 = vmatprep.subr.bf16.mxu0 %v7529
  %10292 = vmatpush1.bf16.msra.mxu0 %v7528
  %10293 = vmatprep.subr.bf16.mxu0 %v7533
  %10294 = vmatpush1.bf16.msra.mxu0 %v7532
  %10295 = vmatprep.mubr.bf16.mxu0 %v1741
  %10296 = vmatmul.mubr.bf16.gmra.mrb[0].mxu0 %v1740
  %v10297 = vpop.f32.mrb[0].mxu0
  %v10298 = vadd.f32 %v10257, %v10297
  %v10299 = vpop.f32.mrb[0].mxu0
  %v10300 = vadd.f32 %v10259, %v10299
  %v10301 = vpop.f32.mrb[0].mxu0
  %v10302 = vpop.f32.mrb[0].mxu0
  %10303 = vdwg.mxu0
  %10304 = vmatprep.subr.bf16.mxu0 %v7537
  %10305 = vmatpush1.bf16.msra.mxu0 %v7536
  %10306 = vmatprep.subr.bf16.mxu0 %v7541
  %10307 = vmatpush1.bf16.msra.mxu0 %v7540
  %10308 = vmatprep.subr.bf16.mxu0 %v7545
  %10309 = vmatpush1.bf16.msra.mxu0 %v7544
  %10310 = vmatprep.subr.bf16.mxu0 %v7549
  %10311 = vmatpush1.bf16.msra.mxu0 %v7548
  %10312 = vmatprep.subr.bf16.mxu0 %v7553
  %10313 = vmatpush1.bf16.msra.mxu0 %v7552
  %10314 = vmatprep.subr.bf16.mxu0 %v7557
  %10315 = vmatpush1.bf16.msra.mxu0 %v7556
  %10316 = vmatprep.subr.bf16.mxu0 %v7561
  %10317 = vmatpush1.bf16.msra.mxu0 %v7560
  %10318 = vmatprep.subr.bf16.mxu0 %v7565
  %10319 = vmatpush1.bf16.msra.mxu0 %v7564
  %10320 = vmatprep.subr.bf16.mxu0 %v7569
  %10321 = vmatpush1.bf16.msra.mxu0 %v7568
  %10322 = vmatprep.subr.bf16.mxu0 %v7573
  %10323 = vmatpush1.bf16.msra.mxu0 %v7572
  %10324 = vmatprep.subr.bf16.mxu0 %v7577
  %10325 = vmatpush1.bf16.msra.mxu0 %v7576
  %10326 = vmatprep.subr.bf16.mxu0 %v7581
  %10327 = vmatpush1.bf16.msra.mxu0 %v7580
  %10328 = vmatprep.subr.bf16.mxu0 %v7585
  %10329 = vmatpush1.bf16.msra.mxu0 %v7584
  %10330 = vmatprep.subr.bf16.mxu0 %v7589
  %10331 = vmatpush1.bf16.msra.mxu0 %v7588
  %10332 = vmatprep.subr.bf16.mxu0 %v7593
  %10333 = vmatpush1.bf16.msra.mxu0 %v7592
  %10334 = vmatprep.subr.bf16.mxu0 %v7597
  %10335 = vmatpush1.bf16.msra.mxu0 %v7596
  %10336 = vmatprep.mubr.bf16.mxu0 %v1743
  %10337 = vmatmul.mubr.bf16.gmra.mrb[0].mxu0 %v1742
  %v10338 = vpop.f32.mrb[0].mxu0
  %v10339 = vadd.f32 %v10298, %v10338
  %v10340 = vpop.f32.mrb[0].mxu0
  %v10341 = vadd.f32 %v10300, %v10340
  %v10342 = vpop.f32.mrb[0].mxu0
  %v10343 = vpop.f32.mrb[0].mxu0
  %10344 = vdwg.mxu0
  %10345 = vmatprep.subr.bf16.mxu0 %v7601
  %10346 = vmatpush1.bf16.msra.mxu0 %v7600
  %10347 = vmatprep.subr.bf16.mxu0 %v7605
  %10348 = vmatpush1.bf16.msra.mxu0 %v7604
  %10349 = vmatprep.subr.bf16.mxu0 %v7609
  %10350 = vmatpush1.bf16.msra.mxu0 %v7608
  %10351 = vmatprep.subr.bf16.mxu0 %v7613
  %10352 = vmatpush1.bf16.msra.mxu0 %v7612
  %10353 = vmatprep.subr.bf16.mxu0 %v7617
  %10354 = vmatpush1.bf16.msra.mxu0 %v7616
  %10355 = vmatprep.subr.bf16.mxu0 %v7621
  %10356 = vmatpush1.bf16.msra.mxu0 %v7620
  %10357 = vmatprep.subr.bf16.mxu0 %v7625
  %10358 = vmatpush1.bf16.msra.mxu0 %v7624
  %10359 = vmatprep.subr.bf16.mxu0 %v7629
  %10360 = vmatpush1.bf16.msra.mxu0 %v7628
  %10361 = vmatprep.subr.bf16.mxu0 %v7633
  %10362 = vmatpush1.bf16.msra.mxu0 %v7632
  %10363 = vmatprep.subr.bf16.mxu0 %v7637
  %10364 = vmatpush1.bf16.msra.mxu0 %v7636
  %10365 = vmatprep.subr.bf16.mxu0 %v7641
  %10366 = vmatpush1.bf16.msra.mxu0 %v7640
  %10367 = vmatprep.subr.bf16.mxu0 %v7645
  %10368 = vmatpush1.bf16.msra.mxu0 %v7644
  %10369 = vmatprep.subr.bf16.mxu0 %v7649
  %10370 = vmatpush1.bf16.msra.mxu0 %v7648
  %10371 = vmatprep.subr.bf16.mxu0 %v7653
  %10372 = vmatpush1.bf16.msra.mxu0 %v7652
  %10373 = vmatprep.subr.bf16.mxu0 %v7657
  %10374 = vmatpush1.bf16.msra.mxu0 %v7656
  %10375 = vmatprep.subr.bf16.mxu0 %v7661
  %10376 = vmatpush1.bf16.msra.mxu0 %v7660
  %10377 = vmatprep.mubr.bf16.mxu0 %v1745
  %10378 = vmatmul.mubr.bf16.gmra.mrb[0].mxu0 %v1744
  %v10379 = vpop.f32.mrb[0].mxu0
  %v10380 = vadd.f32 %v10339, %v10379
  %v10381 = vpop.f32.mrb[0].mxu0
  %v10382 = vadd.f32 %v10341, %v10381
  %v10383 = vpop.f32.mrb[0].mxu0
  %v10384 = vpop.f32.mrb[0].mxu0
  %10385 = vdwg.mxu0
  %10386 = vmatprep.subr.bf16.mxu0 %v7665
  %10387 = vmatpush1.bf16.msra.mxu0 %v7664
  %10388 = vmatprep.subr.bf16.mxu0 %v7669
  %10389 = vmatpush1.bf16.msra.mxu0 %v7668
  %10390 = vmatprep.subr.bf16.mxu0 %v7673
  %10391 = vmatpush1.bf16.msra.mxu0 %v7672
  %10392 = vmatprep.subr.bf16.mxu0 %v7677
  %10393 = vmatpush1.bf16.msra.mxu0 %v7676
  %10394 = vmatprep.subr.bf16.mxu0 %v7681
  %10395 = vmatpush1.bf16.msra.mxu0 %v7680
  %10396 = vmatprep.subr.bf16.mxu0 %v7685
  %10397 = vmatpush1.bf16.msra.mxu0 %v7684
  %10398 = vmatprep.subr.bf16.mxu0 %v7689
  %10399 = vmatpush1.bf16.msra.mxu0 %v7688
  %10400 = vmatprep.subr.bf16.mxu0 %v7693
  %10401 = vmatpush1.bf16.msra.mxu0 %v7692
  %10402 = vmatprep.subr.bf16.mxu0 %v7697
  %10403 = vmatpush1.bf16.msra.mxu0 %v7696
  %10404 = vmatprep.subr.bf16.mxu0 %v7701
  %10405 = vmatpush1.bf16.msra.mxu0 %v7700
  %10406 = vmatprep.subr.bf16.mxu0 %v7705
  %10407 = vmatpush1.bf16.msra.mxu0 %v7704
  %10408 = vmatprep.subr.bf16.mxu0 %v7709
  %10409 = vmatpush1.bf16.msra.mxu0 %v7708
  %10410 = vmatprep.subr.bf16.mxu0 %v7713
  %10411 = vmatpush1.bf16.msra.mxu0 %v7712
  %10412 = vmatprep.subr.bf16.mxu0 %v7717
  %10413 = vmatpush1.bf16.msra.mxu0 %v7716
  %10414 = vmatprep.subr.bf16.mxu0 %v7721
  %10415 = vmatpush1.bf16.msra.mxu0 %v7720
  %10416 = vmatprep.subr.bf16.mxu0 %v7725
  %10417 = vmatpush1.bf16.msra.mxu0 %v7724
  %10418 = vmatprep.mubr.bf16.mxu0 %v1747
  %10419 = vmatmul.mubr.bf16.gmra.mrb[0].mxu0 %v1746
  %v10420 = vpop.f32.mrb[0].mxu0
  %v10421 = vadd.f32 %v10380, %v10420
  %v10422 = vpop.f32.mrb[0].mxu0
  %v10423 = vadd.f32 %v10382, %v10422
  %v10424 = vpop.f32.mrb[0].mxu0
  %v10425 = vpop.f32.mrb[0].mxu0
  %10426 = vdwg.mxu0
  %10427 = vmatprep.subr.bf16.mxu0 %v7729
  %10428 = vmatpush1.bf16.msra.mxu0 %v7728
  %10429 = vmatprep.subr.bf16.mxu0 %v7733
  %10430 = vmatpush1.bf16.msra.mxu0 %v7732
  %10431 = vmatprep.subr.bf16.mxu0 %v7737
  %10432 = vmatpush1.bf16.msra.mxu0 %v7736
  %10433 = vmatprep.subr.bf16.mxu0 %v7741
  %10434 = vmatpush1.bf16.msra.mxu0 %v7740
  %10435 = vmatprep.subr.bf16.mxu0 %v7745
  %10436 = vmatpush1.bf16.msra.mxu0 %v7744
  %10437 = vmatprep.subr.bf16.mxu0 %v7749
  %10438 = vmatpush1.bf16.msra.mxu0 %v7748
  %10439 = vmatprep.subr.bf16.mxu0 %v7753
  %10440 = vmatpush1.bf16.msra.mxu0 %v7752
  %10441 = vmatprep.subr.bf16.mxu0 %v7757
  %10442 = vmatpush1.bf16.msra.mxu0 %v7756
  %10443 = vmatprep.subr.bf16.mxu0 %v7761
  %10444 = vmatpush1.bf16.msra.mxu0 %v7760
  %10445 = vmatprep.subr.bf16.mxu0 %v7765
  %10446 = vmatpush1.bf16.msra.mxu0 %v7764
  %10447 = vmatprep.subr.bf16.mxu0 %v7769
  %10448 = vmatpush1.bf16.msra.mxu0 %v7768
  %10449 = vmatprep.subr.bf16.mxu0 %v7773
  %10450 = vmatpush1.bf16.msra.mxu0 %v7772
  %10451 = vmatprep.subr.bf16.mxu0 %v7777
  %10452 = vmatpush1.bf16.msra.mxu0 %v7776
  %10453 = vmatprep.subr.bf16.mxu0 %v7781
  %10454 = vmatpush1.bf16.msra.mxu0 %v7780
  %10455 = vmatprep.subr.bf16.mxu0 %v7785
  %10456 = vmatpush1.bf16.msra.mxu0 %v7784
  %10457 = vmatprep.subr.bf16.mxu0 %v7789
  %10458 = vmatpush1.bf16.msra.mxu0 %v7788
  %10459 = vmatprep.mubr.bf16.mxu0 %v1749
  %10460 = vmatmul.mubr.bf16.gmra.mrb[0].mxu0 %v1748
  %v10461 = vpop.f32.mrb[0].mxu0
  %v10462 = vadd.f32 %v10421, %v10461
  %v10463 = vpop.f32.mrb[0].mxu0
  %v10464 = vadd.f32 %v10423, %v10463
  %v10465 = vpop.f32.mrb[0].mxu0
  %v10466 = vpop.f32.mrb[0].mxu0
  %10467 = vdwg.mxu0
  %10468 = vmatprep.subr.bf16.mxu0 %v7793
  %10469 = vmatpush1.bf16.msra.mxu0 %v7792
  %10470 = vmatprep.subr.bf16.mxu0 %v7797
  %10471 = vmatpush1.bf16.msra.mxu0 %v7796
  %10472 = vmatprep.subr.bf16.mxu0 %v7801
  %10473 = vmatpush1.bf16.msra.mxu0 %v7800
  %10474 = vmatprep.subr.bf16.mxu0 %v7805
  %10475 = vmatpush1.bf16.msra.mxu0 %v7804
  %10476 = vmatprep.subr.bf16.mxu0 %v7809
  %10477 = vmatpush1.bf16.msra.mxu0 %v7808
  %10478 = vmatprep.subr.bf16.mxu0 %v7813
  %10479 = vmatpush1.bf16.msra.mxu0 %v7812
  %10480 = vmatprep.subr.bf16.mxu0 %v7817
  %10481 = vmatpush1.bf16.msra.mxu0 %v7816
  %10482 = vmatprep.subr.bf16.mxu0 %v7821
  %10483 = vmatpush1.bf16.msra.mxu0 %v7820
  %10484 = vmatprep.subr.bf16.mxu0 %v7825
  %10485 = vmatpush1.bf16.msra.mxu0 %v7824
  %10486 = vmatprep.subr.bf16.mxu0 %v7829
  %10487 = vmatpush1.bf16.msra.mxu0 %v7828
  %10488 = vmatprep.subr.bf16.mxu0 %v7833
  %10489 = vmatpush1.bf16.msra.mxu0 %v7832
  %10490 = vmatprep.subr.bf16.mxu0 %v7837
  %10491 = vmatpush1.bf16.msra.mxu0 %v7836
  %10492 = vmatprep.subr.bf16.mxu0 %v7841
  %10493 = vmatpush1.bf16.msra.mxu0 %v7840
  %10494 = vmatprep.subr.bf16.mxu0 %v7845
  %10495 = vmatpush1.bf16.msra.mxu0 %v7844
  %10496 = vmatprep.subr.bf16.mxu0 %v7849
  %10497 = vmatpush1.bf16.msra.mxu0 %v7848
  %10498 = vmatprep.subr.bf16.mxu0 %v7853
  %10499 = vmatpush1.bf16.msra.mxu0 %v7852
  %10500 = vmatprep.mubr.bf16.mxu0 %v1751
  %10501 = vmatmul.mubr.bf16.gmra.mrb[0].mxu0 %v1750
  %v10502 = vpop.f32.mrb[0].mxu0
  %v10503 = vadd.f32 %v10462, %v10502
  %v10504 = vpop.f32.mrb[0].mxu0
  %v10505 = vadd.f32 %v10464, %v10504
  %v10506 = vpop.f32.mrb[0].mxu0
  %v10507 = vpop.f32.mrb[0].mxu0
  %10508 = vdwg.mxu0
  %10509 = vmatprep.subr.bf16.mxu0 %v7857
  %10510 = vmatpush1.bf16.msra.mxu0 %v7856
  %10511 = vmatprep.subr.bf16.mxu0 %v7861
  %10512 = vmatpush1.bf16.msra.mxu0 %v7860
  %10513 = vmatprep.subr.bf16.mxu0 %v7865
  %10514 = vmatpush1.bf16.msra.mxu0 %v7864
  %10515 = vmatprep.subr.bf16.mxu0 %v7869
  %10516 = vmatpush1.bf16.msra.mxu0 %v7868
  %10517 = vmatprep.subr.bf16.mxu0 %v7873
  %10518 = vmatpush1.bf16.msra.mxu0 %v7872
  %10519 = vmatprep.subr.bf16.mxu0 %v7877
  %10520 = vmatpush1.bf16.msra.mxu0 %v7876
  %10521 = vmatprep.subr.bf16.mxu0 %v7881
  %10522 = vmatpush1.bf16.msra.mxu0 %v7880
  %10523 = vmatprep.subr.bf16.mxu0 %v7885
  %10524 = vmatpush1.bf16.msra.mxu0 %v7884
  %10525 = vmatprep.subr.bf16.mxu0 %v7889
  %10526 = vmatpush1.bf16.msra.mxu0 %v7888
  %10527 = vmatprep.subr.bf16.mxu0 %v7893
  %10528 = vmatpush1.bf16.msra.mxu0 %v7892
  %10529 = vmatprep.subr.bf16.mxu0 %v7897
  %10530 = vmatpush1.bf16.msra.mxu0 %v7896
  %10531 = vmatprep.subr.bf16.mxu0 %v7901
  %10532 = vmatpush1.bf16.msra.mxu0 %v7900
  %10533 = vmatprep.subr.bf16.mxu0 %v7905
  %10534 = vmatpush1.bf16.msra.mxu0 %v7904
  %10535 = vmatprep.subr.bf16.mxu0 %v7909
  %10536 = vmatpush1.bf16.msra.mxu0 %v7908
  %10537 = vmatprep.subr.bf16.mxu0 %v7913
  %10538 = vmatpush1.bf16.msra.mxu0 %v7912
  %10539 = vmatprep.subr.bf16.mxu0 %v7917
  %10540 = vmatpush1.bf16.msra.mxu0 %v7916
  %10541 = vmatprep.mubr.bf16.mxu0 %v1753
  %10542 = vmatmul.mubr.bf16.gmra.mrb[0].mxu0 %v1752
  %v10543 = vpop.f32.mrb[0].mxu0
  %v10544 = vadd.f32 %v10503, %v10543
  %v10545 = vpop.f32.mrb[0].mxu0
  %v10546 = vadd.f32 %v10505, %v10545
  %v10547 = vpop.f32.mrb[0].mxu0
  %v10548 = vpop.f32.mrb[0].mxu0
  %10549 = vdwg.mxu0
  %10550 = vmatprep.subr.bf16.mxu0 %v7921
  %10551 = vmatpush1.bf16.msra.mxu0 %v7920
  %10552 = vmatprep.subr.bf16.mxu0 %v7925
  %10553 = vmatpush1.bf16.msra.mxu0 %v7924
  %10554 = vmatprep.subr.bf16.mxu0 %v7929
  %10555 = vmatpush1.bf16.msra.mxu0 %v7928
  %10556 = vmatprep.subr.bf16.mxu0 %v7933
  %10557 = vmatpush1.bf16.msra.mxu0 %v7932
  %10558 = vmatprep.subr.bf16.mxu0 %v7937
  %10559 = vmatpush1.bf16.msra.mxu0 %v7936
  %10560 = vmatprep.subr.bf16.mxu0 %v7941
  %10561 = vmatpush1.bf16.msra.mxu0 %v7940
  %10562 = vmatprep.subr.bf16.mxu0 %v7945
  %10563 = vmatpush1.bf16.msra.mxu0 %v7944
  %10564 = vmatprep.subr.bf16.mxu0 %v7949
  %10565 = vmatpush1.bf16.msra.mxu0 %v7948
  %10566 = vmatprep.subr.bf16.mxu0 %v7953
  %10567 = vmatpush1.bf16.msra.mxu0 %v7952
  %10568 = vmatprep.subr.bf16.mxu0 %v7957
  %10569 = vmatpush1.bf16.msra.mxu0 %v7956
  %10570 = vmatprep.subr.bf16.mxu0 %v7961
  %10571 = vmatpush1.bf16.msra.mxu0 %v7960
  %10572 = vmatprep.subr.bf16.mxu0 %v7965
  %10573 = vmatpush1.bf16.msra.mxu0 %v7964
  %10574 = vmatprep.subr.bf16.mxu0 %v7969
  %10575 = vmatpush1.bf16.msra.mxu0 %v7968
  %10576 = vmatprep.subr.bf16.mxu0 %v7973
  %10577 = vmatpush1.bf16.msra.mxu0 %v7972
  %10578 = vmatprep.subr.bf16.mxu0 %v7977
  %10579 = vmatpush1.bf16.msra.mxu0 %v7976
  %10580 = vmatprep.subr.bf16.mxu0 %v7981
  %10581 = vmatpush1.bf16.msra.mxu0 %v7980
  %10582 = vmatprep.mubr.bf16.mxu0 %v1755
  %10583 = vmatmul.mubr.bf16.gmra.mrb[0].mxu0 %v1754
  %v10584 = vpop.f32.mrb[0].mxu0
  %v10585 = vadd.f32 %v10544, %v10584
  %v10586 = vpop.f32.mrb[0].mxu0
  %v10587 = vadd.f32 %v10546, %v10586
  %v10588 = vpop.f32.mrb[0].mxu0
  %v10589 = vpop.f32.mrb[0].mxu0
  %10590 = vdwg.mxu0
  %10591 = vmatprep.subr.bf16.mxu0 %v7985
  %10592 = vmatpush1.bf16.msra.mxu0 %v7984
  %10593 = vmatprep.subr.bf16.mxu0 %v7989
  %10594 = vmatpush1.bf16.msra.mxu0 %v7988
  %10595 = vmatprep.subr.bf16.mxu0 %v7993
  %10596 = vmatpush1.bf16.msra.mxu0 %v7992
  %10597 = vmatprep.subr.bf16.mxu0 %v7997
  %10598 = vmatpush1.bf16.msra.mxu0 %v7996
  %10599 = vmatprep.subr.bf16.mxu0 %v8001
  %10600 = vmatpush1.bf16.msra.mxu0 %v8000
  %10601 = vmatprep.subr.bf16.mxu0 %v8005
  %10602 = vmatpush1.bf16.msra.mxu0 %v8004
  %10603 = vmatprep.subr.bf16.mxu0 %v8009
  %10604 = vmatpush1.bf16.msra.mxu0 %v8008
  %10605 = vmatprep.subr.bf16.mxu0 %v8013
  %10606 = vmatpush1.bf16.msra.mxu0 %v8012
  %10607 = vmatprep.subr.bf16.mxu0 %v8017
  %10608 = vmatpush1.bf16.msra.mxu0 %v8016
  %10609 = vmatprep.subr.bf16.mxu0 %v8021
  %10610 = vmatpush1.bf16.msra.mxu0 %v8020
  %10611 = vmatprep.subr.bf16.mxu0 %v8025
  %10612 = vmatpush1.bf16.msra.mxu0 %v8024
  %10613 = vmatprep.subr.bf16.mxu0 %v8029
  %10614 = vmatpush1.bf16.msra.mxu0 %v8028
  %10615 = vmatprep.subr.bf16.mxu0 %v8033
  %10616 = vmatpush1.bf16.msra.mxu0 %v8032
  %10617 = vmatprep.subr.bf16.mxu0 %v8037
  %10618 = vmatpush1.bf16.msra.mxu0 %v8036
  %10619 = vmatprep.subr.bf16.mxu0 %v8041
  %10620 = vmatpush1.bf16.msra.mxu0 %v8040
  %10621 = vmatprep.subr.bf16.mxu0 %v8045
  %10622 = vmatpush1.bf16.msra.mxu0 %v8044
  %10623 = vmatprep.mubr.bf16.mxu0 %v1757
  %10624 = vmatmul.mubr.bf16.gmra.mrb[0].mxu0 %v1756
  %v10625 = vpop.f32.mrb[0].mxu0
  %v10626 = vadd.f32 %v10585, %v10625
  %v10627 = vpop.f32.mrb[0].mxu0
  %v10628 = vadd.f32 %v10587, %v10627
  %v10629 = vpop.f32.mrb[0].mxu0
  %v10630 = vpop.f32.mrb[0].mxu0
  %10631 = vdwg.mxu0
  %10632 = vmatprep.subr.bf16.mxu0 %v8049
  %10633 = vmatpush1.bf16.msra.mxu0 %v8048
  %10634 = vmatprep.subr.bf16.mxu0 %v8053
  %10635 = vmatpush1.bf16.msra.mxu0 %v8052
  %10636 = vmatprep.subr.bf16.mxu0 %v8057
  %10637 = vmatpush1.bf16.msra.mxu0 %v8056
  %10638 = vmatprep.subr.bf16.mxu0 %v8061
  %10639 = vmatpush1.bf16.msra.mxu0 %v8060
  %10640 = vmatprep.subr.bf16.mxu0 %v8065
  %10641 = vmatpush1.bf16.msra.mxu0 %v8064
  %10642 = vmatprep.subr.bf16.mxu0 %v8069
  %10643 = vmatpush1.bf16.msra.mxu0 %v8068
  %10644 = vmatprep.subr.bf16.mxu0 %v8073
  %10645 = vmatpush1.bf16.msra.mxu0 %v8072
  %10646 = vmatprep.subr.bf16.mxu0 %v8077
  %10647 = vmatpush1.bf16.msra.mxu0 %v8076
  %10648 = vmatprep.subr.bf16.mxu0 0
  %10649 = vmatpush1.bf16.msra.mxu0 0
  %10650 = vmatprep.subr.bf16.mxu0 0
  %10651 = vmatpush1.bf16.msra.mxu0 0
  %10652 = vmatprep.subr.bf16.mxu0 0
  %10653 = vmatpush1.bf16.msra.mxu0 0
  %10654 = vmatprep.subr.bf16.mxu0 0
  %10655 = vmatpush1.bf16.msra.mxu0 0
  %10656 = vmatprep.subr.bf16.mxu0 0
  %10657 = vmatpush1.bf16.msra.mxu0 0
  %10658 = vmatprep.subr.bf16.mxu0 0
  %10659 = vmatpush1.bf16.msra.mxu0 0
  %10660 = vmatprep.subr.bf16.mxu0 0
  %10661 = vmatpush1.bf16.msra.mxu0 0
  %10662 = vmatprep.subr.bf16.mxu0 0
  %10663 = vmatpush1.bf16.msra.mxu0 0
  %10664 = vmatprep.mubr.bf16.mxu0 0
  %10665 = vmatmul.mubr.bf16.gmra.mrb[0].mxu0 %v1758
  %v10666 = vpop.f32.mrb[0].mxu0
  %v10667 = vadd.f32 %v10626, %v10666
  %v10668 = vpop.f32.mrb[0].mxu0
  %v10669 = vadd.f32 %v10628, %v10668
  %v10670 = vpop.f32.mrb[0].mxu0
  %v10671 = vpop.f32.mrb[0].mxu0
  %10672 = vdwg.mxu0
  %10673 = vmatprep.subr.bf16.mxu0 %v6515
  %10674 = vmatpush1.bf16.msra.mxu0 %v6514
  %10675 = vmatprep.subr.bf16.mxu0 %v6519
  %10676 = vmatpush1.bf16.msra.mxu0 %v6518
  %10677 = vmatprep.subr.bf16.mxu0 %v6523
  %10678 = vmatpush1.bf16.msra.mxu0 %v6522
  %10679 = vmatprep.subr.bf16.mxu0 %v6527
  %10680 = vmatpush1.bf16.msra.mxu0 %v6526
  %10681 = vmatprep.subr.bf16.mxu0 %v6531
  %10682 = vmatpush1.bf16.msra.mxu0 %v6530
  %10683 = vmatprep.subr.bf16.mxu0 %v6535
  %10684 = vmatpush1.bf16.msra.mxu0 %v6534
  %10685 = vmatprep.subr.bf16.mxu0 %v6539
  %10686 = vmatpush1.bf16.msra.mxu0 %v6538
  %10687 = vmatprep.subr.bf16.mxu0 %v6543
  %10688 = vmatpush1.bf16.msra.mxu0 %v6542
  %10689 = vmatprep.subr.bf16.mxu0 %v6547
  %10690 = vmatpush1.bf16.msra.mxu0 %v6546
  %10691 = vmatprep.subr.bf16.mxu0 %v6551
  %10692 = vmatpush1.bf16.msra.mxu0 %v6550
  %10693 = vmatprep.subr.bf16.mxu0 %v6555
  %10694 = vmatpush1.bf16.msra.mxu0 %v6554
  %10695 = vmatprep.subr.bf16.mxu0 %v6559
  %10696 = vmatpush1.bf16.msra.mxu0 %v6558
  %10697 = vmatprep.subr.bf16.mxu0 %v6563
  %10698 = vmatpush1.bf16.msra.mxu0 %v6562
  %10699 = vmatprep.subr.bf16.mxu0 %v6567
  %10700 = vmatpush1.bf16.msra.mxu0 %v6566
  %10701 = vmatprep.subr.bf16.mxu0 %v6571
  %10702 = vmatpush1.bf16.msra.mxu0 %v6570
  %10703 = vmatprep.subr.bf16.mxu0 %v6575
  %10704 = vmatpush1.bf16.msra.mxu0 %v6574
  %10705 = vmatprep.mubr.bf16.mxu0 %v1711
  %10706 = vmatmul.mubr.bf16.gmra.mrb[0].mxu0 %v1710
  %v10707 = vpop.f32.mrb[0].mxu0
  %v10708 = vadd.f32 %v1627, %v10707
  %v10709 = vpop.f32.mrb[0].mxu0
  %v10710 = vadd.f32 %v1631, %v10709
  %v10711 = vpop.f32.mrb[0].mxu0
  %v10712 = vpop.f32.mrb[0].mxu0
  %10713 = vdwg.mxu0
  %10714 = vmatprep.subr.bf16.mxu0 %v6579
  %10715 = vmatpush1.bf16.msra.mxu0 %v6578
  %10716 = vmatprep.subr.bf16.mxu0 %v6583
  %10717 = vmatpush1.bf16.msra.mxu0 %v6582
  %10718 = vmatprep.subr.bf16.mxu0 %v6587
  %10719 = vmatpush1.bf16.msra.mxu0 %v6586
  %10720 = vmatprep.subr.bf16.mxu0 %v6591
  %10721 = vmatpush1.bf16.msra.mxu0 %v6590
  %10722 = vmatprep.subr.bf16.mxu0 %v6595
  %10723 = vmatpush1.bf16.msra.mxu0 %v6594
  %10724 = vmatprep.subr.bf16.mxu0 %v6599
  %10725 = vmatpush1.bf16.msra.mxu0 %v6598
  %10726 = vmatprep.subr.bf16.mxu0 %v6603
  %10727 = vmatpush1.bf16.msra.mxu0 %v6602
  %10728 = vmatprep.subr.bf16.mxu0 %v6607
  %10729 = vmatpush1.bf16.msra.mxu0 %v6606
  %10730 = vmatprep.subr.bf16.mxu0 %v6611
  %10731 = vmatpush1.bf16.msra.mxu0 %v6610
  %10732 = vmatprep.subr.bf16.mxu0 %v6615
  %10733 = vmatpush1.bf16.msra.mxu0 %v6614
  %10734 = vmatprep.subr.bf16.mxu0 %v6619
  %10735 = vmatpush1.bf16.msra.mxu0 %v6618
  %10736 = vmatprep.subr.bf16.mxu0 %v6623
  %10737 = vmatpush1.bf16.msra.mxu0 %v6622
  %10738 = vmatprep.subr.bf16.mxu0 %v6627
  %10739 = vmatpush1.bf16.msra.mxu0 %v6626
  %10740 = vmatprep.subr.bf16.mxu0 %v6631
  %10741 = vmatpush1.bf16.msra.mxu0 %v6630
  %10742 = vmatprep.subr.bf16.mxu0 %v6635
  %10743 = vmatpush1.bf16.msra.mxu0 %v6634
  %10744 = vmatprep.subr.bf16.mxu0 %v6639
  %10745 = vmatpush1.bf16.msra.mxu0 %v6638
  %10746 = vmatprep.mubr.bf16.mxu0 %v1713
  %10747 = vmatmul.mubr.bf16.gmra.mrb[0].mxu0 %v1712
  %v10748 = vpop.f32.mrb[0].mxu0
  %v10749 = vadd.f32 %v10708, %v10748
  %v10750 = vpop.f32.mrb[0].mxu0
  %v10751 = vadd.f32 %v10710, %v10750
  %v10752 = vpop.f32.mrb[0].mxu0
  %v10753 = vpop.f32.mrb[0].mxu0
  %10754 = vdwg.mxu0
  %10755 = vmatprep.subr.bf16.mxu0 %v6643
  %10756 = vmatpush1.bf16.msra.mxu0 %v6642
  %10757 = vmatprep.subr.bf16.mxu0 %v6647
  %10758 = vmatpush1.bf16.msra.mxu0 %v6646
  %10759 = vmatprep.subr.bf16.mxu0 %v6651
  %10760 = vmatpush1.bf16.msra.mxu0 %v6650
  %10761 = vmatprep.subr.bf16.mxu0 %v6655
  %10762 = vmatpush1.bf16.msra.mxu0 %v6654
  %10763 = vmatprep.subr.bf16.mxu0 %v6659
  %10764 = vmatpush1.bf16.msra.mxu0 %v6658
  %10765 = vmatprep.subr.bf16.mxu0 %v6663
  %10766 = vmatpush1.bf16.msra.mxu0 %v6662
  %10767 = vmatprep.subr.bf16.mxu0 %v6667
  %10768 = vmatpush1.bf16.msra.mxu0 %v6666
  %10769 = vmatprep.subr.bf16.mxu0 %v6671
  %10770 = vmatpush1.bf16.msra.mxu0 %v6670
  %10771 = vmatprep.subr.bf16.mxu0 %v6675
  %10772 = vmatpush1.bf16.msra.mxu0 %v6674
  %10773 = vmatprep.subr.bf16.mxu0 %v6679
  %10774 = vmatpush1.bf16.msra.mxu0 %v6678
  %10775 = vmatprep.subr.bf16.mxu0 %v6683
  %10776 = vmatpush1.bf16.msra.mxu0 %v6682
  %10777 = vmatprep.subr.bf16.mxu0 %v6687
  %10778 = vmatpush1.bf16.msra.mxu0 %v6686
  %10779 = vmatprep.subr.bf16.mxu0 %v6691
  %10780 = vmatpush1.bf16.msra.mxu0 %v6690
  %10781 = vmatprep.subr.bf16.mxu0 %v6695
  %10782 = vmatpush1.bf16.msra.mxu0 %v6694
  %10783 = vmatprep.subr.bf16.mxu0 %v6699
  %10784 = vmatpush1.bf16.msra.mxu0 %v6698
  %10785 = vmatprep.subr.bf16.mxu0 %v6703
  %10786 = vmatpush1.bf16.msra.mxu0 %v6702
  %10787 = vmatprep.mubr.bf16.mxu0 %v1715
  %10788 = vmatmul.mubr.bf16.gmra.mrb[0].mxu0 %v1714
  %v10789 = vpop.f32.mrb[0].mxu0
  %v10790 = vadd.f32 %v10749, %v10789
  %v10791 = vpop.f32.mrb[0].mxu0
  %v10792 = vadd.f32 %v10751, %v10791
  %v10793 = vpop.f32.mrb[0].mxu0
  %v10794 = vpop.f32.mrb[0].mxu0
  %10795 = vdwg.mxu0
  %10796 = vmatprep.subr.bf16.mxu0 %v6707
  %10797 = vmatpush1.bf16.msra.mxu0 %v6706
  %10798 = vmatprep.subr.bf16.mxu0 %v6711
  %10799 = vmatpush1.bf16.msra.mxu0 %v6710
  %10800 = vmatprep.subr.bf16.mxu0 %v6715
  %10801 = vmatpush1.bf16.msra.mxu0 %v6714
  %10802 = vmatprep.subr.bf16.mxu0 %v6719
  %10803 = vmatpush1.bf16.msra.mxu0 %v6718
  %10804 = vmatprep.subr.bf16.mxu0 %v6723
  %10805 = vmatpush1.bf16.msra.mxu0 %v6722
  %10806 = vmatprep.subr.bf16.mxu0 %v6727
  %10807 = vmatpush1.bf16.msra.mxu0 %v6726
  %10808 = vmatprep.subr.bf16.mxu0 %v6731
  %10809 = vmatpush1.bf16.msra.mxu0 %v6730
  %10810 = vmatprep.subr.bf16.mxu0 %v6735
  %10811 = vmatpush1.bf16.msra.mxu0 %v6734
  %10812 = vmatprep.subr.bf16.mxu0 %v6739
  %10813 = vmatpush1.bf16.msra.mxu0 %v6738
  %10814 = vmatprep.subr.bf16.mxu0 %v6743
  %10815 = vmatpush1.bf16.msra.mxu0 %v6742
  %10816 = vmatprep.subr.bf16.mxu0 %v6747
  %10817 = vmatpush1.bf16.msra.mxu0 %v6746
  %10818 = vmatprep.subr.bf16.mxu0 %v6751
  %10819 = vmatpush1.bf16.msra.mxu0 %v6750
  %10820 = vmatprep.subr.bf16.mxu0 %v6755
  %10821 = vmatpush1.bf16.msra.mxu0 %v6754
  %10822 = vmatprep.subr.bf16.mxu0 %v6759
  %10823 = vmatpush1.bf16.msra.mxu0 %v6758
  %10824 = vmatprep.subr.bf16.mxu0 %v6763
  %10825 = vmatpush1.bf16.msra.mxu0 %v6762
  %10826 = vmatprep.subr.bf16.mxu0 %v6767
  %10827 = vmatpush1.bf16.msra.mxu0 %v6766
  %10828 = vmatprep.mubr.bf16.mxu0 %v1717
  %10829 = vmatmul.mubr.bf16.gmra.mrb[0].mxu0 %v1716
  %v10830 = vpop.f32.mrb[0].mxu0
  %v10831 = vadd.f32 %v10790, %v10830
  %v10832 = vpop.f32.mrb[0].mxu0
  %v10833 = vadd.f32 %v10792, %v10832
  %v10834 = vpop.f32.mrb[0].mxu0
  %v10835 = vpop.f32.mrb[0].mxu0
  %10836 = vdwg.mxu0
  %10837 = vmatprep.subr.bf16.mxu0 %v6771
  %10838 = vmatpush1.bf16.msra.mxu0 %v6770
  %10839 = vmatprep.subr.bf16.mxu0 %v6775
  %10840 = vmatpush1.bf16.msra.mxu0 %v6774
  %10841 = vmatprep.subr.bf16.mxu0 %v6779
  %10842 = vmatpush1.bf16.msra.mxu0 %v6778
  %10843 = vmatprep.subr.bf16.mxu0 %v6783
  %10844 = vmatpush1.bf16.msra.mxu0 %v6782
  %10845 = vmatprep.subr.bf16.mxu0 %v6787
  %10846 = vmatpush1.bf16.msra.mxu0 %v6786
  %10847 = vmatprep.subr.bf16.mxu0 %v6791
  %10848 = vmatpush1.bf16.msra.mxu0 %v6790
  %10849 = vmatprep.subr.bf16.mxu0 %v6795
  %10850 = vmatpush1.bf16.msra.mxu0 %v6794
  %10851 = vmatprep.subr.bf16.mxu0 %v6799
  %10852 = vmatpush1.bf16.msra.mxu0 %v6798
  %10853 = vmatprep.subr.bf16.mxu0 %v6803
  %10854 = vmatpush1.bf16.msra.mxu0 %v6802
  %10855 = vmatprep.subr.bf16.mxu0 %v6807
  %10856 = vmatpush1.bf16.msra.mxu0 %v6806
  %10857 = vmatprep.subr.bf16.mxu0 %v6811
  %10858 = vmatpush1.bf16.msra.mxu0 %v6810
  %10859 = vmatprep.subr.bf16.mxu0 %v6815
  %10860 = vmatpush1.bf16.msra.mxu0 %v6814
  %10861 = vmatprep.subr.bf16.mxu0 %v6819
  %10862 = vmatpush1.bf16.msra.mxu0 %v6818
  %10863 = vmatprep.subr.bf16.mxu0 %v6823
  %10864 = vmatpush1.bf16.msra.mxu0 %v6822
  %10865 = vmatprep.subr.bf16.mxu0 %v6827
  %10866 = vmatpush1.bf16.msra.mxu0 %v6826
  %10867 = vmatprep.subr.bf16.mxu0 %v6831
  %10868 = vmatpush1.bf16.msra.mxu0 %v6830
  %10869 = vmatprep.mubr.bf16.mxu0 %v1719
  %10870 = vmatmul.mubr.bf16.gmra.mrb[0].mxu0 %v1718
  %v10871 = vpop.f32.mrb[0].mxu0
  %v10872 = vadd.f32 %v10831, %v10871
  %v10873 = vpop.f32.mrb[0].mxu0
  %v10874 = vadd.f32 %v10833, %v10873
  %v10875 = vpop.f32.mrb[0].mxu0
  %v10876 = vpop.f32.mrb[0].mxu0
  %10877 = vdwg.mxu0
  %10878 = vmatprep.subr.bf16.mxu0 %v6835
  %10879 = vmatpush1.bf16.msra.mxu0 %v6834
  %10880 = vmatprep.subr.bf16.mxu0 %v6839
  %10881 = vmatpush1.bf16.msra.mxu0 %v6838
  %10882 = vmatprep.subr.bf16.mxu0 %v6843
  %10883 = vmatpush1.bf16.msra.mxu0 %v6842
  %10884 = vmatprep.subr.bf16.mxu0 %v6847
  %10885 = vmatpush1.bf16.msra.mxu0 %v6846
  %10886 = vmatprep.subr.bf16.mxu0 %v6851
  %10887 = vmatpush1.bf16.msra.mxu0 %v6850
  %10888 = vmatprep.subr.bf16.mxu0 %v6855
  %10889 = vmatpush1.bf16.msra.mxu0 %v6854
  %10890 = vmatprep.subr.bf16.mxu0 %v6859
  %10891 = vmatpush1.bf16.msra.mxu0 %v6858
  %10892 = vmatprep.subr.bf16.mxu0 %v6863
  %10893 = vmatpush1.bf16.msra.mxu0 %v6862
  %10894 = vmatprep.subr.bf16.mxu0 %v6867
  %10895 = vmatpush1.bf16.msra.mxu0 %v6866
  %10896 = vmatprep.subr.bf16.mxu0 %v6871
  %10897 = vmatpush1.bf16.msra.mxu0 %v6870
  %10898 = vmatprep.subr.bf16.mxu0 %v6875
  %10899 = vmatpush1.bf16.msra.mxu0 %v6874
  %10900 = vmatprep.subr.bf16.mxu0 %v6879
  %10901 = vmatpush1.bf16.msra.mxu0 %v6878
  %10902 = vmatprep.subr.bf16.mxu0 %v6883
  %10903 = vmatpush1.bf16.msra.mxu0 %v6882
  %10904 = vmatprep.subr.bf16.mxu0 %v6887
  %10905 = vmatpush1.bf16.msra.mxu0 %v6886
  %10906 = vmatprep.subr.bf16.mxu0 %v6891
  %10907 = vmatpush1.bf16.msra.mxu0 %v6890
  %10908 = vmatprep.subr.bf16.mxu0 %v6895
  %10909 = vmatpush1.bf16.msra.mxu0 %v6894
  %10910 = vmatprep.mubr.bf16.mxu0 %v1721
  %10911 = vmatmul.mubr.bf16.gmra.mrb[0].mxu0 %v1720
  %v10912 = vpop.f32.mrb[0].mxu0
  %v10913 = vadd.f32 %v10872, %v10912
  %v10914 = vpop.f32.mrb[0].mxu0
  %v10915 = vadd.f32 %v10874, %v10914
  %v10916 = vpop.f32.mrb[0].mxu0
  %v10917 = vpop.f32.mrb[0].mxu0
  %10918 = vdwg.mxu0
  %10919 = vmatprep.subr.bf16.mxu0 %v6899
  %10920 = vmatpush1.bf16.msra.mxu0 %v6898
  %10921 = vmatprep.subr.bf16.mxu0 %v6903
  %10922 = vmatpush1.bf16.msra.mxu0 %v6902
  %10923 = vmatprep.subr.bf16.mxu0 %v6907
  %10924 = vmatpush1.bf16.msra.mxu0 %v6906
  %10925 = vmatprep.subr.bf16.mxu0 %v6911
  %10926 = vmatpush1.bf16.msra.mxu0 %v6910
  %10927 = vmatprep.subr.bf16.mxu0 %v6915
  %10928 = vmatpush1.bf16.msra.mxu0 %v6914
  %10929 = vmatprep.subr.bf16.mxu0 %v6919
  %10930 = vmatpush1.bf16.msra.mxu0 %v6918
  %10931 = vmatprep.subr.bf16.mxu0 %v6923
  %10932 = vmatpush1.bf16.msra.mxu0 %v6922
  %10933 = vmatprep.subr.bf16.mxu0 %v6927
  %10934 = vmatpush1.bf16.msra.mxu0 %v6926
  %10935 = vmatprep.subr.bf16.mxu0 %v6931
  %10936 = vmatpush1.bf16.msra.mxu0 %v6930
  %10937 = vmatprep.subr.bf16.mxu0 %v6935
  %10938 = vmatpush1.bf16.msra.mxu0 %v6934
  %10939 = vmatprep.subr.bf16.mxu0 %v6939
  %10940 = vmatpush1.bf16.msra.mxu0 %v6938
  %10941 = vmatprep.subr.bf16.mxu0 %v6943
  %10942 = vmatpush1.bf16.msra.mxu0 %v6942
  %10943 = vmatprep.subr.bf16.mxu0 %v6947
  %10944 = vmatpush1.bf16.msra.mxu0 %v6946
  %10945 = vmatprep.subr.bf16.mxu0 %v6951
  %10946 = vmatpush1.bf16.msra.mxu0 %v6950
  %10947 = vmatprep.subr.bf16.mxu0 %v6955
  %10948 = vmatpush1.bf16.msra.mxu0 %v6954
  %10949 = vmatprep.subr.bf16.mxu0 %v6959
  %10950 = vmatpush1.bf16.msra.mxu0 %v6958
  %10951 = vmatprep.mubr.bf16.mxu0 %v1723
  %10952 = vmatmul.mubr.bf16.gmra.mrb[0].mxu0 %v1722
  %v10953 = vpop.f32.mrb[0].mxu0
  %v10954 = vadd.f32 %v10913, %v10953
  %v10955 = vpop.f32.mrb[0].mxu0
  %v10956 = vadd.f32 %v10915, %v10955
  %v10957 = vpop.f32.mrb[0].mxu0
  %v10958 = vpop.f32.mrb[0].mxu0
  %10959 = vdwg.mxu0
  %10960 = vmatprep.subr.bf16.mxu0 %v6963
  %10961 = vmatpush1.bf16.msra.mxu0 %v6962
  %10962 = vmatprep.subr.bf16.mxu0 %v6967
  %10963 = vmatpush1.bf16.msra.mxu0 %v6966
  %10964 = vmatprep.subr.bf16.mxu0 %v6971
  %10965 = vmatpush1.bf16.msra.mxu0 %v6970
  %10966 = vmatprep.subr.bf16.mxu0 %v6975
  %10967 = vmatpush1.bf16.msra.mxu0 %v6974
  %10968 = vmatprep.subr.bf16.mxu0 %v6979
  %10969 = vmatpush1.bf16.msra.mxu0 %v6978
  %10970 = vmatprep.subr.bf16.mxu0 %v6983
  %10971 = vmatpush1.bf16.msra.mxu0 %v6982
  %10972 = vmatprep.subr.bf16.mxu0 %v6987
  %10973 = vmatpush1.bf16.msra.mxu0 %v6986
  %10974 = vmatprep.subr.bf16.mxu0 %v6991
  %10975 = vmatpush1.bf16.msra.mxu0 %v6990
  %10976 = vmatprep.subr.bf16.mxu0 %v6995
  %10977 = vmatpush1.bf16.msra.mxu0 %v6994
  %10978 = vmatprep.subr.bf16.mxu0 %v6999
  %10979 = vmatpush1.bf16.msra.mxu0 %v6998
  %10980 = vmatprep.subr.bf16.mxu0 %v7003
  %10981 = vmatpush1.bf16.msra.mxu0 %v7002
  %10982 = vmatprep.subr.bf16.mxu0 %v7007
  %10983 = vmatpush1.bf16.msra.mxu0 %v7006
  %10984 = vmatprep.subr.bf16.mxu0 %v7011
  %10985 = vmatpush1.bf16.msra.mxu0 %v7010
  %10986 = vmatprep.subr.bf16.mxu0 %v7015
  %10987 = vmatpush1.bf16.msra.mxu0 %v7014
  %10988 = vmatprep.subr.bf16.mxu0 %v7019
  %10989 = vmatpush1.bf16.msra.mxu0 %v7018
  %10990 = vmatprep.subr.bf16.mxu0 %v7023
  %10991 = vmatpush1.bf16.msra.mxu0 %v7022
  %10992 = vmatprep.mubr.bf16.mxu0 %v1725
  %10993 = vmatmul.mubr.bf16.gmra.mrb[0].mxu0 %v1724
  %v10994 = vpop.f32.mrb[0].mxu0
  %v10995 = vadd.f32 %v10954, %v10994
  %v10996 = vpop.f32.mrb[0].mxu0
  %v10997 = vadd.f32 %v10956, %v10996
  %v10998 = vpop.f32.mrb[0].mxu0
  %v10999 = vpop.f32.mrb[0].mxu0
  %11000 = vdwg.mxu0
  %11001 = vmatprep.subr.bf16.mxu0 %v7027
  %11002 = vmatpush1.bf16.msra.mxu0 %v7026
  %11003 = vmatprep.subr.bf16.mxu0 %v7031
  %11004 = vmatpush1.bf16.msra.mxu0 %v7030
  %11005 = vmatprep.subr.bf16.mxu0 %v7035
  %11006 = vmatpush1.bf16.msra.mxu0 %v7034
  %11007 = vmatprep.subr.bf16.mxu0 %v7039
  %11008 = vmatpush1.bf16.msra.mxu0 %v7038
  %11009 = vmatprep.subr.bf16.mxu0 %v7043
  %11010 = vmatpush1.bf16.msra.mxu0 %v7042
  %11011 = vmatprep.subr.bf16.mxu0 %v7047
  %11012 = vmatpush1.bf16.msra.mxu0 %v7046
  %11013 = vmatprep.subr.bf16.mxu0 %v7051
  %11014 = vmatpush1.bf16.msra.mxu0 %v7050
  %11015 = vmatprep.subr.bf16.mxu0 %v7055
  %11016 = vmatpush1.bf16.msra.mxu0 %v7054
  %11017 = vmatprep.subr.bf16.mxu0 %v7059
  %11018 = vmatpush1.bf16.msra.mxu0 %v7058
  %11019 = vmatprep.subr.bf16.mxu0 %v7063
  %11020 = vmatpush1.bf16.msra.mxu0 %v7062
  %11021 = vmatprep.subr.bf16.mxu0 %v7067
  %11022 = vmatpush1.bf16.msra.mxu0 %v7066
  %11023 = vmatprep.subr.bf16.mxu0 %v7071
  %11024 = vmatpush1.bf16.msra.mxu0 %v7070
  %11025 = vmatprep.subr.bf16.mxu0 %v7075
  %11026 = vmatpush1.bf16.msra.mxu0 %v7074
  %11027 = vmatprep.subr.bf16.mxu0 %v7079
  %11028 = vmatpush1.bf16.msra.mxu0 %v7078
  %11029 = vmatprep.subr.bf16.mxu0 %v7083
  %11030 = vmatpush1.bf16.msra.mxu0 %v7082
  %11031 = vmatprep.subr.bf16.mxu0 %v7087
  %11032 = vmatpush1.bf16.msra.mxu0 %v7086
  %11033 = vmatprep.mubr.bf16.mxu0 %v1727
  %11034 = vmatmul.mubr.bf16.gmra.mrb[0].mxu0 %v1726
  %v11035 = vpop.f32.mrb[0].mxu0
  %v11036 = vadd.f32 %v10995, %v11035
  %v11037 = vpop.f32.mrb[0].mxu0
  %v11038 = vadd.f32 %v10997, %v11037
  %v11039 = vpop.f32.mrb[0].mxu0
  %v11040 = vpop.f32.mrb[0].mxu0
  %11041 = vdwg.mxu0
  %11042 = vmatprep.subr.bf16.mxu0 %v7091
  %11043 = vmatpush1.bf16.msra.mxu0 %v7090
  %11044 = vmatprep.subr.bf16.mxu0 %v7095
  %11045 = vmatpush1.bf16.msra.mxu0 %v7094
  %11046 = vmatprep.subr.bf16.mxu0 %v7099
  %11047 = vmatpush1.bf16.msra.mxu0 %v7098
  %11048 = vmatprep.subr.bf16.mxu0 %v7103
  %11049 = vmatpush1.bf16.msra.mxu0 %v7102
  %11050 = vmatprep.subr.bf16.mxu0 %v7107
  %11051 = vmatpush1.bf16.msra.mxu0 %v7106
  %11052 = vmatprep.subr.bf16.mxu0 %v7111
  %11053 = vmatpush1.bf16.msra.mxu0 %v7110
  %11054 = vmatprep.subr.bf16.mxu0 %v7115
  %11055 = vmatpush1.bf16.msra.mxu0 %v7114
  %11056 = vmatprep.subr.bf16.mxu0 %v7119
  %11057 = vmatpush1.bf16.msra.mxu0 %v7118
  %11058 = vmatprep.subr.bf16.mxu0 %v7123
  %11059 = vmatpush1.bf16.msra.mxu0 %v7122
  %11060 = vmatprep.subr.bf16.mxu0 %v7127
  %11061 = vmatpush1.bf16.msra.mxu0 %v7126
  %11062 = vmatprep.subr.bf16.mxu0 %v7131
  %11063 = vmatpush1.bf16.msra.mxu0 %v7130
  %11064 = vmatprep.subr.bf16.mxu0 %v7135
  %11065 = vmatpush1.bf16.msra.mxu0 %v7134
  %11066 = vmatprep.subr.bf16.mxu0 %v7139
  %11067 = vmatpush1.bf16.msra.mxu0 %v7138
  %11068 = vmatprep.subr.bf16.mxu0 %v7143
  %11069 = vmatpush1.bf16.msra.mxu0 %v7142
  %11070 = vmatprep.subr.bf16.mxu0 %v7147
  %11071 = vmatpush1.bf16.msra.mxu0 %v7146
  %11072 = vmatprep.subr.bf16.mxu0 %v7151
  %11073 = vmatpush1.bf16.msra.mxu0 %v7150
  %11074 = vmatprep.mubr.bf16.mxu0 %v1729
  %11075 = vmatmul.mubr.bf16.gmra.mrb[0].mxu0 %v1728
  %v11076 = vpop.f32.mrb[0].mxu0
  %v11077 = vadd.f32 %v11036, %v11076
  %v11078 = vpop.f32.mrb[0].mxu0
  %v11079 = vadd.f32 %v11038, %v11078
  %v11080 = vpop.f32.mrb[0].mxu0
  %v11081 = vpop.f32.mrb[0].mxu0
  %11082 = vdwg.mxu0
  %11083 = vmatprep.subr.bf16.mxu0 %v7155
  %11084 = vmatpush1.bf16.msra.mxu0 %v7154
  %11085 = vmatprep.subr.bf16.mxu0 %v7159
  %11086 = vmatpush1.bf16.msra.mxu0 %v7158
  %11087 = vmatprep.subr.bf16.mxu0 %v7163
  %11088 = vmatpush1.bf16.msra.mxu0 %v7162
  %11089 = vmatprep.subr.bf16.mxu0 %v7167
  %11090 = vmatpush1.bf16.msra.mxu0 %v7166
  %11091 = vmatprep.subr.bf16.mxu0 %v7171
  %11092 = vmatpush1.bf16.msra.mxu0 %v7170
  %11093 = vmatprep.subr.bf16.mxu0 %v7175
  %11094 = vmatpush1.bf16.msra.mxu0 %v7174
  %11095 = vmatprep.subr.bf16.mxu0 %v7179
  %11096 = vmatpush1.bf16.msra.mxu0 %v7178
  %11097 = vmatprep.subr.bf16.mxu0 %v7183
  %11098 = vmatpush1.bf16.msra.mxu0 %v7182
  %11099 = vmatprep.subr.bf16.mxu0 %v7187
  %11100 = vmatpush1.bf16.msra.mxu0 %v7186
  %11101 = vmatprep.subr.bf16.mxu0 %v7191
  %11102 = vmatpush1.bf16.msra.mxu0 %v7190
  %11103 = vmatprep.subr.bf16.mxu0 %v7195
  %11104 = vmatpush1.bf16.msra.mxu0 %v7194
  %11105 = vmatprep.subr.bf16.mxu0 %v7199
  %11106 = vmatpush1.bf16.msra.mxu0 %v7198
  %11107 = vmatprep.subr.bf16.mxu0 %v7203
  %11108 = vmatpush1.bf16.msra.mxu0 %v7202
  %11109 = vmatprep.subr.bf16.mxu0 %v7207
  %11110 = vmatpush1.bf16.msra.mxu0 %v7206
  %11111 = vmatprep.subr.bf16.mxu0 %v7211
  %11112 = vmatpush1.bf16.msra.mxu0 %v7210
  %11113 = vmatprep.subr.bf16.mxu0 %v7215
  %11114 = vmatpush1.bf16.msra.mxu0 %v7214
  %11115 = vmatprep.mubr.bf16.mxu0 %v1731
  %11116 = vmatmul.mubr.bf16.gmra.mrb[0].mxu0 %v1730
  %v11117 = vpop.f32.mrb[0].mxu0
  %v11118 = vadd.f32 %v11077, %v11117
  %v11119 = vpop.f32.mrb[0].mxu0
  %v11120 = vadd.f32 %v11079, %v11119
  %v11121 = vpop.f32.mrb[0].mxu0
  %v11122 = vpop.f32.mrb[0].mxu0
  %11123 = vdwg.mxu0
  %11124 = vmatprep.subr.bf16.mxu0 %v7219
  %11125 = vmatpush1.bf16.msra.mxu0 %v7218
  %11126 = vmatprep.subr.bf16.mxu0 %v7223
  %11127 = vmatpush1.bf16.msra.mxu0 %v7222
  %11128 = vmatprep.subr.bf16.mxu0 %v7227
  %11129 = vmatpush1.bf16.msra.mxu0 %v7226
  %11130 = vmatprep.subr.bf16.mxu0 %v7231
  %11131 = vmatpush1.bf16.msra.mxu0 %v7230
  %11132 = vmatprep.subr.bf16.mxu0 %v7235
  %11133 = vmatpush1.bf16.msra.mxu0 %v7234
  %11134 = vmatprep.subr.bf16.mxu0 %v7239
  %11135 = vmatpush1.bf16.msra.mxu0 %v7238
  %11136 = vmatprep.subr.bf16.mxu0 %v7243
  %11137 = vmatpush1.bf16.msra.mxu0 %v7242
  %11138 = vmatprep.subr.bf16.mxu0 %v7247
  %11139 = vmatpush1.bf16.msra.mxu0 %v7246
  %11140 = vmatprep.subr.bf16.mxu0 %v7251
  %11141 = vmatpush1.bf16.msra.mxu0 %v7250
  %11142 = vmatprep.subr.bf16.mxu0 %v7255
  %11143 = vmatpush1.bf16.msra.mxu0 %v7254
  %11144 = vmatprep.subr.bf16.mxu0 %v7259
  %11145 = vmatpush1.bf16.msra.mxu0 %v7258
  %11146 = vmatprep.subr.bf16.mxu0 %v7263
  %11147 = vmatpush1.bf16.msra.mxu0 %v7262
  %11148 = vmatprep.subr.bf16.mxu0 %v7267
  %11149 = vmatpush1.bf16.msra.mxu0 %v7266
  %11150 = vmatprep.subr.bf16.mxu0 %v7271
  %11151 = vmatpush1.bf16.msra.mxu0 %v7270
  %11152 = vmatprep.subr.bf16.mxu0 %v7275
  %11153 = vmatpush1.bf16.msra.mxu0 %v7274
  %11154 = vmatprep.subr.bf16.mxu0 %v7279
  %11155 = vmatpush1.bf16.msra.mxu0 %v7278
  %11156 = vmatprep.mubr.bf16.mxu0 %v1733
  %11157 = vmatmul.mubr.bf16.gmra.mrb[0].mxu0 %v1732
  %v11158 = vpop.f32.mrb[0].mxu0
  %v11159 = vadd.f32 %v11118, %v11158
  %v11160 = vpop.f32.mrb[0].mxu0
  %v11161 = vadd.f32 %v11120, %v11160
  %v11162 = vpop.f32.mrb[0].mxu0
  %v11163 = vpop.f32.mrb[0].mxu0
  %11164 = vdwg.mxu0
  %11165 = vmatprep.subr.bf16.mxu0 %v7283
  %11166 = vmatpush1.bf16.msra.mxu0 %v7282
  %11167 = vmatprep.subr.bf16.mxu0 %v7287
  %11168 = vmatpush1.bf16.msra.mxu0 %v7286
  %11169 = vmatprep.subr.bf16.mxu0 %v7291
  %11170 = vmatpush1.bf16.msra.mxu0 %v7290
  %11171 = vmatprep.subr.bf16.mxu0 %v7295
  %11172 = vmatpush1.bf16.msra.mxu0 %v7294
  %11173 = vmatprep.subr.bf16.mxu0 %v7299
  %11174 = vmatpush1.bf16.msra.mxu0 %v7298
  %11175 = vmatprep.subr.bf16.mxu0 %v7303
  %11176 = vmatpush1.bf16.msra.mxu0 %v7302
  %11177 = vmatprep.subr.bf16.mxu0 %v7307
  %11178 = vmatpush1.bf16.msra.mxu0 %v7306
  %11179 = vmatprep.subr.bf16.mxu0 %v7311
  %11180 = vmatpush1.bf16.msra.mxu0 %v7310
  %11181 = vmatprep.subr.bf16.mxu0 %v7315
  %11182 = vmatpush1.bf16.msra.mxu0 %v7314
  %11183 = vmatprep.subr.bf16.mxu0 %v7319
  %11184 = vmatpush1.bf16.msra.mxu0 %v7318
  %11185 = vmatprep.subr.bf16.mxu0 %v7323
  %11186 = vmatpush1.bf16.msra.mxu0 %v7322
  %11187 = vmatprep.subr.bf16.mxu0 %v7327
  %11188 = vmatpush1.bf16.msra.mxu0 %v7326
  %11189 = vmatprep.subr.bf16.mxu0 %v7331
  %11190 = vmatpush1.bf16.msra.mxu0 %v7330
  %11191 = vmatprep.subr.bf16.mxu0 %v7335
  %11192 = vmatpush1.bf16.msra.mxu0 %v7334
  %11193 = vmatprep.subr.bf16.mxu0 %v7339
  %11194 = vmatpush1.bf16.msra.mxu0 %v7338
  %11195 = vmatprep.subr.bf16.mxu0 %v7343
  %11196 = vmatpush1.bf16.msra.mxu0 %v7342
  %11197 = vmatprep.mubr.bf16.mxu0 %v1735
  %11198 = vmatmul.mubr.bf16.gmra.mrb[0].mxu0 %v1734
  %v11199 = vpop.f32.mrb[0].mxu0
  %v11200 = vadd.f32 %v11159, %v11199
  %v11201 = vpop.f32.mrb[0].mxu0
  %v11202 = vadd.f32 %v11161, %v11201
  %v11203 = vpop.f32.mrb[0].mxu0
  %v11204 = vpop.f32.mrb[0].mxu0
  %11205 = vdwg.mxu0
  %11206 = vmatprep.subr.bf16.mxu0 %v7347
  %11207 = vmatpush1.bf16.msra.mxu0 %v7346
  %11208 = vmatprep.subr.bf16.mxu0 %v7351
  %11209 = vmatpush1.bf16.msra.mxu0 %v7350
  %11210 = vmatprep.subr.bf16.mxu0 %v7355
  %11211 = vmatpush1.bf16.msra.mxu0 %v7354
  %11212 = vmatprep.subr.bf16.mxu0 %v7359
  %11213 = vmatpush1.bf16.msra.mxu0 %v7358
  %11214 = vmatprep.subr.bf16.mxu0 %v7363
  %11215 = vmatpush1.bf16.msra.mxu0 %v7362
  %11216 = vmatprep.subr.bf16.mxu0 %v7367
  %11217 = vmatpush1.bf16.msra.mxu0 %v7366
  %11218 = vmatprep.subr.bf16.mxu0 %v7371
  %11219 = vmatpush1.bf16.msra.mxu0 %v7370
  %11220 = vmatprep.subr.bf16.mxu0 %v7375
  %11221 = vmatpush1.bf16.msra.mxu0 %v7374
  %11222 = vmatprep.subr.bf16.mxu0 %v7379
  %11223 = vmatpush1.bf16.msra.mxu0 %v7378
  %11224 = vmatprep.subr.bf16.mxu0 %v7383
  %11225 = vmatpush1.bf16.msra.mxu0 %v7382
  %11226 = vmatprep.subr.bf16.mxu0 %v7387
  %11227 = vmatpush1.bf16.msra.mxu0 %v7386
  %11228 = vmatprep.subr.bf16.mxu0 %v7391
  %11229 = vmatpush1.bf16.msra.mxu0 %v7390
  %11230 = vmatprep.subr.bf16.mxu0 %v7395
  %11231 = vmatpush1.bf16.msra.mxu0 %v7394
  %11232 = vmatprep.subr.bf16.mxu0 %v7399
  %11233 = vmatpush1.bf16.msra.mxu0 %v7398
  %11234 = vmatprep.subr.bf16.mxu0 %v7403
  %11235 = vmatpush1.bf16.msra.mxu0 %v7402
  %11236 = vmatprep.subr.bf16.mxu0 %v7407
  %11237 = vmatpush1.bf16.msra.mxu0 %v7406
  %11238 = vmatprep.mubr.bf16.mxu0 %v1737
  %11239 = vmatmul.mubr.bf16.gmra.mrb[0].mxu0 %v1736
  %v11240 = vpop.f32.mrb[0].mxu0
  %v11241 = vadd.f32 %v11200, %v11240
  %v11242 = vpop.f32.mrb[0].mxu0
  %v11243 = vadd.f32 %v11202, %v11242
  %v11244 = vpop.f32.mrb[0].mxu0
  %v11245 = vpop.f32.mrb[0].mxu0
  %11246 = vdwg.mxu0
  %11247 = vmatprep.subr.bf16.mxu0 %v7411
  %11248 = vmatpush1.bf16.msra.mxu0 %v7410
  %11249 = vmatprep.subr.bf16.mxu0 %v7415
  %11250 = vmatpush1.bf16.msra.mxu0 %v7414
  %11251 = vmatprep.subr.bf16.mxu0 %v7419
  %11252 = vmatpush1.bf16.msra.mxu0 %v7418
  %11253 = vmatprep.subr.bf16.mxu0 %v7423
  %11254 = vmatpush1.bf16.msra.mxu0 %v7422
  %11255 = vmatprep.subr.bf16.mxu0 %v7427
  %11256 = vmatpush1.bf16.msra.mxu0 %v7426
  %11257 = vmatprep.subr.bf16.mxu0 %v7431
  %11258 = vmatpush1.bf16.msra.mxu0 %v7430
  %11259 = vmatprep.subr.bf16.mxu0 %v7435
  %11260 = vmatpush1.bf16.msra.mxu0 %v7434
  %11261 = vmatprep.subr.bf16.mxu0 %v7439
  %11262 = vmatpush1.bf16.msra.mxu0 %v7438
  %11263 = vmatprep.subr.bf16.mxu0 %v7443
  %11264 = vmatpush1.bf16.msra.mxu0 %v7442
  %11265 = vmatprep.subr.bf16.mxu0 %v7447
  %11266 = vmatpush1.bf16.msra.mxu0 %v7446
  %11267 = vmatprep.subr.bf16.mxu0 %v7451
  %11268 = vmatpush1.bf16.msra.mxu0 %v7450
  %11269 = vmatprep.subr.bf16.mxu0 %v7455
  %11270 = vmatpush1.bf16.msra.mxu0 %v7454
  %11271 = vmatprep.subr.bf16.mxu0 %v7459
  %11272 = vmatpush1.bf16.msra.mxu0 %v7458
  %11273 = vmatprep.subr.bf16.mxu0 %v7463
  %11274 = vmatpush1.bf16.msra.mxu0 %v7462
  %11275 = vmatprep.subr.bf16.mxu0 %v7467
  %11276 = vmatpush1.bf16.msra.mxu0 %v7466
  %11277 = vmatprep.subr.bf16.mxu0 %v7471
  %11278 = vmatpush1.bf16.msra.mxu0 %v7470
  %11279 = vmatprep.mubr.bf16.mxu0 %v1739
  %11280 = vmatmul.mubr.bf16.gmra.mrb[0].mxu0 %v1738
  %v11281 = vpop.f32.mrb[0].mxu0
  %v11282 = vadd.f32 %v11241, %v11281
  %v11283 = vpop.f32.mrb[0].mxu0
  %v11284 = vadd.f32 %v11243, %v11283
  %v11285 = vpop.f32.mrb[0].mxu0
  %v11286 = vpop.f32.mrb[0].mxu0
  %11287 = vdwg.mxu0
  %11288 = vmatprep.subr.bf16.mxu0 %v7475
  %11289 = vmatpush1.bf16.msra.mxu0 %v7474
  %11290 = vmatprep.subr.bf16.mxu0 %v7479
  %11291 = vmatpush1.bf16.msra.mxu0 %v7478
  %11292 = vmatprep.subr.bf16.mxu0 %v7483
  %11293 = vmatpush1.bf16.msra.mxu0 %v7482
  %11294 = vmatprep.subr.bf16.mxu0 %v7487
  %11295 = vmatpush1.bf16.msra.mxu0 %v7486
  %11296 = vmatprep.subr.bf16.mxu0 %v7491
  %11297 = vmatpush1.bf16.msra.mxu0 %v7490
  %11298 = vmatprep.subr.bf16.mxu0 %v7495
  %11299 = vmatpush1.bf16.msra.mxu0 %v7494
  %11300 = vmatprep.subr.bf16.mxu0 %v7499
  %11301 = vmatpush1.bf16.msra.mxu0 %v7498
  %11302 = vmatprep.subr.bf16.mxu0 %v7503
  %11303 = vmatpush1.bf16.msra.mxu0 %v7502
  %11304 = vmatprep.subr.bf16.mxu0 %v7507
  %11305 = vmatpush1.bf16.msra.mxu0 %v7506
  %11306 = vmatprep.subr.bf16.mxu0 %v7511
  %11307 = vmatpush1.bf16.msra.mxu0 %v7510
  %11308 = vmatprep.subr.bf16.mxu0 %v7515
  %11309 = vmatpush1.bf16.msra.mxu0 %v7514
  %11310 = vmatprep.subr.bf16.mxu0 %v7519
  %11311 = vmatpush1.bf16.msra.mxu0 %v7518
  %11312 = vmatprep.subr.bf16.mxu0 %v7523
  %11313 = vmatpush1.bf16.msra.mxu0 %v7522
  %11314 = vmatprep.subr.bf16.mxu0 %v7527
  %11315 = vmatpush1.bf16.msra.mxu0 %v7526
  %11316 = vmatprep.subr.bf16.mxu0 %v7531
  %11317 = vmatpush1.bf16.msra.mxu0 %v7530
  %11318 = vmatprep.subr.bf16.mxu0 %v7535
  %11319 = vmatpush1.bf16.msra.mxu0 %v7534
  %11320 = vmatprep.mubr.bf16.mxu0 %v1741
  %11321 = vmatmul.mubr.bf16.gmra.mrb[0].mxu0 %v1740
  %v11322 = vpop.f32.mrb[0].mxu0
  %v11323 = vadd.f32 %v11282, %v11322
  %v11324 = vpop.f32.mrb[0].mxu0
  %v11325 = vadd.f32 %v11284, %v11324
  %v11326 = vpop.f32.mrb[0].mxu0
  %v11327 = vpop.f32.mrb[0].mxu0
  %11328 = vdwg.mxu0
  %11329 = vmatprep.subr.bf16.mxu0 %v7539
  %11330 = vmatpush1.bf16.msra.mxu0 %v7538
  %11331 = vmatprep.subr.bf16.mxu0 %v7543
  %11332 = vmatpush1.bf16.msra.mxu0 %v7542
  %11333 = vmatprep.subr.bf16.mxu0 %v7547
  %11334 = vmatpush1.bf16.msra.mxu0 %v7546
  %11335 = vmatprep.subr.bf16.mxu0 %v7551
  %11336 = vmatpush1.bf16.msra.mxu0 %v7550
  %11337 = vmatprep.subr.bf16.mxu0 %v7555
  %11338 = vmatpush1.bf16.msra.mxu0 %v7554
  %11339 = vmatprep.subr.bf16.mxu0 %v7559
  %11340 = vmatpush1.bf16.msra.mxu0 %v7558
  %11341 = vmatprep.subr.bf16.mxu0 %v7563
  %11342 = vmatpush1.bf16.msra.mxu0 %v7562
  %11343 = vmatprep.subr.bf16.mxu0 %v7567
  %11344 = vmatpush1.bf16.msra.mxu0 %v7566
  %11345 = vmatprep.subr.bf16.mxu0 %v7571
  %11346 = vmatpush1.bf16.msra.mxu0 %v7570
  %11347 = vmatprep.subr.bf16.mxu0 %v7575
  %11348 = vmatpush1.bf16.msra.mxu0 %v7574
  %11349 = vmatprep.subr.bf16.mxu0 %v7579
  %11350 = vmatpush1.bf16.msra.mxu0 %v7578
  %11351 = vmatprep.subr.bf16.mxu0 %v7583
  %11352 = vmatpush1.bf16.msra.mxu0 %v7582
  %11353 = vmatprep.subr.bf16.mxu0 %v7587
  %11354 = vmatpush1.bf16.msra.mxu0 %v7586
  %11355 = vmatprep.subr.bf16.mxu0 %v7591
  %11356 = vmatpush1.bf16.msra.mxu0 %v7590
  %11357 = vmatprep.subr.bf16.mxu0 %v7595
  %11358 = vmatpush1.bf16.msra.mxu0 %v7594
  %11359 = vmatprep.subr.bf16.mxu0 %v7599
  %11360 = vmatpush1.bf16.msra.mxu0 %v7598
  %11361 = vmatprep.mubr.bf16.mxu0 %v1743
  %11362 = vmatmul.mubr.bf16.gmra.mrb[0].mxu0 %v1742
  %v11363 = vpop.f32.mrb[0].mxu0
  %v11364 = vadd.f32 %v11323, %v11363
  %v11365 = vpop.f32.mrb[0].mxu0
  %v11366 = vadd.f32 %v11325, %v11365
  %v11367 = vpop.f32.mrb[0].mxu0
  %v11368 = vpop.f32.mrb[0].mxu0
  %11369 = vdwg.mxu0
  %11370 = vmatprep.subr.bf16.mxu0 %v7603
  %11371 = vmatpush1.bf16.msra.mxu0 %v7602
  %11372 = vmatprep.subr.bf16.mxu0 %v7607
  %11373 = vmatpush1.bf16.msra.mxu0 %v7606
  %11374 = vmatprep.subr.bf16.mxu0 %v7611
  %11375 = vmatpush1.bf16.msra.mxu0 %v7610
  %11376 = vmatprep.subr.bf16.mxu0 %v7615
  %11377 = vmatpush1.bf16.msra.mxu0 %v7614
  %11378 = vmatprep.subr.bf16.mxu0 %v7619
  %11379 = vmatpush1.bf16.msra.mxu0 %v7618
  %11380 = vmatprep.subr.bf16.mxu0 %v7623
  %11381 = vmatpush1.bf16.msra.mxu0 %v7622
  %11382 = vmatprep.subr.bf16.mxu0 %v7627
  %11383 = vmatpush1.bf16.msra.mxu0 %v7626
  %11384 = vmatprep.subr.bf16.mxu0 %v7631
  %11385 = vmatpush1.bf16.msra.mxu0 %v7630
  %11386 = vmatprep.subr.bf16.mxu0 %v7635
  %11387 = vmatpush1.bf16.msra.mxu0 %v7634
  %11388 = vmatprep.subr.bf16.mxu0 %v7639
  %11389 = vmatpush1.bf16.msra.mxu0 %v7638
  %11390 = vmatprep.subr.bf16.mxu0 %v7643
  %11391 = vmatpush1.bf16.msra.mxu0 %v7642
  %11392 = vmatprep.subr.bf16.mxu0 %v7647
  %11393 = vmatpush1.bf16.msra.mxu0 %v7646
  %11394 = vmatprep.subr.bf16.mxu0 %v7651
  %11395 = vmatpush1.bf16.msra.mxu0 %v7650
  %11396 = vmatprep.subr.bf16.mxu0 %v7655
  %11397 = vmatpush1.bf16.msra.mxu0 %v7654
  %11398 = vmatprep.subr.bf16.mxu0 %v7659
  %11399 = vmatpush1.bf16.msra.mxu0 %v7658
  %11400 = vmatprep.subr.bf16.mxu0 %v7663
  %11401 = vmatpush1.bf16.msra.mxu0 %v7662
  %11402 = vmatprep.mubr.bf16.mxu0 %v1745
  %11403 = vmatmul.mubr.bf16.gmra.mrb[0].mxu0 %v1744
  %v11404 = vpop.f32.mrb[0].mxu0
  %v11405 = vadd.f32 %v11364, %v11404
  %v11406 = vpop.f32.mrb[0].mxu0
  %v11407 = vadd.f32 %v11366, %v11406
  %v11408 = vpop.f32.mrb[0].mxu0
  %v11409 = vpop.f32.mrb[0].mxu0
  %11410 = vdwg.mxu0
  %11411 = vmatprep.subr.bf16.mxu0 %v7667
  %11412 = vmatpush1.bf16.msra.mxu0 %v7666
  %11413 = vmatprep.subr.bf16.mxu0 %v7671
  %11414 = vmatpush1.bf16.msra.mxu0 %v7670
  %11415 = vmatprep.subr.bf16.mxu0 %v7675
  %11416 = vmatpush1.bf16.msra.mxu0 %v7674
  %11417 = vmatprep.subr.bf16.mxu0 %v7679
  %11418 = vmatpush1.bf16.msra.mxu0 %v7678
  %11419 = vmatprep.subr.bf16.mxu0 %v7683
  %11420 = vmatpush1.bf16.msra.mxu0 %v7682
  %11421 = vmatprep.subr.bf16.mxu0 %v7687
  %11422 = vmatpush1.bf16.msra.mxu0 %v7686
  %11423 = vmatprep.subr.bf16.mxu0 %v7691
  %11424 = vmatpush1.bf16.msra.mxu0 %v7690
  %11425 = vmatprep.subr.bf16.mxu0 %v7695
  %11426 = vmatpush1.bf16.msra.mxu0 %v7694
  %11427 = vmatprep.subr.bf16.mxu0 %v7699
  %11428 = vmatpush1.bf16.msra.mxu0 %v7698
  %11429 = vmatprep.subr.bf16.mxu0 %v7703
  %11430 = vmatpush1.bf16.msra.mxu0 %v7702
  %11431 = vmatprep.subr.bf16.mxu0 %v7707
  %11432 = vmatpush1.bf16.msra.mxu0 %v7706
  %11433 = vmatprep.subr.bf16.mxu0 %v7711
  %11434 = vmatpush1.bf16.msra.mxu0 %v7710
  %11435 = vmatprep.subr.bf16.mxu0 %v7715
  %11436 = vmatpush1.bf16.msra.mxu0 %v7714
  %11437 = vmatprep.subr.bf16.mxu0 %v7719
  %11438 = vmatpush1.bf16.msra.mxu0 %v7718
  %11439 = vmatprep.subr.bf16.mxu0 %v7723
  %11440 = vmatpush1.bf16.msra.mxu0 %v7722
  %11441 = vmatprep.subr.bf16.mxu0 %v7727
  %11442 = vmatpush1.bf16.msra.mxu0 %v7726
  %11443 = vmatprep.mubr.bf16.mxu0 %v1747
  %11444 = vmatmul.mubr.bf16.gmra.mrb[0].mxu0 %v1746
  %v11445 = vpop.f32.mrb[0].mxu0
  %v11446 = vadd.f32 %v11405, %v11445
  %v11447 = vpop.f32.mrb[0].mxu0
  %v11448 = vadd.f32 %v11407, %v11447
  %v11449 = vpop.f32.mrb[0].mxu0
  %v11450 = vpop.f32.mrb[0].mxu0
  %11451 = vdwg.mxu0
  %11452 = vmatprep.subr.bf16.mxu0 %v7731
  %11453 = vmatpush1.bf16.msra.mxu0 %v7730
  %11454 = vmatprep.subr.bf16.mxu0 %v7735
  %11455 = vmatpush1.bf16.msra.mxu0 %v7734
  %11456 = vmatprep.subr.bf16.mxu0 %v7739
  %11457 = vmatpush1.bf16.msra.mxu0 %v7738
  %11458 = vmatprep.subr.bf16.mxu0 %v7743
  %11459 = vmatpush1.bf16.msra.mxu0 %v7742
  %11460 = vmatprep.subr.bf16.mxu0 %v7747
  %11461 = vmatpush1.bf16.msra.mxu0 %v7746
  %11462 = vmatprep.subr.bf16.mxu0 %v7751
  %11463 = vmatpush1.bf16.msra.mxu0 %v7750
  %11464 = vmatprep.subr.bf16.mxu0 %v7755
  %11465 = vmatpush1.bf16.msra.mxu0 %v7754
  %11466 = vmatprep.subr.bf16.mxu0 %v7759
  %11467 = vmatpush1.bf16.msra.mxu0 %v7758
  %11468 = vmatprep.subr.bf16.mxu0 %v7763
  %11469 = vmatpush1.bf16.msra.mxu0 %v7762
  %11470 = vmatprep.subr.bf16.mxu0 %v7767
  %11471 = vmatpush1.bf16.msra.mxu0 %v7766
  %11472 = vmatprep.subr.bf16.mxu0 %v7771
  %11473 = vmatpush1.bf16.msra.mxu0 %v7770
  %11474 = vmatprep.subr.bf16.mxu0 %v7775
  %11475 = vmatpush1.bf16.msra.mxu0 %v7774
  %11476 = vmatprep.subr.bf16.mxu0 %v7779
  %11477 = vmatpush1.bf16.msra.mxu0 %v7778
  %11478 = vmatprep.subr.bf16.mxu0 %v7783
  %11479 = vmatpush1.bf16.msra.mxu0 %v7782
  %11480 = vmatprep.subr.bf16.mxu0 %v7787
  %11481 = vmatpush1.bf16.msra.mxu0 %v7786
  %11482 = vmatprep.subr.bf16.mxu0 %v7791
  %11483 = vmatpush1.bf16.msra.mxu0 %v7790
  %11484 = vmatprep.mubr.bf16.mxu0 %v1749
  %11485 = vmatmul.mubr.bf16.gmra.mrb[0].mxu0 %v1748
  %v11486 = vpop.f32.mrb[0].mxu0
  %v11487 = vadd.f32 %v11446, %v11486
  %v11488 = vpop.f32.mrb[0].mxu0
  %v11489 = vadd.f32 %v11448, %v11488
  %v11490 = vpop.f32.mrb[0].mxu0
  %v11491 = vpop.f32.mrb[0].mxu0
  %11492 = vdwg.mxu0
  %11493 = vmatprep.subr.bf16.mxu0 %v7795
  %11494 = vmatpush1.bf16.msra.mxu0 %v7794
  %11495 = vmatprep.subr.bf16.mxu0 %v7799
  %11496 = vmatpush1.bf16.msra.mxu0 %v7798
  %11497 = vmatprep.subr.bf16.mxu0 %v7803
  %11498 = vmatpush1.bf16.msra.mxu0 %v7802
  %11499 = vmatprep.subr.bf16.mxu0 %v7807
  %11500 = vmatpush1.bf16.msra.mxu0 %v7806
  %11501 = vmatprep.subr.bf16.mxu0 %v7811
  %11502 = vmatpush1.bf16.msra.mxu0 %v7810
  %11503 = vmatprep.subr.bf16.mxu0 %v7815
  %11504 = vmatpush1.bf16.msra.mxu0 %v7814
  %11505 = vmatprep.subr.bf16.mxu0 %v7819
  %11506 = vmatpush1.bf16.msra.mxu0 %v7818
  %11507 = vmatprep.subr.bf16.mxu0 %v7823
  %11508 = vmatpush1.bf16.msra.mxu0 %v7822
  %11509 = vmatprep.subr.bf16.mxu0 %v7827
  %11510 = vmatpush1.bf16.msra.mxu0 %v7826
  %11511 = vmatprep.subr.bf16.mxu0 %v7831
  %11512 = vmatpush1.bf16.msra.mxu0 %v7830
  %11513 = vmatprep.subr.bf16.mxu0 %v7835
  %11514 = vmatpush1.bf16.msra.mxu0 %v7834
  %11515 = vmatprep.subr.bf16.mxu0 %v7839
  %11516 = vmatpush1.bf16.msra.mxu0 %v7838
  %11517 = vmatprep.subr.bf16.mxu0 %v7843
  %11518 = vmatpush1.bf16.msra.mxu0 %v7842
  %11519 = vmatprep.subr.bf16.mxu0 %v7847
  %11520 = vmatpush1.bf16.msra.mxu0 %v7846
  %11521 = vmatprep.subr.bf16.mxu0 %v7851
  %11522 = vmatpush1.bf16.msra.mxu0 %v7850
  %11523 = vmatprep.subr.bf16.mxu0 %v7855
  %11524 = vmatpush1.bf16.msra.mxu0 %v7854
  %11525 = vmatprep.mubr.bf16.mxu0 %v1751
  %11526 = vmatmul.mubr.bf16.gmra.mrb[0].mxu0 %v1750
  %v11527 = vpop.f32.mrb[0].mxu0
  %v11528 = vadd.f32 %v11487, %v11527
  %v11529 = vpop.f32.mrb[0].mxu0
  %v11530 = vadd.f32 %v11489, %v11529
  %v11531 = vpop.f32.mrb[0].mxu0
  %v11532 = vpop.f32.mrb[0].mxu0
  %11533 = vdwg.mxu0
  %11534 = vmatprep.subr.bf16.mxu0 %v7859
  %11535 = vmatpush1.bf16.msra.mxu0 %v7858
  %11536 = vmatprep.subr.bf16.mxu0 %v7863
  %11537 = vmatpush1.bf16.msra.mxu0 %v7862
  %11538 = vmatprep.subr.bf16.mxu0 %v7867
  %11539 = vmatpush1.bf16.msra.mxu0 %v7866
  %11540 = vmatprep.subr.bf16.mxu0 %v7871
  %11541 = vmatpush1.bf16.msra.mxu0 %v7870
  %11542 = vmatprep.subr.bf16.mxu0 %v7875
  %11543 = vmatpush1.bf16.msra.mxu0 %v7874
  %11544 = vmatprep.subr.bf16.mxu0 %v7879
  %11545 = vmatpush1.bf16.msra.mxu0 %v7878
  %11546 = vmatprep.subr.bf16.mxu0 %v7883
  %11547 = vmatpush1.bf16.msra.mxu0 %v7882
  %11548 = vmatprep.subr.bf16.mxu0 %v7887
  %11549 = vmatpush1.bf16.msra.mxu0 %v7886
  %11550 = vmatprep.subr.bf16.mxu0 %v7891
  %11551 = vmatpush1.bf16.msra.mxu0 %v7890
  %11552 = vmatprep.subr.bf16.mxu0 %v7895
  %11553 = vmatpush1.bf16.msra.mxu0 %v7894
  %11554 = vmatprep.subr.bf16.mxu0 %v7899
  %11555 = vmatpush1.bf16.msra.mxu0 %v7898
  %11556 = vmatprep.subr.bf16.mxu0 %v7903
  %11557 = vmatpush1.bf16.msra.mxu0 %v7902
  %11558 = vmatprep.subr.bf16.mxu0 %v7907
  %11559 = vmatpush1.bf16.msra.mxu0 %v7906
  %11560 = vmatprep.subr.bf16.mxu0 %v7911
  %11561 = vmatpush1.bf16.msra.mxu0 %v7910
  %11562 = vmatprep.subr.bf16.mxu0 %v7915
  %11563 = vmatpush1.bf16.msra.mxu0 %v7914
  %11564 = vmatprep.subr.bf16.mxu0 %v7919
  %11565 = vmatpush1.bf16.msra.mxu0 %v7918
  %11566 = vmatprep.mubr.bf16.mxu0 %v1753
  %11567 = vmatmul.mubr.bf16.gmra.mrb[0].mxu0 %v1752
  %v11568 = vpop.f32.mrb[0].mxu0
  %v11569 = vadd.f32 %v11528, %v11568
  %v11570 = vpop.f32.mrb[0].mxu0
  %v11571 = vadd.f32 %v11530, %v11570
  %v11572 = vpop.f32.mrb[0].mxu0
  %v11573 = vpop.f32.mrb[0].mxu0
  %11574 = vdwg.mxu0
  %11575 = vmatprep.subr.bf16.mxu0 %v7923
  %11576 = vmatpush1.bf16.msra.mxu0 %v7922
  %11577 = vmatprep.subr.bf16.mxu0 %v7927
  %11578 = vmatpush1.bf16.msra.mxu0 %v7926
  %11579 = vmatprep.subr.bf16.mxu0 %v7931
  %11580 = vmatpush1.bf16.msra.mxu0 %v7930
  %11581 = vmatprep.subr.bf16.mxu0 %v7935
  %11582 = vmatpush1.bf16.msra.mxu0 %v7934
  %11583 = vmatprep.subr.bf16.mxu0 %v7939
  %11584 = vmatpush1.bf16.msra.mxu0 %v7938
  %11585 = vmatprep.subr.bf16.mxu0 %v7943
  %11586 = vmatpush1.bf16.msra.mxu0 %v7942
  %11587 = vmatprep.subr.bf16.mxu0 %v7947
  %11588 = vmatpush1.bf16.msra.mxu0 %v7946
  %11589 = vmatprep.subr.bf16.mxu0 %v7951
  %11590 = vmatpush1.bf16.msra.mxu0 %v7950
  %11591 = vmatprep.subr.bf16.mxu0 %v7955
  %11592 = vmatpush1.bf16.msra.mxu0 %v7954
  %11593 = vmatprep.subr.bf16.mxu0 %v7959
  %11594 = vmatpush1.bf16.msra.mxu0 %v7958
  %11595 = vmatprep.subr.bf16.mxu0 %v7963
  %11596 = vmatpush1.bf16.msra.mxu0 %v7962
  %11597 = vmatprep.subr.bf16.mxu0 %v7967
  %11598 = vmatpush1.bf16.msra.mxu0 %v7966
  %11599 = vmatprep.subr.bf16.mxu0 %v7971
  %11600 = vmatpush1.bf16.msra.mxu0 %v7970
  %11601 = vmatprep.subr.bf16.mxu0 %v7975
  %11602 = vmatpush1.bf16.msra.mxu0 %v7974
  %11603 = vmatprep.subr.bf16.mxu0 %v7979
  %11604 = vmatpush1.bf16.msra.mxu0 %v7978
  %11605 = vmatprep.subr.bf16.mxu0 %v7983
  %11606 = vmatpush1.bf16.msra.mxu0 %v7982
  %11607 = vmatprep.mubr.bf16.mxu0 %v1755
  %11608 = vmatmul.mubr.bf16.gmra.mrb[0].mxu0 %v1754
  %v11609 = vpop.f32.mrb[0].mxu0
  %v11610 = vadd.f32 %v11569, %v11609
  %v11611 = vpop.f32.mrb[0].mxu0
  %v11612 = vadd.f32 %v11571, %v11611
  %v11613 = vpop.f32.mrb[0].mxu0
  %v11614 = vpop.f32.mrb[0].mxu0
  %11615 = vdwg.mxu0
  %11616 = vmatprep.subr.bf16.mxu0 %v7987
  %11617 = vmatpush1.bf16.msra.mxu0 %v7986
  %11618 = vmatprep.subr.bf16.mxu0 %v7991
  %11619 = vmatpush1.bf16.msra.mxu0 %v7990
  %11620 = vmatprep.subr.bf16.mxu0 %v7995
  %11621 = vmatpush1.bf16.msra.mxu0 %v7994
  %11622 = vmatprep.subr.bf16.mxu0 %v7999
  %11623 = vmatpush1.bf16.msra.mxu0 %v7998
  %11624 = vmatprep.subr.bf16.mxu0 %v8003
  %11625 = vmatpush1.bf16.msra.mxu0 %v8002
  %11626 = vmatprep.subr.bf16.mxu0 %v8007
  %11627 = vmatpush1.bf16.msra.mxu0 %v8006
  %11628 = vmatprep.subr.bf16.mxu0 %v8011
  %11629 = vmatpush1.bf16.msra.mxu0 %v8010
  %11630 = vmatprep.subr.bf16.mxu0 %v8015
  %11631 = vmatpush1.bf16.msra.mxu0 %v8014
  %11632 = vmatprep.subr.bf16.mxu0 %v8019
  %11633 = vmatpush1.bf16.msra.mxu0 %v8018
  %11634 = vmatprep.subr.bf16.mxu0 %v8023
  %11635 = vmatpush1.bf16.msra.mxu0 %v8022
  %11636 = vmatprep.subr.bf16.mxu0 %v8027
  %11637 = vmatpush1.bf16.msra.mxu0 %v8026
  %11638 = vmatprep.subr.bf16.mxu0 %v8031
  %11639 = vmatpush1.bf16.msra.mxu0 %v8030
  %11640 = vmatprep.subr.bf16.mxu0 %v8035
  %11641 = vmatpush1.bf16.msra.mxu0 %v8034
  %11642 = vmatprep.subr.bf16.mxu0 %v8039
  %11643 = vmatpush1.bf16.msra.mxu0 %v8038
  %11644 = vmatprep.subr.bf16.mxu0 %v8043
  %11645 = vmatpush1.bf16.msra.mxu0 %v8042
  %11646 = vmatprep.subr.bf16.mxu0 %v8047
  %11647 = vmatpush1.bf16.msra.mxu0 %v8046
  %11648 = vmatprep.mubr.bf16.mxu0 %v1757
  %11649 = vmatmul.mubr.bf16.gmra.mrb[0].mxu0 %v1756
  %v11650 = vpop.f32.mrb[0].mxu0
  %v11651 = vadd.f32 %v11610, %v11650
  %v11652 = vpop.f32.mrb[0].mxu0
  %v11653 = vadd.f32 %v11612, %v11652
  %v11654 = vpop.f32.mrb[0].mxu0
  %v11655 = vpop.f32.mrb[0].mxu0
  %11656 = vdwg.mxu0
  %11657 = vmatprep.subr.bf16.mxu0 %v8051
  %11658 = vmatpush1.bf16.msra.mxu0 %v8050
  %11659 = vmatprep.subr.bf16.mxu0 %v8055
  %11660 = vmatpush1.bf16.msra.mxu0 %v8054
  %11661 = vmatprep.subr.bf16.mxu0 %v8059
  %11662 = vmatpush1.bf16.msra.mxu0 %v8058
  %11663 = vmatprep.subr.bf16.mxu0 %v8063
  %11664 = vmatpush1.bf16.msra.mxu0 %v8062
  %11665 = vmatprep.subr.bf16.mxu0 %v8067
  %11666 = vmatpush1.bf16.msra.mxu0 %v8066
  %11667 = vmatprep.subr.bf16.mxu0 %v8071
  %11668 = vmatpush1.bf16.msra.mxu0 %v8070
  %11669 = vmatprep.subr.bf16.mxu0 %v8075
  %11670 = vmatpush1.bf16.msra.mxu0 %v8074
  %11671 = vmatprep.subr.bf16.mxu0 %v8079
  %11672 = vmatpush1.bf16.msra.mxu0 %v8078
  %11673 = vmatprep.subr.bf16.mxu0 0
  %11674 = vmatpush1.bf16.msra.mxu0 0
  %11675 = vmatprep.subr.bf16.mxu0 0
  %11676 = vmatpush1.bf16.msra.mxu0 0
  %11677 = vmatprep.subr.bf16.mxu0 0
  %11678 = vmatpush1.bf16.msra.mxu0 0
  %11679 = vmatprep.subr.bf16.mxu0 0
  %11680 = vmatpush1.bf16.msra.mxu0 0
  %11681 = vmatprep.subr.bf16.mxu0 0
  %11682 = vmatpush1.bf16.msra.mxu0 0
  %11683 = vmatprep.subr.bf16.mxu0 0
  %11684 = vmatpush1.bf16.msra.mxu0 0
  %11685 = vmatprep.subr.bf16.mxu0 0
  %11686 = vmatpush1.bf16.msra.mxu0 0
  %11687 = vmatprep.subr.bf16.mxu0 0
  %11688 = vmatpush1.bf16.msra.mxu0 0
  %11689 = vmatprep.mubr.bf16.mxu0 0
  %11690 = vmatmul.mubr.bf16.gmra.mrb[0].mxu0 %v1758
  %v11691 = vpop.f32.mrb[0].mxu0
  %v11692 = vadd.f32 %v11651, %v11691
  %v11693 = vpop.f32.mrb[0].mxu0
  %v11694 = vadd.f32 %v11653, %v11693
  %v11695 = vpop.f32.mrb[0].mxu0
  %v11696 = vpop.f32.mrb[0].mxu0
  %11697 = vdwg.mxu0
  %v11698 = vmax.f32 %v10667, 0.0
  %v11699 = vmax.f32 %v10669, 0.0
  %v11700 = vmax.f32 %v11692, 0.0
  %v11701 = vmax.f32 %v11694, 0.0
  %v11702 = vpack.c.bf16 %v11698, %v11698
  %v11703 = vpack.c.bf16 %v11699, %v11699
  %v11704 = vpack.c.bf16 %v11700, %v11700
  %v11705 = vpack.c.bf16 %v11701, %v11701
  %v11706 = vld [vmem:[%s3] sm:$0xf]
  %v11707 = vld [vmem:[%s3 + $0x4] sm:$0xf]
  %v11708 = vld [vmem:[%s3 + $0x8] sm:$0xf]
  %v11709 = vld [vmem:[%s3 + $0xc] sm:$0xf]
  %v11710 = vld [vmem:[%s3 + $0x10] sm:$0xf]
  %v11711 = vld [vmem:[%s3 + $0x14] sm:$0xf]
  %v11712 = vld [vmem:[%s3 + $0x18] sm:$0xf]
  %v11713 = vld [vmem:[%s3 + $0x1c] sm:$0xf]
  %v11714 = vld [vmem:[%s3 + $0x20] sm:$0xf]
  %v11715 = vld [vmem:[%s3 + $0x24] sm:$0xf]
  %v11716 = vld [vmem:[%s3 + $0x28] sm:$0xf]
  %v11717 = vld [vmem:[%s3 + $0x2c] sm:$0xf]
  %v11718 = vld [vmem:[%s3 + $0x30] sm:$0xf]
  %v11719 = vld [vmem:[%s3 + $0x34] sm:$0xf]
  %v11720 = vld [vmem:[%s3 + $0x38] sm:$0xf]
  %v11721 = vld [vmem:[%s3 + $0x3c] sm:$0xf]
  %v11722 = vld [vmem:[%s3 + $0x40] sm:$0xf]
  %v11723 = vld [vmem:[%s3 + $0x44] sm:$0xf]
  %v11724 = vld [vmem:[%s3 + $0x48] sm:$0xf]
  %v11725 = vld [vmem:[%s3 + $0x4c] sm:$0xf]
  %v11726 = vld [vmem:[%s3 + $0x50] sm:$0xf]
  %v11727 = vld [vmem:[%s3 + $0x54] sm:$0xf]
  %v11728 = vld [vmem:[%s3 + $0x58] sm:$0xf]
  %v11729 = vld [vmem:[%s3 + $0x5c] sm:$0xf]
  %v11730 = vld [vmem:[%s3 + $0x60] sm:$0xf]
  %v11731 = vld [vmem:[%s3 + $0x64] sm:$0xf]
  %v11732 = vld [vmem:[%s3 + $0x68] sm:$0xf]
  %v11733 = vld [vmem:[%s3 + $0x6c] sm:$0xf]
  %v11734 = vld [vmem:[%s3 + $0x70] sm:$0xf]
  %v11735 = vld [vmem:[%s3 + $0x74] sm:$0xf]
  %v11736 = vld [vmem:[%s3 + $0x78] sm:$0xf]
  %v11737 = vld [vmem:[%s3 + $0x7c] sm:$0xf]
  %v11738 = vld [vmem:[%s3 + $0x80] sm:$0xf]
  %v11739 = vld [vmem:[%s3 + $0x84] sm:$0xf]
  %v11740 = vld [vmem:[%s3 + $0x88] sm:$0xf]
  %v11741 = vld [vmem:[%s3 + $0x8c] sm:$0xf]
  %v11742 = vld [vmem:[%s3 + $0x90] sm:$0xf]
  %v11743 = vld [vmem:[%s3 + $0x94] sm:$0xf]
  %v11744 = vld [vmem:[%s3 + $0x98] sm:$0xf]
  %v11745 = vld [vmem:[%s3 + $0x9c] sm:$0xf]
  %v11746 = vld [vmem:[%s3 + $0xa0] sm:$0xf]
  %v11747 = vld [vmem:[%s3 + $0xa4] sm:$0xf]
  %v11748 = vld [vmem:[%s3 + $0xa8] sm:$0xf]
  %v11749 = vld [vmem:[%s3 + $0xac] sm:$0xf]
  %v11750 = vld [vmem:[%s3 + $0xb0] sm:$0xf]
  %v11751 = vld [vmem:[%s3 + $0xb4] sm:$0xf]
  %v11752 = vld [vmem:[%s3 + $0xb8] sm:$0xf]
  %v11753 = vld [vmem:[%s3 + $0xbc] sm:$0xf]
  %v11754 = vld [vmem:[%s3 + $0xc0] sm:$0xf]
  %v11755 = vld [vmem:[%s3 + $0xc4] sm:$0xf]
  %v11756 = vld [vmem:[%s3 + $0xc8] sm:$0xf]
  %v11757 = vld [vmem:[%s3 + $0xcc] sm:$0xf]
  %v11758 = vld [vmem:[%s3 + $0xd0] sm:$0xf]
  %v11759 = vld [vmem:[%s3 + $0xd4] sm:$0xf]
  %v11760 = vld [vmem:[%s3 + $0xd8] sm:$0xf]
  %v11761 = vld [vmem:[%s3 + $0xdc] sm:$0xf]
  %v11762 = vld [vmem:[%s3 + $0xe0] sm:$0xf]
  %v11763 = vld [vmem:[%s3 + $0xe4] sm:$0xf]
  %v11764 = vld [vmem:[%s3 + $0xe8] sm:$0xf]
  %v11765 = vld [vmem:[%s3 + $0xec] sm:$0xf]
  %v11766 = vld [vmem:[%s3 + $0xf0] sm:$0xf]
  %v11767 = vld [vmem:[%s3 + $0xf4] sm:$0xf]
  %v11768 = vld [vmem:[%s3 + $0xf8] sm:$0xf]
  %v11769 = vld [vmem:[%s3 + $0xfc] sm:$0xf]
  %v11770 = vld [vmem:[%s4] sm:$0x1]
  %v11772 = vlaneseq
  %v11773 = vshrl.u32 %v11772, 7
  %v11774 = vsub.s32 0, %v11773
  %v11775 = vrot.slane %v11770, %v11774
  %v11841 = vunpack.c.l.b16 %v11706
  %v11842 = vunpack.c.l.b16 %v11707
  %v11843 = vunpack.c.l.b16 %v11708
  %v11844 = vunpack.c.l.b16 %v11709
  %v11845 = vunpack.c.l.b16 %v11710
  %v11846 = vunpack.c.l.b16 %v11711
  %v11847 = vunpack.c.l.b16 %v11712
  %v11848 = vunpack.c.l.b16 %v11713
  %v11849 = vunpack.c.l.b16 %v11714
  %v11850 = vunpack.c.l.b16 %v11715
  %v11851 = vunpack.c.l.b16 %v11716
  %v11852 = vunpack.c.l.b16 %v11717
  %v11853 = vunpack.c.l.b16 %v11718
  %v11854 = vunpack.c.l.b16 %v11719
  %v11855 = vunpack.c.l.b16 %v11720
  %v11856 = vunpack.c.l.b16 %v11721
  %v11857 = vunpack.c.l.b16 %v11722
  %v11858 = vunpack.c.l.b16 %v11723
  %v11859 = vunpack.c.l.b16 %v11724
  %v11860 = vunpack.c.l.b16 %v11725
  %v11861 = vunpack.c.l.b16 %v11726
  %v11862 = vunpack.c.l.b16 %v11727
  %v11863 = vunpack.c.l.b16 %v11728
  %v11864 = vunpack.c.l.b16 %v11729
  %v11865 = vunpack.c.l.b16 %v11730
  %v11866 = vunpack.c.l.b16 %v11731
  %v11867 = vunpack.c.l.b16 %v11732
  %v11868 = vunpack.c.l.b16 %v11733
  %v11869 = vunpack.c.l.b16 %v11734
  %v11870 = vunpack.c.l.b16 %v11735
  %v11871 = vunpack.c.l.b16 %v11736
  %v11872 = vunpack.c.l.b16 %v11737
  %v11873 = vunpack.c.l.b16 %v11738
  %v11874 = vunpack.c.l.b16 %v11739
  %v11875 = vunpack.c.l.b16 %v11740
  %v11876 = vunpack.c.l.b16 %v11741
  %v11877 = vunpack.c.l.b16 %v11742
  %v11878 = vunpack.c.l.b16 %v11743
  %v11879 = vunpack.c.l.b16 %v11744
  %v11880 = vunpack.c.l.b16 %v11745
  %v11881 = vunpack.c.l.b16 %v11746
  %v11882 = vunpack.c.l.b16 %v11747
  %v11883 = vunpack.c.l.b16 %v11748
  %v11884 = vunpack.c.l.b16 %v11749
  %v11885 = vunpack.c.l.b16 %v11750
  %v11886 = vunpack.c.l.b16 %v11751
  %v11887 = vunpack.c.l.b16 %v11752
  %v11888 = vunpack.c.l.b16 %v11753
  %v11889 = vunpack.c.l.b16 %v11754
  %v11890 = vunpack.c.l.b16 %v11755
  %v11891 = vunpack.c.l.b16 %v11756
  %v11892 = vunpack.c.l.b16 %v11757
  %v11893 = vunpack.c.l.b16 %v11758
  %v11894 = vunpack.c.l.b16 %v11759
  %v11895 = vunpack.c.l.b16 %v11760
  %v11896 = vunpack.c.l.b16 %v11761
  %v11897 = vunpack.c.l.b16 %v11762
  %v11898 = vunpack.c.l.b16 %v11763
  %v11899 = vunpack.c.l.b16 %v11764
  %v11900 = vunpack.c.l.b16 %v11765
  %v11901 = vunpack.c.l.b16 %v11766
  %v11902 = vunpack.c.l.b16 %v11767
  %v11903 = vunpack.c.l.b16 %v11768
  %v11904 = vunpack.c.l.b16 %v11769
  %v11905 = vpack.c.b16 %v11842, %v11841
  %v11906 = vpack.c.b16 %v11844, %v11843
  %v11907 = vpack.c.b16 %v11846, %v11845
  %v11908 = vpack.c.b16 %v11848, %v11847
  %v11909 = vpack.c.b16 %v11850, %v11849
  %v11910 = vpack.c.b16 %v11852, %v11851
  %v11911 = vpack.c.b16 %v11854, %v11853
  %v11912 = vpack.c.b16 %v11856, %v11855
  %v11913 = vpack.c.b16 %v11858, %v11857
  %v11914 = vpack.c.b16 %v11860, %v11859
  %v11915 = vpack.c.b16 %v11862, %v11861
  %v11916 = vpack.c.b16 %v11864, %v11863
  %v11917 = vpack.c.b16 %v11866, %v11865
  %v11918 = vpack.c.b16 %v11868, %v11867
  %v11919 = vpack.c.b16 %v11870, %v11869
  %v11920 = vpack.c.b16 %v11872, %v11871
  %v11921 = vpack.c.b16 %v11874, %v11873
  %v11922 = vpack.c.b16 %v11876, %v11875
  %v11923 = vpack.c.b16 %v11878, %v11877
  %v11924 = vpack.c.b16 %v11880, %v11879
  %v11925 = vpack.c.b16 %v11882, %v11881
  %v11926 = vpack.c.b16 %v11884, %v11883
  %v11927 = vpack.c.b16 %v11886, %v11885
  %v11928 = vpack.c.b16 %v11888, %v11887
  %v11929 = vpack.c.b16 %v11890, %v11889
  %v11930 = vpack.c.b16 %v11892, %v11891
  %v11931 = vpack.c.b16 %v11894, %v11893
  %v11932 = vpack.c.b16 %v11896, %v11895
  %v11933 = vpack.c.b16 %v11898, %v11897
  %v11934 = vpack.c.b16 %v11900, %v11899
  %v11935 = vpack.c.b16 %v11902, %v11901
  %v11936 = vpack.c.b16 %v11904, %v11903
  %11969 = vmatprep.subr.bf16.mxu0 0
  %11970 = vmatpush1.bf16.msra.mxu0 %v11905
  %11971 = vmatprep.subr.bf16.mxu0 0
  %11972 = vmatpush1.bf16.msra.mxu0 %v11906
  %11973 = vmatprep.subr.bf16.mxu0 0
  %11974 = vmatpush1.bf16.msra.mxu0 %v11907
  %11975 = vmatprep.subr.bf16.mxu0 0
  %11976 = vmatpush1.bf16.msra.mxu0 %v11908
  %11977 = vmatprep.subr.bf16.mxu0 0
  %11978 = vmatpush1.bf16.msra.mxu0 %v11909
  %11979 = vmatprep.subr.bf16.mxu0 0
  %11980 = vmatpush1.bf16.msra.mxu0 %v11910
  %11981 = vmatprep.subr.bf16.mxu0 0
  %11982 = vmatpush1.bf16.msra.mxu0 %v11911
  %11983 = vmatprep.subr.bf16.mxu0 0
  %11984 = vmatpush1.bf16.msra.mxu0 %v11912
  %11985 = vmatprep.subr.bf16.mxu0 0
  %11986 = vmatpush1.bf16.msra.mxu0 %v11913
  %11987 = vmatprep.subr.bf16.mxu0 0
  %11988 = vmatpush1.bf16.msra.mxu0 %v11914
  %11989 = vmatprep.subr.bf16.mxu0 0
  %11990 = vmatpush1.bf16.msra.mxu0 %v11915
  %11991 = vmatprep.subr.bf16.mxu0 0
  %11992 = vmatpush1.bf16.msra.mxu0 %v11916
  %11993 = vmatprep.subr.bf16.mxu0 0
  %11994 = vmatpush1.bf16.msra.mxu0 %v11917
  %11995 = vmatprep.subr.bf16.mxu0 0
  %11996 = vmatpush1.bf16.msra.mxu0 %v11918
  %11997 = vmatprep.subr.bf16.mxu0 0
  %11998 = vmatpush1.bf16.msra.mxu0 %v11919
  %11999 = vmatprep.subr.bf16.mxu0 0
  %12000 = vmatpush1.bf16.msra.mxu0 %v11920
  %12001 = vmatprep.mubr.bf16.mxu0 %v11703
  %12002 = vmatmul.mubr.bf16.gmra.mrb[0].mxu0 %v11702
  %v12003 = vpop.f32.mrb[0].mxu0
  %v12004 = vadd.f32 %v11775, %v12003
  %v12005 = vpop.f32.mrb[0].mxu0
  %v12006 = vpop.f32.mrb[0].mxu0
  %v12007 = vpop.f32.mrb[0].mxu0
  %12008 = vdwg.mxu0
  %12009 = vmatprep.subr.bf16.mxu0 0
  %12010 = vmatpush1.bf16.msra.mxu0 %v11921
  %12011 = vmatprep.subr.bf16.mxu0 0
  %12012 = vmatpush1.bf16.msra.mxu0 %v11922
  %12013 = vmatprep.subr.bf16.mxu0 0
  %12014 = vmatpush1.bf16.msra.mxu0 %v11923
  %12015 = vmatprep.subr.bf16.mxu0 0
  %12016 = vmatpush1.bf16.msra.mxu0 %v11924
  %12017 = vmatprep.subr.bf16.mxu0 0
  %12018 = vmatpush1.bf16.msra.mxu0 %v11925
  %12019 = vmatprep.subr.bf16.mxu0 0
  %12020 = vmatpush1.bf16.msra.mxu0 %v11926
  %12021 = vmatprep.subr.bf16.mxu0 0
  %12022 = vmatpush1.bf16.msra.mxu0 %v11927
  %12023 = vmatprep.subr.bf16.mxu0 0
  %12024 = vmatpush1.bf16.msra.mxu0 %v11928
  %12025 = vmatprep.subr.bf16.mxu0 0
  %12026 = vmatpush1.bf16.msra.mxu0 %v11929
  %12027 = vmatprep.subr.bf16.mxu0 0
  %12028 = vmatpush1.bf16.msra.mxu0 %v11930
  %12029 = vmatprep.subr.bf16.mxu0 0
  %12030 = vmatpush1.bf16.msra.mxu0 %v11931
  %12031 = vmatprep.subr.bf16.mxu0 0
  %12032 = vmatpush1.bf16.msra.mxu0 %v11932
  %12033 = vmatprep.subr.bf16.mxu0 0
  %12034 = vmatpush1.bf16.msra.mxu0 %v11933
  %12035 = vmatprep.subr.bf16.mxu0 0
  %12036 = vmatpush1.bf16.msra.mxu0 %v11934
  %12037 = vmatprep.subr.bf16.mxu0 0
  %12038 = vmatpush1.bf16.msra.mxu0 %v11935
  %12039 = vmatprep.subr.bf16.mxu0 0
  %12040 = vmatpush1.bf16.msra.mxu0 %v11936
  %12041 = vmatprep.mubr.bf16.mxu0 %v11705
  %12042 = vmatmul.mubr.bf16.gmra.mrb[0].mxu0 %v11704
  %v12043 = vpop.f32.mrb[0].mxu0
  %v12044 = vadd.f32 %v12004, %v12043
  %v12045 = vpop.f32.mrb[0].mxu0
  %v12046 = vpop.f32.mrb[0].mxu0
  %v12047 = vpop.f32.mrb[0].mxu0
  %12048 = vdwg.mxu0
  %12049 = vmax.xlane.f32.xlu0 %v12044
  %v12050 = vpop.xlane.xlu0 %12049
  %v12051 = vsub.f32 %v12044, %v12050
  %v12052 = vmul.f32 %v12051, 1.442695
  %v12053 = vpow.pop %v12052
  %12054 = vadd.xlane.f32.xlu0 %v12053
  %v12055 = vpop.xlane.xlu0 %12054
  %v12056 = vlog2.pop %v12055
  %v12057 = vmul.f32 %v12056, 0.6931472
  %v12058 = vadd.f32 %v12050, %v12057
  %v12059 = vsub.f32 %v12044, %v12058
  %12060 = vst [vmem:[%s5] sm:$0xff] %v12059
  // Predicated region
  $region22: #{forward.5} parent=0 // pred_check
    _
  $region23: #{forward.5} parent=0 // pred_check_branch
    %12062 = sbr.rel (0) target = $region25
  $region24: #{forward.5} parent=0 // pred_region
    _
  $region25: #{forward.5} parent=0 // pred_fallthru
    _
  // Predicated region
  $region26: #{forward.5} parent=0 // pred_check
    _
  $region27: #{forward.5} parent=0 // pred_check_branch
    %12064 = sbr.rel (0) target = $region29
  $region28: #{forward.5} parent=0 // pred_region
    _
  $region29: #{forward.5} parent=0 // pred_fallthru
    _

</llo_original>
